<compile_context>
chip_gen: v6e
topology: v6e:2x2x1
jax: 0.10.0
libtpu: 0.0.40
codegen_flags: <defaults>
</compile_context>

<pallas_src>
import collections
import functools

import numpy as np

import jax
import jax.numpy as jnp
from jax import lax
from jax.experimental import pallas as pl
from jax.experimental.pallas import tpu as pltpu

SELU_ALPHA = 1.6732632423543772
SELU_LAMBDA = 1.0507009873554805
BN_EPS = 1e-5

CPAD = 128      # channel / lane padding for every layer
OUT_ROWS = 8    # sublane-aligned output block height

EscStatic = collections.namedtuple(
    "EscStatic",
    ["conv_geom", "rbuf1", "scratch_rows", "n_pos", "num_classes"],
)


def _round_up(x, m):
    return (x + m - 1) // m * m


def _selu(y):
    # clamp before exp so the dead branch never produces inf
    neg = SELU_ALPHA * (jnp.exp(jnp.minimum(y, 0.0)) - 1.0)
    return SELU_LAMBDA * jnp.where(y > 0.0, y, neg)


def _zero_index_map(ndim):
    def index_map(b):
        return (0,) * ndim
    return index_map


def _pad_to(a, shape):
    return jnp.pad(a, [(0, t - s) for s, t in zip(a.shape, shape)])


# ---------------------------------------------------------------------------
# The fused kernel: whole forward pass for one batch element per grid step.
# ---------------------------------------------------------------------------
def _esc_kernel(*refs, conv_geom, n_pos):
    (x_ref,
     t1, t2, t3, t4,
     cw1, cb1, cw2, cb2, cw3, cb3, cw4, cb4,
     fw1, fb1, fw2, fb2, fw3, fb3,
     o_ref,
     pad2, pad3, pad4, feat) = refs

    conv_w = (cw1, cw2, cw3, cw4)
    conv_b = (cb1, cb2, cb3, cb4)
    sel_t = (t1, t2, t3, t4)
    bufs = (pad2, pad3, pad4, feat)

    src = x_ref  # flat, zero-padded (rows, 128) activation of conv1's input
    for i in range(4):
        wp, lpad = conv_geom[i]  # padded width, padded patch length
        # Bias (BN already folded) seeds the f32 accumulator.
        acc = jnp.broadcast_to(conv_b[i][...], (lpad, CPAD))
        for kh in range(3):
            for kw in range(3):
                off = kh * wp + kw
                patch = src[off:off + lpad, :]              # in-kernel im2col
                acc = acc + jnp.dot(patch.astype(jnp.bfloat16),
                                    conv_w[i][kh * 3 + kw],
                                    preferred_element_type=jnp.float32)
        y = _selu(acc).astype(jnp.bfloat16)   # next matmul consumes bf16 anyway
        # Scatter valid output rows into the next layer's padded flat buffer
        # (also performs stride-2 subsampling); padding rows come out as 0.
        # bf16 x bf16 -> f32 (single MXU pass; row selection is exact).
        bufs[i][...] = jnp.dot(sel_t[i][...], y,
                               preferred_element_type=jnp.float32)
        src = bufs[i]

    # MLP head.  `feat` is (n_pos_pad, 128): rows ordered (h, w), lanes = c,
    # matching fc1's weight prepared as (pos, cin_pad, cout_pad).
    h = fb1[...]
    for p in range(n_pos):
        h = h + jnp.dot(feat[p:p + 1, :].astype(jnp.bfloat16), fw1[p],
                        preferred_element_type=jnp.float32)
    h = _selu(h)                                            # Dropout = identity (eval)
    h = _selu(jnp.dot(h.astype(jnp.bfloat16), fw2[...],
                      preferred_element_type=jnp.float32) + fb2[...])
    logits = jnp.dot(h.astype(jnp.bfloat16), fw3[...],
                     preferred_element_type=jnp.float32) + fb3[...]
    o_ref[...] = jnp.broadcast_to(logits, (OUT_ROWS, CPAD))


# ---------------------------------------------------------------------------
# Forward wrapper (single pallas_call).
# ---------------------------------------------------------------------------
@functools.partial(jax.jit, static_argnums=(2,))
def _forward_impl(x_nchw, arrays, static):
    B, C, H, W = x_nchw.shape
    rbuf1 = static.rbuf1

    # One-time input prep: NCHW -> flat zero-padded (rows, 128-lane) slab.
    x = jnp.transpose(x_nchw, (0, 2, 3, 1)).astype(jnp.float32)
    x = jnp.pad(x, ((0, 0), (1, 1), (1, 1), (0, CPAD - C)))
    x = x.reshape(B, (H + 2) * (W + 2), CPAD)
    x = jnp.pad(x, ((0, 0), (0, rbuf1 - (H + 2) * (W + 2)), (0, 0)))

    in_specs = [pl.BlockSpec((None, rbuf1, CPAD), lambda b: (b, 0, 0))]
    for a in arrays:
        in_specs.append(pl.BlockSpec(a.shape, _zero_index_map(a.ndim)))

    kernel = functools.partial(_esc_kernel,
                               conv_geom=static.conv_geom,
                               n_pos=static.n_pos)

    out = pl.pallas_call(
        kernel,
        out_shape=jax.ShapeDtypeStruct((B, OUT_ROWS, CPAD), jnp.float32),
        grid=(B,),
        in_specs=in_specs,
        out_specs=pl.BlockSpec((None, OUT_ROWS, CPAD), lambda b: (b, 0, 0)),
        scratch_shapes=[pltpu.VMEM((r, CPAD), jnp.float32)
                        for r in static.scratch_rows],
        compiler_params=pltpu.CompilerParams(
            dimension_semantics=("parallel",)),
    )(x, *arrays)
    return out[:, 0, :static.num_classes]


def esc_forward(x_nchw, prepped):
    return _forward_impl(x_nchw, prepped["arrays"], prepped["static"])


# ---------------------------------------------------------------------------
# Parameter init (PyTorch layouts / init scheme) and one-time kernel prep.
# ---------------------------------------------------------------------------
def init_params(key, in_channels, hid_channels, num_classes, feature_dim):
    def conv_p(k, cin, cout):
        kw_, kb_ = jax.random.split(k)
        fan_in = cin * 9
        w = jax.random.normal(kw_, (cout, cin, 3, 3), jnp.float32) * np.sqrt(2.0 / fan_in)
        bound = 1.0 / np.sqrt(fan_in)
        b = jax.random.uniform(kb_, (cout,), jnp.float32, -bound, bound)
        bn = {"gamma": jnp.ones((cout,), jnp.float32),
              "beta": jnp.zeros((cout,), jnp.float32),
              "mean": jnp.zeros((cout,), jnp.float32),
              "var": jnp.ones((cout,), jnp.float32)}
        return {"w": w, "b": b, "bn": bn}

    def lin_p(k, fin, fout):
        kw_, kb_ = jax.random.split(k)
        bound = 1.0 / np.sqrt(fin)
        w = jax.random.uniform(kw_, (fout, fin), jnp.float32, -bound, bound)
        b = jax.random.uniform(kb_, (fout,), jnp.float32, -bound, bound)
        return {"w": w, "b": b}

    keys = jax.random.split(key, 7)
    h = hid_channels
    return {
        "conv1": conv_p(keys[0], in_channels, h),
        "conv2": conv_p(keys[1], h, 2 * h),
        "conv3": conv_p(keys[2], 2 * h, 2 * h),
        "conv4": conv_p(keys[3], 2 * h, 4 * h),
        "fc1": lin_p(keys[4], feature_dim, 8 * h),
        "fc2": lin_p(keys[5], 8 * h, 8 * h),
        "fc3": lin_p(keys[6], 8 * h, num_classes),
    }


def prepare_params(params, *, grid_size, num_classes, with_bn=True, bn_eps=BN_EPS):
    """Fold BN, hoist all layout transforms, pad everything to TPU-friendly
    shapes, and build the per-layer scatter (subsample + re-pad) matrices."""
    strides = (1, 2, 1, 2)
    geom = []
    h, w = grid_size
    for s in strides:
        wp = w + 2                               # padded width of this input
        rp = (h + 2) * wp                        # flat padded row count
        lpad = _round_up((h - 1) * wp + w, 8)    # padded im2col patch length
        rbuf = _round_up(max(rp, 2 * wp + 2 + lpad), 8)
        ho, wo = (h - 1) // s + 1, (w - 1) // s + 1
        geom.append(dict(wp=wp, lpad=lpad, rbuf=rbuf, stride=s, ho=ho, wo=wo))
        h, w = ho, wo
    h4, w4 = h, w
    n_pos = h4 * w4
    npos_pad = _round_up(n_pos, 8)

    # 0/1 scatter matrices: selu(conv_full) rows -> next padded flat buffer.
    # Stored bf16 (0/1 are exact) so the scatter is a single-pass MXU matmul.
    ts = []
    for i, g in enumerate(geom):
        if i + 1 < len(geom):
            rows_out, wp_out, to_fc = geom[i + 1]["rbuf"], geom[i + 1]["wp"], False
        else:
            rows_out, wp_out, to_fc = npos_pad, None, True
        t = np.zeros((rows_out, g["lpad"]), np.float32)
        for ho in range(g["ho"]):
            for wo in range(g["wo"]):
                src = g["stride"] * ho * g["wp"] + g["stride"] * wo
                dst = ho * g["wo"] + wo if to_fc else (ho + 1) * wp_out + (wo + 1)
                t[dst, src] = 1.0
        ts.append(jnp.asarray(t, dtype=jnp.bfloat16))

    # Conv weights: fold BN, reorder to (9, Cin, Cout), pad to 128 lanes, bf16.
    conv_args = []
    for name in ("conv1", "conv2", "conv3", "conv4"):
        p = params[name]
        wgt, bias = p["w"], p["b"]
        if with_bn:
            bn = p["bn"]
            s = bn["gamma"] / jnp.sqrt(bn["var"] + bn_eps)
            wgt = wgt * s[:, None, None, None]
            bias = (bias - bn["mean"]) * s + bn["beta"]
        cout, cin = wgt.shape[0], wgt.shape[1]
        wk = jnp.transpose(wgt, (2, 3, 1, 0)).reshape(9, cin, cout)
        wk = _pad_to(wk, (9, CPAD, CPAD)).astype(jnp.bfloat16)
        bk = _pad_to(bias, (CPAD,)).reshape(1, CPAD).astype(jnp.float32)
        conv_args += [wk, bk]

    # fc1: bake the NCHW flatten permutation into the weight -> (pos, cin, cout)
    c4 = params["conv4"]["w"].shape[0]
    n1 = params["fc1"]["w"].shape[0]
    w1 = params["fc1"]["w"].reshape(n1, c4, h4, w4)
    w1 = jnp.transpose(w1, (2, 3, 1, 0)).reshape(n_pos, c4, n1)
    w1 = _pad_to(w1, (npos_pad, CPAD, CPAD)).astype(jnp.bfloat16)
    b1 = _pad_to(params["fc1"]["b"], (CPAD,)).reshape(1, CPAD).astype(jnp.float32)
    w2 = _pad_to(params["fc2"]["w"].T, (CPAD, CPAD)).astype(jnp.bfloat16)
    b2 = _pad_to(params["fc2"]["b"], (CPAD,)).reshape(1, CPAD).astype(jnp.float32)
    w3 = _pad_to(params["fc3"]["w"].T, (CPAD, CPAD)).astype(jnp.bfloat16)
    b3 = _pad_to(params["fc3"]["b"], (CPAD,)).reshape(1, CPAD).astype(jnp.float32)

    arrays = tuple(ts) + tuple(conv_args) + (w1, b1, w2, b2, w3, b3)
    static = EscStatic(
        conv_geom=tuple((g["wp"], g["lpad"]) for g in geom),
        rbuf1=geom[0]["rbuf"],
        scratch_rows=(geom[1]["rbuf"], geom[2]["rbuf"], geom[3]["rbuf"], npos_pad),
        n_pos=n_pos,
        num_classes=num_classes,
    )
    return {"arrays": arrays, "static": static}


# ---------------------------------------------------------------------------
# Pure-JAX reference (eval-mode semantics) for a correctness check.
# ---------------------------------------------------------------------------
def reference_forward(x_nchw, params, with_bn=True, eps=BN_EPS):
    x = x_nchw.astype(jnp.float32)
    for name, stride in (("conv1", 1), ("conv2", 2), ("conv3", 1), ("conv4", 2)):
        p = params[name]
        x = lax.conv_general_dilated(x, p["w"], (stride, stride), ((1, 1), (1, 1)),
                                     dimension_numbers=("NCHW", "OIHW", "NCHW"))
        x = x + p["b"][None, :, None, None]
        if with_bn:
            bn = p["bn"]
            x = ((x - bn["mean"][None, :, None, None])
                 * (bn["gamma"][None, :, None, None]
                    / jnp.sqrt(bn["var"][None, :, None, None] + eps))
                 + bn["beta"][None, :, None, None])
        x = jax.nn.selu(x)
    x = x.reshape(x.shape[0], -1)
    x = jax.nn.selu(x @ params["fc1"]["w"].T + params["fc1"]["b"])
    x = jax.nn.selu(x @ params["fc2"]["w"].T + params["fc2"]["b"])
    return x @ params["fc3"]["w"].T + params["fc3"]["b"]


def _conv_out(n, stride):
    return (n + 2 - 3) // stride + 1


if __name__ == "__main__":
    # Small, module-consistent shapes.
    batch = 2
    in_channels = 8
    hid_channels = 8
    grid_size = (9, 9)
    num_classes = 2

    h4 = _conv_out(_conv_out(_conv_out(_conv_out(grid_size[0], 1), 2), 1), 2)
    w4 = _conv_out(_conv_out(_conv_out(_conv_out(grid_size[1], 1), 2), 1), 2)
    feature_dim = 4 * hid_channels * h4 * w4  # 32 * 3 * 3 = 288

    key = jax.random.PRNGKey(0)
    k_params, k_x = jax.random.split(key)
    params = init_params(k_params, in_channels, hid_channels, num_classes, feature_dim)
    prepped = prepare_params(params, grid_size=grid_size, num_classes=num_classes,
                             with_bn=True)

    x = jax.random.normal(k_x, (batch, in_channels, *grid_size), jnp.float32)  # NCHW

    out = esc_forward(x, prepped)
    out = jax.block_until_ready(out)

    assert out.shape == (batch, num_classes), out.shape
    assert out.dtype == jnp.float32
    assert bool(jnp.all(jnp.isfinite(out)))

    # Correctness vs. pure-JAX f32 reference (kernel uses bf16 MXU inputs).
    ref = reference_forward(x, params, with_bn=True)
    max_ref = float(jnp.max(jnp.abs(ref)))
    err = float(jnp.max(jnp.abs(out - ref)))
    assert err <= 0.15 * max(1.0, max_ref), (err, max_ref)

    print("KERNEL_OK")
</pallas_src>

<mosaic_0001>
module attributes {stable_mosaic.version = 11 : i64} {
  func.func @_esc_kernel(%arg0: i32, %arg1: memref<1x128x128xf32, #tpu.memory_space<vmem>>, %arg2: memref<128x104xbf16, #tpu.memory_space<vmem>>, %arg3: memref<56x104xbf16, #tpu.memory_space<vmem>>, %arg4: memref<56x40xbf16, #tpu.memory_space<vmem>>, %arg5: memref<16x40xbf16, #tpu.memory_space<vmem>>, %arg6: memref<9x128x128xbf16, #tpu.memory_space<vmem>>, %arg7: memref<1x128xf32, #tpu.memory_space<vmem>>, %arg8: memref<9x128x128xbf16, #tpu.memory_space<vmem>>, %arg9: memref<1x128xf32, #tpu.memory_space<vmem>>, %arg10: memref<9x128x128xbf16, #tpu.memory_space<vmem>>, %arg11: memref<1x128xf32, #tpu.memory_space<vmem>>, %arg12: memref<9x128x128xbf16, #tpu.memory_space<vmem>>, %arg13: memref<1x128xf32, #tpu.memory_space<vmem>>, %arg14: memref<16x128x128xbf16, #tpu.memory_space<vmem>>, %arg15: memref<1x128xf32, #tpu.memory_space<vmem>>, %arg16: memref<128x128xbf16, #tpu.memory_space<vmem>>, %arg17: memref<1x128xf32, #tpu.memory_space<vmem>>, %arg18: memref<128x128xbf16, #tpu.memory_space<vmem>>, %arg19: memref<1x128xf32, #tpu.memory_space<vmem>>, %arg20: memref<1x8x128xf32, #tpu.memory_space<vmem>>, %arg21: memref<128x128xf32, #tpu.memory_space<vmem>>, %arg22: memref<56x128xf32, #tpu.memory_space<vmem>>, %arg23: memref<56x128xf32, #tpu.memory_space<vmem>>, %arg24: memref<16x128xf32, #tpu.memory_space<vmem>>) attributes {dimension_semantics = [#tpu.dimension_semantics<parallel>], iteration_bounds = array<i64: 2>, scalar_prefetch = 0 : i64, scratch_operands = 4 : i64, tpu.core_type = #tpu.core_type<tc>, window_params = [{transform_indices = @transform_0, window_bounds = array<i64: 1, 128, 128>}, {pipeline_mode = #tpu.pipeline_mode<synchronous>, transform_indices = @transform_1, window_bounds = array<i64: 128, 104>}, {pipeline_mode = #tpu.pipeline_mode<synchronous>, transform_indices = @transform_2, window_bounds = array<i64: 56, 104>}, {pipeline_mode = #tpu.pipeline_mode<synchronous>, transform_indices = @transform_3, window_bounds = array<i64: 56, 40>}, {pipeline_mode = #tpu.pipeline_mode<synchronous>, transform_indices = @transform_4, window_bounds = array<i64: 16, 40>}, {pipeline_mode = #tpu.pipeline_mode<synchronous>, transform_indices = @transform_5, window_bounds = array<i64: 9, 128, 128>}, {pipeline_mode = #tpu.pipeline_mode<synchronous>, transform_indices = @transform_6, window_bounds = array<i64: 1, 128>}, {pipeline_mode = #tpu.pipeline_mode<synchronous>, transform_indices = @transform_7, window_bounds = array<i64: 9, 128, 128>}, {pipeline_mode = #tpu.pipeline_mode<synchronous>, transform_indices = @transform_8, window_bounds = array<i64: 1, 128>}, {pipeline_mode = #tpu.pipeline_mode<synchronous>, transform_indices = @transform_9, window_bounds = array<i64: 9, 128, 128>}, {pipeline_mode = #tpu.pipeline_mode<synchronous>, transform_indices = @transform_10, window_bounds = array<i64: 1, 128>}, {pipeline_mode = #tpu.pipeline_mode<synchronous>, transform_indices = @transform_11, window_bounds = array<i64: 9, 128, 128>}, {pipeline_mode = #tpu.pipeline_mode<synchronous>, transform_indices = @transform_12, window_bounds = array<i64: 1, 128>}, {pipeline_mode = #tpu.pipeline_mode<synchronous>, transform_indices = @transform_13, window_bounds = array<i64: 16, 128, 128>}, {pipeline_mode = #tpu.pipeline_mode<synchronous>, transform_indices = @transform_14, window_bounds = array<i64: 1, 128>}, {pipeline_mode = #tpu.pipeline_mode<synchronous>, transform_indices = @transform_15, window_bounds = array<i64: 128, 128>}, {pipeline_mode = #tpu.pipeline_mode<synchronous>, transform_indices = @transform_16, window_bounds = array<i64: 1, 128>}, {pipeline_mode = #tpu.pipeline_mode<synchronous>, transform_indices = @transform_17, window_bounds = array<i64: 128, 128>}, {pipeline_mode = #tpu.pipeline_mode<synchronous>, transform_indices = @transform_18, window_bounds = array<i64: 1, 128>}, {transform_indices = @transform_19, window_bounds = array<i64: 1, 8, 128>}]} {
    %c0 = arith.constant 0 : index
    %c0_0 = arith.constant 0 : index
    %0 = vector.load %arg7[%c0, %c0_0] : memref<1x128xf32, #tpu.memory_space<vmem>>, vector<1x128xf32>
    %1 = vector.shape_cast %0 : vector<1x128xf32> to vector<1x128xf32>
    %2 = vector.broadcast %1 : vector<1x128xf32> to vector<104x128xf32>
    %c0_1 = arith.constant 0 : index
    %c0_2 = arith.constant 0 : index
    %c0_3 = arith.constant 0 : index
    %3 = vector.load %arg1[%c0_1, %c0_2, %c0_3] : memref<1x128x128xf32, #tpu.memory_space<vmem>>, vector<1x104x128xf32>
    %4 = vector.shape_cast %3 : vector<1x104x128xf32> to vector<104x128xf32>
    %5 = arith.truncf %4 : vector<104x128xf32> to vector<104x128xbf16>
    %c0_4 = arith.constant 0 : index
    %c0_5 = arith.constant 0 : index
    %c0_6 = arith.constant 0 : index
    %6 = vector.load %arg6[%c0_4, %c0_5, %c0_6] : memref<9x128x128xbf16, #tpu.memory_space<vmem>>, vector<1x128x128xbf16>
    %7 = vector.shape_cast %6 : vector<1x128x128xbf16> to vector<128x128xbf16>
    %cst = arith.constant dense<0.000000e+00> : vector<104x128xf32>
    %8 = tpu.matmul %5, %7, %cst {dimension_numbers = #tpu.dot_dimension_numbers<[1], [0], [0], [1], [0, 0, 1, 1], [], []>} : vector<104x128xbf16>, vector<128x128xbf16>, vector<104x128xf32> -> vector<104x128xf32>
    %9 = arith.addf %2, %8 : vector<104x128xf32>
    %c0_7 = arith.constant 0 : index
    %c1 = arith.constant 1 : index
    %c0_8 = arith.constant 0 : index
    %10 = vector.load %arg1[%c0_7, %c1, %c0_8] : memref<1x128x128xf32, #tpu.memory_space<vmem>>, vector<1x104x128xf32>
    %11 = vector.shape_cast %10 : vector<1x104x128xf32> to vector<104x128xf32>
    %12 = arith.truncf %11 : vector<104x128xf32> to vector<104x128xbf16>
    %c1_9 = arith.constant 1 : index
    %c0_10 = arith.constant 0 : index
    %c0_11 = arith.constant 0 : index
    %13 = vector.load %arg6[%c1_9, %c0_10, %c0_11] : memref<9x128x128xbf16, #tpu.memory_space<vmem>>, vector<1x128x128xbf16>
    %14 = vector.shape_cast %13 : vector<1x128x128xbf16> to vector<128x128xbf16>
    %cst_12 = arith.constant dense<0.000000e+00> : vector<104x128xf32>
    %15 = tpu.matmul %12, %14, %cst_12 {dimension_numbers = #tpu.dot_dimension_numbers<[1], [0], [0], [1], [0, 0, 1, 1], [], []>} : vector<104x128xbf16>, vector<128x128xbf16>, vector<104x128xf32> -> vector<104x128xf32>
    %16 = arith.addf %9, %15 : vector<104x128xf32>
    %c0_13 = arith.constant 0 : index
    %c2 = arith.constant 2 : index
    %c0_14 = arith.constant 0 : index
    %17 = vector.load %arg1[%c0_13, %c2, %c0_14] : memref<1x128x128xf32, #tpu.memory_space<vmem>>, vector<1x104x128xf32>
    %18 = vector.shape_cast %17 : vector<1x104x128xf32> to vector<104x128xf32>
    %19 = arith.truncf %18 : vector<104x128xf32> to vector<104x128xbf16>
    %c2_15 = arith.constant 2 : index
    %c0_16 = arith.constant 0 : index
    %c0_17 = arith.constant 0 : index
    %20 = vector.load %arg6[%c2_15, %c0_16, %c0_17] : memref<9x128x128xbf16, #tpu.memory_space<vmem>>, vector<1x128x128xbf16>
    %21 = vector.shape_cast %20 : vector<1x128x128xbf16> to vector<128x128xbf16>
    %cst_18 = arith.constant dense<0.000000e+00> : vector<104x128xf32>
    %22 = tpu.matmul %19, %21, %cst_18 {dimension_numbers = #tpu.dot_dimension_numbers<[1], [0], [0], [1], [0, 0, 1, 1], [], []>} : vector<104x128xbf16>, vector<128x128xbf16>, vector<104x128xf32> -> vector<104x128xf32>
    %23 = arith.addf %16, %22 : vector<104x128xf32>
    %c0_19 = arith.constant 0 : index
    %c11 = arith.constant 11 : index
    %c0_20 = arith.constant 0 : index
    %24 = vector.load %arg1[%c0_19, %c11, %c0_20] : memref<1x128x128xf32, #tpu.memory_space<vmem>>, vector<1x104x128xf32>
    %25 = vector.shape_cast %24 : vector<1x104x128xf32> to vector<104x128xf32>
    %26 = arith.truncf %25 : vector<104x128xf32> to vector<104x128xbf16>
    %c3 = arith.constant 3 : index
    %c0_21 = arith.constant 0 : index
    %c0_22 = arith.constant 0 : index
    %27 = vector.load %arg6[%c3, %c0_21, %c0_22] : memref<9x128x128xbf16, #tpu.memory_space<vmem>>, vector<1x128x128xbf16>
    %28 = vector.shape_cast %27 : vector<1x128x128xbf16> to vector<128x128xbf16>
    %cst_23 = arith.constant dense<0.000000e+00> : vector<104x128xf32>
    %29 = tpu.matmul %26, %28, %cst_23 {dimension_numbers = #tpu.dot_dimension_numbers<[1], [0], [0], [1], [0, 0, 1, 1], [], []>} : vector<104x128xbf16>, vector<128x128xbf16>, vector<104x128xf32> -> vector<104x128xf32>
    %30 = arith.addf %23, %29 : vector<104x128xf32>
    %c0_24 = arith.constant 0 : index
    %c12 = arith.constant 12 : index
    %c0_25 = arith.constant 0 : index
    %31 = vector.load %arg1[%c0_24, %c12, %c0_25] : memref<1x128x128xf32, #tpu.memory_space<vmem>>, vector<1x104x128xf32>
    %32 = vector.shape_cast %31 : vector<1x104x128xf32> to vector<104x128xf32>
    %33 = arith.truncf %32 : vector<104x128xf32> to vector<104x128xbf16>
    %c4 = arith.constant 4 : index
    %c0_26 = arith.constant 0 : index
    %c0_27 = arith.constant 0 : index
    %34 = vector.load %arg6[%c4, %c0_26, %c0_27] : memref<9x128x128xbf16, #tpu.memory_space<vmem>>, vector<1x128x128xbf16>
    %35 = vector.shape_cast %34 : vector<1x128x128xbf16> to vector<128x128xbf16>
    %cst_28 = arith.constant dense<0.000000e+00> : vector<104x128xf32>
    %36 = tpu.matmul %33, %35, %cst_28 {dimension_numbers = #tpu.dot_dimension_numbers<[1], [0], [0], [1], [0, 0, 1, 1], [], []>} : vector<104x128xbf16>, vector<128x128xbf16>, vector<104x128xf32> -> vector<104x128xf32>
    %37 = arith.addf %30, %36 : vector<104x128xf32>
    %c0_29 = arith.constant 0 : index
    %c13 = arith.constant 13 : index
    %c0_30 = arith.constant 0 : index
    %38 = vector.load %arg1[%c0_29, %c13, %c0_30] : memref<1x128x128xf32, #tpu.memory_space<vmem>>, vector<1x104x128xf32>
    %39 = vector.shape_cast %38 : vector<1x104x128xf32> to vector<104x128xf32>
    %40 = arith.truncf %39 : vector<104x128xf32> to vector<104x128xbf16>
    %c5 = arith.constant 5 : index
    %c0_31 = arith.constant 0 : index
    %c0_32 = arith.constant 0 : index
    %41 = vector.load %arg6[%c5, %c0_31, %c0_32] : memref<9x128x128xbf16, #tpu.memory_space<vmem>>, vector<1x128x128xbf16>
    %42 = vector.shape_cast %41 : vector<1x128x128xbf16> to vector<128x128xbf16>
    %cst_33 = arith.constant dense<0.000000e+00> : vector<104x128xf32>
    %43 = tpu.matmul %40, %42, %cst_33 {dimension_numbers = #tpu.dot_dimension_numbers<[1], [0], [0], [1], [0, 0, 1, 1], [], []>} : vector<104x128xbf16>, vector<128x128xbf16>, vector<104x128xf32> -> vector<104x128xf32>
    %44 = arith.addf %37, %43 : vector<104x128xf32>
    %c0_34 = arith.constant 0 : index
    %c22 = arith.constant 22 : index
    %c0_35 = arith.constant 0 : index
    %45 = vector.load %arg1[%c0_34, %c22, %c0_35] : memref<1x128x128xf32, #tpu.memory_space<vmem>>, vector<1x104x128xf32>
    %46 = vector.shape_cast %45 : vector<1x104x128xf32> to vector<104x128xf32>
    %47 = arith.truncf %46 : vector<104x128xf32> to vector<104x128xbf16>
    %c6 = arith.constant 6 : index
    %c0_36 = arith.constant 0 : index
    %c0_37 = arith.constant 0 : index
    %48 = vector.load %arg6[%c6, %c0_36, %c0_37] : memref<9x128x128xbf16, #tpu.memory_space<vmem>>, vector<1x128x128xbf16>
    %49 = vector.shape_cast %48 : vector<1x128x128xbf16> to vector<128x128xbf16>
    %cst_38 = arith.constant dense<0.000000e+00> : vector<104x128xf32>
    %50 = tpu.matmul %47, %49, %cst_38 {dimension_numbers = #tpu.dot_dimension_numbers<[1], [0], [0], [1], [0, 0, 1, 1], [], []>} : vector<104x128xbf16>, vector<128x128xbf16>, vector<104x128xf32> -> vector<104x128xf32>
    %51 = arith.addf %44, %50 : vector<104x128xf32>
    %c0_39 = arith.constant 0 : index
    %c23 = arith.constant 23 : index
    %c0_40 = arith.constant 0 : index
    %52 = vector.load %arg1[%c0_39, %c23, %c0_40] : memref<1x128x128xf32, #tpu.memory_space<vmem>>, vector<1x104x128xf32>
    %53 = vector.shape_cast %52 : vector<1x104x128xf32> to vector<104x128xf32>
    %54 = arith.truncf %53 : vector<104x128xf32> to vector<104x128xbf16>
    %c7 = arith.constant 7 : index
    %c0_41 = arith.constant 0 : index
    %c0_42 = arith.constant 0 : index
    %55 = vector.load %arg6[%c7, %c0_41, %c0_42] : memref<9x128x128xbf16, #tpu.memory_space<vmem>>, vector<1x128x128xbf16>
    %56 = vector.shape_cast %55 : vector<1x128x128xbf16> to vector<128x128xbf16>
    %cst_43 = arith.constant dense<0.000000e+00> : vector<104x128xf32>
    %57 = tpu.matmul %54, %56, %cst_43 {dimension_numbers = #tpu.dot_dimension_numbers<[1], [0], [0], [1], [0, 0, 1, 1], [], []>} : vector<104x128xbf16>, vector<128x128xbf16>, vector<104x128xf32> -> vector<104x128xf32>
    %58 = arith.addf %51, %57 : vector<104x128xf32>
    %c0_44 = arith.constant 0 : index
    %c24 = arith.constant 24 : index
    %c0_45 = arith.constant 0 : index
    %59 = vector.load %arg1[%c0_44, %c24, %c0_45] : memref<1x128x128xf32, #tpu.memory_space<vmem>>, vector<1x104x128xf32>
    %60 = vector.shape_cast %59 : vector<1x104x128xf32> to vector<104x128xf32>
    %61 = arith.truncf %60 : vector<104x128xf32> to vector<104x128xbf16>
    %c8 = arith.constant 8 : index
    %c0_46 = arith.constant 0 : index
    %c0_47 = arith.constant 0 : index
    %62 = vector.load %arg6[%c8, %c0_46, %c0_47] : memref<9x128x128xbf16, #tpu.memory_space<vmem>>, vector<1x128x128xbf16>
    %63 = vector.shape_cast %62 : vector<1x128x128xbf16> to vector<128x128xbf16>
    %cst_48 = arith.constant dense<0.000000e+00> : vector<104x128xf32>
    %64 = tpu.matmul %61, %63, %cst_48 {dimension_numbers = #tpu.dot_dimension_numbers<[1], [0], [0], [1], [0, 0, 1, 1], [], []>} : vector<104x128xbf16>, vector<128x128xbf16>, vector<104x128xf32> -> vector<104x128xf32>
    %65 = arith.addf %58, %64 : vector<104x128xf32>
    %cst_49 = arith.constant 0.000000e+00 : f32
    %66 = vector.broadcast %cst_49 : f32 to vector<104x128xf32>
    %67 = arith.minimumf %65, %66 : vector<104x128xf32>
    %68 = math.exp %67 : vector<104x128xf32>
    %cst_50 = arith.constant 1.000000e+00 : f32
    %69 = vector.broadcast %cst_50 : f32 to vector<104x128xf32>
    %70 = arith.subf %68, %69 : vector<104x128xf32>
    %cst_51 = arith.constant 1.67326319 : f32
    %71 = vector.broadcast %cst_51 : f32 to vector<104x128xf32>
    %72 = arith.mulf %71, %70 : vector<104x128xf32>
    %cst_52 = arith.constant 0.000000e+00 : f32
    %73 = vector.broadcast %cst_52 : f32 to vector<104x128xf32>
    %74 = arith.cmpf ogt, %65, %73 : vector<104x128xf32>
    %75 = arith.select %74, %65, %72 : vector<104x128xi1>, vector<104x128xf32>
    %cst_53 = arith.constant 1.05070102 : f32
    %76 = vector.broadcast %cst_53 : f32 to vector<104x128xf32>
    %77 = arith.mulf %76, %75 : vector<104x128xf32>
    %78 = arith.truncf %77 : vector<104x128xf32> to vector<104x128xbf16>
    %c0_54 = arith.constant 0 : index
    %c0_55 = arith.constant 0 : index
    %79 = vector.load %arg2[%c0_54, %c0_55] : memref<128x104xbf16, #tpu.memory_space<vmem>>, vector<128x104xbf16>
    %cst_56 = arith.constant dense<0.000000e+00> : vector<128x128xf32>
    %80 = tpu.matmul %79, %78, %cst_56 {dimension_numbers = #tpu.dot_dimension_numbers<[1], [0], [0], [1], [0, 0, 1, 1], [], []>} : vector<128x104xbf16>, vector<104x128xbf16>, vector<128x128xf32> -> vector<128x128xf32>
    %c0_57 = arith.constant 0 : index
    %c0_58 = arith.constant 0 : index
    %81 = vector.load %arg21[%c0_57, %c0_58] : memref<128x128xf32, #tpu.memory_space<vmem>>, vector<128x128xf32>
    tpu.vector_store %arg21[%c0_57, %c0_58], %80 {strides = array<i32>} : memref<128x128xf32, #tpu.memory_space<vmem>>, vector<128x128xf32>,
    %c0_59 = arith.constant 0 : index
    %c0_60 = arith.constant 0 : index
    %82 = vector.load %arg9[%c0_59, %c0_60] : memref<1x128xf32, #tpu.memory_space<vmem>>, vector<1x128xf32>
    %83 = vector.shape_cast %82 : vector<1x128xf32> to vector<1x128xf32>
    %84 = vector.broadcast %83 : vector<1x128xf32> to vector<104x128xf32>
    %c0_61 = arith.constant 0 : index
    %c0_62 = arith.constant 0 : index
    %85 = vector.load %arg21[%c0_61, %c0_62] : memref<128x128xf32, #tpu.memory_space<vmem>>, vector<104x128xf32>
    %86 = arith.truncf %85 : vector<104x128xf32> to vector<104x128xbf16>
    %c0_63 = arith.constant 0 : index
    %c0_64 = arith.constant 0 : index
    %c0_65 = arith.constant 0 : index
    %87 = vector.load %arg8[%c0_63, %c0_64, %c0_65] : memref<9x128x128xbf16, #tpu.memory_space<vmem>>, vector<1x128x128xbf16>
    %88 = vector.shape_cast %87 : vector<1x128x128xbf16> to vector<128x128xbf16>
    %cst_66 = arith.constant dense<0.000000e+00> : vector<104x128xf32>
    %89 = tpu.matmul %86, %88, %cst_66 {dimension_numbers = #tpu.dot_dimension_numbers<[1], [0], [0], [1], [0, 0, 1, 1], [], []>} : vector<104x128xbf16>, vector<128x128xbf16>, vector<104x128xf32> -> vector<104x128xf32>
    %90 = arith.addf %84, %89 : vector<104x128xf32>
    %c1_67 = arith.constant 1 : index
    %c0_68 = arith.constant 0 : index
    %91 = vector.load %arg21[%c1_67, %c0_68] : memref<128x128xf32, #tpu.memory_space<vmem>>, vector<104x128xf32>
    %92 = arith.truncf %91 : vector<104x128xf32> to vector<104x128xbf16>
    %c1_69 = arith.constant 1 : index
    %c0_70 = arith.constant 0 : index
    %c0_71 = arith.constant 0 : index
    %93 = vector.load %arg8[%c1_69, %c0_70, %c0_71] : memref<9x128x128xbf16, #tpu.memory_space<vmem>>, vector<1x128x128xbf16>
    %94 = vector.shape_cast %93 : vector<1x128x128xbf16> to vector<128x128xbf16>
    %cst_72 = arith.constant dense<0.000000e+00> : vector<104x128xf32>
    %95 = tpu.matmul %92, %94, %cst_72 {dimension_numbers = #tpu.dot_dimension_numbers<[1], [0], [0], [1], [0, 0, 1, 1], [], []>} : vector<104x128xbf16>, vector<128x128xbf16>, vector<104x128xf32> -> vector<104x128xf32>
    %96 = arith.addf %90, %95 : vector<104x128xf32>
    %c2_73 = arith.constant 2 : index
    %c0_74 = arith.constant 0 : index
    %97 = vector.load %arg21[%c2_73, %c0_74] : memref<128x128xf32, #tpu.memory_space<vmem>>, vector<104x128xf32>
    %98 = arith.truncf %97 : vector<104x128xf32> to vector<104x128xbf16>
    %c2_75 = arith.constant 2 : index
    %c0_76 = arith.constant 0 : index
    %c0_77 = arith.constant 0 : index
    %99 = vector.load %arg8[%c2_75, %c0_76, %c0_77] : memref<9x128x128xbf16, #tpu.memory_space<vmem>>, vector<1x128x128xbf16>
    %100 = vector.shape_cast %99 : vector<1x128x128xbf16> to vector<128x128xbf16>
    %cst_78 = arith.constant dense<0.000000e+00> : vector<104x128xf32>
    %101 = tpu.matmul %98, %100, %cst_78 {dimension_numbers = #tpu.dot_dimension_numbers<[1], [0], [0], [1], [0, 0, 1, 1], [], []>} : vector<104x128xbf16>, vector<128x128xbf16>, vector<104x128xf32> -> vector<104x128xf32>
    %102 = arith.addf %96, %101 : vector<104x128xf32>
    %c11_79 = arith.constant 11 : index
    %c0_80 = arith.constant 0 : index
    %103 = vector.load %arg21[%c11_79, %c0_80] : memref<128x128xf32, #tpu.memory_space<vmem>>, vector<104x128xf32>
    %104 = arith.truncf %103 : vector<104x128xf32> to vector<104x128xbf16>
    %c3_81 = arith.constant 3 : index
    %c0_82 = arith.constant 0 : index
    %c0_83 = arith.constant 0 : index
    %105 = vector.load %arg8[%c3_81, %c0_82, %c0_83] : memref<9x128x128xbf16, #tpu.memory_space<vmem>>, vector<1x128x128xbf16>
    %106 = vector.shape_cast %105 : vector<1x128x128xbf16> to vector<128x128xbf16>
    %cst_84 = arith.constant dense<0.000000e+00> : vector<104x128xf32>
    %107 = tpu.matmul %104, %106, %cst_84 {dimension_numbers = #tpu.dot_dimension_numbers<[1], [0], [0], [1], [0, 0, 1, 1], [], []>} : vector<104x128xbf16>, vector<128x128xbf16>, vector<104x128xf32> -> vector<104x128xf32>
    %108 = arith.addf %102, %107 : vector<104x128xf32>
    %c12_85 = arith.constant 12 : index
    %c0_86 = arith.constant 0 : index
    %109 = vector.load %arg21[%c12_85, %c0_86] : memref<128x128xf32, #tpu.memory_space<vmem>>, vector<104x128xf32>
    %110 = arith.truncf %109 : vector<104x128xf32> to vector<104x128xbf16>
    %c4_87 = arith.constant 4 : index
    %c0_88 = arith.constant 0 : index
    %c0_89 = arith.constant 0 : index
    %111 = vector.load %arg8[%c4_87, %c0_88, %c0_89] : memref<9x128x128xbf16, #tpu.memory_space<vmem>>, vector<1x128x128xbf16>
    %112 = vector.shape_cast %111 : vector<1x128x128xbf16> to vector<128x128xbf16>
    %cst_90 = arith.constant dense<0.000000e+00> : vector<104x128xf32>
    %113 = tpu.matmul %110, %112, %cst_90 {dimension_numbers = #tpu.dot_dimension_numbers<[1], [0], [0], [1], [0, 0, 1, 1], [], []>} : vector<104x128xbf16>, vector<128x128xbf16>, vector<104x128xf32> -> vector<104x128xf32>
    %114 = arith.addf %108, %113 : vector<104x128xf32>
    %c13_91 = arith.constant 13 : index
    %c0_92 = arith.constant 0 : index
    %115 = vector.load %arg21[%c13_91, %c0_92] : memref<128x128xf32, #tpu.memory_space<vmem>>, vector<104x128xf32>
    %116 = arith.truncf %115 : vector<104x128xf32> to vector<104x128xbf16>
    %c5_93 = arith.constant 5 : index
    %c0_94 = arith.constant 0 : index
    %c0_95 = arith.constant 0 : index
    %117 = vector.load %arg8[%c5_93, %c0_94, %c0_95] : memref<9x128x128xbf16, #tpu.memory_space<vmem>>, vector<1x128x128xbf16>
    %118 = vector.shape_cast %117 : vector<1x128x128xbf16> to vector<128x128xbf16>
    %cst_96 = arith.constant dense<0.000000e+00> : vector<104x128xf32>
    %119 = tpu.matmul %116, %118, %cst_96 {dimension_numbers = #tpu.dot_dimension_numbers<[1], [0], [0], [1], [0, 0, 1, 1], [], []>} : vector<104x128xbf16>, vector<128x128xbf16>, vector<104x128xf32> -> vector<104x128xf32>
    %120 = arith.addf %114, %119 : vector<104x128xf32>
    %c22_97 = arith.constant 22 : index
    %c0_98 = arith.constant 0 : index
    %121 = vector.load %arg21[%c22_97, %c0_98] : memref<128x128xf32, #tpu.memory_space<vmem>>, vector<104x128xf32>
    %122 = arith.truncf %121 : vector<104x128xf32> to vector<104x128xbf16>
    %c6_99 = arith.constant 6 : index
    %c0_100 = arith.constant 0 : index
    %c0_101 = arith.constant 0 : index
    %123 = vector.load %arg8[%c6_99, %c0_100, %c0_101] : memref<9x128x128xbf16, #tpu.memory_space<vmem>>, vector<1x128x128xbf16>
    %124 = vector.shape_cast %123 : vector<1x128x128xbf16> to vector<128x128xbf16>
    %cst_102 = arith.constant dense<0.000000e+00> : vector<104x128xf32>
    %125 = tpu.matmul %122, %124, %cst_102 {dimension_numbers = #tpu.dot_dimension_numbers<[1], [0], [0], [1], [0, 0, 1, 1], [], []>} : vector<104x128xbf16>, vector<128x128xbf16>, vector<104x128xf32> -> vector<104x128xf32>
    %126 = arith.addf %120, %125 : vector<104x128xf32>
    %c23_103 = arith.constant 23 : index
    %c0_104 = arith.constant 0 : index
    %127 = vector.load %arg21[%c23_103, %c0_104] : memref<128x128xf32, #tpu.memory_space<vmem>>, vector<104x128xf32>
    %128 = arith.truncf %127 : vector<104x128xf32> to vector<104x128xbf16>
    %c7_105 = arith.constant 7 : index
    %c0_106 = arith.constant 0 : index
    %c0_107 = arith.constant 0 : index
    %129 = vector.load %arg8[%c7_105, %c0_106, %c0_107] : memref<9x128x128xbf16, #tpu.memory_space<vmem>>, vector<1x128x128xbf16>
    %130 = vector.shape_cast %129 : vector<1x128x128xbf16> to vector<128x128xbf16>
    %cst_108 = arith.constant dense<0.000000e+00> : vector<104x128xf32>
    %131 = tpu.matmul %128, %130, %cst_108 {dimension_numbers = #tpu.dot_dimension_numbers<[1], [0], [0], [1], [0, 0, 1, 1], [], []>} : vector<104x128xbf16>, vector<128x128xbf16>, vector<104x128xf32> -> vector<104x128xf32>
    %132 = arith.addf %126, %131 : vector<104x128xf32>
    %c24_109 = arith.constant 24 : index
    %c0_110 = arith.constant 0 : index
    %133 = vector.load %arg21[%c24_109, %c0_110] : memref<128x128xf32, #tpu.memory_space<vmem>>, vector<104x128xf32>
    %134 = arith.truncf %133 : vector<104x128xf32> to vector<104x128xbf16>
    %c8_111 = arith.constant 8 : index
    %c0_112 = arith.constant 0 : index
    %c0_113 = arith.constant 0 : index
    %135 = vector.load %arg8[%c8_111, %c0_112, %c0_113] : memref<9x128x128xbf16, #tpu.memory_space<vmem>>, vector<1x128x128xbf16>
    %136 = vector.shape_cast %135 : vector<1x128x128xbf16> to vector<128x128xbf16>
    %cst_114 = arith.constant dense<0.000000e+00> : vector<104x128xf32>
    %137 = tpu.matmul %134, %136, %cst_114 {dimension_numbers = #tpu.dot_dimension_numbers<[1], [0], [0], [1], [0, 0, 1, 1], [], []>} : vector<104x128xbf16>, vector<128x128xbf16>, vector<104x128xf32> -> vector<104x128xf32>
    %138 = arith.addf %132, %137 : vector<104x128xf32>
    %cst_115 = arith.constant 0.000000e+00 : f32
    %139 = vector.broadcast %cst_115 : f32 to vector<104x128xf32>
    %140 = arith.minimumf %138, %139 : vector<104x128xf32>
    %141 = math.exp %140 : vector<104x128xf32>
    %cst_116 = arith.constant 1.000000e+00 : f32
    %142 = vector.broadcast %cst_116 : f32 to vector<104x128xf32>
    %143 = arith.subf %141, %142 : vector<104x128xf32>
    %cst_117 = arith.constant 1.67326319 : f32
    %144 = vector.broadcast %cst_117 : f32 to vector<104x128xf32>
    %145 = arith.mulf %144, %143 : vector<104x128xf32>
    %cst_118 = arith.constant 0.000000e+00 : f32
    %146 = vector.broadcast %cst_118 : f32 to vector<104x128xf32>
    %147 = arith.cmpf ogt, %138, %146 : vector<104x128xf32>
    %148 = arith.select %147, %138, %145 : vector<104x128xi1>, vector<104x128xf32>
    %cst_119 = arith.constant 1.05070102 : f32
    %149 = vector.broadcast %cst_119 : f32 to vector<104x128xf32>
    %150 = arith.mulf %149, %148 : vector<104x128xf32>
    %151 = arith.truncf %150 : vector<104x128xf32> to vector<104x128xbf16>
    %c0_120 = arith.constant 0 : index
    %c0_121 = arith.constant 0 : index
    %152 = vector.load %arg3[%c0_120, %c0_121] : memref<56x104xbf16, #tpu.memory_space<vmem>>, vector<56x104xbf16>
    %cst_122 = arith.constant dense<0.000000e+00> : vector<56x128xf32>
    %153 = tpu.matmul %152, %151, %cst_122 {dimension_numbers = #tpu.dot_dimension_numbers<[1], [0], [0], [1], [0, 0, 1, 1], [], []>} : vector<56x104xbf16>, vector<104x128xbf16>, vector<56x128xf32> -> vector<56x128xf32>
    %c0_123 = arith.constant 0 : index
    %c0_124 = arith.constant 0 : index
    %154 = vector.load %arg22[%c0_123, %c0_124] : memref<56x128xf32, #tpu.memory_space<vmem>>, vector<56x128xf32>
    tpu.vector_store %arg22[%c0_123, %c0_124], %153 {strides = array<i32>} : memref<56x128xf32, #tpu.memory_space<vmem>>, vector<56x128xf32>,
    %c0_125 = arith.constant 0 : index
    %c0_126 = arith.constant 0 : index
    %155 = vector.load %arg11[%c0_125, %c0_126] : memref<1x128xf32, #tpu.memory_space<vmem>>, vector<1x128xf32>
    %156 = vector.shape_cast %155 : vector<1x128xf32> to vector<1x128xf32>
    %157 = vector.broadcast %156 : vector<1x128xf32> to vector<40x128xf32>
    %c0_127 = arith.constant 0 : index
    %c0_128 = arith.constant 0 : index
    %158 = vector.load %arg22[%c0_127, %c0_128] : memref<56x128xf32, #tpu.memory_space<vmem>>, vector<40x128xf32>
    %159 = arith.truncf %158 : vector<40x128xf32> to vector<40x128xbf16>
    %c0_129 = arith.constant 0 : index
    %c0_130 = arith.constant 0 : index
    %c0_131 = arith.constant 0 : index
    %160 = vector.load %arg10[%c0_129, %c0_130, %c0_131] : memref<9x128x128xbf16, #tpu.memory_space<vmem>>, vector<1x128x128xbf16>
    %161 = vector.shape_cast %160 : vector<1x128x128xbf16> to vector<128x128xbf16>
    %cst_132 = arith.constant dense<0.000000e+00> : vector<40x128xf32>
    %162 = tpu.matmul %159, %161, %cst_132 {dimension_numbers = #tpu.dot_dimension_numbers<[1], [0], [0], [1], [0, 0, 1, 1], [], []>} : vector<40x128xbf16>, vector<128x128xbf16>, vector<40x128xf32> -> vector<40x128xf32>
    %163 = arith.addf %157, %162 : vector<40x128xf32>
    %c1_133 = arith.constant 1 : index
    %c0_134 = arith.constant 0 : index
    %164 = vector.load %arg22[%c1_133, %c0_134] : memref<56x128xf32, #tpu.memory_space<vmem>>, vector<40x128xf32>
    %165 = arith.truncf %164 : vector<40x128xf32> to vector<40x128xbf16>
    %c1_135 = arith.constant 1 : index
    %c0_136 = arith.constant 0 : index
    %c0_137 = arith.constant 0 : index
    %166 = vector.load %arg10[%c1_135, %c0_136, %c0_137] : memref<9x128x128xbf16, #tpu.memory_space<vmem>>, vector<1x128x128xbf16>
    %167 = vector.shape_cast %166 : vector<1x128x128xbf16> to vector<128x128xbf16>
    %cst_138 = arith.constant dense<0.000000e+00> : vector<40x128xf32>
    %168 = tpu.matmul %165, %167, %cst_138 {dimension_numbers = #tpu.dot_dimension_numbers<[1], [0], [0], [1], [0, 0, 1, 1], [], []>} : vector<40x128xbf16>, vector<128x128xbf16>, vector<40x128xf32> -> vector<40x128xf32>
    %169 = arith.addf %163, %168 : vector<40x128xf32>
    %c2_139 = arith.constant 2 : index
    %c0_140 = arith.constant 0 : index
    %170 = vector.load %arg22[%c2_139, %c0_140] : memref<56x128xf32, #tpu.memory_space<vmem>>, vector<40x128xf32>
    %171 = arith.truncf %170 : vector<40x128xf32> to vector<40x128xbf16>
    %c2_141 = arith.constant 2 : index
    %c0_142 = arith.constant 0 : index
    %c0_143 = arith.constant 0 : index
    %172 = vector.load %arg10[%c2_141, %c0_142, %c0_143] : memref<9x128x128xbf16, #tpu.memory_space<vmem>>, vector<1x128x128xbf16>
    %173 = vector.shape_cast %172 : vector<1x128x128xbf16> to vector<128x128xbf16>
    %cst_144 = arith.constant dense<0.000000e+00> : vector<40x128xf32>
    %174 = tpu.matmul %171, %173, %cst_144 {dimension_numbers = #tpu.dot_dimension_numbers<[1], [0], [0], [1], [0, 0, 1, 1], [], []>} : vector<40x128xbf16>, vector<128x128xbf16>, vector<40x128xf32> -> vector<40x128xf32>
    %175 = arith.addf %169, %174 : vector<40x128xf32>
    %c7_145 = arith.constant 7 : index
    %c0_146 = arith.constant 0 : index
    %176 = vector.load %arg22[%c7_145, %c0_146] : memref<56x128xf32, #tpu.memory_space<vmem>>, vector<40x128xf32>
    %177 = arith.truncf %176 : vector<40x128xf32> to vector<40x128xbf16>
    %c3_147 = arith.constant 3 : index
    %c0_148 = arith.constant 0 : index
    %c0_149 = arith.constant 0 : index
    %178 = vector.load %arg10[%c3_147, %c0_148, %c0_149] : memref<9x128x128xbf16, #tpu.memory_space<vmem>>, vector<1x128x128xbf16>
    %179 = vector.shape_cast %178 : vector<1x128x128xbf16> to vector<128x128xbf16>
    %cst_150 = arith.constant dense<0.000000e+00> : vector<40x128xf32>
    %180 = tpu.matmul %177, %179, %cst_150 {dimension_numbers = #tpu.dot_dimension_numbers<[1], [0], [0], [1], [0, 0, 1, 1], [], []>} : vector<40x128xbf16>, vector<128x128xbf16>, vector<40x128xf32> -> vector<40x128xf32>
    %181 = arith.addf %175, %180 : vector<40x128xf32>
    %c8_151 = arith.constant 8 : index
    %c0_152 = arith.constant 0 : index
    %182 = vector.load %arg22[%c8_151, %c0_152] : memref<56x128xf32, #tpu.memory_space<vmem>>, vector<40x128xf32>
    %183 = arith.truncf %182 : vector<40x128xf32> to vector<40x128xbf16>
    %c4_153 = arith.constant 4 : index
    %c0_154 = arith.constant 0 : index
    %c0_155 = arith.constant 0 : index
    %184 = vector.load %arg10[%c4_153, %c0_154, %c0_155] : memref<9x128x128xbf16, #tpu.memory_space<vmem>>, vector<1x128x128xbf16>
    %185 = vector.shape_cast %184 : vector<1x128x128xbf16> to vector<128x128xbf16>
    %cst_156 = arith.constant dense<0.000000e+00> : vector<40x128xf32>
    %186 = tpu.matmul %183, %185, %cst_156 {dimension_numbers = #tpu.dot_dimension_numbers<[1], [0], [0], [1], [0, 0, 1, 1], [], []>} : vector<40x128xbf16>, vector<128x128xbf16>, vector<40x128xf32> -> vector<40x128xf32>
    %187 = arith.addf %181, %186 : vector<40x128xf32>
    %c9 = arith.constant 9 : index
    %c0_157 = arith.constant 0 : index
    %188 = vector.load %arg22[%c9, %c0_157] : memref<56x128xf32, #tpu.memory_space<vmem>>, vector<40x128xf32>
    %189 = arith.truncf %188 : vector<40x128xf32> to vector<40x128xbf16>
    %c5_158 = arith.constant 5 : index
    %c0_159 = arith.constant 0 : index
    %c0_160 = arith.constant 0 : index
    %190 = vector.load %arg10[%c5_158, %c0_159, %c0_160] : memref<9x128x128xbf16, #tpu.memory_space<vmem>>, vector<1x128x128xbf16>
    %191 = vector.shape_cast %190 : vector<1x128x128xbf16> to vector<128x128xbf16>
    %cst_161 = arith.constant dense<0.000000e+00> : vector<40x128xf32>
    %192 = tpu.matmul %189, %191, %cst_161 {dimension_numbers = #tpu.dot_dimension_numbers<[1], [0], [0], [1], [0, 0, 1, 1], [], []>} : vector<40x128xbf16>, vector<128x128xbf16>, vector<40x128xf32> -> vector<40x128xf32>
    %193 = arith.addf %187, %192 : vector<40x128xf32>
    %c14 = arith.constant 14 : index
    %c0_162 = arith.constant 0 : index
    %194 = vector.load %arg22[%c14, %c0_162] : memref<56x128xf32, #tpu.memory_space<vmem>>, vector<40x128xf32>
    %195 = arith.truncf %194 : vector<40x128xf32> to vector<40x128xbf16>
    %c6_163 = arith.constant 6 : index
    %c0_164 = arith.constant 0 : index
    %c0_165 = arith.constant 0 : index
    %196 = vector.load %arg10[%c6_163, %c0_164, %c0_165] : memref<9x128x128xbf16, #tpu.memory_space<vmem>>, vector<1x128x128xbf16>
    %197 = vector.shape_cast %196 : vector<1x128x128xbf16> to vector<128x128xbf16>
    %cst_166 = arith.constant dense<0.000000e+00> : vector<40x128xf32>
    %198 = tpu.matmul %195, %197, %cst_166 {dimension_numbers = #tpu.dot_dimension_numbers<[1], [0], [0], [1], [0, 0, 1, 1], [], []>} : vector<40x128xbf16>, vector<128x128xbf16>, vector<40x128xf32> -> vector<40x128xf32>
    %199 = arith.addf %193, %198 : vector<40x128xf32>
    %c15 = arith.constant 15 : index
    %c0_167 = arith.constant 0 : index
    %200 = vector.load %arg22[%c15, %c0_167] : memref<56x128xf32, #tpu.memory_space<vmem>>, vector<40x128xf32>
    %201 = arith.truncf %200 : vector<40x128xf32> to vector<40x128xbf16>
    %c7_168 = arith.constant 7 : index
    %c0_169 = arith.constant 0 : index
    %c0_170 = arith.constant 0 : index
    %202 = vector.load %arg10[%c7_168, %c0_169, %c0_170] : memref<9x128x128xbf16, #tpu.memory_space<vmem>>, vector<1x128x128xbf16>
    %203 = vector.shape_cast %202 : vector<1x128x128xbf16> to vector<128x128xbf16>
    %cst_171 = arith.constant dense<0.000000e+00> : vector<40x128xf32>
    %204 = tpu.matmul %201, %203, %cst_171 {dimension_numbers = #tpu.dot_dimension_numbers<[1], [0], [0], [1], [0, 0, 1, 1], [], []>} : vector<40x128xbf16>, vector<128x128xbf16>, vector<40x128xf32> -> vector<40x128xf32>
    %205 = arith.addf %199, %204 : vector<40x128xf32>
    %c16 = arith.constant 16 : index
    %c0_172 = arith.constant 0 : index
    %206 = vector.load %arg22[%c16, %c0_172] : memref<56x128xf32, #tpu.memory_space<vmem>>, vector<40x128xf32>
    %207 = arith.truncf %206 : vector<40x128xf32> to vector<40x128xbf16>
    %c8_173 = arith.constant 8 : index
    %c0_174 = arith.constant 0 : index
    %c0_175 = arith.constant 0 : index
    %208 = vector.load %arg10[%c8_173, %c0_174, %c0_175] : memref<9x128x128xbf16, #tpu.memory_space<vmem>>, vector<1x128x128xbf16>
    %209 = vector.shape_cast %208 : vector<1x128x128xbf16> to vector<128x128xbf16>
    %cst_176 = arith.constant dense<0.000000e+00> : vector<40x128xf32>
    %210 = tpu.matmul %207, %209, %cst_176 {dimension_numbers = #tpu.dot_dimension_numbers<[1], [0], [0], [1], [0, 0, 1, 1], [], []>} : vector<40x128xbf16>, vector<128x128xbf16>, vector<40x128xf32> -> vector<40x128xf32>
    %211 = arith.addf %205, %210 : vector<40x128xf32>
    %cst_177 = arith.constant 0.000000e+00 : f32
    %212 = vector.broadcast %cst_177 : f32 to vector<40x128xf32>
    %213 = arith.minimumf %211, %212 : vector<40x128xf32>
    %214 = math.exp %213 : vector<40x128xf32>
    %cst_178 = arith.constant 1.000000e+00 : f32
    %215 = vector.broadcast %cst_178 : f32 to vector<40x128xf32>
    %216 = arith.subf %214, %215 : vector<40x128xf32>
    %cst_179 = arith.constant 1.67326319 : f32
    %217 = vector.broadcast %cst_179 : f32 to vector<40x128xf32>
    %218 = arith.mulf %217, %216 : vector<40x128xf32>
    %cst_180 = arith.constant 0.000000e+00 : f32
    %219 = vector.broadcast %cst_180 : f32 to vector<40x128xf32>
    %220 = arith.cmpf ogt, %211, %219 : vector<40x128xf32>
    %221 = arith.select %220, %211, %218 : vector<40x128xi1>, vector<40x128xf32>
    %cst_181 = arith.constant 1.05070102 : f32
    %222 = vector.broadcast %cst_181 : f32 to vector<40x128xf32>
    %223 = arith.mulf %222, %221 : vector<40x128xf32>
    %224 = arith.truncf %223 : vector<40x128xf32> to vector<40x128xbf16>
    %c0_182 = arith.constant 0 : index
    %c0_183 = arith.constant 0 : index
    %225 = vector.load %arg4[%c0_182, %c0_183] : memref<56x40xbf16, #tpu.memory_space<vmem>>, vector<56x40xbf16>
    %cst_184 = arith.constant dense<0.000000e+00> : vector<56x128xf32>
    %226 = tpu.matmul %225, %224, %cst_184 {dimension_numbers = #tpu.dot_dimension_numbers<[1], [0], [0], [1], [0, 0, 1, 1], [], []>} : vector<56x40xbf16>, vector<40x128xbf16>, vector<56x128xf32> -> vector<56x128xf32>
    %c0_185 = arith.constant 0 : index
    %c0_186 = arith.constant 0 : index
    %227 = vector.load %arg23[%c0_185, %c0_186] : memref<56x128xf32, #tpu.memory_space<vmem>>, vector<56x128xf32>
    tpu.vector_store %arg23[%c0_185, %c0_186], %226 {strides = array<i32>} : memref<56x128xf32, #tpu.memory_space<vmem>>, vector<56x128xf32>,
    %c0_187 = arith.constant 0 : index
    %c0_188 = arith.constant 0 : index
    %228 = vector.load %arg13[%c0_187, %c0_188] : memref<1x128xf32, #tpu.memory_space<vmem>>, vector<1x128xf32>
    %229 = vector.shape_cast %228 : vector<1x128xf32> to vector<1x128xf32>
    %230 = vector.broadcast %229 : vector<1x128xf32> to vector<40x128xf32>
    %c0_189 = arith.constant 0 : index
    %c0_190 = arith.constant 0 : index
    %231 = vector.load %arg23[%c0_189, %c0_190] : memref<56x128xf32, #tpu.memory_space<vmem>>, vector<40x128xf32>
    %232 = arith.truncf %231 : vector<40x128xf32> to vector<40x128xbf16>
    %c0_191 = arith.constant 0 : index
    %c0_192 = arith.constant 0 : index
    %c0_193 = arith.constant 0 : index
    %233 = vector.load %arg12[%c0_191, %c0_192, %c0_193] : memref<9x128x128xbf16, #tpu.memory_space<vmem>>, vector<1x128x128xbf16>
    %234 = vector.shape_cast %233 : vector<1x128x128xbf16> to vector<128x128xbf16>
    %cst_194 = arith.constant dense<0.000000e+00> : vector<40x128xf32>
    %235 = tpu.matmul %232, %234, %cst_194 {dimension_numbers = #tpu.dot_dimension_numbers<[1], [0], [0], [1], [0, 0, 1, 1], [], []>} : vector<40x128xbf16>, vector<128x128xbf16>, vector<40x128xf32> -> vector<40x128xf32>
    %236 = arith.addf %230, %235 : vector<40x128xf32>
    %c1_195 = arith.constant 1 : index
    %c0_196 = arith.constant 0 : index
    %237 = vector.load %arg23[%c1_195, %c0_196] : memref<56x128xf32, #tpu.memory_space<vmem>>, vector<40x128xf32>
    %238 = arith.truncf %237 : vector<40x128xf32> to vector<40x128xbf16>
    %c1_197 = arith.constant 1 : index
    %c0_198 = arith.constant 0 : index
    %c0_199 = arith.constant 0 : index
    %239 = vector.load %arg12[%c1_197, %c0_198, %c0_199] : memref<9x128x128xbf16, #tpu.memory_space<vmem>>, vector<1x128x128xbf16>
    %240 = vector.shape_cast %239 : vector<1x128x128xbf16> to vector<128x128xbf16>
    %cst_200 = arith.constant dense<0.000000e+00> : vector<40x128xf32>
    %241 = tpu.matmul %238, %240, %cst_200 {dimension_numbers = #tpu.dot_dimension_numbers<[1], [0], [0], [1], [0, 0, 1, 1], [], []>} : vector<40x128xbf16>, vector<128x128xbf16>, vector<40x128xf32> -> vector<40x128xf32>
    %242 = arith.addf %236, %241 : vector<40x128xf32>
    %c2_201 = arith.constant 2 : index
    %c0_202 = arith.constant 0 : index
    %243 = vector.load %arg23[%c2_201, %c0_202] : memref<56x128xf32, #tpu.memory_space<vmem>>, vector<40x128xf32>
    %244 = arith.truncf %243 : vector<40x128xf32> to vector<40x128xbf16>
    %c2_203 = arith.constant 2 : index
    %c0_204 = arith.constant 0 : index
    %c0_205 = arith.constant 0 : index
    %245 = vector.load %arg12[%c2_203, %c0_204, %c0_205] : memref<9x128x128xbf16, #tpu.memory_space<vmem>>, vector<1x128x128xbf16>
    %246 = vector.shape_cast %245 : vector<1x128x128xbf16> to vector<128x128xbf16>
    %cst_206 = arith.constant dense<0.000000e+00> : vector<40x128xf32>
    %247 = tpu.matmul %244, %246, %cst_206 {dimension_numbers = #tpu.dot_dimension_numbers<[1], [0], [0], [1], [0, 0, 1, 1], [], []>} : vector<40x128xbf16>, vector<128x128xbf16>, vector<40x128xf32> -> vector<40x128xf32>
    %248 = arith.addf %242, %247 : vector<40x128xf32>
    %c7_207 = arith.constant 7 : index
    %c0_208 = arith.constant 0 : index
    %249 = vector.load %arg23[%c7_207, %c0_208] : memref<56x128xf32, #tpu.memory_space<vmem>>, vector<40x128xf32>
    %250 = arith.truncf %249 : vector<40x128xf32> to vector<40x128xbf16>
    %c3_209 = arith.constant 3 : index
    %c0_210 = arith.constant 0 : index
    %c0_211 = arith.constant 0 : index
    %251 = vector.load %arg12[%c3_209, %c0_210, %c0_211] : memref<9x128x128xbf16, #tpu.memory_space<vmem>>, vector<1x128x128xbf16>
    %252 = vector.shape_cast %251 : vector<1x128x128xbf16> to vector<128x128xbf16>
    %cst_212 = arith.constant dense<0.000000e+00> : vector<40x128xf32>
    %253 = tpu.matmul %250, %252, %cst_212 {dimension_numbers = #tpu.dot_dimension_numbers<[1], [0], [0], [1], [0, 0, 1, 1], [], []>} : vector<40x128xbf16>, vector<128x128xbf16>, vector<40x128xf32> -> vector<40x128xf32>
    %254 = arith.addf %248, %253 : vector<40x128xf32>
    %c8_213 = arith.constant 8 : index
    %c0_214 = arith.constant 0 : index
    %255 = vector.load %arg23[%c8_213, %c0_214] : memref<56x128xf32, #tpu.memory_space<vmem>>, vector<40x128xf32>
    %256 = arith.truncf %255 : vector<40x128xf32> to vector<40x128xbf16>
    %c4_215 = arith.constant 4 : index
    %c0_216 = arith.constant 0 : index
    %c0_217 = arith.constant 0 : index
    %257 = vector.load %arg12[%c4_215, %c0_216, %c0_217] : memref<9x128x128xbf16, #tpu.memory_space<vmem>>, vector<1x128x128xbf16>
    %258 = vector.shape_cast %257 : vector<1x128x128xbf16> to vector<128x128xbf16>
    %cst_218 = arith.constant dense<0.000000e+00> : vector<40x128xf32>
    %259 = tpu.matmul %256, %258, %cst_218 {dimension_numbers = #tpu.dot_dimension_numbers<[1], [0], [0], [1], [0, 0, 1, 1], [], []>} : vector<40x128xbf16>, vector<128x128xbf16>, vector<40x128xf32> -> vector<40x128xf32>
    %260 = arith.addf %254, %259 : vector<40x128xf32>
    %c9_219 = arith.constant 9 : index
    %c0_220 = arith.constant 0 : index
    %261 = vector.load %arg23[%c9_219, %c0_220] : memref<56x128xf32, #tpu.memory_space<vmem>>, vector<40x128xf32>
    %262 = arith.truncf %261 : vector<40x128xf32> to vector<40x128xbf16>
    %c5_221 = arith.constant 5 : index
    %c0_222 = arith.constant 0 : index
    %c0_223 = arith.constant 0 : index
    %263 = vector.load %arg12[%c5_221, %c0_222, %c0_223] : memref<9x128x128xbf16, #tpu.memory_space<vmem>>, vector<1x128x128xbf16>
    %264 = vector.shape_cast %263 : vector<1x128x128xbf16> to vector<128x128xbf16>
    %cst_224 = arith.constant dense<0.000000e+00> : vector<40x128xf32>
    %265 = tpu.matmul %262, %264, %cst_224 {dimension_numbers = #tpu.dot_dimension_numbers<[1], [0], [0], [1], [0, 0, 1, 1], [], []>} : vector<40x128xbf16>, vector<128x128xbf16>, vector<40x128xf32> -> vector<40x128xf32>
    %266 = arith.addf %260, %265 : vector<40x128xf32>
    %c14_225 = arith.constant 14 : index
    %c0_226 = arith.constant 0 : index
    %267 = vector.load %arg23[%c14_225, %c0_226] : memref<56x128xf32, #tpu.memory_space<vmem>>, vector<40x128xf32>
    %268 = arith.truncf %267 : vector<40x128xf32> to vector<40x128xbf16>
    %c6_227 = arith.constant 6 : index
    %c0_228 = arith.constant 0 : index
    %c0_229 = arith.constant 0 : index
    %269 = vector.load %arg12[%c6_227, %c0_228, %c0_229] : memref<9x128x128xbf16, #tpu.memory_space<vmem>>, vector<1x128x128xbf16>
    %270 = vector.shape_cast %269 : vector<1x128x128xbf16> to vector<128x128xbf16>
    %cst_230 = arith.constant dense<0.000000e+00> : vector<40x128xf32>
    %271 = tpu.matmul %268, %270, %cst_230 {dimension_numbers = #tpu.dot_dimension_numbers<[1], [0], [0], [1], [0, 0, 1, 1], [], []>} : vector<40x128xbf16>, vector<128x128xbf16>, vector<40x128xf32> -> vector<40x128xf32>
    %272 = arith.addf %266, %271 : vector<40x128xf32>
    %c15_231 = arith.constant 15 : index
    %c0_232 = arith.constant 0 : index
    %273 = vector.load %arg23[%c15_231, %c0_232] : memref<56x128xf32, #tpu.memory_space<vmem>>, vector<40x128xf32>
    %274 = arith.truncf %273 : vector<40x128xf32> to vector<40x128xbf16>
    %c7_233 = arith.constant 7 : index
    %c0_234 = arith.constant 0 : index
    %c0_235 = arith.constant 0 : index
    %275 = vector.load %arg12[%c7_233, %c0_234, %c0_235] : memref<9x128x128xbf16, #tpu.memory_space<vmem>>, vector<1x128x128xbf16>
    %276 = vector.shape_cast %275 : vector<1x128x128xbf16> to vector<128x128xbf16>
    %cst_236 = arith.constant dense<0.000000e+00> : vector<40x128xf32>
    %277 = tpu.matmul %274, %276, %cst_236 {dimension_numbers = #tpu.dot_dimension_numbers<[1], [0], [0], [1], [0, 0, 1, 1], [], []>} : vector<40x128xbf16>, vector<128x128xbf16>, vector<40x128xf32> -> vector<40x128xf32>
    %278 = arith.addf %272, %277 : vector<40x128xf32>
    %c16_237 = arith.constant 16 : index
    %c0_238 = arith.constant 0 : index
    %279 = vector.load %arg23[%c16_237, %c0_238] : memref<56x128xf32, #tpu.memory_space<vmem>>, vector<40x128xf32>
    %280 = arith.truncf %279 : vector<40x128xf32> to vector<40x128xbf16>
    %c8_239 = arith.constant 8 : index
    %c0_240 = arith.constant 0 : index
    %c0_241 = arith.constant 0 : index
    %281 = vector.load %arg12[%c8_239, %c0_240, %c0_241] : memref<9x128x128xbf16, #tpu.memory_space<vmem>>, vector<1x128x128xbf16>
    %282 = vector.shape_cast %281 : vector<1x128x128xbf16> to vector<128x128xbf16>
    %cst_242 = arith.constant dense<0.000000e+00> : vector<40x128xf32>
    %283 = tpu.matmul %280, %282, %cst_242 {dimension_numbers = #tpu.dot_dimension_numbers<[1], [0], [0], [1], [0, 0, 1, 1], [], []>} : vector<40x128xbf16>, vector<128x128xbf16>, vector<40x128xf32> -> vector<40x128xf32>
    %284 = arith.addf %278, %283 : vector<40x128xf32>
    %cst_243 = arith.constant 0.000000e+00 : f32
    %285 = vector.broadcast %cst_243 : f32 to vector<40x128xf32>
    %286 = arith.minimumf %284, %285 : vector<40x128xf32>
    %287 = math.exp %286 : vector<40x128xf32>
    %cst_244 = arith.constant 1.000000e+00 : f32
    %288 = vector.broadcast %cst_244 : f32 to vector<40x128xf32>
    %289 = arith.subf %287, %288 : vector<40x128xf32>
    %cst_245 = arith.constant 1.67326319 : f32
    %290 = vector.broadcast %cst_245 : f32 to vector<40x128xf32>
    %291 = arith.mulf %290, %289 : vector<40x128xf32>
    %cst_246 = arith.constant 0.000000e+00 : f32
    %292 = vector.broadcast %cst_246 : f32 to vector<40x128xf32>
    %293 = arith.cmpf ogt, %284, %292 : vector<40x128xf32>
    %294 = arith.select %293, %284, %291 : vector<40x128xi1>, vector<40x128xf32>
    %cst_247 = arith.constant 1.05070102 : f32
    %295 = vector.broadcast %cst_247 : f32 to vector<40x128xf32>
    %296 = arith.mulf %295, %294 : vector<40x128xf32>
    %297 = arith.truncf %296 : vector<40x128xf32> to vector<40x128xbf16>
    %c0_248 = arith.constant 0 : index
    %c0_249 = arith.constant 0 : index
    %298 = vector.load %arg5[%c0_248, %c0_249] : memref<16x40xbf16, #tpu.memory_space<vmem>>, vector<16x40xbf16>
    %cst_250 = arith.constant dense<0.000000e+00> : vector<16x128xf32>
    %299 = tpu.matmul %298, %297, %cst_250 {dimension_numbers = #tpu.dot_dimension_numbers<[1], [0], [0], [1], [0, 0, 1, 1], [], []>} : vector<16x40xbf16>, vector<40x128xbf16>, vector<16x128xf32> -> vector<16x128xf32>
    %c0_251 = arith.constant 0 : index
    %c0_252 = arith.constant 0 : index
    %300 = vector.load %arg24[%c0_251, %c0_252] : memref<16x128xf32, #tpu.memory_space<vmem>>, vector<16x128xf32>
    tpu.vector_store %arg24[%c0_251, %c0_252], %299 {strides = array<i32>} : memref<16x128xf32, #tpu.memory_space<vmem>>, vector<16x128xf32>,
    %c0_253 = arith.constant 0 : index
    %c0_254 = arith.constant 0 : index
    %301 = vector.load %arg15[%c0_253, %c0_254] : memref<1x128xf32, #tpu.memory_space<vmem>>, vector<1x128xf32>
    %c0_255 = arith.constant 0 : index
    %c0_256 = arith.constant 0 : index
    %302 = vector.load %arg24[%c0_255, %c0_256] : memref<16x128xf32, #tpu.memory_space<vmem>>, vector<1x128xf32>
    %303 = arith.truncf %302 : vector<1x128xf32> to vector<1x128xbf16>
    %c0_257 = arith.constant 0 : index
    %c0_258 = arith.constant 0 : index
    %c0_259 = arith.constant 0 : index
    %304 = vector.load %arg14[%c0_257, %c0_258, %c0_259] : memref<16x128x128xbf16, #tpu.memory_space<vmem>>, vector<1x128x128xbf16>
    %305 = vector.shape_cast %304 : vector<1x128x128xbf16> to vector<128x128xbf16>
    %cst_260 = arith.constant dense<0.000000e+00> : vector<1x128xf32>
    %306 = tpu.matmul %303, %305, %cst_260 {dimension_numbers = #tpu.dot_dimension_numbers<[1], [0], [0], [1], [0, 0, 1, 1], [], []>} : vector<1x128xbf16>, vector<128x128xbf16>, vector<1x128xf32> -> vector<1x128xf32>
    %307 = arith.addf %301, %306 : vector<1x128xf32>
    %c1_261 = arith.constant 1 : index
    %c0_262 = arith.constant 0 : index
    %308 = vector.load %arg24[%c1_261, %c0_262] : memref<16x128xf32, #tpu.memory_space<vmem>>, vector<1x128xf32>
    %309 = arith.truncf %308 : vector<1x128xf32> to vector<1x128xbf16>
    %c1_263 = arith.constant 1 : index
    %c0_264 = arith.constant 0 : index
    %c0_265 = arith.constant 0 : index
    %310 = vector.load %arg14[%c1_263, %c0_264, %c0_265] : memref<16x128x128xbf16, #tpu.memory_space<vmem>>, vector<1x128x128xbf16>
    %311 = vector.shape_cast %310 : vector<1x128x128xbf16> to vector<128x128xbf16>
    %cst_266 = arith.constant dense<0.000000e+00> : vector<1x128xf32>
    %312 = tpu.matmul %309, %311, %cst_266 {dimension_numbers = #tpu.dot_dimension_numbers<[1], [0], [0], [1], [0, 0, 1, 1], [], []>} : vector<1x128xbf16>, vector<128x128xbf16>, vector<1x128xf32> -> vector<1x128xf32>
    %313 = arith.addf %307, %312 : vector<1x128xf32>
    %c2_267 = arith.constant 2 : index
    %c0_268 = arith.constant 0 : index
    %314 = vector.load %arg24[%c2_267, %c0_268] : memref<16x128xf32, #tpu.memory_space<vmem>>, vector<1x128xf32>
    %315 = arith.truncf %314 : vector<1x128xf32> to vector<1x128xbf16>
    %c2_269 = arith.constant 2 : index
    %c0_270 = arith.constant 0 : index
    %c0_271 = arith.constant 0 : index
    %316 = vector.load %arg14[%c2_269, %c0_270, %c0_271] : memref<16x128x128xbf16, #tpu.memory_space<vmem>>, vector<1x128x128xbf16>
    %317 = vector.shape_cast %316 : vector<1x128x128xbf16> to vector<128x128xbf16>
    %cst_272 = arith.constant dense<0.000000e+00> : vector<1x128xf32>
    %318 = tpu.matmul %315, %317, %cst_272 {dimension_numbers = #tpu.dot_dimension_numbers<[1], [0], [0], [1], [0, 0, 1, 1], [], []>} : vector<1x128xbf16>, vector<128x128xbf16>, vector<1x128xf32> -> vector<1x128xf32>
    %319 = arith.addf %313, %318 : vector<1x128xf32>
    %c3_273 = arith.constant 3 : index
    %c0_274 = arith.constant 0 : index
    %320 = vector.load %arg24[%c3_273, %c0_274] : memref<16x128xf32, #tpu.memory_space<vmem>>, vector<1x128xf32>
    %321 = arith.truncf %320 : vector<1x128xf32> to vector<1x128xbf16>
    %c3_275 = arith.constant 3 : index
    %c0_276 = arith.constant 0 : index
    %c0_277 = arith.constant 0 : index
    %322 = vector.load %arg14[%c3_275, %c0_276, %c0_277] : memref<16x128x128xbf16, #tpu.memory_space<vmem>>, vector<1x128x128xbf16>
    %323 = vector.shape_cast %322 : vector<1x128x128xbf16> to vector<128x128xbf16>
    %cst_278 = arith.constant dense<0.000000e+00> : vector<1x128xf32>
    %324 = tpu.matmul %321, %323, %cst_278 {dimension_numbers = #tpu.dot_dimension_numbers<[1], [0], [0], [1], [0, 0, 1, 1], [], []>} : vector<1x128xbf16>, vector<128x128xbf16>, vector<1x128xf32> -> vector<1x128xf32>
    %325 = arith.addf %319, %324 : vector<1x128xf32>
    %c4_279 = arith.constant 4 : index
    %c0_280 = arith.constant 0 : index
    %326 = vector.load %arg24[%c4_279, %c0_280] : memref<16x128xf32, #tpu.memory_space<vmem>>, vector<1x128xf32>
    %327 = arith.truncf %326 : vector<1x128xf32> to vector<1x128xbf16>
    %c4_281 = arith.constant 4 : index
    %c0_282 = arith.constant 0 : index
    %c0_283 = arith.constant 0 : index
    %328 = vector.load %arg14[%c4_281, %c0_282, %c0_283] : memref<16x128x128xbf16, #tpu.memory_space<vmem>>, vector<1x128x128xbf16>
    %329 = vector.shape_cast %328 : vector<1x128x128xbf16> to vector<128x128xbf16>
    %cst_284 = arith.constant dense<0.000000e+00> : vector<1x128xf32>
    %330 = tpu.matmul %327, %329, %cst_284 {dimension_numbers = #tpu.dot_dimension_numbers<[1], [0], [0], [1], [0, 0, 1, 1], [], []>} : vector<1x128xbf16>, vector<128x128xbf16>, vector<1x128xf32> -> vector<1x128xf32>
    %331 = arith.addf %325, %330 : vector<1x128xf32>
    %c5_285 = arith.constant 5 : index
    %c0_286 = arith.constant 0 : index
    %332 = vector.load %arg24[%c5_285, %c0_286] : memref<16x128xf32, #tpu.memory_space<vmem>>, vector<1x128xf32>
    %333 = arith.truncf %332 : vector<1x128xf32> to vector<1x128xbf16>
    %c5_287 = arith.constant 5 : index
    %c0_288 = arith.constant 0 : index
    %c0_289 = arith.constant 0 : index
    %334 = vector.load %arg14[%c5_287, %c0_288, %c0_289] : memref<16x128x128xbf16, #tpu.memory_space<vmem>>, vector<1x128x128xbf16>
    %335 = vector.shape_cast %334 : vector<1x128x128xbf16> to vector<128x128xbf16>
    %cst_290 = arith.constant dense<0.000000e+00> : vector<1x128xf32>
    %336 = tpu.matmul %333, %335, %cst_290 {dimension_numbers = #tpu.dot_dimension_numbers<[1], [0], [0], [1], [0, 0, 1, 1], [], []>} : vector<1x128xbf16>, vector<128x128xbf16>, vector<1x128xf32> -> vector<1x128xf32>
    %337 = arith.addf %331, %336 : vector<1x128xf32>
    %c6_291 = arith.constant 6 : index
    %c0_292 = arith.constant 0 : index
    %338 = vector.load %arg24[%c6_291, %c0_292] : memref<16x128xf32, #tpu.memory_space<vmem>>, vector<1x128xf32>
    %339 = arith.truncf %338 : vector<1x128xf32> to vector<1x128xbf16>
    %c6_293 = arith.constant 6 : index
    %c0_294 = arith.constant 0 : index
    %c0_295 = arith.constant 0 : index
    %340 = vector.load %arg14[%c6_293, %c0_294, %c0_295] : memref<16x128x128xbf16, #tpu.memory_space<vmem>>, vector<1x128x128xbf16>
    %341 = vector.shape_cast %340 : vector<1x128x128xbf16> to vector<128x128xbf16>
    %cst_296 = arith.constant dense<0.000000e+00> : vector<1x128xf32>
    %342 = tpu.matmul %339, %341, %cst_296 {dimension_numbers = #tpu.dot_dimension_numbers<[1], [0], [0], [1], [0, 0, 1, 1], [], []>} : vector<1x128xbf16>, vector<128x128xbf16>, vector<1x128xf32> -> vector<1x128xf32>
    %343 = arith.addf %337, %342 : vector<1x128xf32>
    %c7_297 = arith.constant 7 : index
    %c0_298 = arith.constant 0 : index
    %344 = vector.load %arg24[%c7_297, %c0_298] : memref<16x128xf32, #tpu.memory_space<vmem>>, vector<1x128xf32>
    %345 = arith.truncf %344 : vector<1x128xf32> to vector<1x128xbf16>
    %c7_299 = arith.constant 7 : index
    %c0_300 = arith.constant 0 : index
    %c0_301 = arith.constant 0 : index
    %346 = vector.load %arg14[%c7_299, %c0_300, %c0_301] : memref<16x128x128xbf16, #tpu.memory_space<vmem>>, vector<1x128x128xbf16>
    %347 = vector.shape_cast %346 : vector<1x128x128xbf16> to vector<128x128xbf16>
    %cst_302 = arith.constant dense<0.000000e+00> : vector<1x128xf32>
    %348 = tpu.matmul %345, %347, %cst_302 {dimension_numbers = #tpu.dot_dimension_numbers<[1], [0], [0], [1], [0, 0, 1, 1], [], []>} : vector<1x128xbf16>, vector<128x128xbf16>, vector<1x128xf32> -> vector<1x128xf32>
    %349 = arith.addf %343, %348 : vector<1x128xf32>
    %c8_303 = arith.constant 8 : index
    %c0_304 = arith.constant 0 : index
    %350 = vector.load %arg24[%c8_303, %c0_304] : memref<16x128xf32, #tpu.memory_space<vmem>>, vector<1x128xf32>
    %351 = arith.truncf %350 : vector<1x128xf32> to vector<1x128xbf16>
    %c8_305 = arith.constant 8 : index
    %c0_306 = arith.constant 0 : index
    %c0_307 = arith.constant 0 : index
    %352 = vector.load %arg14[%c8_305, %c0_306, %c0_307] : memref<16x128x128xbf16, #tpu.memory_space<vmem>>, vector<1x128x128xbf16>
    %353 = vector.shape_cast %352 : vector<1x128x128xbf16> to vector<128x128xbf16>
    %cst_308 = arith.constant dense<0.000000e+00> : vector<1x128xf32>
    %354 = tpu.matmul %351, %353, %cst_308 {dimension_numbers = #tpu.dot_dimension_numbers<[1], [0], [0], [1], [0, 0, 1, 1], [], []>} : vector<1x128xbf16>, vector<128x128xbf16>, vector<1x128xf32> -> vector<1x128xf32>
    %355 = arith.addf %349, %354 : vector<1x128xf32>
    %cst_309 = arith.constant 0.000000e+00 : f32
    %356 = vector.broadcast %cst_309 : f32 to vector<1x128xf32>
    %357 = arith.minimumf %355, %356 : vector<1x128xf32>
    %358 = math.exp %357 : vector<1x128xf32>
    %cst_310 = arith.constant 1.000000e+00 : f32
    %359 = vector.broadcast %cst_310 : f32 to vector<1x128xf32>
    %360 = arith.subf %358, %359 : vector<1x128xf32>
    %cst_311 = arith.constant 1.67326319 : f32
    %361 = vector.broadcast %cst_311 : f32 to vector<1x128xf32>
    %362 = arith.mulf %361, %360 : vector<1x128xf32>
    %cst_312 = arith.constant 0.000000e+00 : f32
    %363 = vector.broadcast %cst_312 : f32 to vector<1x128xf32>
    %364 = arith.cmpf ogt, %355, %363 : vector<1x128xf32>
    %365 = arith.select %364, %355, %362 : vector<1x128xi1>, vector<1x128xf32>
    %cst_313 = arith.constant 1.05070102 : f32
    %366 = vector.broadcast %cst_313 : f32 to vector<1x128xf32>
    %367 = arith.mulf %366, %365 : vector<1x128xf32>
    %368 = arith.truncf %367 : vector<1x128xf32> to vector<1x128xbf16>
    %c0_314 = arith.constant 0 : index
    %c0_315 = arith.constant 0 : index
    %369 = vector.load %arg16[%c0_314, %c0_315] : memref<128x128xbf16, #tpu.memory_space<vmem>>, vector<128x128xbf16>
    %cst_316 = arith.constant dense<0.000000e+00> : vector<1x128xf32>
    %370 = tpu.matmul %368, %369, %cst_316 {dimension_numbers = #tpu.dot_dimension_numbers<[1], [0], [0], [1], [0, 0, 1, 1], [], []>} : vector<1x128xbf16>, vector<128x128xbf16>, vector<1x128xf32> -> vector<1x128xf32>
    %c0_317 = arith.constant 0 : index
    %c0_318 = arith.constant 0 : index
    %371 = vector.load %arg17[%c0_317, %c0_318] : memref<1x128xf32, #tpu.memory_space<vmem>>, vector<1x128xf32>
    %372 = arith.addf %370, %371 : vector<1x128xf32>
    %cst_319 = arith.constant 0.000000e+00 : f32
    %373 = vector.broadcast %cst_319 : f32 to vector<1x128xf32>
    %374 = arith.minimumf %372, %373 : vector<1x128xf32>
    %375 = math.exp %374 : vector<1x128xf32>
    %cst_320 = arith.constant 1.000000e+00 : f32
    %376 = vector.broadcast %cst_320 : f32 to vector<1x128xf32>
    %377 = arith.subf %375, %376 : vector<1x128xf32>
    %cst_321 = arith.constant 1.67326319 : f32
    %378 = vector.broadcast %cst_321 : f32 to vector<1x128xf32>
    %379 = arith.mulf %378, %377 : vector<1x128xf32>
    %cst_322 = arith.constant 0.000000e+00 : f32
    %380 = vector.broadcast %cst_322 : f32 to vector<1x128xf32>
    %381 = arith.cmpf ogt, %372, %380 : vector<1x128xf32>
    %382 = arith.select %381, %372, %379 : vector<1x128xi1>, vector<1x128xf32>
    %cst_323 = arith.constant 1.05070102 : f32
    %383 = vector.broadcast %cst_323 : f32 to vector<1x128xf32>
    %384 = arith.mulf %383, %382 : vector<1x128xf32>
    %385 = arith.truncf %384 : vector<1x128xf32> to vector<1x128xbf16>
    %c0_324 = arith.constant 0 : index
    %c0_325 = arith.constant 0 : index
    %386 = vector.load %arg18[%c0_324, %c0_325] : memref<128x128xbf16, #tpu.memory_space<vmem>>, vector<128x128xbf16>
    %cst_326 = arith.constant dense<0.000000e+00> : vector<1x128xf32>
    %387 = tpu.matmul %385, %386, %cst_326 {dimension_numbers = #tpu.dot_dimension_numbers<[1], [0], [0], [1], [0, 0, 1, 1], [], []>} : vector<1x128xbf16>, vector<128x128xbf16>, vector<1x128xf32> -> vector<1x128xf32>
    %c0_327 = arith.constant 0 : index
    %c0_328 = arith.constant 0 : index
    %388 = vector.load %arg19[%c0_327, %c0_328] : memref<1x128xf32, #tpu.memory_space<vmem>>, vector<1x128xf32>
    %389 = arith.addf %387, %388 : vector<1x128xf32>
    %390 = vector.shape_cast %389 : vector<1x128xf32> to vector<1x128xf32>
    %391 = vector.broadcast %390 : vector<1x128xf32> to vector<8x128xf32>
    %c0_329 = arith.constant 0 : index
    %c0_330 = arith.constant 0 : index
    %c0_331 = arith.constant 0 : index
    %392 = vector.load %arg20[%c0_329, %c0_330, %c0_331] : memref<1x8x128xf32, #tpu.memory_space<vmem>>, vector<1x8x128xf32>
    %393 = vector.shape_cast %392 : vector<1x8x128xf32> to vector<8x128xf32>
    %394 = vector.shape_cast %391 : vector<8x128xf32> to vector<1x8x128xf32>
    tpu.vector_store %arg20[%c0_329, %c0_330, %c0_331], %394 {strides = array<i32>} : memref<1x8x128xf32, #tpu.memory_space<vmem>>, vector<1x8x128xf32>,
    return
  }
  func.func @transform_0(%arg0: i32) -> (i32, i32, i32) {
    %c0_i32 = arith.constant 0 : i32
    %c0_i32_0 = arith.constant 0 : i32
    %c0_i32_1 = arith.constant 0 : i32
    return %arg0, %c0_i32, %c0_i32_0 : i32, i32, i32
  }
  func.func @transform_1(%arg0: i32) -> (i32, i32) {
    %c0_i32 = arith.constant 0 : i32
    %c0_i32_0 = arith.constant 0 : i32
    %c0_i32_1 = arith.constant 0 : i32
    return %c0_i32, %c0_i32_0 : i32, i32
  }
  func.func @transform_2(%arg0: i32) -> (i32, i32) {
    %c0_i32 = arith.constant 0 : i32
    %c0_i32_0 = arith.constant 0 : i32
    %c0_i32_1 = arith.constant 0 : i32
    return %c0_i32, %c0_i32_0 : i32, i32
  }
  func.func @transform_3(%arg0: i32) -> (i32, i32) {
    %c0_i32 = arith.constant 0 : i32
    %c0_i32_0 = arith.constant 0 : i32
    %c0_i32_1 = arith.constant 0 : i32
    return %c0_i32, %c0_i32_0 : i32, i32
  }
  func.func @transform_4(%arg0: i32) -> (i32, i32) {
    %c0_i32 = arith.constant 0 : i32
    %c0_i32_0 = arith.constant 0 : i32
    %c0_i32_1 = arith.constant 0 : i32
    return %c0_i32, %c0_i32_0 : i32, i32
  }
  func.func @transform_5(%arg0: i32) -> (i32, i32, i32) {
    %c0_i32 = arith.constant 0 : i32
    %c0_i32_0 = arith.constant 0 : i32
    %c0_i32_1 = arith.constant 0 : i32
    %c0_i32_2 = arith.constant 0 : i32
    return %c0_i32, %c0_i32_0, %c0_i32_1 : i32, i32, i32
  }
  func.func @transform_6(%arg0: i32) -> (i32, i32) {
    %c0_i32 = arith.constant 0 : i32
    %c0_i32_0 = arith.constant 0 : i32
    %c0_i32_1 = arith.constant 0 : i32
    return %c0_i32, %c0_i32_0 : i32, i32
  }
  func.func @transform_7(%arg0: i32) -> (i32, i32, i32) {
    %c0_i32 = arith.constant 0 : i32
    %c0_i32_0 = arith.constant 0 : i32
    %c0_i32_1 = arith.constant 0 : i32
    %c0_i32_2 = arith.constant 0 : i32
    return %c0_i32, %c0_i32_0, %c0_i32_1 : i32, i32, i32
  }
  func.func @transform_8(%arg0: i32) -> (i32, i32) {
    %c0_i32 = arith.constant 0 : i32
    %c0_i32_0 = arith.constant 0 : i32
    %c0_i32_1 = arith.constant 0 : i32
    return %c0_i32, %c0_i32_0 : i32, i32
  }
  func.func @transform_9(%arg0: i32) -> (i32, i32, i32) {
    %c0_i32 = arith.constant 0 : i32
    %c0_i32_0 = arith.constant 0 : i32
    %c0_i32_1 = arith.constant 0 : i32
    %c0_i32_2 = arith.constant 0 : i32
    return %c0_i32, %c0_i32_0, %c0_i32_1 : i32, i32, i32
  }
  func.func @transform_10(%arg0: i32) -> (i32, i32) {
    %c0_i32 = arith.constant 0 : i32
    %c0_i32_0 = arith.constant 0 : i32
    %c0_i32_1 = arith.constant 0 : i32
    return %c0_i32, %c0_i32_0 : i32, i32
  }
  func.func @transform_11(%arg0: i32) -> (i32, i32, i32) {
    %c0_i32 = arith.constant 0 : i32
    %c0_i32_0 = arith.constant 0 : i32
    %c0_i32_1 = arith.constant 0 : i32
    %c0_i32_2 = arith.constant 0 : i32
    return %c0_i32, %c0_i32_0, %c0_i32_1 : i32, i32, i32
  }
  func.func @transform_12(%arg0: i32) -> (i32, i32) {
    %c0_i32 = arith.constant 0 : i32
    %c0_i32_0 = arith.constant 0 : i32
    %c0_i32_1 = arith.constant 0 : i32
    return %c0_i32, %c0_i32_0 : i32, i32
  }
  func.func @transform_13(%arg0: i32) -> (i32, i32, i32) {
    %c0_i32 = arith.constant 0 : i32
    %c0_i32_0 = arith.constant 0 : i32
    %c0_i32_1 = arith.constant 0 : i32
    %c0_i32_2 = arith.constant 0 : i32
    return %c0_i32, %c0_i32_0, %c0_i32_1 : i32, i32, i32
  }
  func.func @transform_14(%arg0: i32) -> (i32, i32) {
    %c0_i32 = arith.constant 0 : i32
    %c0_i32_0 = arith.constant 0 : i32
    %c0_i32_1 = arith.constant 0 : i32
    return %c0_i32, %c0_i32_0 : i32, i32
  }
  func.func @transform_15(%arg0: i32) -> (i32, i32) {
    %c0_i32 = arith.constant 0 : i32
    %c0_i32_0 = arith.constant 0 : i32
    %c0_i32_1 = arith.constant 0 : i32
    return %c0_i32, %c0_i32_0 : i32, i32
  }
  func.func @transform_16(%arg0: i32) -> (i32, i32) {
    %c0_i32 = arith.constant 0 : i32
    %c0_i32_0 = arith.constant 0 : i32
    %c0_i32_1 = arith.constant 0 : i32
    return %c0_i32, %c0_i32_0 : i32, i32
  }
  func.func @transform_17(%arg0: i32) -> (i32, i32) {
    %c0_i32 = arith.constant 0 : i32
    %c0_i32_0 = arith.constant 0 : i32
    %c0_i32_1 = arith.constant 0 : i32
    return %c0_i32, %c0_i32_0 : i32, i32
  }
  func.func @transform_18(%arg0: i32) -> (i32, i32) {
    %c0_i32 = arith.constant 0 : i32
    %c0_i32_0 = arith.constant 0 : i32
    %c0_i32_1 = arith.constant 0 : i32
    return %c0_i32, %c0_i32_0 : i32, i32
  }
  func.func @transform_19(%arg0: i32) -> (i32, i32, i32) {
    %c0_i32 = arith.constant 0 : i32
    %c0_i32_0 = arith.constant 0 : i32
    %c0_i32_1 = arith.constant 0 : i32
    return %arg0, %c0_i32, %c0_i32_0 : i32, i32, i32
  }
}

</mosaic_0001>

<llo_original>
// kernel: _forward_impl.1
$region0: #{_forward_impl.1}
  #allocation0 [shape = 'u32[]', space=smem, size = 0x4, offset = 0x4, fixed_abs, tag = 'smem constant byte address 0x4 - core index']
  #allocation1 [shape = 'u32[144,128]{1,0:T(1,128)}', space=vmem, size = 0x12000, scoped, tag = 'internal scratch']
  #allocation2 [shape = 'f32[128,128]{1,0:T(8,128)}', space=vmem, size = 0x10000, scoped, tag = 'scratch operand']
  #allocation3 [shape = 'f32[56,128]{1,0:T(8,128)}', space=vmem, size = 0x7000, scoped, tag = 'scratch operand']
  #allocation4 [shape = 'f32[56,128]{1,0:T(8,128)}', space=vmem, size = 0x7000, scoped, tag = 'scratch operand']
  #allocation5 [shape = 'f32[16,128]{1,0:T(8,128)}', space=vmem, size = 0x2000, scoped, tag = 'scratch operand']
  %s0 = inlined_call_operand.vmem [shape: f32[2,128,128], index: 0, kind: input, shape index: {}]
  %s1 = inlined_call_operand.vmem [shape: bf16[128,104], index: 1, kind: input, shape index: {}]
  %s2 = inlined_call_operand.vmem [shape: bf16[56,104], index: 2, kind: input, shape index: {}]
  %s3 = inlined_call_operand.vmem [shape: bf16[56,40], index: 3, kind: input, shape index: {}]
  %s4 = inlined_call_operand.vmem [shape: bf16[16,40], index: 4, kind: input, shape index: {}]
  %s5 = inlined_call_operand.vmem [shape: bf16[9,128,128], index: 5, kind: input, shape index: {}]
  %s6 = inlined_call_operand.vmem [shape: f32[1,128], index: 6, kind: input, shape index: {}]
  %s7 = inlined_call_operand.hbm [shape: bf16[9,128,128], index: 7, kind: input, shape index: {}]
  %s8 = inlined_call_operand.vmem [shape: f32[1,128], index: 8, kind: input, shape index: {}]
  %s9 = inlined_call_operand.hbm [shape: bf16[9,128,128], index: 9, kind: input, shape index: {}]
  %s10 = inlined_call_operand.vmem [shape: f32[1,128], index: 10, kind: input, shape index: {}]
  %s11 = inlined_call_operand.hbm [shape: bf16[9,128,128], index: 11, kind: input, shape index: {}]
  %s12 = inlined_call_operand.vmem [shape: f32[1,128], index: 12, kind: input, shape index: {}]
  %s13 = inlined_call_operand.vmem [shape: bf16[16,128,128], index: 13, kind: input, shape index: {}]
  %s14 = inlined_call_operand.vmem [shape: f32[1,128], index: 14, kind: input, shape index: {}]
  %s15 = inlined_call_operand.vmem [shape: bf16[128,128], index: 15, kind: input, shape index: {}]
  %s16 = inlined_call_operand.vmem [shape: f32[1,128], index: 16, kind: input, shape index: {}]
  %s17 = inlined_call_operand.vmem [shape: bf16[128,128], index: 17, kind: input, shape index: {}]
  %s18 = inlined_call_operand.vmem [shape: f32[1,128], index: 18, kind: input, shape index: {}]
  %s19 = inlined_call_operand.vmem [shape: f32[2,8,128], index: 19, kind: output, shape index: {}]
  %s20 = sld [smem:[#allocation0]]
  $region121: #{_forward_impl.1} parent=0
    _
  %s22 = ssub.s32 1, %s20
  %s23 = scalar_select 0, %s22, %s20
  $region1: #{_forward_impl.1} parent=0
    #allocation6 [shape = 'u8[294912]{0}', space=vmem, size = 0x48000, scoped, tag = 'input window, operand 7, single buffered']
    #allocation7 [shape = 's32[2]{0}', space=sflag, size = 0x8, scoped, tag = 'scoped memory for _forward_impl.1']
    #allocation8 [shape = 'u8[294912]{0}', space=vmem, size = 0x48000, scoped, tag = 'input window, operand 9, single buffered']
    #allocation9 [shape = 's32[1]{0}', space=sflag, size = 0x4, scoped, tag = 'scoped memory for _forward_impl.1']
    #allocation10 [shape = 'u8[294912]{0}', space=vmem, size = 0x48000, scoped, tag = 'input window, operand 11, single buffered']
    %24 = vsyncpa [#allocation7], 0
    %25 = vsyncpa [#allocation9], 0
    loop: start=0, step=1, limit=4
    $region2: #{_forward_impl.1} parent=1 // loop_pre_header
      _
    $region3: #{_forward_impl.1} parent=1 // loop_header
      %s27 = sphi 0, %s31
      %p28 = scmp.ge.s32.totalorder %s27, 4
      %s37 = sphi 0, %s39
      %s40 = sphi 0, %s37
      %s41 = sphi 0, %s40
      %s57 = sphi 0, %s41
      %s61 = sphi 0, %s61
      %s63 = sphi 0, %s61
      %s64 = sphi 0, %s63
      %s78 = sphi 0, %s64
      %s82 = sphi 0, %s82
      %s84 = sphi 0, %s82
      %s85 = sphi 0, %s84
      %s99 = sphi 0, %s85
      %s103 = sphi 0, %s103
      %s105 = sphi 0, %s103
      %s106 = sphi 0, %s105
      %s120 = sphi 0, %s106
      %s124 = sphi 0, %s124
      %s126 = sphi 0, %s124
      %s127 = sphi 0, %s126
      %s141 = sphi 0, %s127
      %s145 = sphi 0, %s145
      %s147 = sphi 0, %s145
      %s148 = sphi 0, %s147
      %s162 = sphi 0, %s148
      %s166 = sphi 0, %s166
      %s168 = sphi 0, %s166
      %s169 = sphi 0, %s168
      %s183 = sphi 0, %s169
      %s187 = sphi 0, %s187
      %s189 = sphi 0, %s187
      %s190 = sphi 0, %s189
      %s204 = sphi 0, %s190
      %s208 = sphi 0, %s208
      %s210 = sphi 0, %s208
      %s211 = sphi 0, %s210
      %s225 = sphi 0, %s211
      %s229 = sphi 0, %s229
      %s231 = sphi 0, %s229
      %s232 = sphi 0, %s231
      %s246 = sphi 0, %s232
      %s250 = sphi 0, %s250
      %s252 = sphi 0, %s250
      %s253 = sphi 0, %s252
      %s267 = sphi 0, %s253
      %s271 = sphi 0, %s271
      %s273 = sphi 0, %s271
      %s274 = sphi 0, %s273
      %s288 = sphi 0, %s274
      %s292 = sphi 0, %s292
      %s294 = sphi 0, %s292
      %s295 = sphi 0, %s294
      %s309 = sphi 0, %s295
      %s313 = sphi 0, %s313
      %s315 = sphi 0, %s313
      %s316 = sphi 0, %s315
      %s330 = sphi 0, %s316
      %s334 = sphi 0, %s334
      %s336 = sphi 0, %s334
      %s337 = sphi 0, %s336
      %s351 = sphi 0, %s337
      %s355 = sphi 0, %s355
      %s357 = sphi 0, %s355
      %s358 = sphi 0, %s357
      %s372 = sphi 0, %s358
      %s376 = sphi 0, %s376
      %s378 = sphi 0, %s376
      %s379 = sphi 0, %s378
      %s393 = sphi 0, %s379
      %s397 = sphi 0, %s397
      %s399 = sphi 0, %s397
      %s400 = sphi 0, %s399
      %s414 = sphi 0, %s400
      %s418 = sphi 0, %s418
      %s420 = sphi 0, %s418
      %s421 = sphi 0, %s420
      %s435 = sphi 0, %s421
      %s441 = sphi 0, %s443
      %s444 = sphi 0, %s441
      %s445 = sphi 0, %s444
      %s461 = sphi 0, %s445
    $region4: #{_forward_impl.1} parent=1 // loop_header_branch
      %30 = sbr.rel (%p28) target = $region8
    $region5: #{_forward_impl.1} parent=1 // loop_body
      %s32 = ssub.s32 %s27, 1
      %s33 = ssub.s32 %s27, 2
      %s34 = sadd.s32 %s27, 1
      %s35 = ssub.s32 %s27, %s34
      %p36 = scmp.eq.s32.totalorder %s35, 0
      %s38 = sadd.s32 %s37, 1
      %s39 = scalar_select %p36, %s37, %s38
      %p42 = pneg %p36
      %p43 = scmp.eq.s32.totalorder %s27, 1
      %p44 = por %p42, %p43
      %p45 = scmp.ne.s32.totalorder %s37, %s40
      %p46 = scmp.eq.s32.totalorder %s27, 0
      %p47 = por %p45, %p46
      %p48 = scmp.ne.s32.totalorder %s37, %s40
      %p49 = scmp.eq.s32.totalorder %s32, 1
      %p50 = por %p48, %p49
      %p51 = scmp.ne.s32.totalorder %s40, %s41
      %p52 = scmp.eq.s32.totalorder %s32, 0
      %p53 = por %p51, %p52
      %p54 = scmp.ne.s32.totalorder %s40, %s41
      %p55 = scmp.eq.s32.totalorder %s33, 1
      %p56 = por %p54, %p55
      %p58 = scmp.ne.s32.totalorder %s41, %s57
      %p59 = scmp.eq.s32.totalorder %s33, 0
      %p60 = por %p58, %p59
      %s62 = sadd.s32 %s61, 1
      %p65 = scmp.eq.s32.totalorder %s27, 1
      %p66 = scmp.ne.s32.totalorder %s61, %s63
      %p67 = scmp.eq.s32.totalorder %s27, 0
      %p68 = por %p66, %p67
      %p69 = scmp.ne.s32.totalorder %s61, %s63
      %p70 = scmp.eq.s32.totalorder %s32, 1
      %p71 = por %p69, %p70
      %p72 = scmp.ne.s32.totalorder %s63, %s64
      %p73 = scmp.eq.s32.totalorder %s32, 0
      %p74 = por %p72, %p73
      %p75 = scmp.ne.s32.totalorder %s63, %s64
      %p76 = scmp.eq.s32.totalorder %s33, 1
      %p77 = por %p75, %p76
      %p79 = scmp.ne.s32.totalorder %s64, %s78
      %p80 = scmp.eq.s32.totalorder %s33, 0
      %p81 = por %p79, %p80
      %s83 = sadd.s32 %s82, 1
      %p86 = scmp.eq.s32.totalorder %s27, 1
      %p87 = scmp.ne.s32.totalorder %s82, %s84
      %p88 = scmp.eq.s32.totalorder %s27, 0
      %p89 = por %p87, %p88
      %p90 = scmp.ne.s32.totalorder %s82, %s84
      %p91 = scmp.eq.s32.totalorder %s32, 1
      %p92 = por %p90, %p91
      %p93 = scmp.ne.s32.totalorder %s84, %s85
      %p94 = scmp.eq.s32.totalorder %s32, 0
      %p95 = por %p93, %p94
      %p96 = scmp.ne.s32.totalorder %s84, %s85
      %p97 = scmp.eq.s32.totalorder %s33, 1
      %p98 = por %p96, %p97
      %p100 = scmp.ne.s32.totalorder %s85, %s99
      %p101 = scmp.eq.s32.totalorder %s33, 0
      %p102 = por %p100, %p101
      %s104 = sadd.s32 %s103, 1
      %p107 = scmp.eq.s32.totalorder %s27, 1
      %p108 = scmp.ne.s32.totalorder %s103, %s105
      %p109 = scmp.eq.s32.totalorder %s27, 0
      %p110 = por %p108, %p109
      %p111 = scmp.ne.s32.totalorder %s103, %s105
      %p112 = scmp.eq.s32.totalorder %s32, 1
      %p113 = por %p111, %p112
      %p114 = scmp.ne.s32.totalorder %s105, %s106
      %p115 = scmp.eq.s32.totalorder %s32, 0
      %p116 = por %p114, %p115
      %p117 = scmp.ne.s32.totalorder %s105, %s106
      %p118 = scmp.eq.s32.totalorder %s33, 1
      %p119 = por %p117, %p118
      %p121 = scmp.ne.s32.totalorder %s106, %s120
      %p122 = scmp.eq.s32.totalorder %s33, 0
      %p123 = por %p121, %p122
      %s125 = sadd.s32 %s124, 1
      %p128 = scmp.eq.s32.totalorder %s27, 1
      %p129 = scmp.ne.s32.totalorder %s124, %s126
      %p130 = scmp.eq.s32.totalorder %s27, 0
      %p131 = por %p129, %p130
      %p132 = scmp.ne.s32.totalorder %s124, %s126
      %p133 = scmp.eq.s32.totalorder %s32, 1
      %p134 = por %p132, %p133
      %p135 = scmp.ne.s32.totalorder %s126, %s127
      %p136 = scmp.eq.s32.totalorder %s32, 0
      %p137 = por %p135, %p136
      %p138 = scmp.ne.s32.totalorder %s126, %s127
      %p139 = scmp.eq.s32.totalorder %s33, 1
      %p140 = por %p138, %p139
      %p142 = scmp.ne.s32.totalorder %s127, %s141
      %p143 = scmp.eq.s32.totalorder %s33, 0
      %p144 = por %p142, %p143
      %s146 = sadd.s32 %s145, 1
      %p149 = scmp.eq.s32.totalorder %s27, 1
      %p150 = scmp.ne.s32.totalorder %s145, %s147
      %p151 = scmp.eq.s32.totalorder %s27, 0
      %p152 = por %p150, %p151
      %p153 = scmp.ne.s32.totalorder %s145, %s147
      %p154 = scmp.eq.s32.totalorder %s32, 1
      %p155 = por %p153, %p154
      %p156 = scmp.ne.s32.totalorder %s147, %s148
      %p157 = scmp.eq.s32.totalorder %s32, 0
      %p158 = por %p156, %p157
      %p159 = scmp.ne.s32.totalorder %s147, %s148
      %p160 = scmp.eq.s32.totalorder %s33, 1
      %p161 = por %p159, %p160
      %p163 = scmp.ne.s32.totalorder %s148, %s162
      %p164 = scmp.eq.s32.totalorder %s33, 0
      %p165 = por %p163, %p164
      %s167 = sadd.s32 %s166, 1
      %p170 = scmp.eq.s32.totalorder %s27, 1
      %p171 = scmp.ne.s32.totalorder %s166, %s168
      %p172 = scmp.eq.s32.totalorder %s27, 0
      %p173 = por %p171, %p172
      %p174 = scmp.ne.s32.totalorder %s166, %s168
      %p175 = scmp.eq.s32.totalorder %s32, 1
      %p176 = por %p174, %p175
      %p177 = scmp.ne.s32.totalorder %s168, %s169
      %p178 = scmp.eq.s32.totalorder %s32, 0
      %p179 = por %p177, %p178
      %p180 = scmp.ne.s32.totalorder %s168, %s169
      %p181 = scmp.eq.s32.totalorder %s33, 1
      %p182 = por %p180, %p181
      %p184 = scmp.ne.s32.totalorder %s169, %s183
      %p185 = scmp.eq.s32.totalorder %s33, 0
      %p186 = por %p184, %p185
      %s188 = sadd.s32 %s187, 1
      %p191 = scmp.eq.s32.totalorder %s27, 1
      %p192 = scmp.ne.s32.totalorder %s187, %s189
      %p193 = scmp.eq.s32.totalorder %s27, 0
      %p194 = por %p192, %p193
      %p195 = scmp.ne.s32.totalorder %s187, %s189
      %p196 = scmp.eq.s32.totalorder %s32, 1
      %p197 = por %p195, %p196
      %p198 = scmp.ne.s32.totalorder %s189, %s190
      %p199 = scmp.eq.s32.totalorder %s32, 0
      %p200 = por %p198, %p199
      %p201 = scmp.ne.s32.totalorder %s189, %s190
      %p202 = scmp.eq.s32.totalorder %s33, 1
      %p203 = por %p201, %p202
      %p205 = scmp.ne.s32.totalorder %s190, %s204
      %p206 = scmp.eq.s32.totalorder %s33, 0
      %p207 = por %p205, %p206
      %s209 = sadd.s32 %s208, 1
      %p212 = scmp.eq.s32.totalorder %s27, 1
      %p213 = scmp.ne.s32.totalorder %s208, %s210
      %p214 = scmp.eq.s32.totalorder %s27, 0
      %p215 = por %p213, %p214
      %p216 = scmp.ne.s32.totalorder %s208, %s210
      %p217 = scmp.eq.s32.totalorder %s32, 1
      %p218 = por %p216, %p217
      %p219 = scmp.ne.s32.totalorder %s210, %s211
      %p220 = scmp.eq.s32.totalorder %s32, 0
      %p221 = por %p219, %p220
      %p222 = scmp.ne.s32.totalorder %s210, %s211
      %p223 = scmp.eq.s32.totalorder %s33, 1
      %p224 = por %p222, %p223
      %p226 = scmp.ne.s32.totalorder %s211, %s225
      %p227 = scmp.eq.s32.totalorder %s33, 0
      %p228 = por %p226, %p227
      %s230 = sadd.s32 %s229, 1
      %p233 = scmp.eq.s32.totalorder %s27, 1
      %p234 = scmp.ne.s32.totalorder %s229, %s231
      %p235 = scmp.eq.s32.totalorder %s27, 0
      %p236 = por %p234, %p235
      %p237 = scmp.ne.s32.totalorder %s229, %s231
      %p238 = scmp.eq.s32.totalorder %s32, 1
      %p239 = por %p237, %p238
      %p240 = scmp.ne.s32.totalorder %s231, %s232
      %p241 = scmp.eq.s32.totalorder %s32, 0
      %p242 = por %p240, %p241
      %p243 = scmp.ne.s32.totalorder %s231, %s232
      %p244 = scmp.eq.s32.totalorder %s33, 1
      %p245 = por %p243, %p244
      %p247 = scmp.ne.s32.totalorder %s232, %s246
      %p248 = scmp.eq.s32.totalorder %s33, 0
      %p249 = por %p247, %p248
      %s251 = sadd.s32 %s250, 1
      %p254 = scmp.eq.s32.totalorder %s27, 1
      %p255 = scmp.ne.s32.totalorder %s250, %s252
      %p256 = scmp.eq.s32.totalorder %s27, 0
      %p257 = por %p255, %p256
      %p258 = scmp.ne.s32.totalorder %s250, %s252
      %p259 = scmp.eq.s32.totalorder %s32, 1
      %p260 = por %p258, %p259
      %p261 = scmp.ne.s32.totalorder %s252, %s253
      %p262 = scmp.eq.s32.totalorder %s32, 0
      %p263 = por %p261, %p262
      %p264 = scmp.ne.s32.totalorder %s252, %s253
      %p265 = scmp.eq.s32.totalorder %s33, 1
      %p266 = por %p264, %p265
      %p268 = scmp.ne.s32.totalorder %s253, %s267
      %p269 = scmp.eq.s32.totalorder %s33, 0
      %p270 = por %p268, %p269
      %s272 = sadd.s32 %s271, 1
      %p275 = scmp.eq.s32.totalorder %s27, 1
      %p276 = scmp.ne.s32.totalorder %s271, %s273
      %p277 = scmp.eq.s32.totalorder %s27, 0
      %p278 = por %p276, %p277
      %p279 = scmp.ne.s32.totalorder %s271, %s273
      %p280 = scmp.eq.s32.totalorder %s32, 1
      %p281 = por %p279, %p280
      %p282 = scmp.ne.s32.totalorder %s273, %s274
      %p283 = scmp.eq.s32.totalorder %s32, 0
      %p284 = por %p282, %p283
      %p285 = scmp.ne.s32.totalorder %s273, %s274
      %p286 = scmp.eq.s32.totalorder %s33, 1
      %p287 = por %p285, %p286
      %p289 = scmp.ne.s32.totalorder %s274, %s288
      %p290 = scmp.eq.s32.totalorder %s33, 0
      %p291 = por %p289, %p290
      %s293 = sadd.s32 %s292, 1
      %p296 = scmp.eq.s32.totalorder %s27, 1
      %p297 = scmp.ne.s32.totalorder %s292, %s294
      %p298 = scmp.eq.s32.totalorder %s27, 0
      %p299 = por %p297, %p298
      %p300 = scmp.ne.s32.totalorder %s292, %s294
      %p301 = scmp.eq.s32.totalorder %s32, 1
      %p302 = por %p300, %p301
      %p303 = scmp.ne.s32.totalorder %s294, %s295
      %p304 = scmp.eq.s32.totalorder %s32, 0
      %p305 = por %p303, %p304
      %p306 = scmp.ne.s32.totalorder %s294, %s295
      %p307 = scmp.eq.s32.totalorder %s33, 1
      %p308 = por %p306, %p307
      %p310 = scmp.ne.s32.totalorder %s295, %s309
      %p311 = scmp.eq.s32.totalorder %s33, 0
      %p312 = por %p310, %p311
      %s314 = sadd.s32 %s313, 1
      %p317 = scmp.eq.s32.totalorder %s27, 1
      %p318 = scmp.ne.s32.totalorder %s313, %s315
      %p319 = scmp.eq.s32.totalorder %s27, 0
      %p320 = por %p318, %p319
      %p321 = scmp.ne.s32.totalorder %s313, %s315
      %p322 = scmp.eq.s32.totalorder %s32, 1
      %p323 = por %p321, %p322
      %p324 = scmp.ne.s32.totalorder %s315, %s316
      %p325 = scmp.eq.s32.totalorder %s32, 0
      %p326 = por %p324, %p325
      %p327 = scmp.ne.s32.totalorder %s315, %s316
      %p328 = scmp.eq.s32.totalorder %s33, 1
      %p329 = por %p327, %p328
      %p331 = scmp.ne.s32.totalorder %s316, %s330
      %p332 = scmp.eq.s32.totalorder %s33, 0
      %p333 = por %p331, %p332
      %s335 = sadd.s32 %s334, 1
      %p338 = scmp.eq.s32.totalorder %s27, 1
      %p339 = scmp.ne.s32.totalorder %s334, %s336
      %p340 = scmp.eq.s32.totalorder %s27, 0
      %p341 = por %p339, %p340
      %p342 = scmp.ne.s32.totalorder %s334, %s336
      %p343 = scmp.eq.s32.totalorder %s32, 1
      %p344 = por %p342, %p343
      %p345 = scmp.ne.s32.totalorder %s336, %s337
      %p346 = scmp.eq.s32.totalorder %s32, 0
      %p347 = por %p345, %p346
      %p348 = scmp.ne.s32.totalorder %s336, %s337
      %p349 = scmp.eq.s32.totalorder %s33, 1
      %p350 = por %p348, %p349
      %p352 = scmp.ne.s32.totalorder %s337, %s351
      %p353 = scmp.eq.s32.totalorder %s33, 0
      %p354 = por %p352, %p353
      %s356 = sadd.s32 %s355, 1
      %p359 = scmp.eq.s32.totalorder %s27, 1
      %p360 = scmp.ne.s32.totalorder %s355, %s357
      %p361 = scmp.eq.s32.totalorder %s27, 0
      %p362 = por %p360, %p361
      %p363 = scmp.ne.s32.totalorder %s355, %s357
      %p364 = scmp.eq.s32.totalorder %s32, 1
      %p365 = por %p363, %p364
      %p366 = scmp.ne.s32.totalorder %s357, %s358
      %p367 = scmp.eq.s32.totalorder %s32, 0
      %p368 = por %p366, %p367
      %p369 = scmp.ne.s32.totalorder %s357, %s358
      %p370 = scmp.eq.s32.totalorder %s33, 1
      %p371 = por %p369, %p370
      %p373 = scmp.ne.s32.totalorder %s358, %s372
      %p374 = scmp.eq.s32.totalorder %s33, 0
      %p375 = por %p373, %p374
      %s377 = sadd.s32 %s376, 1
      %p380 = scmp.eq.s32.totalorder %s27, 1
      %p381 = scmp.ne.s32.totalorder %s376, %s378
      %p382 = scmp.eq.s32.totalorder %s27, 0
      %p383 = por %p381, %p382
      %p384 = scmp.ne.s32.totalorder %s376, %s378
      %p385 = scmp.eq.s32.totalorder %s32, 1
      %p386 = por %p384, %p385
      %p387 = scmp.ne.s32.totalorder %s378, %s379
      %p388 = scmp.eq.s32.totalorder %s32, 0
      %p389 = por %p387, %p388
      %p390 = scmp.ne.s32.totalorder %s378, %s379
      %p391 = scmp.eq.s32.totalorder %s33, 1
      %p392 = por %p390, %p391
      %p394 = scmp.ne.s32.totalorder %s379, %s393
      %p395 = scmp.eq.s32.totalorder %s33, 0
      %p396 = por %p394, %p395
      %s398 = sadd.s32 %s397, 1
      %p401 = scmp.eq.s32.totalorder %s27, 1
      %p402 = scmp.ne.s32.totalorder %s397, %s399
      %p403 = scmp.eq.s32.totalorder %s27, 0
      %p404 = por %p402, %p403
      %p405 = scmp.ne.s32.totalorder %s397, %s399
      %p406 = scmp.eq.s32.totalorder %s32, 1
      %p407 = por %p405, %p406
      %p408 = scmp.ne.s32.totalorder %s399, %s400
      %p409 = scmp.eq.s32.totalorder %s32, 0
      %p410 = por %p408, %p409
      %p411 = scmp.ne.s32.totalorder %s399, %s400
      %p412 = scmp.eq.s32.totalorder %s33, 1
      %p413 = por %p411, %p412
      %p415 = scmp.ne.s32.totalorder %s400, %s414
      %p416 = scmp.eq.s32.totalorder %s33, 0
      %p417 = por %p415, %p416
      %s419 = sadd.s32 %s418, 1
      %p422 = scmp.eq.s32.totalorder %s27, 1
      %p423 = scmp.ne.s32.totalorder %s418, %s420
      %p424 = scmp.eq.s32.totalorder %s27, 0
      %p425 = por %p423, %p424
      %p426 = scmp.ne.s32.totalorder %s418, %s420
      %p427 = scmp.eq.s32.totalorder %s32, 1
      %p428 = por %p426, %p427
      %p429 = scmp.ne.s32.totalorder %s420, %s421
      %p430 = scmp.eq.s32.totalorder %s32, 0
      %p431 = por %p429, %p430
      %p432 = scmp.ne.s32.totalorder %s420, %s421
      %p433 = scmp.eq.s32.totalorder %s33, 1
      %p434 = por %p432, %p433
      %p436 = scmp.ne.s32.totalorder %s421, %s435
      %p437 = scmp.eq.s32.totalorder %s33, 0
      %p438 = por %p436, %p437
      %s439 = ssub.s32 %s27, %s34
      %p440 = scmp.eq.s32.totalorder %s439, 0
      %s442 = sadd.s32 %s441, 1
      %s443 = scalar_select %p440, %s441, %s442
      %p446 = pneg %p440
      %p447 = scmp.eq.s32.totalorder %s27, 1
      %p448 = por %p446, %p447
      %p449 = scmp.ne.s32.totalorder %s441, %s444
      %p450 = scmp.eq.s32.totalorder %s27, 0
      %p451 = por %p449, %p450
      %p452 = scmp.ne.s32.totalorder %s441, %s444
      %p453 = scmp.eq.s32.totalorder %s32, 1
      %p454 = por %p452, %p453
      %p455 = scmp.ne.s32.totalorder %s444, %s445
      %p456 = scmp.eq.s32.totalorder %s32, 0
      %p457 = por %p455, %p456
      %p458 = scmp.ne.s32.totalorder %s444, %s445
      %p459 = scmp.eq.s32.totalorder %s33, 1
      %p460 = por %p458, %p459
      %p462 = scmp.ne.s32.totalorder %s445, %s461
      %p463 = scmp.eq.s32.totalorder %s33, 0
      %p464 = por %p462, %p463
      %p465 = scmp.le.s32.totalorder 1, %s27
      %p466 = scmp.lt.s32.totalorder %s27, 3
      %p467 = pnand %p465, %p466
      %p468 = pneg %p467
      // Predicated region
      $region9: #{_forward_impl.1} parent=5 // pred_check
        _
      $region10: #{_forward_impl.1} parent=5 // pred_check_branch
        %470 = sbr.rel (%p467) target = $region12
      $region11: #{_forward_impl.1} parent=5 // pred_region
        %s471 = ssub.s32 %s27, 1
        // Predicated region
        $region13: #{_forward_impl.1} parent=11 // pred_check
          %p472 = pneg %p74
        $region14: #{_forward_impl.1} parent=11 // pred_check_branch
          %474 = sbr.rel (%p472) target = $region16
        $region15: #{_forward_impl.1} parent=11 // pred_region
          _
        $region16: #{_forward_impl.1} parent=11 // pred_fallthru
          _
        // Predicated region
        $region17: #{_forward_impl.1} parent=11 // pred_check
          %p475 = pneg %p95
        $region18: #{_forward_impl.1} parent=11 // pred_check_branch
          %477 = sbr.rel (%p475) target = $region20
        $region19: #{_forward_impl.1} parent=11 // pred_region
          _
        $region20: #{_forward_impl.1} parent=11 // pred_fallthru
          _
        // Predicated region
        $region21: #{_forward_impl.1} parent=11 // pred_check
          %p478 = pneg %p116
        $region22: #{_forward_impl.1} parent=11 // pred_check_branch
          %480 = sbr.rel (%p478) target = $region24
        $region23: #{_forward_impl.1} parent=11 // pred_region
          _
        $region24: #{_forward_impl.1} parent=11 // pred_fallthru
          _
        // Predicated region
        $region25: #{_forward_impl.1} parent=11 // pred_check
          %p481 = pneg %p137
        $region26: #{_forward_impl.1} parent=11 // pred_check_branch
          %483 = sbr.rel (%p481) target = $region28
        $region27: #{_forward_impl.1} parent=11 // pred_region
          _
        $region28: #{_forward_impl.1} parent=11 // pred_fallthru
          _
        // Predicated region
        $region29: #{_forward_impl.1} parent=11 // pred_check
          %p484 = pneg %p158
        $region30: #{_forward_impl.1} parent=11 // pred_check_branch
          %486 = sbr.rel (%p484) target = $region32
        $region31: #{_forward_impl.1} parent=11 // pred_region
          _
        $region32: #{_forward_impl.1} parent=11 // pred_fallthru
          _
        // Predicated region
        $region33: #{_forward_impl.1} parent=11 // pred_check
          %p487 = pneg %p179
        $region34: #{_forward_impl.1} parent=11 // pred_check_branch
          %489 = sbr.rel (%p487) target = $region36
        $region35: #{_forward_impl.1} parent=11 // pred_region
          _
        $region36: #{_forward_impl.1} parent=11 // pred_fallthru
          _
        // Predicated region
        $region37: #{_forward_impl.1} parent=11 // pred_check
          %p490 = pneg %p200
        $region38: #{_forward_impl.1} parent=11 // pred_check_branch
          %492 = sbr.rel (%p490) target = $region40
        $region39: #{_forward_impl.1} parent=11 // pred_region
          %s494 = ssub.s32 9216, 9216
          %495 = vsyncadd [#allocation7], %s494
          %s496 = sshll.u32 [#allocation6], 4
          %s497 = int_to_ptr.vmem [resolvable:$true] %s496
          %502 = dma.hbm_to_vmem [thread:$0]  %s7, 9216, %s497, [#allocation7], 64, 64, 4
        $region40: #{_forward_impl.1} parent=11 // pred_fallthru
          _
        // Predicated region
        $region41: #{_forward_impl.1} parent=11 // pred_check
          %p503 = pneg %p221
        $region42: #{_forward_impl.1} parent=11 // pred_check_branch
          %505 = sbr.rel (%p503) target = $region44
        $region43: #{_forward_impl.1} parent=11 // pred_region
          _
        $region44: #{_forward_impl.1} parent=11 // pred_fallthru
          _
        // Predicated region
        $region45: #{_forward_impl.1} parent=11 // pred_check
          %p506 = pneg %p242
        $region46: #{_forward_impl.1} parent=11 // pred_check_branch
          %508 = sbr.rel (%p506) target = $region48
        $region47: #{_forward_impl.1} parent=11 // pred_region
          %s510 = ssub.s32 9216, 9216
          %511 = vsyncadd [#allocation9], %s510
          %s512 = sshll.u32 [#allocation8], 4
          %s513 = int_to_ptr.vmem [resolvable:$true] %s512
          %518 = dma.hbm_to_vmem [thread:$0]  %s9, 9216, %s513, [#allocation9], 64, 64, 4
        $region48: #{_forward_impl.1} parent=11 // pred_fallthru
          _
        // Predicated region
        $region49: #{_forward_impl.1} parent=11 // pred_check
          %p519 = pneg %p263
        $region50: #{_forward_impl.1} parent=11 // pred_check_branch
          %521 = sbr.rel (%p519) target = $region52
        $region51: #{_forward_impl.1} parent=11 // pred_region
          _
        $region52: #{_forward_impl.1} parent=11 // pred_fallthru
          _
        // Predicated region
        $region53: #{_forward_impl.1} parent=11 // pred_check
          %p522 = pneg %p284
        $region54: #{_forward_impl.1} parent=11 // pred_check_branch
          %524 = sbr.rel (%p522) target = $region56
        $region55: #{_forward_impl.1} parent=11 // pred_region
          %s526 = ssub.s32 9216, 9216
          %527 = vsyncadd [#allocation9], %s526
          %s528 = sshll.u32 [#allocation10], 4
          %s529 = int_to_ptr.vmem [resolvable:$true] %s528
          %534 = dma.hbm_to_vmem [thread:$0]  %s11, 9216, %s529, [#allocation9], 64, 64, 4
        $region56: #{_forward_impl.1} parent=11 // pred_fallthru
          _
        // Predicated region
        $region57: #{_forward_impl.1} parent=11 // pred_check
          %p535 = pneg %p305
        $region58: #{_forward_impl.1} parent=11 // pred_check_branch
          %537 = sbr.rel (%p535) target = $region60
        $region59: #{_forward_impl.1} parent=11 // pred_region
          _
        $region60: #{_forward_impl.1} parent=11 // pred_fallthru
          _
        // Predicated region
        $region61: #{_forward_impl.1} parent=11 // pred_check
          %p538 = pneg %p326
        $region62: #{_forward_impl.1} parent=11 // pred_check_branch
          %540 = sbr.rel (%p538) target = $region64
        $region63: #{_forward_impl.1} parent=11 // pred_region
          _
        $region64: #{_forward_impl.1} parent=11 // pred_fallthru
          _
        // Predicated region
        $region65: #{_forward_impl.1} parent=11 // pred_check
          %p541 = pneg %p347
        $region66: #{_forward_impl.1} parent=11 // pred_check_branch
          %543 = sbr.rel (%p541) target = $region68
        $region67: #{_forward_impl.1} parent=11 // pred_region
          _
        $region68: #{_forward_impl.1} parent=11 // pred_fallthru
          _
        // Predicated region
        $region69: #{_forward_impl.1} parent=11 // pred_check
          %p544 = pneg %p368
        $region70: #{_forward_impl.1} parent=11 // pred_check_branch
          %546 = sbr.rel (%p544) target = $region72
        $region71: #{_forward_impl.1} parent=11 // pred_region
          _
        $region72: #{_forward_impl.1} parent=11 // pred_fallthru
          _
        // Predicated region
        $region73: #{_forward_impl.1} parent=11 // pred_check
          %p547 = pneg %p389
        $region74: #{_forward_impl.1} parent=11 // pred_check_branch
          %549 = sbr.rel (%p547) target = $region76
        $region75: #{_forward_impl.1} parent=11 // pred_region
          _
        $region76: #{_forward_impl.1} parent=11 // pred_fallthru
          _
        // Predicated region
        $region77: #{_forward_impl.1} parent=11 // pred_check
          %p550 = pneg %p410
        $region78: #{_forward_impl.1} parent=11 // pred_check_branch
          %552 = sbr.rel (%p550) target = $region80
        $region79: #{_forward_impl.1} parent=11 // pred_region
          _
        $region80: #{_forward_impl.1} parent=11 // pred_fallthru
          _
        // Predicated region
        $region81: #{_forward_impl.1} parent=11 // pred_check
          %p553 = pneg %p431
        $region82: #{_forward_impl.1} parent=11 // pred_check_branch
          %555 = sbr.rel (%p553) target = $region84
        $region83: #{_forward_impl.1} parent=11 // pred_region
          _
        $region84: #{_forward_impl.1} parent=11 // pred_fallthru
          _
      $region12: #{_forward_impl.1} parent=5 // pred_fallthru
        _
      %p556 = scmp.lt.s32.totalorder %s27, 2
      // Predicated region
      $region85: #{_forward_impl.1} parent=5 // pred_check
        %p557 = pneg %p556
      $region86: #{_forward_impl.1} parent=5 // pred_check_branch
        %559 = sbr.rel (%p557) target = $region88
      $region87: #{_forward_impl.1} parent=5 // pred_region
        // Predicated region
        $region89: #{_forward_impl.1} parent=87 // pred_check
          %p560 = pneg %p47
        $region90: #{_forward_impl.1} parent=87 // pred_check_branch
          %562 = sbr.rel (%p560) target = $region92
        $region91: #{_forward_impl.1} parent=87 // pred_region
          %p563 = scmp.lt.s32.totalorder %s27, 1
          %s564 = scalar_select %p563, %s27, 1
          %s565 = smul.addr %s564, 16
          %s566 = smul.addr %s565, 8
          %s567 = scalar_lea.vmem %s0, %s566
        $region92: #{_forward_impl.1} parent=87 // pred_fallthru
          _
      $region88: #{_forward_impl.1} parent=5 // pred_fallthru
        _
      %p568 = scmp.le.s32.totalorder 1, %s27
      %p569 = scmp.lt.s32.totalorder %s27, 3
      %p570 = pnand %p568, %p569
      %p571 = pneg %p570
      // Predicated region
      $region93: #{_forward_impl.1} parent=5 // pred_check
        _
      $region94: #{_forward_impl.1} parent=5 // pred_check_branch
        %573 = sbr.rel (%p570) target = $region96
      $region95: #{_forward_impl.1} parent=5 // pred_region
        %s574 = ssub.s32 %s27, 1
        // Predicated region
        $region97: #{_forward_impl.1} parent=95 // pred_check
          %p575 = pneg %p200
        $region98: #{_forward_impl.1} parent=95 // pred_check_branch
          %577 = sbr.rel (%p575) target = $region100
        $region99: #{_forward_impl.1} parent=95 // pred_region
          %578 = dma.done [#allocation7], 9216
        $region100: #{_forward_impl.1} parent=95 // pred_fallthru
          _
        // Predicated region
        $region101: #{_forward_impl.1} parent=95 // pred_check
          %p579 = pneg %p242
        $region102: #{_forward_impl.1} parent=95 // pred_check_branch
          %581 = sbr.rel (%p579) target = $region104
        $region103: #{_forward_impl.1} parent=95 // pred_region
          %582 = dma.done [#allocation9], 9216
        $region104: #{_forward_impl.1} parent=95 // pred_fallthru
          _
        // Predicated region
        $region105: #{_forward_impl.1} parent=95 // pred_check
          %p583 = pneg %p284
        $region106: #{_forward_impl.1} parent=95 // pred_check_branch
          %585 = sbr.rel (%p583) target = $region108
        $region107: #{_forward_impl.1} parent=95 // pred_region
          %586 = dma.done [#allocation9], 9216
        $region108: #{_forward_impl.1} parent=95 // pred_fallthru
          _
        %p587 = scmp.lt.s32.totalorder %s32, 1
        %s588 = scalar_select %p587, %s32, 1
        %s589 = smul.addr %s588, 16
        %s590 = smul.addr %s589, 8
        %s591 = scalar_lea.vmem %s0, %s590
        %p592 = pneg %p53
        %p593 = pneg %p50
        %p594 = pneg %p74
        %p595 = pneg %p71
        %p596 = pneg %p95
        %p597 = pneg %p92
        %p598 = pneg %p116
        %p599 = pneg %p113
        %p600 = pneg %p137
        %p601 = pneg %p134
        %p602 = pneg %p158
        %p603 = pneg %p155
        %p604 = pneg %p179
        %p605 = pneg %p176
        %p606 = pneg %p200
        %p607 = pneg %p197
        %p608 = pneg %p221
        %p609 = pneg %p218
        %p610 = pneg %p242
        %p611 = pneg %p239
        %p612 = pneg %p263
        %p613 = pneg %p260
        %p614 = pneg %p284
        %p615 = pneg %p281
        %p616 = pneg %p305
        %p617 = pneg %p302
        %p618 = pneg %p326
        %p619 = pneg %p323
        %p620 = pneg %p347
        %p621 = pneg %p344
        %p622 = pneg %p368
        %p623 = pneg %p365
        %p624 = pneg %p389
        %p625 = pneg %p386
        %p626 = pneg %p410
        %p627 = pneg %p407
        %p628 = pneg %p431
        %p629 = pneg %p428
        %p630 = pneg %p457
        %p631 = pneg %p454
        %p632 = scmp.lt.s32.totalorder %s32, 1
        %s633 = scalar_select %p632, %s32, 1
        %s634 = smul.addr %s633, 8
        %s635 = scalar_lea.vmem %s19, %s634
        %p636 = scmp.lt.s32.totalorder %s32, 1
        %s637 = scalar_select %p636, %s32, 1
        %s638 = smul.addr %s637, 16
        %s639 = smul.addr %s638, 8
        %s640 = scalar_lea.vmem %s0, %s639
        %p641 = scmp.lt.s32.totalorder %s32, 1
        %s642 = scalar_select %p641, %s32, 1
        %s643 = smul.addr %s642, 8
        %s644 = scalar_lea.vmem %s19, %s643
        %v646 = vld [vmem:[%s6] sm:$0x1]
        %v648 = vlaneseq
        %v649 = vshrl.u32 %v648, 7
        %v650 = vsub.s32 0, %v649
        %v651 = vrot.slane %v646, %v650
        %v653 = vld [vmem:[%s640] sm:$0xff]
        %v654 = vld [vmem:[%s640 + $0x8] sm:$0xff]
        %v655 = vld [vmem:[%s640 + $0x10] sm:$0xff]
        %v656 = vld [vmem:[%s640 + $0x18] sm:$0xff]
        %v657 = vld [vmem:[%s640 + $0x20] sm:$0xff]
        %v658 = vld [vmem:[%s640 + $0x28] sm:$0xff]
        %v659 = vld [vmem:[%s640 + $0x30] sm:$0xff]
        %v660 = vld [vmem:[%s640 + $0x38] sm:$0xff]
        %v661 = vld [vmem:[%s640 + $0x40] sm:$0xff]
        %v662 = vld [vmem:[%s640 + $0x48] sm:$0xff]
        %v663 = vld [vmem:[%s640 + $0x50] sm:$0xff]
        %v664 = vld [vmem:[%s640 + $0x58] sm:$0xff]
        %v665 = vld [vmem:[%s640 + $0x60] sm:$0xff]
        %v666 = vpack.c.bf16 %v654, %v653
        %v667 = vpack.c.bf16 %v656, %v655
        %v668 = vpack.c.bf16 %v658, %v657
        %v669 = vpack.c.bf16 %v660, %v659
        %v670 = vpack.c.bf16 %v662, %v661
        %v671 = vpack.c.bf16 %v664, %v663
        %v672 = vpack.c.bf16 %v665, %v665
        %v673 = vld [vmem:[%s5] sm:$0xf]
        %v674 = vld [vmem:[%s5 + $0x4] sm:$0xf]
        %v675 = vld [vmem:[%s5 + $0x8] sm:$0xf]
        %v676 = vld [vmem:[%s5 + $0xc] sm:$0xf]
        %v677 = vld [vmem:[%s5 + $0x10] sm:$0xf]
        %v678 = vld [vmem:[%s5 + $0x14] sm:$0xf]
        %v679 = vld [vmem:[%s5 + $0x18] sm:$0xf]
        %v680 = vld [vmem:[%s5 + $0x1c] sm:$0xf]
        %v681 = vld [vmem:[%s5 + $0x20] sm:$0xf]
        %v682 = vld [vmem:[%s5 + $0x24] sm:$0xf]
        %v683 = vld [vmem:[%s5 + $0x28] sm:$0xf]
        %v684 = vld [vmem:[%s5 + $0x2c] sm:$0xf]
        %v685 = vld [vmem:[%s5 + $0x30] sm:$0xf]
        %v686 = vld [vmem:[%s5 + $0x34] sm:$0xf]
        %v687 = vld [vmem:[%s5 + $0x38] sm:$0xf]
        %v688 = vld [vmem:[%s5 + $0x3c] sm:$0xf]
        %v705 = vunpack.c.l.b16 %v673
        %v706 = vunpack.c.l.b16 %v674
        %v707 = vunpack.c.l.b16 %v675
        %v708 = vunpack.c.l.b16 %v676
        %v709 = vunpack.c.l.b16 %v677
        %v710 = vunpack.c.l.b16 %v678
        %v711 = vunpack.c.l.b16 %v679
        %v712 = vunpack.c.l.b16 %v680
        %v713 = vunpack.c.l.b16 %v681
        %v714 = vunpack.c.l.b16 %v682
        %v715 = vunpack.c.l.b16 %v683
        %v716 = vunpack.c.l.b16 %v684
        %v717 = vunpack.c.l.b16 %v685
        %v718 = vunpack.c.l.b16 %v686
        %v719 = vunpack.c.l.b16 %v687
        %v720 = vunpack.c.l.b16 %v688
        %v721 = vpack.c.b16 %v706, %v705
        %v722 = vpack.c.b16 %v708, %v707
        %v723 = vpack.c.b16 %v710, %v709
        %v724 = vpack.c.b16 %v712, %v711
        %v725 = vpack.c.b16 %v714, %v713
        %v726 = vpack.c.b16 %v716, %v715
        %v727 = vpack.c.b16 %v718, %v717
        %v728 = vpack.c.b16 %v720, %v719
        %737 = vmatprep.subr.bf16.mxu0 0
        %738 = vmatpush1.bf16.msra.mxu0 %v728
        %739 = vmatprep.subr.bf16.mxu0 0
        %740 = vmatpush1.bf16.msra.mxu0 %v727
        %741 = vmatprep.subr.bf16.mxu0 0
        %742 = vmatpush1.bf16.msra.mxu0 %v726
        %743 = vmatprep.subr.bf16.mxu0 0
        %744 = vmatpush1.bf16.msra.mxu0 %v725
        %745 = vmatprep.subr.bf16.mxu0 0
        %746 = vmatpush1.bf16.msra.mxu0 %v724
        %747 = vmatprep.subr.bf16.mxu0 0
        %748 = vmatpush1.bf16.msra.mxu0 %v723
        %749 = vmatprep.subr.bf16.mxu0 0
        %750 = vmatpush1.bf16.msra.mxu0 %v722
        %751 = vmatprep.subr.bf16.mxu0 0
        %752 = vmatpush1.bf16.msra.mxu0 %v721
        %753 = vmatprep.subr.bf16.mxu0 0
        %754 = vmatpush2.bf16.msra.mxu0 0
        %755 = vmatprep.subr.bf16.mxu0 0
        %756 = vmatpush2.bf16.msra.mxu0 0
        %757 = vmatprep.subr.bf16.mxu0 0
        %758 = vmatpush2.bf16.msra.mxu0 0
        %759 = vmatprep.subr.bf16.mxu0 0
        %760 = vmatpush2.bf16.msra.mxu0 0
        %761 = vmatprep.subr.bf16.mxu0 0
        %762 = vmatpush2.bf16.msra.mxu0 0
        %763 = vmatprep.subr.bf16.mxu0 0
        %764 = vmatpush2.bf16.msra.mxu0 0
        %765 = vmatprep.subr.bf16.mxu0 0
        %766 = vmatpush2.bf16.msra.mxu0 0
        %767 = vmatprep.subr.bf16.mxu0 0
        %768 = vmatpush2.bf16.msra.mxu0 0
        %769 = vmatprep.mubr.bf16.mxu0 0
        %770 = vmatmul.mubr.bf16.gmra.mxu0 %v666
        %v771 = vpop.f32.mrf.mxu0
        %v772 = vadd.f32 0.0, %v771
        %v773 = vpop.f32.mrf.mxu0
        %v774 = vpop.f32.mrf.mxu0
        %v775 = vadd.f32 0.0, %v774
        %v776 = vpop.f32.mrf.mxu0
        %777 = vmatprep.mubr.bf16.mxu0 0
        %778 = vmatmul.mubr.bf16.gmra.mxu0 %v667
        %v779 = vpop.f32.mrf.mxu0
        %v780 = vadd.f32 0.0, %v779
        %v781 = vpop.f32.mrf.mxu0
        %v782 = vpop.f32.mrf.mxu0
        %v783 = vadd.f32 0.0, %v782
        %v784 = vpop.f32.mrf.mxu0
        %785 = vmatprep.mubr.bf16.mxu0 0
        %786 = vmatmul.mubr.bf16.gmra.mxu0 %v668
        %v787 = vpop.f32.mrf.mxu0
        %v788 = vadd.f32 0.0, %v787
        %v789 = vpop.f32.mrf.mxu0
        %v790 = vpop.f32.mrf.mxu0
        %v791 = vadd.f32 0.0, %v790
        %v792 = vpop.f32.mrf.mxu0
        %793 = vmatprep.mubr.bf16.mxu0 0
        %794 = vmatmul.mubr.bf16.gmra.mxu0 %v669
        %v795 = vpop.f32.mrf.mxu0
        %v796 = vadd.f32 0.0, %v795
        %v797 = vpop.f32.mrf.mxu0
        %v798 = vpop.f32.mrf.mxu0
        %v799 = vadd.f32 0.0, %v798
        %v800 = vpop.f32.mrf.mxu0
        %801 = vmatprep.mubr.bf16.mxu0 0
        %802 = vmatmul.mubr.bf16.gmra.mxu0 %v670
        %v803 = vpop.f32.mrf.mxu0
        %v804 = vadd.f32 0.0, %v803
        %v805 = vpop.f32.mrf.mxu0
        %v806 = vpop.f32.mrf.mxu0
        %v807 = vadd.f32 0.0, %v806
        %v808 = vpop.f32.mrf.mxu0
        %809 = vmatprep.mubr.bf16.mxu0 0
        %810 = vmatmul.mubr.bf16.gmra.mxu0 %v671
        %v811 = vpop.f32.mrf.mxu0
        %v812 = vadd.f32 0.0, %v811
        %v813 = vpop.f32.mrf.mxu0
        %v814 = vpop.f32.mrf.mxu0
        %v815 = vadd.f32 0.0, %v814
        %v816 = vpop.f32.mrf.mxu0
        %817 = vmatprep.mubr.bf16.mxu0 0
        %818 = vmatmul.mubr.bf16.gmra.mxu0 %v672
        %v819 = vpop.f32.mrf.mxu0
        %v820 = vadd.f32 0.0, %v819
        %v821 = vpop.f32.mrf.mxu0
        %v822 = vpop.f32.mrf.mxu0
        %v823 = vpop.f32.mrf.mxu0
        %824 = vdwg.mxu0
        %v825 = vadd.f32 %v651, %v772
        %v826 = vadd.f32 %v651, %v775
        %v827 = vadd.f32 %v651, %v780
        %v828 = vadd.f32 %v651, %v783
        %v829 = vadd.f32 %v651, %v788
        %v830 = vadd.f32 %v651, %v791
        %v831 = vadd.f32 %v651, %v796
        %v832 = vadd.f32 %v651, %v799
        %v833 = vadd.f32 %v651, %v804
        %v834 = vadd.f32 %v651, %v807
        %v835 = vadd.f32 %v651, %v812
        %v836 = vadd.f32 %v651, %v815
        %v837 = vadd.f32 %v651, %v820
        %v838 = vld [vmem:[%s640 + $0x1] sm:$0xff]
        %v839 = vld [vmem:[%s640 + $0x9] sm:$0xff]
        %v840 = vld [vmem:[%s640 + $0x11] sm:$0xff]
        %v841 = vld [vmem:[%s640 + $0x19] sm:$0xff]
        %v842 = vld [vmem:[%s640 + $0x21] sm:$0xff]
        %v843 = vld [vmem:[%s640 + $0x29] sm:$0xff]
        %v844 = vld [vmem:[%s640 + $0x31] sm:$0xff]
        %v845 = vld [vmem:[%s640 + $0x39] sm:$0xff]
        %v846 = vld [vmem:[%s640 + $0x41] sm:$0xff]
        %v847 = vld [vmem:[%s640 + $0x49] sm:$0xff]
        %v848 = vld [vmem:[%s640 + $0x51] sm:$0xff]
        %v849 = vld [vmem:[%s640 + $0x59] sm:$0xff]
        %v850 = vld [vmem:[%s640 + $0x61] sm:$0xff]
        %v851 = vpack.c.bf16 %v839, %v838
        %v852 = vpack.c.bf16 %v841, %v840
        %v853 = vpack.c.bf16 %v843, %v842
        %v854 = vpack.c.bf16 %v845, %v844
        %v855 = vpack.c.bf16 %v847, %v846
        %v856 = vpack.c.bf16 %v849, %v848
        %v857 = vpack.c.bf16 %v850, %v850
        %s858 = scalar_lea.vmem %s5, 64
        %v859 = vld [vmem:[%s858] sm:$0xf]
        %v860 = vld [vmem:[%s858 + $0x4] sm:$0xf]
        %v861 = vld [vmem:[%s858 + $0x8] sm:$0xf]
        %v862 = vld [vmem:[%s858 + $0xc] sm:$0xf]
        %v863 = vld [vmem:[%s858 + $0x10] sm:$0xf]
        %v864 = vld [vmem:[%s858 + $0x14] sm:$0xf]
        %v865 = vld [vmem:[%s858 + $0x18] sm:$0xf]
        %v866 = vld [vmem:[%s858 + $0x1c] sm:$0xf]
        %v867 = vld [vmem:[%s858 + $0x20] sm:$0xf]
        %v868 = vld [vmem:[%s858 + $0x24] sm:$0xf]
        %v869 = vld [vmem:[%s858 + $0x28] sm:$0xf]
        %v870 = vld [vmem:[%s858 + $0x2c] sm:$0xf]
        %v871 = vld [vmem:[%s858 + $0x30] sm:$0xf]
        %v872 = vld [vmem:[%s858 + $0x34] sm:$0xf]
        %v873 = vld [vmem:[%s858 + $0x38] sm:$0xf]
        %v874 = vld [vmem:[%s858 + $0x3c] sm:$0xf]
        %v891 = vunpack.c.l.b16 %v859
        %v892 = vunpack.c.l.b16 %v860
        %v893 = vunpack.c.l.b16 %v861
        %v894 = vunpack.c.l.b16 %v862
        %v895 = vunpack.c.l.b16 %v863
        %v896 = vunpack.c.l.b16 %v864
        %v897 = vunpack.c.l.b16 %v865
        %v898 = vunpack.c.l.b16 %v866
        %v899 = vunpack.c.l.b16 %v867
        %v900 = vunpack.c.l.b16 %v868
        %v901 = vunpack.c.l.b16 %v869
        %v902 = vunpack.c.l.b16 %v870
        %v903 = vunpack.c.l.b16 %v871
        %v904 = vunpack.c.l.b16 %v872
        %v905 = vunpack.c.l.b16 %v873
        %v906 = vunpack.c.l.b16 %v874
        %v907 = vpack.c.b16 %v892, %v891
        %v908 = vpack.c.b16 %v894, %v893
        %v909 = vpack.c.b16 %v896, %v895
        %v910 = vpack.c.b16 %v898, %v897
        %v911 = vpack.c.b16 %v900, %v899
        %v912 = vpack.c.b16 %v902, %v901
        %v913 = vpack.c.b16 %v904, %v903
        %v914 = vpack.c.b16 %v906, %v905
        %923 = vmatprep.subr.bf16.mxu0 0
        %924 = vmatpush1.bf16.msra.mxu0 %v914
        %925 = vmatprep.subr.bf16.mxu0 0
        %926 = vmatpush1.bf16.msra.mxu0 %v913
        %927 = vmatprep.subr.bf16.mxu0 0
        %928 = vmatpush1.bf16.msra.mxu0 %v912
        %929 = vmatprep.subr.bf16.mxu0 0
        %930 = vmatpush1.bf16.msra.mxu0 %v911
        %931 = vmatprep.subr.bf16.mxu0 0
        %932 = vmatpush1.bf16.msra.mxu0 %v910
        %933 = vmatprep.subr.bf16.mxu0 0
        %934 = vmatpush1.bf16.msra.mxu0 %v909
        %935 = vmatprep.subr.bf16.mxu0 0
        %936 = vmatpush1.bf16.msra.mxu0 %v908
        %937 = vmatprep.subr.bf16.mxu0 0
        %938 = vmatpush1.bf16.msra.mxu0 %v907
        %939 = vmatprep.subr.bf16.mxu0 0
        %940 = vmatpush2.bf16.msra.mxu0 0
        %941 = vmatprep.subr.bf16.mxu0 0
        %942 = vmatpush2.bf16.msra.mxu0 0
        %943 = vmatprep.subr.bf16.mxu0 0
        %944 = vmatpush2.bf16.msra.mxu0 0
        %945 = vmatprep.subr.bf16.mxu0 0
        %946 = vmatpush2.bf16.msra.mxu0 0
        %947 = vmatprep.subr.bf16.mxu0 0
        %948 = vmatpush2.bf16.msra.mxu0 0
        %949 = vmatprep.subr.bf16.mxu0 0
        %950 = vmatpush2.bf16.msra.mxu0 0
        %951 = vmatprep.subr.bf16.mxu0 0
        %952 = vmatpush2.bf16.msra.mxu0 0
        %953 = vmatprep.subr.bf16.mxu0 0
        %954 = vmatpush2.bf16.msra.mxu0 0
        %955 = vmatprep.mubr.bf16.mxu0 0
        %956 = vmatmul.mubr.bf16.gmra.mxu0 %v851
        %v957 = vpop.f32.mrf.mxu0
        %v958 = vadd.f32 0.0, %v957
        %v959 = vpop.f32.mrf.mxu0
        %v960 = vpop.f32.mrf.mxu0
        %v961 = vadd.f32 0.0, %v960
        %v962 = vpop.f32.mrf.mxu0
        %963 = vmatprep.mubr.bf16.mxu0 0
        %964 = vmatmul.mubr.bf16.gmra.mxu0 %v852
        %v965 = vpop.f32.mrf.mxu0
        %v966 = vadd.f32 0.0, %v965
        %v967 = vpop.f32.mrf.mxu0
        %v968 = vpop.f32.mrf.mxu0
        %v969 = vadd.f32 0.0, %v968
        %v970 = vpop.f32.mrf.mxu0
        %971 = vmatprep.mubr.bf16.mxu0 0
        %972 = vmatmul.mubr.bf16.gmra.mxu0 %v853
        %v973 = vpop.f32.mrf.mxu0
        %v974 = vadd.f32 0.0, %v973
        %v975 = vpop.f32.mrf.mxu0
        %v976 = vpop.f32.mrf.mxu0
        %v977 = vadd.f32 0.0, %v976
        %v978 = vpop.f32.mrf.mxu0
        %979 = vmatprep.mubr.bf16.mxu0 0
        %980 = vmatmul.mubr.bf16.gmra.mxu0 %v854
        %v981 = vpop.f32.mrf.mxu0
        %v982 = vadd.f32 0.0, %v981
        %v983 = vpop.f32.mrf.mxu0
        %v984 = vpop.f32.mrf.mxu0
        %v985 = vadd.f32 0.0, %v984
        %v986 = vpop.f32.mrf.mxu0
        %987 = vmatprep.mubr.bf16.mxu0 0
        %988 = vmatmul.mubr.bf16.gmra.mxu0 %v855
        %v989 = vpop.f32.mrf.mxu0
        %v990 = vadd.f32 0.0, %v989
        %v991 = vpop.f32.mrf.mxu0
        %v992 = vpop.f32.mrf.mxu0
        %v993 = vadd.f32 0.0, %v992
        %v994 = vpop.f32.mrf.mxu0
        %995 = vmatprep.mubr.bf16.mxu0 0
        %996 = vmatmul.mubr.bf16.gmra.mxu0 %v856
        %v997 = vpop.f32.mrf.mxu0
        %v998 = vadd.f32 0.0, %v997
        %v999 = vpop.f32.mrf.mxu0
        %v1000 = vpop.f32.mrf.mxu0
        %v1001 = vadd.f32 0.0, %v1000
        %v1002 = vpop.f32.mrf.mxu0
        %1003 = vmatprep.mubr.bf16.mxu0 0
        %1004 = vmatmul.mubr.bf16.gmra.mxu0 %v857
        %v1005 = vpop.f32.mrf.mxu0
        %v1006 = vadd.f32 0.0, %v1005
        %v1007 = vpop.f32.mrf.mxu0
        %v1008 = vpop.f32.mrf.mxu0
        %v1009 = vpop.f32.mrf.mxu0
        %1010 = vdwg.mxu0
        %v1011 = vadd.f32 %v825, %v958
        %v1012 = vadd.f32 %v826, %v961
        %v1013 = vadd.f32 %v827, %v966
        %v1014 = vadd.f32 %v828, %v969
        %v1015 = vadd.f32 %v829, %v974
        %v1016 = vadd.f32 %v830, %v977
        %v1017 = vadd.f32 %v831, %v982
        %v1018 = vadd.f32 %v832, %v985
        %v1019 = vadd.f32 %v833, %v990
        %v1020 = vadd.f32 %v834, %v993
        %v1021 = vadd.f32 %v835, %v998
        %v1022 = vadd.f32 %v836, %v1001
        %v1023 = vadd.f32 %v837, %v1006
        %v1024 = vld [vmem:[%s640 + $0x2] sm:$0xff]
        %v1025 = vld [vmem:[%s640 + $0xa] sm:$0xff]
        %v1026 = vld [vmem:[%s640 + $0x12] sm:$0xff]
        %v1027 = vld [vmem:[%s640 + $0x1a] sm:$0xff]
        %v1028 = vld [vmem:[%s640 + $0x22] sm:$0xff]
        %v1029 = vld [vmem:[%s640 + $0x2a] sm:$0xff]
        %v1030 = vld [vmem:[%s640 + $0x32] sm:$0xff]
        %v1031 = vld [vmem:[%s640 + $0x3a] sm:$0xff]
        %v1032 = vld [vmem:[%s640 + $0x42] sm:$0xff]
        %v1033 = vld [vmem:[%s640 + $0x4a] sm:$0xff]
        %v1034 = vld [vmem:[%s640 + $0x52] sm:$0xff]
        %v1035 = vld [vmem:[%s640 + $0x5a] sm:$0xff]
        %v1036 = vld [vmem:[%s640 + $0x62] sm:$0xff]
        %v1037 = vpack.c.bf16 %v1025, %v1024
        %v1038 = vpack.c.bf16 %v1027, %v1026
        %v1039 = vpack.c.bf16 %v1029, %v1028
        %v1040 = vpack.c.bf16 %v1031, %v1030
        %v1041 = vpack.c.bf16 %v1033, %v1032
        %v1042 = vpack.c.bf16 %v1035, %v1034
        %v1043 = vpack.c.bf16 %v1036, %v1036
        %s1044 = scalar_lea.vmem %s5, 128
        %v1045 = vld [vmem:[%s1044] sm:$0xf]
        %v1046 = vld [vmem:[%s1044 + $0x4] sm:$0xf]
        %v1047 = vld [vmem:[%s1044 + $0x8] sm:$0xf]
        %v1048 = vld [vmem:[%s1044 + $0xc] sm:$0xf]
        %v1049 = vld [vmem:[%s1044 + $0x10] sm:$0xf]
        %v1050 = vld [vmem:[%s1044 + $0x14] sm:$0xf]
        %v1051 = vld [vmem:[%s1044 + $0x18] sm:$0xf]
        %v1052 = vld [vmem:[%s1044 + $0x1c] sm:$0xf]
        %v1053 = vld [vmem:[%s1044 + $0x20] sm:$0xf]
        %v1054 = vld [vmem:[%s1044 + $0x24] sm:$0xf]
        %v1055 = vld [vmem:[%s1044 + $0x28] sm:$0xf]
        %v1056 = vld [vmem:[%s1044 + $0x2c] sm:$0xf]
        %v1057 = vld [vmem:[%s1044 + $0x30] sm:$0xf]
        %v1058 = vld [vmem:[%s1044 + $0x34] sm:$0xf]
        %v1059 = vld [vmem:[%s1044 + $0x38] sm:$0xf]
        %v1060 = vld [vmem:[%s1044 + $0x3c] sm:$0xf]
        %v1077 = vunpack.c.l.b16 %v1045
        %v1078 = vunpack.c.l.b16 %v1046
        %v1079 = vunpack.c.l.b16 %v1047
        %v1080 = vunpack.c.l.b16 %v1048
        %v1081 = vunpack.c.l.b16 %v1049
        %v1082 = vunpack.c.l.b16 %v1050
        %v1083 = vunpack.c.l.b16 %v1051
        %v1084 = vunpack.c.l.b16 %v1052
        %v1085 = vunpack.c.l.b16 %v1053
        %v1086 = vunpack.c.l.b16 %v1054
        %v1087 = vunpack.c.l.b16 %v1055
        %v1088 = vunpack.c.l.b16 %v1056
        %v1089 = vunpack.c.l.b16 %v1057
        %v1090 = vunpack.c.l.b16 %v1058
        %v1091 = vunpack.c.l.b16 %v1059
        %v1092 = vunpack.c.l.b16 %v1060
        %v1093 = vpack.c.b16 %v1078, %v1077
        %v1094 = vpack.c.b16 %v1080, %v1079
        %v1095 = vpack.c.b16 %v1082, %v1081
        %v1096 = vpack.c.b16 %v1084, %v1083
        %v1097 = vpack.c.b16 %v1086, %v1085
        %v1098 = vpack.c.b16 %v1088, %v1087
        %v1099 = vpack.c.b16 %v1090, %v1089
        %v1100 = vpack.c.b16 %v1092, %v1091
        %1109 = vmatprep.subr.bf16.mxu0 0
        %1110 = vmatpush1.bf16.msra.mxu0 %v1100
        %1111 = vmatprep.subr.bf16.mxu0 0
        %1112 = vmatpush1.bf16.msra.mxu0 %v1099
        %1113 = vmatprep.subr.bf16.mxu0 0
        %1114 = vmatpush1.bf16.msra.mxu0 %v1098
        %1115 = vmatprep.subr.bf16.mxu0 0
        %1116 = vmatpush1.bf16.msra.mxu0 %v1097
        %1117 = vmatprep.subr.bf16.mxu0 0
        %1118 = vmatpush1.bf16.msra.mxu0 %v1096
        %1119 = vmatprep.subr.bf16.mxu0 0
        %1120 = vmatpush1.bf16.msra.mxu0 %v1095
        %1121 = vmatprep.subr.bf16.mxu0 0
        %1122 = vmatpush1.bf16.msra.mxu0 %v1094
        %1123 = vmatprep.subr.bf16.mxu0 0
        %1124 = vmatpush1.bf16.msra.mxu0 %v1093
        %1125 = vmatprep.subr.bf16.mxu0 0
        %1126 = vmatpush2.bf16.msra.mxu0 0
        %1127 = vmatprep.subr.bf16.mxu0 0
        %1128 = vmatpush2.bf16.msra.mxu0 0
        %1129 = vmatprep.subr.bf16.mxu0 0
        %1130 = vmatpush2.bf16.msra.mxu0 0
        %1131 = vmatprep.subr.bf16.mxu0 0
        %1132 = vmatpush2.bf16.msra.mxu0 0
        %1133 = vmatprep.subr.bf16.mxu0 0
        %1134 = vmatpush2.bf16.msra.mxu0 0
        %1135 = vmatprep.subr.bf16.mxu0 0
        %1136 = vmatpush2.bf16.msra.mxu0 0
        %1137 = vmatprep.subr.bf16.mxu0 0
        %1138 = vmatpush2.bf16.msra.mxu0 0
        %1139 = vmatprep.subr.bf16.mxu0 0
        %1140 = vmatpush2.bf16.msra.mxu0 0
        %1141 = vmatprep.mubr.bf16.mxu0 0
        %1142 = vmatmul.mubr.bf16.gmra.mxu0 %v1037
        %v1143 = vpop.f32.mrf.mxu0
        %v1144 = vadd.f32 0.0, %v1143
        %v1145 = vpop.f32.mrf.mxu0
        %v1146 = vpop.f32.mrf.mxu0
        %v1147 = vadd.f32 0.0, %v1146
        %v1148 = vpop.f32.mrf.mxu0
        %1149 = vmatprep.mubr.bf16.mxu0 0
        %1150 = vmatmul.mubr.bf16.gmra.mxu0 %v1038
        %v1151 = vpop.f32.mrf.mxu0
        %v1152 = vadd.f32 0.0, %v1151
        %v1153 = vpop.f32.mrf.mxu0
        %v1154 = vpop.f32.mrf.mxu0
        %v1155 = vadd.f32 0.0, %v1154
        %v1156 = vpop.f32.mrf.mxu0
        %1157 = vmatprep.mubr.bf16.mxu0 0
        %1158 = vmatmul.mubr.bf16.gmra.mxu0 %v1039
        %v1159 = vpop.f32.mrf.mxu0
        %v1160 = vadd.f32 0.0, %v1159
        %v1161 = vpop.f32.mrf.mxu0
        %v1162 = vpop.f32.mrf.mxu0
        %v1163 = vadd.f32 0.0, %v1162
        %v1164 = vpop.f32.mrf.mxu0
        %1165 = vmatprep.mubr.bf16.mxu0 0
        %1166 = vmatmul.mubr.bf16.gmra.mxu0 %v1040
        %v1167 = vpop.f32.mrf.mxu0
        %v1168 = vadd.f32 0.0, %v1167
        %v1169 = vpop.f32.mrf.mxu0
        %v1170 = vpop.f32.mrf.mxu0
        %v1171 = vadd.f32 0.0, %v1170
        %v1172 = vpop.f32.mrf.mxu0
        %1173 = vmatprep.mubr.bf16.mxu0 0
        %1174 = vmatmul.mubr.bf16.gmra.mxu0 %v1041
        %v1175 = vpop.f32.mrf.mxu0
        %v1176 = vadd.f32 0.0, %v1175
        %v1177 = vpop.f32.mrf.mxu0
        %v1178 = vpop.f32.mrf.mxu0
        %v1179 = vadd.f32 0.0, %v1178
        %v1180 = vpop.f32.mrf.mxu0
        %1181 = vmatprep.mubr.bf16.mxu0 0
        %1182 = vmatmul.mubr.bf16.gmra.mxu0 %v1042
        %v1183 = vpop.f32.mrf.mxu0
        %v1184 = vadd.f32 0.0, %v1183
        %v1185 = vpop.f32.mrf.mxu0
        %v1186 = vpop.f32.mrf.mxu0
        %v1187 = vadd.f32 0.0, %v1186
        %v1188 = vpop.f32.mrf.mxu0
        %1189 = vmatprep.mubr.bf16.mxu0 0
        %1190 = vmatmul.mubr.bf16.gmra.mxu0 %v1043
        %v1191 = vpop.f32.mrf.mxu0
        %v1192 = vadd.f32 0.0, %v1191
        %v1193 = vpop.f32.mrf.mxu0
        %v1194 = vpop.f32.mrf.mxu0
        %v1195 = vpop.f32.mrf.mxu0
        %1196 = vdwg.mxu0
        %v1197 = vadd.f32 %v1011, %v1144
        %v1198 = vadd.f32 %v1012, %v1147
        %v1199 = vadd.f32 %v1013, %v1152
        %v1200 = vadd.f32 %v1014, %v1155
        %v1201 = vadd.f32 %v1015, %v1160
        %v1202 = vadd.f32 %v1016, %v1163
        %v1203 = vadd.f32 %v1017, %v1168
        %v1204 = vadd.f32 %v1018, %v1171
        %v1205 = vadd.f32 %v1019, %v1176
        %v1206 = vadd.f32 %v1020, %v1179
        %v1207 = vadd.f32 %v1021, %v1184
        %v1208 = vadd.f32 %v1022, %v1187
        %v1209 = vadd.f32 %v1023, %v1192
        %v1210 = vld [vmem:[%s640 + $0xb] sm:$0xff]
        %v1211 = vld [vmem:[%s640 + $0x13] sm:$0xff]
        %v1212 = vld [vmem:[%s640 + $0x1b] sm:$0xff]
        %v1213 = vld [vmem:[%s640 + $0x23] sm:$0xff]
        %v1214 = vld [vmem:[%s640 + $0x2b] sm:$0xff]
        %v1215 = vld [vmem:[%s640 + $0x33] sm:$0xff]
        %v1216 = vld [vmem:[%s640 + $0x3b] sm:$0xff]
        %v1217 = vld [vmem:[%s640 + $0x43] sm:$0xff]
        %v1218 = vld [vmem:[%s640 + $0x4b] sm:$0xff]
        %v1219 = vld [vmem:[%s640 + $0x53] sm:$0xff]
        %v1220 = vld [vmem:[%s640 + $0x5b] sm:$0xff]
        %v1221 = vld [vmem:[%s640 + $0x63] sm:$0xff]
        %v1222 = vld [vmem:[%s640 + $0x6b] sm:$0xff]
        %v1223 = vpack.c.bf16 %v1211, %v1210
        %v1224 = vpack.c.bf16 %v1213, %v1212
        %v1225 = vpack.c.bf16 %v1215, %v1214
        %v1226 = vpack.c.bf16 %v1217, %v1216
        %v1227 = vpack.c.bf16 %v1219, %v1218
        %v1228 = vpack.c.bf16 %v1221, %v1220
        %v1229 = vpack.c.bf16 %v1222, %v1222
        %s1230 = scalar_lea.vmem %s5, 192
        %v1231 = vld [vmem:[%s1230] sm:$0xf]
        %v1232 = vld [vmem:[%s1230 + $0x4] sm:$0xf]
        %v1233 = vld [vmem:[%s1230 + $0x8] sm:$0xf]
        %v1234 = vld [vmem:[%s1230 + $0xc] sm:$0xf]
        %v1235 = vld [vmem:[%s1230 + $0x10] sm:$0xf]
        %v1236 = vld [vmem:[%s1230 + $0x14] sm:$0xf]
        %v1237 = vld [vmem:[%s1230 + $0x18] sm:$0xf]
        %v1238 = vld [vmem:[%s1230 + $0x1c] sm:$0xf]
        %v1239 = vld [vmem:[%s1230 + $0x20] sm:$0xf]
        %v1240 = vld [vmem:[%s1230 + $0x24] sm:$0xf]
        %v1241 = vld [vmem:[%s1230 + $0x28] sm:$0xf]
        %v1242 = vld [vmem:[%s1230 + $0x2c] sm:$0xf]
        %v1243 = vld [vmem:[%s1230 + $0x30] sm:$0xf]
        %v1244 = vld [vmem:[%s1230 + $0x34] sm:$0xf]
        %v1245 = vld [vmem:[%s1230 + $0x38] sm:$0xf]
        %v1246 = vld [vmem:[%s1230 + $0x3c] sm:$0xf]
        %v1263 = vunpack.c.l.b16 %v1231
        %v1264 = vunpack.c.l.b16 %v1232
        %v1265 = vunpack.c.l.b16 %v1233
        %v1266 = vunpack.c.l.b16 %v1234
        %v1267 = vunpack.c.l.b16 %v1235
        %v1268 = vunpack.c.l.b16 %v1236
        %v1269 = vunpack.c.l.b16 %v1237
        %v1270 = vunpack.c.l.b16 %v1238
        %v1271 = vunpack.c.l.b16 %v1239
        %v1272 = vunpack.c.l.b16 %v1240
        %v1273 = vunpack.c.l.b16 %v1241
        %v1274 = vunpack.c.l.b16 %v1242
        %v1275 = vunpack.c.l.b16 %v1243
        %v1276 = vunpack.c.l.b16 %v1244
        %v1277 = vunpack.c.l.b16 %v1245
        %v1278 = vunpack.c.l.b16 %v1246
        %v1279 = vpack.c.b16 %v1264, %v1263
        %v1280 = vpack.c.b16 %v1266, %v1265
        %v1281 = vpack.c.b16 %v1268, %v1267
        %v1282 = vpack.c.b16 %v1270, %v1269
        %v1283 = vpack.c.b16 %v1272, %v1271
        %v1284 = vpack.c.b16 %v1274, %v1273
        %v1285 = vpack.c.b16 %v1276, %v1275
        %v1286 = vpack.c.b16 %v1278, %v1277
        %1295 = vmatprep.subr.bf16.mxu0 0
        %1296 = vmatpush1.bf16.msra.mxu0 %v1286
        %1297 = vmatprep.subr.bf16.mxu0 0
        %1298 = vmatpush1.bf16.msra.mxu0 %v1285
        %1299 = vmatprep.subr.bf16.mxu0 0
        %1300 = vmatpush1.bf16.msra.mxu0 %v1284
        %1301 = vmatprep.subr.bf16.mxu0 0
        %1302 = vmatpush1.bf16.msra.mxu0 %v1283
        %1303 = vmatprep.subr.bf16.mxu0 0
        %1304 = vmatpush1.bf16.msra.mxu0 %v1282
        %1305 = vmatprep.subr.bf16.mxu0 0
        %1306 = vmatpush1.bf16.msra.mxu0 %v1281
        %1307 = vmatprep.subr.bf16.mxu0 0
        %1308 = vmatpush1.bf16.msra.mxu0 %v1280
        %1309 = vmatprep.subr.bf16.mxu0 0
        %1310 = vmatpush1.bf16.msra.mxu0 %v1279
        %1311 = vmatprep.subr.bf16.mxu0 0
        %1312 = vmatpush2.bf16.msra.mxu0 0
        %1313 = vmatprep.subr.bf16.mxu0 0
        %1314 = vmatpush2.bf16.msra.mxu0 0
        %1315 = vmatprep.subr.bf16.mxu0 0
        %1316 = vmatpush2.bf16.msra.mxu0 0
        %1317 = vmatprep.subr.bf16.mxu0 0
        %1318 = vmatpush2.bf16.msra.mxu0 0
        %1319 = vmatprep.subr.bf16.mxu0 0
        %1320 = vmatpush2.bf16.msra.mxu0 0
        %1321 = vmatprep.subr.bf16.mxu0 0
        %1322 = vmatpush2.bf16.msra.mxu0 0
        %1323 = vmatprep.subr.bf16.mxu0 0
        %1324 = vmatpush2.bf16.msra.mxu0 0
        %1325 = vmatprep.subr.bf16.mxu0 0
        %1326 = vmatpush2.bf16.msra.mxu0 0
        %1327 = vmatprep.mubr.bf16.mxu0 0
        %1328 = vmatmul.mubr.bf16.gmra.mxu0 %v1223
        %v1329 = vpop.f32.mrf.mxu0
        %v1330 = vadd.f32 0.0, %v1329
        %v1331 = vpop.f32.mrf.mxu0
        %v1332 = vpop.f32.mrf.mxu0
        %v1333 = vadd.f32 0.0, %v1332
        %v1334 = vpop.f32.mrf.mxu0
        %1335 = vmatprep.mubr.bf16.mxu0 0
        %1336 = vmatmul.mubr.bf16.gmra.mxu0 %v1224
        %v1337 = vpop.f32.mrf.mxu0
        %v1338 = vadd.f32 0.0, %v1337
        %v1339 = vpop.f32.mrf.mxu0
        %v1340 = vpop.f32.mrf.mxu0
        %v1341 = vadd.f32 0.0, %v1340
        %v1342 = vpop.f32.mrf.mxu0
        %1343 = vmatprep.mubr.bf16.mxu0 0
        %1344 = vmatmul.mubr.bf16.gmra.mxu0 %v1225
        %v1345 = vpop.f32.mrf.mxu0
        %v1346 = vadd.f32 0.0, %v1345
        %v1347 = vpop.f32.mrf.mxu0
        %v1348 = vpop.f32.mrf.mxu0
        %v1349 = vadd.f32 0.0, %v1348
        %v1350 = vpop.f32.mrf.mxu0
        %1351 = vmatprep.mubr.bf16.mxu0 0
        %1352 = vmatmul.mubr.bf16.gmra.mxu0 %v1226
        %v1353 = vpop.f32.mrf.mxu0
        %v1354 = vadd.f32 0.0, %v1353
        %v1355 = vpop.f32.mrf.mxu0
        %v1356 = vpop.f32.mrf.mxu0
        %v1357 = vadd.f32 0.0, %v1356
        %v1358 = vpop.f32.mrf.mxu0
        %1359 = vmatprep.mubr.bf16.mxu0 0
        %1360 = vmatmul.mubr.bf16.gmra.mxu0 %v1227
        %v1361 = vpop.f32.mrf.mxu0
        %v1362 = vadd.f32 0.0, %v1361
        %v1363 = vpop.f32.mrf.mxu0
        %v1364 = vpop.f32.mrf.mxu0
        %v1365 = vadd.f32 0.0, %v1364
        %v1366 = vpop.f32.mrf.mxu0
        %1367 = vmatprep.mubr.bf16.mxu0 0
        %1368 = vmatmul.mubr.bf16.gmra.mxu0 %v1228
        %v1369 = vpop.f32.mrf.mxu0
        %v1370 = vadd.f32 0.0, %v1369
        %v1371 = vpop.f32.mrf.mxu0
        %v1372 = vpop.f32.mrf.mxu0
        %v1373 = vadd.f32 0.0, %v1372
        %v1374 = vpop.f32.mrf.mxu0
        %1375 = vmatprep.mubr.bf16.mxu0 0
        %1376 = vmatmul.mubr.bf16.gmra.mxu0 %v1229
        %v1377 = vpop.f32.mrf.mxu0
        %v1378 = vadd.f32 0.0, %v1377
        %v1379 = vpop.f32.mrf.mxu0
        %v1380 = vpop.f32.mrf.mxu0
        %v1381 = vpop.f32.mrf.mxu0
        %1382 = vdwg.mxu0
        %v1383 = vadd.f32 %v1197, %v1330
        %v1384 = vadd.f32 %v1198, %v1333
        %v1385 = vadd.f32 %v1199, %v1338
        %v1386 = vadd.f32 %v1200, %v1341
        %v1387 = vadd.f32 %v1201, %v1346
        %v1388 = vadd.f32 %v1202, %v1349
        %v1389 = vadd.f32 %v1203, %v1354
        %v1390 = vadd.f32 %v1204, %v1357
        %v1391 = vadd.f32 %v1205, %v1362
        %v1392 = vadd.f32 %v1206, %v1365
        %v1393 = vadd.f32 %v1207, %v1370
        %v1394 = vadd.f32 %v1208, %v1373
        %v1395 = vadd.f32 %v1209, %v1378
        %v1396 = vld [vmem:[%s640 + $0xc] sm:$0xff]
        %v1397 = vld [vmem:[%s640 + $0x14] sm:$0xff]
        %v1398 = vld [vmem:[%s640 + $0x1c] sm:$0xff]
        %v1399 = vld [vmem:[%s640 + $0x24] sm:$0xff]
        %v1400 = vld [vmem:[%s640 + $0x2c] sm:$0xff]
        %v1401 = vld [vmem:[%s640 + $0x34] sm:$0xff]
        %v1402 = vld [vmem:[%s640 + $0x3c] sm:$0xff]
        %v1403 = vld [vmem:[%s640 + $0x44] sm:$0xff]
        %v1404 = vld [vmem:[%s640 + $0x4c] sm:$0xff]
        %v1405 = vld [vmem:[%s640 + $0x54] sm:$0xff]
        %v1406 = vld [vmem:[%s640 + $0x5c] sm:$0xff]
        %v1407 = vld [vmem:[%s640 + $0x64] sm:$0xff]
        %v1408 = vld [vmem:[%s640 + $0x6c] sm:$0xff]
        %v1409 = vpack.c.bf16 %v1397, %v1396
        %v1410 = vpack.c.bf16 %v1399, %v1398
        %v1411 = vpack.c.bf16 %v1401, %v1400
        %v1412 = vpack.c.bf16 %v1403, %v1402
        %v1413 = vpack.c.bf16 %v1405, %v1404
        %v1414 = vpack.c.bf16 %v1407, %v1406
        %v1415 = vpack.c.bf16 %v1408, %v1408
        %s1416 = scalar_lea.vmem %s5, 256
        %v1417 = vld [vmem:[%s1416] sm:$0xf]
        %v1418 = vld [vmem:[%s1416 + $0x4] sm:$0xf]
        %v1419 = vld [vmem:[%s1416 + $0x8] sm:$0xf]
        %v1420 = vld [vmem:[%s1416 + $0xc] sm:$0xf]
        %v1421 = vld [vmem:[%s1416 + $0x10] sm:$0xf]
        %v1422 = vld [vmem:[%s1416 + $0x14] sm:$0xf]
        %v1423 = vld [vmem:[%s1416 + $0x18] sm:$0xf]
        %v1424 = vld [vmem:[%s1416 + $0x1c] sm:$0xf]
        %v1425 = vld [vmem:[%s1416 + $0x20] sm:$0xf]
        %v1426 = vld [vmem:[%s1416 + $0x24] sm:$0xf]
        %v1427 = vld [vmem:[%s1416 + $0x28] sm:$0xf]
        %v1428 = vld [vmem:[%s1416 + $0x2c] sm:$0xf]
        %v1429 = vld [vmem:[%s1416 + $0x30] sm:$0xf]
        %v1430 = vld [vmem:[%s1416 + $0x34] sm:$0xf]
        %v1431 = vld [vmem:[%s1416 + $0x38] sm:$0xf]
        %v1432 = vld [vmem:[%s1416 + $0x3c] sm:$0xf]
        %v1449 = vunpack.c.l.b16 %v1417
        %v1450 = vunpack.c.l.b16 %v1418
        %v1451 = vunpack.c.l.b16 %v1419
        %v1452 = vunpack.c.l.b16 %v1420
        %v1453 = vunpack.c.l.b16 %v1421
        %v1454 = vunpack.c.l.b16 %v1422
        %v1455 = vunpack.c.l.b16 %v1423
        %v1456 = vunpack.c.l.b16 %v1424
        %v1457 = vunpack.c.l.b16 %v1425
        %v1458 = vunpack.c.l.b16 %v1426
        %v1459 = vunpack.c.l.b16 %v1427
        %v1460 = vunpack.c.l.b16 %v1428
        %v1461 = vunpack.c.l.b16 %v1429
        %v1462 = vunpack.c.l.b16 %v1430
        %v1463 = vunpack.c.l.b16 %v1431
        %v1464 = vunpack.c.l.b16 %v1432
        %v1465 = vpack.c.b16 %v1450, %v1449
        %v1466 = vpack.c.b16 %v1452, %v1451
        %v1467 = vpack.c.b16 %v1454, %v1453
        %v1468 = vpack.c.b16 %v1456, %v1455
        %v1469 = vpack.c.b16 %v1458, %v1457
        %v1470 = vpack.c.b16 %v1460, %v1459
        %v1471 = vpack.c.b16 %v1462, %v1461
        %v1472 = vpack.c.b16 %v1464, %v1463
        %1481 = vmatprep.subr.bf16.mxu0 0
        %1482 = vmatpush1.bf16.msra.mxu0 %v1472
        %1483 = vmatprep.subr.bf16.mxu0 0
        %1484 = vmatpush1.bf16.msra.mxu0 %v1471
        %1485 = vmatprep.subr.bf16.mxu0 0
        %1486 = vmatpush1.bf16.msra.mxu0 %v1470
        %1487 = vmatprep.subr.bf16.mxu0 0
        %1488 = vmatpush1.bf16.msra.mxu0 %v1469
        %1489 = vmatprep.subr.bf16.mxu0 0
        %1490 = vmatpush1.bf16.msra.mxu0 %v1468
        %1491 = vmatprep.subr.bf16.mxu0 0
        %1492 = vmatpush1.bf16.msra.mxu0 %v1467
        %1493 = vmatprep.subr.bf16.mxu0 0
        %1494 = vmatpush1.bf16.msra.mxu0 %v1466
        %1495 = vmatprep.subr.bf16.mxu0 0
        %1496 = vmatpush1.bf16.msra.mxu0 %v1465
        %1497 = vmatprep.subr.bf16.mxu0 0
        %1498 = vmatpush2.bf16.msra.mxu0 0
        %1499 = vmatprep.subr.bf16.mxu0 0
        %1500 = vmatpush2.bf16.msra.mxu0 0
        %1501 = vmatprep.subr.bf16.mxu0 0
        %1502 = vmatpush2.bf16.msra.mxu0 0
        %1503 = vmatprep.subr.bf16.mxu0 0
        %1504 = vmatpush2.bf16.msra.mxu0 0
        %1505 = vmatprep.subr.bf16.mxu0 0
        %1506 = vmatpush2.bf16.msra.mxu0 0
        %1507 = vmatprep.subr.bf16.mxu0 0
        %1508 = vmatpush2.bf16.msra.mxu0 0
        %1509 = vmatprep.subr.bf16.mxu0 0
        %1510 = vmatpush2.bf16.msra.mxu0 0
        %1511 = vmatprep.subr.bf16.mxu0 0
        %1512 = vmatpush2.bf16.msra.mxu0 0
        %1513 = vmatprep.mubr.bf16.mxu0 0
        %1514 = vmatmul.mubr.bf16.gmra.mxu0 %v1409
        %v1515 = vpop.f32.mrf.mxu0
        %v1516 = vadd.f32 0.0, %v1515
        %v1517 = vpop.f32.mrf.mxu0
        %v1518 = vpop.f32.mrf.mxu0
        %v1519 = vadd.f32 0.0, %v1518
        %v1520 = vpop.f32.mrf.mxu0
        %1521 = vmatprep.mubr.bf16.mxu0 0
        %1522 = vmatmul.mubr.bf16.gmra.mxu0 %v1410
        %v1523 = vpop.f32.mrf.mxu0
        %v1524 = vadd.f32 0.0, %v1523
        %v1525 = vpop.f32.mrf.mxu0
        %v1526 = vpop.f32.mrf.mxu0
        %v1527 = vadd.f32 0.0, %v1526
        %v1528 = vpop.f32.mrf.mxu0
        %1529 = vmatprep.mubr.bf16.mxu0 0
        %1530 = vmatmul.mubr.bf16.gmra.mxu0 %v1411
        %v1531 = vpop.f32.mrf.mxu0
        %v1532 = vadd.f32 0.0, %v1531
        %v1533 = vpop.f32.mrf.mxu0
        %v1534 = vpop.f32.mrf.mxu0
        %v1535 = vadd.f32 0.0, %v1534
        %v1536 = vpop.f32.mrf.mxu0
        %1537 = vmatprep.mubr.bf16.mxu0 0
        %1538 = vmatmul.mubr.bf16.gmra.mxu0 %v1412
        %v1539 = vpop.f32.mrf.mxu0
        %v1540 = vadd.f32 0.0, %v1539
        %v1541 = vpop.f32.mrf.mxu0
        %v1542 = vpop.f32.mrf.mxu0
        %v1543 = vadd.f32 0.0, %v1542
        %v1544 = vpop.f32.mrf.mxu0
        %1545 = vmatprep.mubr.bf16.mxu0 0
        %1546 = vmatmul.mubr.bf16.gmra.mxu0 %v1413
        %v1547 = vpop.f32.mrf.mxu0
        %v1548 = vadd.f32 0.0, %v1547
        %v1549 = vpop.f32.mrf.mxu0
        %v1550 = vpop.f32.mrf.mxu0
        %v1551 = vadd.f32 0.0, %v1550
        %v1552 = vpop.f32.mrf.mxu0
        %1553 = vmatprep.mubr.bf16.mxu0 0
        %1554 = vmatmul.mubr.bf16.gmra.mxu0 %v1414
        %v1555 = vpop.f32.mrf.mxu0
        %v1556 = vadd.f32 0.0, %v1555
        %v1557 = vpop.f32.mrf.mxu0
        %v1558 = vpop.f32.mrf.mxu0
        %v1559 = vadd.f32 0.0, %v1558
        %v1560 = vpop.f32.mrf.mxu0
        %1561 = vmatprep.mubr.bf16.mxu0 0
        %1562 = vmatmul.mubr.bf16.gmra.mxu0 %v1415
        %v1563 = vpop.f32.mrf.mxu0
        %v1564 = vadd.f32 0.0, %v1563
        %v1565 = vpop.f32.mrf.mxu0
        %v1566 = vpop.f32.mrf.mxu0
        %v1567 = vpop.f32.mrf.mxu0
        %1568 = vdwg.mxu0
        %v1569 = vadd.f32 %v1383, %v1516
        %v1570 = vadd.f32 %v1384, %v1519
        %v1571 = vadd.f32 %v1385, %v1524
        %v1572 = vadd.f32 %v1386, %v1527
        %v1573 = vadd.f32 %v1387, %v1532
        %v1574 = vadd.f32 %v1388, %v1535
        %v1575 = vadd.f32 %v1389, %v1540
        %v1576 = vadd.f32 %v1390, %v1543
        %v1577 = vadd.f32 %v1391, %v1548
        %v1578 = vadd.f32 %v1392, %v1551
        %v1579 = vadd.f32 %v1393, %v1556
        %v1580 = vadd.f32 %v1394, %v1559
        %v1581 = vadd.f32 %v1395, %v1564
        %v1582 = vld [vmem:[%s640 + $0xd] sm:$0xff]
        %v1583 = vld [vmem:[%s640 + $0x15] sm:$0xff]
        %v1584 = vld [vmem:[%s640 + $0x1d] sm:$0xff]
        %v1585 = vld [vmem:[%s640 + $0x25] sm:$0xff]
        %v1586 = vld [vmem:[%s640 + $0x2d] sm:$0xff]
        %v1587 = vld [vmem:[%s640 + $0x35] sm:$0xff]
        %v1588 = vld [vmem:[%s640 + $0x3d] sm:$0xff]
        %v1589 = vld [vmem:[%s640 + $0x45] sm:$0xff]
        %v1590 = vld [vmem:[%s640 + $0x4d] sm:$0xff]
        %v1591 = vld [vmem:[%s640 + $0x55] sm:$0xff]
        %v1592 = vld [vmem:[%s640 + $0x5d] sm:$0xff]
        %v1593 = vld [vmem:[%s640 + $0x65] sm:$0xff]
        %v1594 = vld [vmem:[%s640 + $0x6d] sm:$0xff]
        %v1595 = vpack.c.bf16 %v1583, %v1582
        %v1596 = vpack.c.bf16 %v1585, %v1584
        %v1597 = vpack.c.bf16 %v1587, %v1586
        %v1598 = vpack.c.bf16 %v1589, %v1588
        %v1599 = vpack.c.bf16 %v1591, %v1590
        %v1600 = vpack.c.bf16 %v1593, %v1592
        %v1601 = vpack.c.bf16 %v1594, %v1594
        %s1602 = scalar_lea.vmem %s5, 320
        %v1603 = vld [vmem:[%s1602] sm:$0xf]
        %v1604 = vld [vmem:[%s1602 + $0x4] sm:$0xf]
        %v1605 = vld [vmem:[%s1602 + $0x8] sm:$0xf]
        %v1606 = vld [vmem:[%s1602 + $0xc] sm:$0xf]
        %v1607 = vld [vmem:[%s1602 + $0x10] sm:$0xf]
        %v1608 = vld [vmem:[%s1602 + $0x14] sm:$0xf]
        %v1609 = vld [vmem:[%s1602 + $0x18] sm:$0xf]
        %v1610 = vld [vmem:[%s1602 + $0x1c] sm:$0xf]
        %v1611 = vld [vmem:[%s1602 + $0x20] sm:$0xf]
        %v1612 = vld [vmem:[%s1602 + $0x24] sm:$0xf]
        %v1613 = vld [vmem:[%s1602 + $0x28] sm:$0xf]
        %v1614 = vld [vmem:[%s1602 + $0x2c] sm:$0xf]
        %v1615 = vld [vmem:[%s1602 + $0x30] sm:$0xf]
        %v1616 = vld [vmem:[%s1602 + $0x34] sm:$0xf]
        %v1617 = vld [vmem:[%s1602 + $0x38] sm:$0xf]
        %v1618 = vld [vmem:[%s1602 + $0x3c] sm:$0xf]
        %v1635 = vunpack.c.l.b16 %v1603
        %v1636 = vunpack.c.l.b16 %v1604
        %v1637 = vunpack.c.l.b16 %v1605
        %v1638 = vunpack.c.l.b16 %v1606
        %v1639 = vunpack.c.l.b16 %v1607
        %v1640 = vunpack.c.l.b16 %v1608
        %v1641 = vunpack.c.l.b16 %v1609
        %v1642 = vunpack.c.l.b16 %v1610
        %v1643 = vunpack.c.l.b16 %v1611
        %v1644 = vunpack.c.l.b16 %v1612
        %v1645 = vunpack.c.l.b16 %v1613
        %v1646 = vunpack.c.l.b16 %v1614
        %v1647 = vunpack.c.l.b16 %v1615
        %v1648 = vunpack.c.l.b16 %v1616
        %v1649 = vunpack.c.l.b16 %v1617
        %v1650 = vunpack.c.l.b16 %v1618
        %v1651 = vpack.c.b16 %v1636, %v1635
        %v1652 = vpack.c.b16 %v1638, %v1637
        %v1653 = vpack.c.b16 %v1640, %v1639
        %v1654 = vpack.c.b16 %v1642, %v1641
        %v1655 = vpack.c.b16 %v1644, %v1643
        %v1656 = vpack.c.b16 %v1646, %v1645
        %v1657 = vpack.c.b16 %v1648, %v1647
        %v1658 = vpack.c.b16 %v1650, %v1649
        %1667 = vmatprep.subr.bf16.mxu0 0
        %1668 = vmatpush1.bf16.msra.mxu0 %v1658
        %1669 = vmatprep.subr.bf16.mxu0 0
        %1670 = vmatpush1.bf16.msra.mxu0 %v1657
        %1671 = vmatprep.subr.bf16.mxu0 0
        %1672 = vmatpush1.bf16.msra.mxu0 %v1656
        %1673 = vmatprep.subr.bf16.mxu0 0
        %1674 = vmatpush1.bf16.msra.mxu0 %v1655
        %1675 = vmatprep.subr.bf16.mxu0 0
        %1676 = vmatpush1.bf16.msra.mxu0 %v1654
        %1677 = vmatprep.subr.bf16.mxu0 0
        %1678 = vmatpush1.bf16.msra.mxu0 %v1653
        %1679 = vmatprep.subr.bf16.mxu0 0
        %1680 = vmatpush1.bf16.msra.mxu0 %v1652
        %1681 = vmatprep.subr.bf16.mxu0 0
        %1682 = vmatpush1.bf16.msra.mxu0 %v1651
        %1683 = vmatprep.subr.bf16.mxu0 0
        %1684 = vmatpush2.bf16.msra.mxu0 0
        %1685 = vmatprep.subr.bf16.mxu0 0
        %1686 = vmatpush2.bf16.msra.mxu0 0
        %1687 = vmatprep.subr.bf16.mxu0 0
        %1688 = vmatpush2.bf16.msra.mxu0 0
        %1689 = vmatprep.subr.bf16.mxu0 0
        %1690 = vmatpush2.bf16.msra.mxu0 0
        %1691 = vmatprep.subr.bf16.mxu0 0
        %1692 = vmatpush2.bf16.msra.mxu0 0
        %1693 = vmatprep.subr.bf16.mxu0 0
        %1694 = vmatpush2.bf16.msra.mxu0 0
        %1695 = vmatprep.subr.bf16.mxu0 0
        %1696 = vmatpush2.bf16.msra.mxu0 0
        %1697 = vmatprep.subr.bf16.mxu0 0
        %1698 = vmatpush2.bf16.msra.mxu0 0
        %1699 = vmatprep.mubr.bf16.mxu0 0
        %1700 = vmatmul.mubr.bf16.gmra.mxu0 %v1595
        %v1701 = vpop.f32.mrf.mxu0
        %v1702 = vadd.f32 0.0, %v1701
        %v1703 = vpop.f32.mrf.mxu0
        %v1704 = vpop.f32.mrf.mxu0
        %v1705 = vadd.f32 0.0, %v1704
        %v1706 = vpop.f32.mrf.mxu0
        %1707 = vmatprep.mubr.bf16.mxu0 0
        %1708 = vmatmul.mubr.bf16.gmra.mxu0 %v1596
        %v1709 = vpop.f32.mrf.mxu0
        %v1710 = vadd.f32 0.0, %v1709
        %v1711 = vpop.f32.mrf.mxu0
        %v1712 = vpop.f32.mrf.mxu0
        %v1713 = vadd.f32 0.0, %v1712
        %v1714 = vpop.f32.mrf.mxu0
        %1715 = vmatprep.mubr.bf16.mxu0 0
        %1716 = vmatmul.mubr.bf16.gmra.mxu0 %v1597
        %v1717 = vpop.f32.mrf.mxu0
        %v1718 = vadd.f32 0.0, %v1717
        %v1719 = vpop.f32.mrf.mxu0
        %v1720 = vpop.f32.mrf.mxu0
        %v1721 = vadd.f32 0.0, %v1720
        %v1722 = vpop.f32.mrf.mxu0
        %1723 = vmatprep.mubr.bf16.mxu0 0
        %1724 = vmatmul.mubr.bf16.gmra.mxu0 %v1598
        %v1725 = vpop.f32.mrf.mxu0
        %v1726 = vadd.f32 0.0, %v1725
        %v1727 = vpop.f32.mrf.mxu0
        %v1728 = vpop.f32.mrf.mxu0
        %v1729 = vadd.f32 0.0, %v1728
        %v1730 = vpop.f32.mrf.mxu0
        %1731 = vmatprep.mubr.bf16.mxu0 0
        %1732 = vmatmul.mubr.bf16.gmra.mxu0 %v1599
        %v1733 = vpop.f32.mrf.mxu0
        %v1734 = vadd.f32 0.0, %v1733
        %v1735 = vpop.f32.mrf.mxu0
        %v1736 = vpop.f32.mrf.mxu0
        %v1737 = vadd.f32 0.0, %v1736
        %v1738 = vpop.f32.mrf.mxu0
        %1739 = vmatprep.mubr.bf16.mxu0 0
        %1740 = vmatmul.mubr.bf16.gmra.mxu0 %v1600
        %v1741 = vpop.f32.mrf.mxu0
        %v1742 = vadd.f32 0.0, %v1741
        %v1743 = vpop.f32.mrf.mxu0
        %v1744 = vpop.f32.mrf.mxu0
        %v1745 = vadd.f32 0.0, %v1744
        %v1746 = vpop.f32.mrf.mxu0
        %1747 = vmatprep.mubr.bf16.mxu0 0
        %1748 = vmatmul.mubr.bf16.gmra.mxu0 %v1601
        %v1749 = vpop.f32.mrf.mxu0
        %v1750 = vadd.f32 0.0, %v1749
        %v1751 = vpop.f32.mrf.mxu0
        %v1752 = vpop.f32.mrf.mxu0
        %v1753 = vpop.f32.mrf.mxu0
        %1754 = vdwg.mxu0
        %v1755 = vadd.f32 %v1569, %v1702
        %v1756 = vadd.f32 %v1570, %v1705
        %v1757 = vadd.f32 %v1571, %v1710
        %v1758 = vadd.f32 %v1572, %v1713
        %v1759 = vadd.f32 %v1573, %v1718
        %v1760 = vadd.f32 %v1574, %v1721
        %v1761 = vadd.f32 %v1575, %v1726
        %v1762 = vadd.f32 %v1576, %v1729
        %v1763 = vadd.f32 %v1577, %v1734
        %v1764 = vadd.f32 %v1578, %v1737
        %v1765 = vadd.f32 %v1579, %v1742
        %v1766 = vadd.f32 %v1580, %v1745
        %v1767 = vadd.f32 %v1581, %v1750
        %v1768 = vld [vmem:[%s640 + $0x16] sm:$0xff]
        %v1769 = vld [vmem:[%s640 + $0x1e] sm:$0xff]
        %v1770 = vld [vmem:[%s640 + $0x26] sm:$0xff]
        %v1771 = vld [vmem:[%s640 + $0x2e] sm:$0xff]
        %v1772 = vld [vmem:[%s640 + $0x36] sm:$0xff]
        %v1773 = vld [vmem:[%s640 + $0x3e] sm:$0xff]
        %v1774 = vld [vmem:[%s640 + $0x46] sm:$0xff]
        %v1775 = vld [vmem:[%s640 + $0x4e] sm:$0xff]
        %v1776 = vld [vmem:[%s640 + $0x56] sm:$0xff]
        %v1777 = vld [vmem:[%s640 + $0x5e] sm:$0xff]
        %v1778 = vld [vmem:[%s640 + $0x66] sm:$0xff]
        %v1779 = vld [vmem:[%s640 + $0x6e] sm:$0xff]
        %v1780 = vld [vmem:[%s640 + $0x76] sm:$0xff]
        %v1781 = vpack.c.bf16 %v1769, %v1768
        %v1782 = vpack.c.bf16 %v1771, %v1770
        %v1783 = vpack.c.bf16 %v1773, %v1772
        %v1784 = vpack.c.bf16 %v1775, %v1774
        %v1785 = vpack.c.bf16 %v1777, %v1776
        %v1786 = vpack.c.bf16 %v1779, %v1778
        %v1787 = vpack.c.bf16 %v1780, %v1780
        %s1788 = scalar_lea.vmem %s5, 384
        %v1789 = vld [vmem:[%s1788] sm:$0xf]
        %v1790 = vld [vmem:[%s1788 + $0x4] sm:$0xf]
        %v1791 = vld [vmem:[%s1788 + $0x8] sm:$0xf]
        %v1792 = vld [vmem:[%s1788 + $0xc] sm:$0xf]
        %v1793 = vld [vmem:[%s1788 + $0x10] sm:$0xf]
        %v1794 = vld [vmem:[%s1788 + $0x14] sm:$0xf]
        %v1795 = vld [vmem:[%s1788 + $0x18] sm:$0xf]
        %v1796 = vld [vmem:[%s1788 + $0x1c] sm:$0xf]
        %v1797 = vld [vmem:[%s1788 + $0x20] sm:$0xf]
        %v1798 = vld [vmem:[%s1788 + $0x24] sm:$0xf]
        %v1799 = vld [vmem:[%s1788 + $0x28] sm:$0xf]
        %v1800 = vld [vmem:[%s1788 + $0x2c] sm:$0xf]
        %v1801 = vld [vmem:[%s1788 + $0x30] sm:$0xf]
        %v1802 = vld [vmem:[%s1788 + $0x34] sm:$0xf]
        %v1803 = vld [vmem:[%s1788 + $0x38] sm:$0xf]
        %v1804 = vld [vmem:[%s1788 + $0x3c] sm:$0xf]
        %v1821 = vunpack.c.l.b16 %v1789
        %v1822 = vunpack.c.l.b16 %v1790
        %v1823 = vunpack.c.l.b16 %v1791
        %v1824 = vunpack.c.l.b16 %v1792
        %v1825 = vunpack.c.l.b16 %v1793
        %v1826 = vunpack.c.l.b16 %v1794
        %v1827 = vunpack.c.l.b16 %v1795
        %v1828 = vunpack.c.l.b16 %v1796
        %v1829 = vunpack.c.l.b16 %v1797
        %v1830 = vunpack.c.l.b16 %v1798
        %v1831 = vunpack.c.l.b16 %v1799
        %v1832 = vunpack.c.l.b16 %v1800
        %v1833 = vunpack.c.l.b16 %v1801
        %v1834 = vunpack.c.l.b16 %v1802
        %v1835 = vunpack.c.l.b16 %v1803
        %v1836 = vunpack.c.l.b16 %v1804
        %v1837 = vpack.c.b16 %v1822, %v1821
        %v1838 = vpack.c.b16 %v1824, %v1823
        %v1839 = vpack.c.b16 %v1826, %v1825
        %v1840 = vpack.c.b16 %v1828, %v1827
        %v1841 = vpack.c.b16 %v1830, %v1829
        %v1842 = vpack.c.b16 %v1832, %v1831
        %v1843 = vpack.c.b16 %v1834, %v1833
        %v1844 = vpack.c.b16 %v1836, %v1835
        %1853 = vmatprep.subr.bf16.mxu0 0
        %1854 = vmatpush1.bf16.msra.mxu0 %v1844
        %1855 = vmatprep.subr.bf16.mxu0 0
        %1856 = vmatpush1.bf16.msra.mxu0 %v1843
        %1857 = vmatprep.subr.bf16.mxu0 0
        %1858 = vmatpush1.bf16.msra.mxu0 %v1842
        %1859 = vmatprep.subr.bf16.mxu0 0
        %1860 = vmatpush1.bf16.msra.mxu0 %v1841
        %1861 = vmatprep.subr.bf16.mxu0 0
        %1862 = vmatpush1.bf16.msra.mxu0 %v1840
        %1863 = vmatprep.subr.bf16.mxu0 0
        %1864 = vmatpush1.bf16.msra.mxu0 %v1839
        %1865 = vmatprep.subr.bf16.mxu0 0
        %1866 = vmatpush1.bf16.msra.mxu0 %v1838
        %1867 = vmatprep.subr.bf16.mxu0 0
        %1868 = vmatpush1.bf16.msra.mxu0 %v1837
        %1869 = vmatprep.subr.bf16.mxu0 0
        %1870 = vmatpush2.bf16.msra.mxu0 0
        %1871 = vmatprep.subr.bf16.mxu0 0
        %1872 = vmatpush2.bf16.msra.mxu0 0
        %1873 = vmatprep.subr.bf16.mxu0 0
        %1874 = vmatpush2.bf16.msra.mxu0 0
        %1875 = vmatprep.subr.bf16.mxu0 0
        %1876 = vmatpush2.bf16.msra.mxu0 0
        %1877 = vmatprep.subr.bf16.mxu0 0
        %1878 = vmatpush2.bf16.msra.mxu0 0
        %1879 = vmatprep.subr.bf16.mxu0 0
        %1880 = vmatpush2.bf16.msra.mxu0 0
        %1881 = vmatprep.subr.bf16.mxu0 0
        %1882 = vmatpush2.bf16.msra.mxu0 0
        %1883 = vmatprep.subr.bf16.mxu0 0
        %1884 = vmatpush2.bf16.msra.mxu0 0
        %1885 = vmatprep.mubr.bf16.mxu0 0
        %1886 = vmatmul.mubr.bf16.gmra.mxu0 %v1781
        %v1887 = vpop.f32.mrf.mxu0
        %v1888 = vadd.f32 0.0, %v1887
        %v1889 = vpop.f32.mrf.mxu0
        %v1890 = vpop.f32.mrf.mxu0
        %v1891 = vadd.f32 0.0, %v1890
        %v1892 = vpop.f32.mrf.mxu0
        %1893 = vmatprep.mubr.bf16.mxu0 0
        %1894 = vmatmul.mubr.bf16.gmra.mxu0 %v1782
        %v1895 = vpop.f32.mrf.mxu0
        %v1896 = vadd.f32 0.0, %v1895
        %v1897 = vpop.f32.mrf.mxu0
        %v1898 = vpop.f32.mrf.mxu0
        %v1899 = vadd.f32 0.0, %v1898
        %v1900 = vpop.f32.mrf.mxu0
        %1901 = vmatprep.mubr.bf16.mxu0 0
        %1902 = vmatmul.mubr.bf16.gmra.mxu0 %v1783
        %v1903 = vpop.f32.mrf.mxu0
        %v1904 = vadd.f32 0.0, %v1903
        %v1905 = vpop.f32.mrf.mxu0
        %v1906 = vpop.f32.mrf.mxu0
        %v1907 = vadd.f32 0.0, %v1906
        %v1908 = vpop.f32.mrf.mxu0
        %1909 = vmatprep.mubr.bf16.mxu0 0
        %1910 = vmatmul.mubr.bf16.gmra.mxu0 %v1784
        %v1911 = vpop.f32.mrf.mxu0
        %v1912 = vadd.f32 0.0, %v1911
        %v1913 = vpop.f32.mrf.mxu0
        %v1914 = vpop.f32.mrf.mxu0
        %v1915 = vadd.f32 0.0, %v1914
        %v1916 = vpop.f32.mrf.mxu0
        %1917 = vmatprep.mubr.bf16.mxu0 0
        %1918 = vmatmul.mubr.bf16.gmra.mxu0 %v1785
        %v1919 = vpop.f32.mrf.mxu0
        %v1920 = vadd.f32 0.0, %v1919
        %v1921 = vpop.f32.mrf.mxu0
        %v1922 = vpop.f32.mrf.mxu0
        %v1923 = vadd.f32 0.0, %v1922
        %v1924 = vpop.f32.mrf.mxu0
        %1925 = vmatprep.mubr.bf16.mxu0 0
        %1926 = vmatmul.mubr.bf16.gmra.mxu0 %v1786
        %v1927 = vpop.f32.mrf.mxu0
        %v1928 = vadd.f32 0.0, %v1927
        %v1929 = vpop.f32.mrf.mxu0
        %v1930 = vpop.f32.mrf.mxu0
        %v1931 = vadd.f32 0.0, %v1930
        %v1932 = vpop.f32.mrf.mxu0
        %1933 = vmatprep.mubr.bf16.mxu0 0
        %1934 = vmatmul.mubr.bf16.gmra.mxu0 %v1787
        %v1935 = vpop.f32.mrf.mxu0
        %v1936 = vadd.f32 0.0, %v1935
        %v1937 = vpop.f32.mrf.mxu0
        %v1938 = vpop.f32.mrf.mxu0
        %v1939 = vpop.f32.mrf.mxu0
        %1940 = vdwg.mxu0
        %v1941 = vadd.f32 %v1755, %v1888
        %v1942 = vadd.f32 %v1756, %v1891
        %v1943 = vadd.f32 %v1757, %v1896
        %v1944 = vadd.f32 %v1758, %v1899
        %v1945 = vadd.f32 %v1759, %v1904
        %v1946 = vadd.f32 %v1760, %v1907
        %v1947 = vadd.f32 %v1761, %v1912
        %v1948 = vadd.f32 %v1762, %v1915
        %v1949 = vadd.f32 %v1763, %v1920
        %v1950 = vadd.f32 %v1764, %v1923
        %v1951 = vadd.f32 %v1765, %v1928
        %v1952 = vadd.f32 %v1766, %v1931
        %v1953 = vadd.f32 %v1767, %v1936
        %v1954 = vld [vmem:[%s640 + $0x17] sm:$0xff]
        %v1955 = vld [vmem:[%s640 + $0x1f] sm:$0xff]
        %v1956 = vld [vmem:[%s640 + $0x27] sm:$0xff]
        %v1957 = vld [vmem:[%s640 + $0x2f] sm:$0xff]
        %v1958 = vld [vmem:[%s640 + $0x37] sm:$0xff]
        %v1959 = vld [vmem:[%s640 + $0x3f] sm:$0xff]
        %v1960 = vld [vmem:[%s640 + $0x47] sm:$0xff]
        %v1961 = vld [vmem:[%s640 + $0x4f] sm:$0xff]
        %v1962 = vld [vmem:[%s640 + $0x57] sm:$0xff]
        %v1963 = vld [vmem:[%s640 + $0x5f] sm:$0xff]
        %v1964 = vld [vmem:[%s640 + $0x67] sm:$0xff]
        %v1965 = vld [vmem:[%s640 + $0x6f] sm:$0xff]
        %v1966 = vld [vmem:[%s640 + $0x77] sm:$0xff]
        %v1967 = vpack.c.bf16 %v1955, %v1954
        %v1968 = vpack.c.bf16 %v1957, %v1956
        %v1969 = vpack.c.bf16 %v1959, %v1958
        %v1970 = vpack.c.bf16 %v1961, %v1960
        %v1971 = vpack.c.bf16 %v1963, %v1962
        %v1972 = vpack.c.bf16 %v1965, %v1964
        %v1973 = vpack.c.bf16 %v1966, %v1966
        %s1974 = scalar_lea.vmem %s5, 448
        %v1975 = vld [vmem:[%s1974] sm:$0xf]
        %v1976 = vld [vmem:[%s1974 + $0x4] sm:$0xf]
        %v1977 = vld [vmem:[%s1974 + $0x8] sm:$0xf]
        %v1978 = vld [vmem:[%s1974 + $0xc] sm:$0xf]
        %v1979 = vld [vmem:[%s1974 + $0x10] sm:$0xf]
        %v1980 = vld [vmem:[%s1974 + $0x14] sm:$0xf]
        %v1981 = vld [vmem:[%s1974 + $0x18] sm:$0xf]
        %v1982 = vld [vmem:[%s1974 + $0x1c] sm:$0xf]
        %v1983 = vld [vmem:[%s1974 + $0x20] sm:$0xf]
        %v1984 = vld [vmem:[%s1974 + $0x24] sm:$0xf]
        %v1985 = vld [vmem:[%s1974 + $0x28] sm:$0xf]
        %v1986 = vld [vmem:[%s1974 + $0x2c] sm:$0xf]
        %v1987 = vld [vmem:[%s1974 + $0x30] sm:$0xf]
        %v1988 = vld [vmem:[%s1974 + $0x34] sm:$0xf]
        %v1989 = vld [vmem:[%s1974 + $0x38] sm:$0xf]
        %v1990 = vld [vmem:[%s1974 + $0x3c] sm:$0xf]
        %v2007 = vunpack.c.l.b16 %v1975
        %v2008 = vunpack.c.l.b16 %v1976
        %v2009 = vunpack.c.l.b16 %v1977
        %v2010 = vunpack.c.l.b16 %v1978
        %v2011 = vunpack.c.l.b16 %v1979
        %v2012 = vunpack.c.l.b16 %v1980
        %v2013 = vunpack.c.l.b16 %v1981
        %v2014 = vunpack.c.l.b16 %v1982
        %v2015 = vunpack.c.l.b16 %v1983
        %v2016 = vunpack.c.l.b16 %v1984
        %v2017 = vunpack.c.l.b16 %v1985
        %v2018 = vunpack.c.l.b16 %v1986
        %v2019 = vunpack.c.l.b16 %v1987
        %v2020 = vunpack.c.l.b16 %v1988
        %v2021 = vunpack.c.l.b16 %v1989
        %v2022 = vunpack.c.l.b16 %v1990
        %v2023 = vpack.c.b16 %v2008, %v2007
        %v2024 = vpack.c.b16 %v2010, %v2009
        %v2025 = vpack.c.b16 %v2012, %v2011
        %v2026 = vpack.c.b16 %v2014, %v2013
        %v2027 = vpack.c.b16 %v2016, %v2015
        %v2028 = vpack.c.b16 %v2018, %v2017
        %v2029 = vpack.c.b16 %v2020, %v2019
        %v2030 = vpack.c.b16 %v2022, %v2021
        %2039 = vmatprep.subr.bf16.mxu0 0
        %2040 = vmatpush1.bf16.msra.mxu0 %v2030
        %2041 = vmatprep.subr.bf16.mxu0 0
        %2042 = vmatpush1.bf16.msra.mxu0 %v2029
        %2043 = vmatprep.subr.bf16.mxu0 0
        %2044 = vmatpush1.bf16.msra.mxu0 %v2028
        %2045 = vmatprep.subr.bf16.mxu0 0
        %2046 = vmatpush1.bf16.msra.mxu0 %v2027
        %2047 = vmatprep.subr.bf16.mxu0 0
        %2048 = vmatpush1.bf16.msra.mxu0 %v2026
        %2049 = vmatprep.subr.bf16.mxu0 0
        %2050 = vmatpush1.bf16.msra.mxu0 %v2025
        %2051 = vmatprep.subr.bf16.mxu0 0
        %2052 = vmatpush1.bf16.msra.mxu0 %v2024
        %2053 = vmatprep.subr.bf16.mxu0 0
        %2054 = vmatpush1.bf16.msra.mxu0 %v2023
        %2055 = vmatprep.subr.bf16.mxu0 0
        %2056 = vmatpush2.bf16.msra.mxu0 0
        %2057 = vmatprep.subr.bf16.mxu0 0
        %2058 = vmatpush2.bf16.msra.mxu0 0
        %2059 = vmatprep.subr.bf16.mxu0 0
        %2060 = vmatpush2.bf16.msra.mxu0 0
        %2061 = vmatprep.subr.bf16.mxu0 0
        %2062 = vmatpush2.bf16.msra.mxu0 0
        %2063 = vmatprep.subr.bf16.mxu0 0
        %2064 = vmatpush2.bf16.msra.mxu0 0
        %2065 = vmatprep.subr.bf16.mxu0 0
        %2066 = vmatpush2.bf16.msra.mxu0 0
        %2067 = vmatprep.subr.bf16.mxu0 0
        %2068 = vmatpush2.bf16.msra.mxu0 0
        %2069 = vmatprep.subr.bf16.mxu0 0
        %2070 = vmatpush2.bf16.msra.mxu0 0
        %2071 = vmatprep.mubr.bf16.mxu0 0
        %2072 = vmatmul.mubr.bf16.gmra.mxu0 %v1967
        %v2073 = vpop.f32.mrf.mxu0
        %v2074 = vadd.f32 0.0, %v2073
        %v2075 = vpop.f32.mrf.mxu0
        %v2076 = vpop.f32.mrf.mxu0
        %v2077 = vadd.f32 0.0, %v2076
        %v2078 = vpop.f32.mrf.mxu0
        %2079 = vmatprep.mubr.bf16.mxu0 0
        %2080 = vmatmul.mubr.bf16.gmra.mxu0 %v1968
        %v2081 = vpop.f32.mrf.mxu0
        %v2082 = vadd.f32 0.0, %v2081
        %v2083 = vpop.f32.mrf.mxu0
        %v2084 = vpop.f32.mrf.mxu0
        %v2085 = vadd.f32 0.0, %v2084
        %v2086 = vpop.f32.mrf.mxu0
        %2087 = vmatprep.mubr.bf16.mxu0 0
        %2088 = vmatmul.mubr.bf16.gmra.mxu0 %v1969
        %v2089 = vpop.f32.mrf.mxu0
        %v2090 = vadd.f32 0.0, %v2089
        %v2091 = vpop.f32.mrf.mxu0
        %v2092 = vpop.f32.mrf.mxu0
        %v2093 = vadd.f32 0.0, %v2092
        %v2094 = vpop.f32.mrf.mxu0
        %2095 = vmatprep.mubr.bf16.mxu0 0
        %2096 = vmatmul.mubr.bf16.gmra.mxu0 %v1970
        %v2097 = vpop.f32.mrf.mxu0
        %v2098 = vadd.f32 0.0, %v2097
        %v2099 = vpop.f32.mrf.mxu0
        %v2100 = vpop.f32.mrf.mxu0
        %v2101 = vadd.f32 0.0, %v2100
        %v2102 = vpop.f32.mrf.mxu0
        %2103 = vmatprep.mubr.bf16.mxu0 0
        %2104 = vmatmul.mubr.bf16.gmra.mxu0 %v1971
        %v2105 = vpop.f32.mrf.mxu0
        %v2106 = vadd.f32 0.0, %v2105
        %v2107 = vpop.f32.mrf.mxu0
        %v2108 = vpop.f32.mrf.mxu0
        %v2109 = vadd.f32 0.0, %v2108
        %v2110 = vpop.f32.mrf.mxu0
        %2111 = vmatprep.mubr.bf16.mxu0 0
        %2112 = vmatmul.mubr.bf16.gmra.mxu0 %v1972
        %v2113 = vpop.f32.mrf.mxu0
        %v2114 = vadd.f32 0.0, %v2113
        %v2115 = vpop.f32.mrf.mxu0
        %v2116 = vpop.f32.mrf.mxu0
        %v2117 = vadd.f32 0.0, %v2116
        %v2118 = vpop.f32.mrf.mxu0
        %2119 = vmatprep.mubr.bf16.mxu0 0
        %2120 = vmatmul.mubr.bf16.gmra.mxu0 %v1973
        %v2121 = vpop.f32.mrf.mxu0
        %v2122 = vadd.f32 0.0, %v2121
        %v2123 = vpop.f32.mrf.mxu0
        %v2124 = vpop.f32.mrf.mxu0
        %v2125 = vpop.f32.mrf.mxu0
        %2126 = vdwg.mxu0
        %v2127 = vadd.f32 %v1941, %v2074
        %v2128 = vadd.f32 %v1942, %v2077
        %v2129 = vadd.f32 %v1943, %v2082
        %v2130 = vadd.f32 %v1944, %v2085
        %v2131 = vadd.f32 %v1945, %v2090
        %v2132 = vadd.f32 %v1946, %v2093
        %v2133 = vadd.f32 %v1947, %v2098
        %v2134 = vadd.f32 %v1948, %v2101
        %v2135 = vadd.f32 %v1949, %v2106
        %v2136 = vadd.f32 %v1950, %v2109
        %v2137 = vadd.f32 %v1951, %v2114
        %v2138 = vadd.f32 %v1952, %v2117
        %v2139 = vadd.f32 %v1953, %v2122
        %v2140 = vld [vmem:[%s640 + $0x18] sm:$0xff]
        %v2141 = vld [vmem:[%s640 + $0x20] sm:$0xff]
        %v2142 = vld [vmem:[%s640 + $0x28] sm:$0xff]
        %v2143 = vld [vmem:[%s640 + $0x30] sm:$0xff]
        %v2144 = vld [vmem:[%s640 + $0x38] sm:$0xff]
        %v2145 = vld [vmem:[%s640 + $0x40] sm:$0xff]
        %v2146 = vld [vmem:[%s640 + $0x48] sm:$0xff]
        %v2147 = vld [vmem:[%s640 + $0x50] sm:$0xff]
        %v2148 = vld [vmem:[%s640 + $0x58] sm:$0xff]
        %v2149 = vld [vmem:[%s640 + $0x60] sm:$0xff]
        %v2150 = vld [vmem:[%s640 + $0x68] sm:$0xff]
        %v2151 = vld [vmem:[%s640 + $0x70] sm:$0xff]
        %v2152 = vld [vmem:[%s640 + $0x78] sm:$0xff]
        %v2153 = vpack.c.bf16 %v2141, %v2140
        %v2154 = vpack.c.bf16 %v2143, %v2142
        %v2155 = vpack.c.bf16 %v2145, %v2144
        %v2156 = vpack.c.bf16 %v2147, %v2146
        %v2157 = vpack.c.bf16 %v2149, %v2148
        %v2158 = vpack.c.bf16 %v2151, %v2150
        %v2159 = vpack.c.bf16 %v2152, %v2152
        %s2160 = scalar_lea.vmem %s5, 512
        %v2161 = vld [vmem:[%s2160] sm:$0xf]
        %v2162 = vld [vmem:[%s2160 + $0x4] sm:$0xf]
        %v2163 = vld [vmem:[%s2160 + $0x8] sm:$0xf]
        %v2164 = vld [vmem:[%s2160 + $0xc] sm:$0xf]
        %v2165 = vld [vmem:[%s2160 + $0x10] sm:$0xf]
        %v2166 = vld [vmem:[%s2160 + $0x14] sm:$0xf]
        %v2167 = vld [vmem:[%s2160 + $0x18] sm:$0xf]
        %v2168 = vld [vmem:[%s2160 + $0x1c] sm:$0xf]
        %v2169 = vld [vmem:[%s2160 + $0x20] sm:$0xf]
        %v2170 = vld [vmem:[%s2160 + $0x24] sm:$0xf]
        %v2171 = vld [vmem:[%s2160 + $0x28] sm:$0xf]
        %v2172 = vld [vmem:[%s2160 + $0x2c] sm:$0xf]
        %v2173 = vld [vmem:[%s2160 + $0x30] sm:$0xf]
        %v2174 = vld [vmem:[%s2160 + $0x34] sm:$0xf]
        %v2175 = vld [vmem:[%s2160 + $0x38] sm:$0xf]
        %v2176 = vld [vmem:[%s2160 + $0x3c] sm:$0xf]
        %v2193 = vunpack.c.l.b16 %v2161
        %v2194 = vunpack.c.l.b16 %v2162
        %v2195 = vunpack.c.l.b16 %v2163
        %v2196 = vunpack.c.l.b16 %v2164
        %v2197 = vunpack.c.l.b16 %v2165
        %v2198 = vunpack.c.l.b16 %v2166
        %v2199 = vunpack.c.l.b16 %v2167
        %v2200 = vunpack.c.l.b16 %v2168
        %v2201 = vunpack.c.l.b16 %v2169
        %v2202 = vunpack.c.l.b16 %v2170
        %v2203 = vunpack.c.l.b16 %v2171
        %v2204 = vunpack.c.l.b16 %v2172
        %v2205 = vunpack.c.l.b16 %v2173
        %v2206 = vunpack.c.l.b16 %v2174
        %v2207 = vunpack.c.l.b16 %v2175
        %v2208 = vunpack.c.l.b16 %v2176
        %v2209 = vpack.c.b16 %v2194, %v2193
        %v2210 = vpack.c.b16 %v2196, %v2195
        %v2211 = vpack.c.b16 %v2198, %v2197
        %v2212 = vpack.c.b16 %v2200, %v2199
        %v2213 = vpack.c.b16 %v2202, %v2201
        %v2214 = vpack.c.b16 %v2204, %v2203
        %v2215 = vpack.c.b16 %v2206, %v2205
        %v2216 = vpack.c.b16 %v2208, %v2207
        %2225 = vmatprep.subr.bf16.mxu0 0
        %2226 = vmatpush1.bf16.msra.mxu0 %v2216
        %2227 = vmatprep.subr.bf16.mxu0 0
        %2228 = vmatpush1.bf16.msra.mxu0 %v2215
        %2229 = vmatprep.subr.bf16.mxu0 0
        %2230 = vmatpush1.bf16.msra.mxu0 %v2214
        %2231 = vmatprep.subr.bf16.mxu0 0
        %2232 = vmatpush1.bf16.msra.mxu0 %v2213
        %2233 = vmatprep.subr.bf16.mxu0 0
        %2234 = vmatpush1.bf16.msra.mxu0 %v2212
        %2235 = vmatprep.subr.bf16.mxu0 0
        %2236 = vmatpush1.bf16.msra.mxu0 %v2211
        %2237 = vmatprep.subr.bf16.mxu0 0
        %2238 = vmatpush1.bf16.msra.mxu0 %v2210
        %2239 = vmatprep.subr.bf16.mxu0 0
        %2240 = vmatpush1.bf16.msra.mxu0 %v2209
        %2241 = vmatprep.subr.bf16.mxu0 0
        %2242 = vmatpush2.bf16.msra.mxu0 0
        %2243 = vmatprep.subr.bf16.mxu0 0
        %2244 = vmatpush2.bf16.msra.mxu0 0
        %2245 = vmatprep.subr.bf16.mxu0 0
        %2246 = vmatpush2.bf16.msra.mxu0 0
        %2247 = vmatprep.subr.bf16.mxu0 0
        %2248 = vmatpush2.bf16.msra.mxu0 0
        %2249 = vmatprep.subr.bf16.mxu0 0
        %2250 = vmatpush2.bf16.msra.mxu0 0
        %2251 = vmatprep.subr.bf16.mxu0 0
        %2252 = vmatpush2.bf16.msra.mxu0 0
        %2253 = vmatprep.subr.bf16.mxu0 0
        %2254 = vmatpush2.bf16.msra.mxu0 0
        %2255 = vmatprep.subr.bf16.mxu0 0
        %2256 = vmatpush2.bf16.msra.mxu0 0
        %2257 = vmatprep.mubr.bf16.mxu0 0
        %2258 = vmatmul.mubr.bf16.gmra.mxu0 %v2153
        %v2259 = vpop.f32.mrf.mxu0
        %v2260 = vadd.f32 0.0, %v2259
        %v2261 = vpop.f32.mrf.mxu0
        %v2262 = vpop.f32.mrf.mxu0
        %v2263 = vadd.f32 0.0, %v2262
        %v2264 = vpop.f32.mrf.mxu0
        %2265 = vmatprep.mubr.bf16.mxu0 0
        %2266 = vmatmul.mubr.bf16.gmra.mxu0 %v2154
        %v2267 = vpop.f32.mrf.mxu0
        %v2268 = vadd.f32 0.0, %v2267
        %v2269 = vpop.f32.mrf.mxu0
        %v2270 = vpop.f32.mrf.mxu0
        %v2271 = vadd.f32 0.0, %v2270
        %v2272 = vpop.f32.mrf.mxu0
        %2273 = vmatprep.mubr.bf16.mxu0 0
        %2274 = vmatmul.mubr.bf16.gmra.mxu0 %v2155
        %v2275 = vpop.f32.mrf.mxu0
        %v2276 = vadd.f32 0.0, %v2275
        %v2277 = vpop.f32.mrf.mxu0
        %v2278 = vpop.f32.mrf.mxu0
        %v2279 = vadd.f32 0.0, %v2278
        %v2280 = vpop.f32.mrf.mxu0
        %2281 = vmatprep.mubr.bf16.mxu0 0
        %2282 = vmatmul.mubr.bf16.gmra.mxu0 %v2156
        %v2283 = vpop.f32.mrf.mxu0
        %v2284 = vadd.f32 0.0, %v2283
        %v2285 = vpop.f32.mrf.mxu0
        %v2286 = vpop.f32.mrf.mxu0
        %v2287 = vadd.f32 0.0, %v2286
        %v2288 = vpop.f32.mrf.mxu0
        %2289 = vmatprep.mubr.bf16.mxu0 0
        %2290 = vmatmul.mubr.bf16.gmra.mxu0 %v2157
        %v2291 = vpop.f32.mrf.mxu0
        %v2292 = vadd.f32 0.0, %v2291
        %v2293 = vpop.f32.mrf.mxu0
        %v2294 = vpop.f32.mrf.mxu0
        %v2295 = vadd.f32 0.0, %v2294
        %v2296 = vpop.f32.mrf.mxu0
        %2297 = vmatprep.mubr.bf16.mxu0 0
        %2298 = vmatmul.mubr.bf16.gmra.mxu0 %v2158
        %v2299 = vpop.f32.mrf.mxu0
        %v2300 = vadd.f32 0.0, %v2299
        %v2301 = vpop.f32.mrf.mxu0
        %v2302 = vpop.f32.mrf.mxu0
        %v2303 = vadd.f32 0.0, %v2302
        %v2304 = vpop.f32.mrf.mxu0
        %2305 = vmatprep.mubr.bf16.mxu0 0
        %2306 = vmatmul.mubr.bf16.gmra.mxu0 %v2159
        %v2307 = vpop.f32.mrf.mxu0
        %v2308 = vadd.f32 0.0, %v2307
        %v2309 = vpop.f32.mrf.mxu0
        %v2310 = vpop.f32.mrf.mxu0
        %v2311 = vpop.f32.mrf.mxu0
        %2312 = vdwg.mxu0
        %v2313 = vadd.f32 %v2127, %v2260
        %v2314 = vadd.f32 %v2128, %v2263
        %v2315 = vadd.f32 %v2129, %v2268
        %v2316 = vadd.f32 %v2130, %v2271
        %v2317 = vadd.f32 %v2131, %v2276
        %v2318 = vadd.f32 %v2132, %v2279
        %v2319 = vadd.f32 %v2133, %v2284
        %v2320 = vadd.f32 %v2134, %v2287
        %v2321 = vadd.f32 %v2135, %v2292
        %v2322 = vadd.f32 %v2136, %v2295
        %v2323 = vadd.f32 %v2137, %v2300
        %v2324 = vadd.f32 %v2138, %v2303
        %v2325 = vadd.f32 %v2139, %v2308
        %v2326 = vmin.f32 %v2313, 0.0
        %v2327 = vmin.f32 %v2314, 0.0
        %v2328 = vmin.f32 %v2315, 0.0
        %v2329 = vmin.f32 %v2316, 0.0
        %v2330 = vmin.f32 %v2317, 0.0
        %v2331 = vmin.f32 %v2318, 0.0
        %v2332 = vmin.f32 %v2319, 0.0
        %v2333 = vmin.f32 %v2320, 0.0
        %v2334 = vmin.f32 %v2321, 0.0
        %v2335 = vmin.f32 %v2322, 0.0
        %v2336 = vmin.f32 %v2323, 0.0
        %v2337 = vmin.f32 %v2324, 0.0
        %v2338 = vmin.f32 %v2325, 0.0
        %v2339 = vmul.f32 %v2326, 1.442695
        %v2340 = vpow.pop %v2339
        %v2341 = vmul.f32 %v2327, 1.442695
        %v2342 = vpow.pop %v2341
        %v2343 = vmul.f32 %v2328, 1.442695
        %v2344 = vpow.pop %v2343
        %v2345 = vmul.f32 %v2329, 1.442695
        %v2346 = vpow.pop %v2345
        %v2347 = vmul.f32 %v2330, 1.442695
        %v2348 = vpow.pop %v2347
        %v2349 = vmul.f32 %v2331, 1.442695
        %v2350 = vpow.pop %v2349
        %v2351 = vmul.f32 %v2332, 1.442695
        %v2352 = vpow.pop %v2351
        %v2353 = vmul.f32 %v2333, 1.442695
        %v2354 = vpow.pop %v2353
        %v2355 = vmul.f32 %v2334, 1.442695
        %v2356 = vpow.pop %v2355
        %v2357 = vmul.f32 %v2335, 1.442695
        %v2358 = vpow.pop %v2357
        %v2359 = vmul.f32 %v2336, 1.442695
        %v2360 = vpow.pop %v2359
        %v2361 = vmul.f32 %v2337, 1.442695
        %v2362 = vpow.pop %v2361
        %v2363 = vmul.f32 %v2338, 1.442695
        %v2364 = vpow.pop %v2363
        %v2365 = vsub.f32 %v2340, 1.0
        %v2366 = vsub.f32 %v2342, 1.0
        %v2367 = vsub.f32 %v2344, 1.0
        %v2368 = vsub.f32 %v2346, 1.0
        %v2369 = vsub.f32 %v2348, 1.0
        %v2370 = vsub.f32 %v2350, 1.0
        %v2371 = vsub.f32 %v2352, 1.0
        %v2372 = vsub.f32 %v2354, 1.0
        %v2373 = vsub.f32 %v2356, 1.0
        %v2374 = vsub.f32 %v2358, 1.0
        %v2375 = vsub.f32 %v2360, 1.0
        %v2376 = vsub.f32 %v2362, 1.0
        %v2377 = vsub.f32 %v2364, 1.0
        %v2378 = vmul.f32 %v2365, 1.6732632
        %v2379 = vmul.f32 %v2366, 1.6732632
        %v2380 = vmul.f32 %v2367, 1.6732632
        %v2381 = vmul.f32 %v2368, 1.6732632
        %v2382 = vmul.f32 %v2369, 1.6732632
        %v2383 = vmul.f32 %v2370, 1.6732632
        %v2384 = vmul.f32 %v2371, 1.6732632
        %v2385 = vmul.f32 %v2372, 1.6732632
        %v2386 = vmul.f32 %v2373, 1.6732632
        %v2387 = vmul.f32 %v2374, 1.6732632
        %v2388 = vmul.f32 %v2375, 1.6732632
        %v2389 = vmul.f32 %v2376, 1.6732632
        %v2390 = vmul.f32 %v2377, 1.6732632
        %vm2391 = vcmp.gt.f32.partialorder %v2313, 0.0
        %vm2392 = vcmp.gt.f32.partialorder %v2314, 0.0
        %vm2393 = vcmp.gt.f32.partialorder %v2315, 0.0
        %vm2394 = vcmp.gt.f32.partialorder %v2316, 0.0
        %vm2395 = vcmp.gt.f32.partialorder %v2317, 0.0
        %vm2396 = vcmp.gt.f32.partialorder %v2318, 0.0
        %vm2397 = vcmp.gt.f32.partialorder %v2319, 0.0
        %vm2398 = vcmp.gt.f32.partialorder %v2320, 0.0
        %vm2399 = vcmp.gt.f32.partialorder %v2321, 0.0
        %vm2400 = vcmp.gt.f32.partialorder %v2322, 0.0
        %vm2401 = vcmp.gt.f32.partialorder %v2323, 0.0
        %vm2402 = vcmp.gt.f32.partialorder %v2324, 0.0
        %vm2403 = vcmp.gt.f32.partialorder %v2325, 0.0
        %v2404 = vsel %vm2391, %v2313, %v2378
        %v2405 = vsel %vm2392, %v2314, %v2379
        %v2406 = vsel %vm2393, %v2315, %v2380
        %v2407 = vsel %vm2394, %v2316, %v2381
        %v2408 = vsel %vm2395, %v2317, %v2382
        %v2409 = vsel %vm2396, %v2318, %v2383
        %v2410 = vsel %vm2397, %v2319, %v2384
        %v2411 = vsel %vm2398, %v2320, %v2385
        %v2412 = vsel %vm2399, %v2321, %v2386
        %v2413 = vsel %vm2400, %v2322, %v2387
        %v2414 = vsel %vm2401, %v2323, %v2388
        %v2415 = vsel %vm2402, %v2324, %v2389
        %v2416 = vsel %vm2403, %v2325, %v2390
        %v2417 = vmul.f32 %v2404, 1.050701
        %v2418 = vmul.f32 %v2405, 1.050701
        %v2419 = vmul.f32 %v2406, 1.050701
        %v2420 = vmul.f32 %v2407, 1.050701
        %v2421 = vmul.f32 %v2408, 1.050701
        %v2422 = vmul.f32 %v2409, 1.050701
        %v2423 = vmul.f32 %v2410, 1.050701
        %v2424 = vmul.f32 %v2411, 1.050701
        %v2425 = vmul.f32 %v2412, 1.050701
        %v2426 = vmul.f32 %v2413, 1.050701
        %v2427 = vmul.f32 %v2414, 1.050701
        %v2428 = vmul.f32 %v2415, 1.050701
        %v2429 = vmul.f32 %v2416, 1.050701
        %v2430 = vpack.c.bf16 %v2418, %v2417
        %v2431 = vpack.c.bf16 %v2420, %v2419
        %v2432 = vpack.c.bf16 %v2422, %v2421
        %v2433 = vpack.c.bf16 %v2424, %v2423
        %v2434 = vpack.c.bf16 %v2426, %v2425
        %v2435 = vpack.c.bf16 %v2428, %v2427
        %v2436 = vpack.c.bf16 %v2429, %v2429
        %v2437 = vld [vmem:[%s1] sm:$0xf]
        %v2438 = vld [vmem:[%s1 + $0x4] sm:$0xf]
        %v2439 = vld [vmem:[%s1 + $0x8] sm:$0xf]
        %v2440 = vld [vmem:[%s1 + $0xc] sm:$0xf]
        %v2441 = vld [vmem:[%s1 + $0x10] sm:$0xf]
        %v2442 = vld [vmem:[%s1 + $0x14] sm:$0xf]
        %v2443 = vld [vmem:[%s1 + $0x18] sm:$0xf]
        %v2444 = vld [vmem:[%s1 + $0x1c] sm:$0xf]
        %v2445 = vld [vmem:[%s1 + $0x20] sm:$0xf]
        %v2446 = vld [vmem:[%s1 + $0x24] sm:$0xf]
        %v2447 = vld [vmem:[%s1 + $0x28] sm:$0xf]
        %v2448 = vld [vmem:[%s1 + $0x2c] sm:$0xf]
        %v2449 = vld [vmem:[%s1 + $0x30] sm:$0xf]
        %v2450 = vld [vmem:[%s1 + $0x34] sm:$0xf]
        %v2451 = vld [vmem:[%s1 + $0x38] sm:$0xf]
        %v2452 = vld [vmem:[%s1 + $0x3c] sm:$0xf]
        %v2469 = vunpack.c.l.b16 %v2437
        %v2470 = vunpack.c.l.b16 %v2438
        %v2471 = vunpack.c.l.b16 %v2439
        %v2472 = vunpack.c.l.b16 %v2440
        %v2473 = vunpack.c.l.b16 %v2441
        %v2474 = vunpack.c.l.b16 %v2442
        %v2475 = vunpack.c.l.b16 %v2443
        %v2476 = vunpack.c.l.b16 %v2444
        %v2477 = vunpack.c.l.b16 %v2445
        %v2478 = vunpack.c.l.b16 %v2446
        %v2479 = vunpack.c.l.b16 %v2447
        %v2480 = vunpack.c.l.b16 %v2448
        %v2481 = vunpack.c.l.b16 %v2449
        %v2482 = vunpack.c.l.b16 %v2450
        %v2483 = vunpack.c.l.b16 %v2451
        %v2484 = vunpack.c.l.b16 %v2452
        %v2485 = vpack.c.b16 %v2470, %v2469
        %v2486 = vpack.c.b16 %v2472, %v2471
        %v2487 = vpack.c.b16 %v2474, %v2473
        %v2488 = vpack.c.b16 %v2476, %v2475
        %v2489 = vpack.c.b16 %v2478, %v2477
        %v2490 = vpack.c.b16 %v2480, %v2479
        %v2491 = vpack.c.b16 %v2482, %v2481
        %v2492 = vpack.c.b16 %v2484, %v2483
        %vm2493 = vcmask 850944
        %v2495 = vsel %vm2493, %v2485, 0
        %v2498 = vsel %vm2493, %v2486, 0
        %v2501 = vsel %vm2493, %v2487, 0
        %v2504 = vsel %vm2493, %v2488, 0
        %v2507 = vsel %vm2493, %v2489, 0
        %v2510 = vsel %vm2493, %v2490, 0
        %v2513 = vsel %vm2493, %v2491, 0
        %v2516 = vsel %vm2493, %v2492, 0
        %vm2518 = vcmask 1043456
        %v2520 = vsel %vm2518, %v2436, 0
        %2522 = vmatprep.subr.bf16.mxu0 0
        %2523 = vmatpush1.bf16.msra.mxu0 0
        %2524 = vmatprep.subr.bf16.mxu0 0
        %2525 = vmatpush1.bf16.msra.mxu0 %v2520
        %2526 = vmatprep.subr.bf16.mxu0 0
        %2527 = vmatpush1.bf16.msra.mxu0 %v2435
        %2528 = vmatprep.subr.bf16.mxu0 0
        %2529 = vmatpush1.bf16.msra.mxu0 %v2434
        %2530 = vmatprep.subr.bf16.mxu0 0
        %2531 = vmatpush1.bf16.msra.mxu0 %v2433
        %2532 = vmatprep.subr.bf16.mxu0 0
        %2533 = vmatpush1.bf16.msra.mxu0 %v2432
        %2534 = vmatprep.subr.bf16.mxu0 0
        %2535 = vmatpush1.bf16.msra.mxu0 %v2431
        %2536 = vmatprep.subr.bf16.mxu0 0
        %2537 = vmatpush1.bf16.msra.mxu0 %v2430
        %2538 = vmatprep.subr.bf16.mxu0 0
        %2539 = vmatpush2.bf16.msra.mxu0 0
        %2540 = vmatprep.subr.bf16.mxu0 0
        %2541 = vmatpush2.bf16.msra.mxu0 0
        %2542 = vmatprep.subr.bf16.mxu0 0
        %2543 = vmatpush2.bf16.msra.mxu0 0
        %2544 = vmatprep.subr.bf16.mxu0 0
        %2545 = vmatpush2.bf16.msra.mxu0 0
        %2546 = vmatprep.subr.bf16.mxu0 0
        %2547 = vmatpush2.bf16.msra.mxu0 0
        %2548 = vmatprep.subr.bf16.mxu0 0
        %2549 = vmatpush2.bf16.msra.mxu0 0
        %2550 = vmatprep.subr.bf16.mxu0 0
        %2551 = vmatpush2.bf16.msra.mxu0 0
        %2552 = vmatprep.subr.bf16.mxu0 0
        %2553 = vmatpush2.bf16.msra.mxu0 0
        %2554 = vmatprep.mubr.bf16.mxu0 0
        %2555 = vmatmul.mubr.bf16.gmra.mxu0 %v2495
        %v2556 = vpop.f32.mrf.mxu0
        %v2557 = vadd.f32 0.0, %v2556
        %v2558 = vpop.f32.mrf.mxu0
        %v2559 = vpop.f32.mrf.mxu0
        %v2560 = vadd.f32 0.0, %v2559
        %v2561 = vpop.f32.mrf.mxu0
        %2562 = vmatprep.mubr.bf16.mxu0 0
        %2563 = vmatmul.mubr.bf16.gmra.mxu0 %v2498
        %v2564 = vpop.f32.mrf.mxu0
        %v2565 = vadd.f32 0.0, %v2564
        %v2566 = vpop.f32.mrf.mxu0
        %v2567 = vpop.f32.mrf.mxu0
        %v2568 = vadd.f32 0.0, %v2567
        %v2569 = vpop.f32.mrf.mxu0
        %2570 = vmatprep.mubr.bf16.mxu0 0
        %2571 = vmatmul.mubr.bf16.gmra.mxu0 %v2501
        %v2572 = vpop.f32.mrf.mxu0
        %v2573 = vadd.f32 0.0, %v2572
        %v2574 = vpop.f32.mrf.mxu0
        %v2575 = vpop.f32.mrf.mxu0
        %v2576 = vadd.f32 0.0, %v2575
        %v2577 = vpop.f32.mrf.mxu0
        %2578 = vmatprep.mubr.bf16.mxu0 0
        %2579 = vmatmul.mubr.bf16.gmra.mxu0 %v2504
        %v2580 = vpop.f32.mrf.mxu0
        %v2581 = vadd.f32 0.0, %v2580
        %v2582 = vpop.f32.mrf.mxu0
        %v2583 = vpop.f32.mrf.mxu0
        %v2584 = vadd.f32 0.0, %v2583
        %v2585 = vpop.f32.mrf.mxu0
        %2586 = vmatprep.mubr.bf16.mxu0 0
        %2587 = vmatmul.mubr.bf16.gmra.mxu0 %v2507
        %v2588 = vpop.f32.mrf.mxu0
        %v2589 = vadd.f32 0.0, %v2588
        %v2590 = vpop.f32.mrf.mxu0
        %v2591 = vpop.f32.mrf.mxu0
        %v2592 = vadd.f32 0.0, %v2591
        %v2593 = vpop.f32.mrf.mxu0
        %2594 = vmatprep.mubr.bf16.mxu0 0
        %2595 = vmatmul.mubr.bf16.gmra.mxu0 %v2510
        %v2596 = vpop.f32.mrf.mxu0
        %v2597 = vadd.f32 0.0, %v2596
        %v2598 = vpop.f32.mrf.mxu0
        %v2599 = vpop.f32.mrf.mxu0
        %v2600 = vadd.f32 0.0, %v2599
        %v2601 = vpop.f32.mrf.mxu0
        %2602 = vmatprep.mubr.bf16.mxu0 0
        %2603 = vmatmul.mubr.bf16.gmra.mxu0 %v2513
        %v2604 = vpop.f32.mrf.mxu0
        %v2605 = vadd.f32 0.0, %v2604
        %v2606 = vpop.f32.mrf.mxu0
        %v2607 = vpop.f32.mrf.mxu0
        %v2608 = vadd.f32 0.0, %v2607
        %v2609 = vpop.f32.mrf.mxu0
        %2610 = vmatprep.mubr.bf16.mxu0 0
        %2611 = vmatmul.mubr.bf16.gmra.mxu0 %v2516
        %v2612 = vpop.f32.mrf.mxu0
        %v2613 = vadd.f32 0.0, %v2612
        %v2614 = vpop.f32.mrf.mxu0
        %v2615 = vpop.f32.mrf.mxu0
        %v2616 = vadd.f32 0.0, %v2615
        %v2617 = vpop.f32.mrf.mxu0
        %2618 = vdwg.mxu0
        %2619 = vst [vmem:[#allocation2] sm:$0xff] %v2557
        %2620 = vst [vmem:[#allocation2 + $0x8] sm:$0xff] %v2560
        %2621 = vst [vmem:[#allocation2 + $0x10] sm:$0xff] %v2565
        %2622 = vst [vmem:[#allocation2 + $0x18] sm:$0xff] %v2568
        %2623 = vst [vmem:[#allocation2 + $0x20] sm:$0xff] %v2573
        %2624 = vst [vmem:[#allocation2 + $0x28] sm:$0xff] %v2576
        %2625 = vst [vmem:[#allocation2 + $0x30] sm:$0xff] %v2581
        %2626 = vst [vmem:[#allocation2 + $0x38] sm:$0xff] %v2584
        %2627 = vst [vmem:[#allocation2 + $0x40] sm:$0xff] %v2589
        %2628 = vst [vmem:[#allocation2 + $0x48] sm:$0xff] %v2592
        %2629 = vst [vmem:[#allocation2 + $0x50] sm:$0xff] %v2597
        %2630 = vst [vmem:[#allocation2 + $0x58] sm:$0xff] %v2600
        %2631 = vst [vmem:[#allocation2 + $0x60] sm:$0xff] %v2605
        %2632 = vst [vmem:[#allocation2 + $0x68] sm:$0xff] %v2608
        %2633 = vst [vmem:[#allocation2 + $0x70] sm:$0xff] %v2613
        %2634 = vst [vmem:[#allocation2 + $0x78] sm:$0xff] %v2616
        %v2635 = vld [vmem:[%s8] sm:$0x1]
        %v2637 = vlaneseq
        %v2638 = vshrl.u32 %v2637, 7
        %v2639 = vsub.s32 0, %v2638
        %v2640 = vrot.slane %v2635, %v2639
        %v2642 = vld [vmem:[#allocation2] sm:$0xff]
        %v2643 = vld [vmem:[#allocation2 + $0x8] sm:$0xff]
        %v2644 = vld [vmem:[#allocation2 + $0x10] sm:$0xff]
        %v2645 = vld [vmem:[#allocation2 + $0x18] sm:$0xff]
        %v2646 = vld [vmem:[#allocation2 + $0x20] sm:$0xff]
        %v2647 = vld [vmem:[#allocation2 + $0x28] sm:$0xff]
        %v2648 = vld [vmem:[#allocation2 + $0x30] sm:$0xff]
        %v2649 = vld [vmem:[#allocation2 + $0x38] sm:$0xff]
        %v2650 = vld [vmem:[#allocation2 + $0x40] sm:$0xff]
        %v2651 = vld [vmem:[#allocation2 + $0x48] sm:$0xff]
        %v2652 = vld [vmem:[#allocation2 + $0x50] sm:$0xff]
        %v2653 = vld [vmem:[#allocation2 + $0x58] sm:$0xff]
        %v2654 = vld [vmem:[#allocation2 + $0x60] sm:$0xff]
        %v2655 = vpack.c.bf16 %v2643, %v2642
        %v2656 = vpack.c.bf16 %v2645, %v2644
        %v2657 = vpack.c.bf16 %v2647, %v2646
        %v2658 = vpack.c.bf16 %v2649, %v2648
        %v2659 = vpack.c.bf16 %v2651, %v2650
        %v2660 = vpack.c.bf16 %v2653, %v2652
        %v2661 = vpack.c.bf16 %v2654, %v2654
        %v2662 = vld [vmem:[#allocation6] sm:$0xf]
        %v2663 = vld [vmem:[#allocation6 + $0x4] sm:$0xf]
        %v2664 = vld [vmem:[#allocation6 + $0x8] sm:$0xf]
        %v2665 = vld [vmem:[#allocation6 + $0xc] sm:$0xf]
        %v2666 = vld [vmem:[#allocation6 + $0x10] sm:$0xf]
        %v2667 = vld [vmem:[#allocation6 + $0x14] sm:$0xf]
        %v2668 = vld [vmem:[#allocation6 + $0x18] sm:$0xf]
        %v2669 = vld [vmem:[#allocation6 + $0x1c] sm:$0xf]
        %v2670 = vld [vmem:[#allocation6 + $0x20] sm:$0xf]
        %v2671 = vld [vmem:[#allocation6 + $0x24] sm:$0xf]
        %v2672 = vld [vmem:[#allocation6 + $0x28] sm:$0xf]
        %v2673 = vld [vmem:[#allocation6 + $0x2c] sm:$0xf]
        %v2674 = vld [vmem:[#allocation6 + $0x30] sm:$0xf]
        %v2675 = vld [vmem:[#allocation6 + $0x34] sm:$0xf]
        %v2676 = vld [vmem:[#allocation6 + $0x38] sm:$0xf]
        %v2677 = vld [vmem:[#allocation6 + $0x3c] sm:$0xf]
        %v2694 = vunpack.c.l.b16 %v2662
        %v2695 = vunpack.c.l.b16 %v2663
        %v2696 = vunpack.c.l.b16 %v2664
        %v2697 = vunpack.c.l.b16 %v2665
        %v2698 = vunpack.c.l.b16 %v2666
        %v2699 = vunpack.c.l.b16 %v2667
        %v2700 = vunpack.c.l.b16 %v2668
        %v2701 = vunpack.c.l.b16 %v2669
        %v2702 = vunpack.c.l.b16 %v2670
        %v2703 = vunpack.c.l.b16 %v2671
        %v2704 = vunpack.c.l.b16 %v2672
        %v2705 = vunpack.c.l.b16 %v2673
        %v2706 = vunpack.c.l.b16 %v2674
        %v2707 = vunpack.c.l.b16 %v2675
        %v2708 = vunpack.c.l.b16 %v2676
        %v2709 = vunpack.c.l.b16 %v2677
        %v2710 = vpack.c.b16 %v2695, %v2694
        %v2711 = vpack.c.b16 %v2697, %v2696
        %v2712 = vpack.c.b16 %v2699, %v2698
        %v2713 = vpack.c.b16 %v2701, %v2700
        %v2714 = vpack.c.b16 %v2703, %v2702
        %v2715 = vpack.c.b16 %v2705, %v2704
        %v2716 = vpack.c.b16 %v2707, %v2706
        %v2717 = vpack.c.b16 %v2709, %v2708
        %2726 = vmatprep.subr.bf16.mxu0 0
        %2727 = vmatpush1.bf16.msra.mxu0 %v2717
        %2728 = vmatprep.subr.bf16.mxu0 0
        %2729 = vmatpush1.bf16.msra.mxu0 %v2716
        %2730 = vmatprep.subr.bf16.mxu0 0
        %2731 = vmatpush1.bf16.msra.mxu0 %v2715
        %2732 = vmatprep.subr.bf16.mxu0 0
        %2733 = vmatpush1.bf16.msra.mxu0 %v2714
        %2734 = vmatprep.subr.bf16.mxu0 0
        %2735 = vmatpush1.bf16.msra.mxu0 %v2713
        %2736 = vmatprep.subr.bf16.mxu0 0
        %2737 = vmatpush1.bf16.msra.mxu0 %v2712
        %2738 = vmatprep.subr.bf16.mxu0 0
        %2739 = vmatpush1.bf16.msra.mxu0 %v2711
        %2740 = vmatprep.subr.bf16.mxu0 0
        %2741 = vmatpush1.bf16.msra.mxu0 %v2710
        %2742 = vmatprep.subr.bf16.mxu0 0
        %2743 = vmatpush2.bf16.msra.mxu0 0
        %2744 = vmatprep.subr.bf16.mxu0 0
        %2745 = vmatpush2.bf16.msra.mxu0 0
        %2746 = vmatprep.subr.bf16.mxu0 0
        %2747 = vmatpush2.bf16.msra.mxu0 0
        %2748 = vmatprep.subr.bf16.mxu0 0
        %2749 = vmatpush2.bf16.msra.mxu0 0
        %2750 = vmatprep.subr.bf16.mxu0 0
        %2751 = vmatpush2.bf16.msra.mxu0 0
        %2752 = vmatprep.subr.bf16.mxu0 0
        %2753 = vmatpush2.bf16.msra.mxu0 0
        %2754 = vmatprep.subr.bf16.mxu0 0
        %2755 = vmatpush2.bf16.msra.mxu0 0
        %2756 = vmatprep.subr.bf16.mxu0 0
        %2757 = vmatpush2.bf16.msra.mxu0 0
        %2758 = vmatprep.mubr.bf16.mxu0 0
        %2759 = vmatmul.mubr.bf16.gmra.mxu0 %v2655
        %v2760 = vpop.f32.mrf.mxu0
        %v2761 = vadd.f32 0.0, %v2760
        %v2762 = vpop.f32.mrf.mxu0
        %v2763 = vpop.f32.mrf.mxu0
        %v2764 = vadd.f32 0.0, %v2763
        %v2765 = vpop.f32.mrf.mxu0
        %2766 = vmatprep.mubr.bf16.mxu0 0
        %2767 = vmatmul.mubr.bf16.gmra.mxu0 %v2656
        %v2768 = vpop.f32.mrf.mxu0
        %v2769 = vadd.f32 0.0, %v2768
        %v2770 = vpop.f32.mrf.mxu0
        %v2771 = vpop.f32.mrf.mxu0
        %v2772 = vadd.f32 0.0, %v2771
        %v2773 = vpop.f32.mrf.mxu0
        %2774 = vmatprep.mubr.bf16.mxu0 0
        %2775 = vmatmul.mubr.bf16.gmra.mxu0 %v2657
        %v2776 = vpop.f32.mrf.mxu0
        %v2777 = vadd.f32 0.0, %v2776
        %v2778 = vpop.f32.mrf.mxu0
        %v2779 = vpop.f32.mrf.mxu0
        %v2780 = vadd.f32 0.0, %v2779
        %v2781 = vpop.f32.mrf.mxu0
        %2782 = vmatprep.mubr.bf16.mxu0 0
        %2783 = vmatmul.mubr.bf16.gmra.mxu0 %v2658
        %v2784 = vpop.f32.mrf.mxu0
        %v2785 = vadd.f32 0.0, %v2784
        %v2786 = vpop.f32.mrf.mxu0
        %v2787 = vpop.f32.mrf.mxu0
        %v2788 = vadd.f32 0.0, %v2787
        %v2789 = vpop.f32.mrf.mxu0
        %2790 = vmatprep.mubr.bf16.mxu0 0
        %2791 = vmatmul.mubr.bf16.gmra.mxu0 %v2659
        %v2792 = vpop.f32.mrf.mxu0
        %v2793 = vadd.f32 0.0, %v2792
        %v2794 = vpop.f32.mrf.mxu0
        %v2795 = vpop.f32.mrf.mxu0
        %v2796 = vadd.f32 0.0, %v2795
        %v2797 = vpop.f32.mrf.mxu0
        %2798 = vmatprep.mubr.bf16.mxu0 0
        %2799 = vmatmul.mubr.bf16.gmra.mxu0 %v2660
        %v2800 = vpop.f32.mrf.mxu0
        %v2801 = vadd.f32 0.0, %v2800
        %v2802 = vpop.f32.mrf.mxu0
        %v2803 = vpop.f32.mrf.mxu0
        %v2804 = vadd.f32 0.0, %v2803
        %v2805 = vpop.f32.mrf.mxu0
        %2806 = vmatprep.mubr.bf16.mxu0 0
        %2807 = vmatmul.mubr.bf16.gmra.mxu0 %v2661
        %v2808 = vpop.f32.mrf.mxu0
        %v2809 = vadd.f32 0.0, %v2808
        %v2810 = vpop.f32.mrf.mxu0
        %v2811 = vpop.f32.mrf.mxu0
        %v2812 = vpop.f32.mrf.mxu0
        %2813 = vdwg.mxu0
        %v2814 = vadd.f32 %v2640, %v2761
        %v2815 = vadd.f32 %v2640, %v2764
        %v2816 = vadd.f32 %v2640, %v2769
        %v2817 = vadd.f32 %v2640, %v2772
        %v2818 = vadd.f32 %v2640, %v2777
        %v2819 = vadd.f32 %v2640, %v2780
        %v2820 = vadd.f32 %v2640, %v2785
        %v2821 = vadd.f32 %v2640, %v2788
        %v2822 = vadd.f32 %v2640, %v2793
        %v2823 = vadd.f32 %v2640, %v2796
        %v2824 = vadd.f32 %v2640, %v2801
        %v2825 = vadd.f32 %v2640, %v2804
        %v2826 = vadd.f32 %v2640, %v2809
        %v2827 = vld [vmem:[#allocation2 + $0x1] sm:$0xff]
        %v2828 = vld [vmem:[#allocation2 + $0x9] sm:$0xff]
        %v2829 = vld [vmem:[#allocation2 + $0x11] sm:$0xff]
        %v2830 = vld [vmem:[#allocation2 + $0x19] sm:$0xff]
        %v2831 = vld [vmem:[#allocation2 + $0x21] sm:$0xff]
        %v2832 = vld [vmem:[#allocation2 + $0x29] sm:$0xff]
        %v2833 = vld [vmem:[#allocation2 + $0x31] sm:$0xff]
        %v2834 = vld [vmem:[#allocation2 + $0x39] sm:$0xff]
        %v2835 = vld [vmem:[#allocation2 + $0x41] sm:$0xff]
        %v2836 = vld [vmem:[#allocation2 + $0x49] sm:$0xff]
        %v2837 = vld [vmem:[#allocation2 + $0x51] sm:$0xff]
        %v2838 = vld [vmem:[#allocation2 + $0x59] sm:$0xff]
        %v2839 = vld [vmem:[#allocation2 + $0x61] sm:$0xff]
        %v2840 = vpack.c.bf16 %v2828, %v2827
        %v2841 = vpack.c.bf16 %v2830, %v2829
        %v2842 = vpack.c.bf16 %v2832, %v2831
        %v2843 = vpack.c.bf16 %v2834, %v2833
        %v2844 = vpack.c.bf16 %v2836, %v2835
        %v2845 = vpack.c.bf16 %v2838, %v2837
        %v2846 = vpack.c.bf16 %v2839, %v2839
        %s2847 = scalar_lea.vmem [#allocation6], 64
        %v2848 = vld [vmem:[%s2847] sm:$0xf]
        %v2849 = vld [vmem:[%s2847 + $0x4] sm:$0xf]
        %v2850 = vld [vmem:[%s2847 + $0x8] sm:$0xf]
        %v2851 = vld [vmem:[%s2847 + $0xc] sm:$0xf]
        %v2852 = vld [vmem:[%s2847 + $0x10] sm:$0xf]
        %v2853 = vld [vmem:[%s2847 + $0x14] sm:$0xf]
        %v2854 = vld [vmem:[%s2847 + $0x18] sm:$0xf]
        %v2855 = vld [vmem:[%s2847 + $0x1c] sm:$0xf]
        %v2856 = vld [vmem:[%s2847 + $0x20] sm:$0xf]
        %v2857 = vld [vmem:[%s2847 + $0x24] sm:$0xf]
        %v2858 = vld [vmem:[%s2847 + $0x28] sm:$0xf]
        %v2859 = vld [vmem:[%s2847 + $0x2c] sm:$0xf]
        %v2860 = vld [vmem:[%s2847 + $0x30] sm:$0xf]
        %v2861 = vld [vmem:[%s2847 + $0x34] sm:$0xf]
        %v2862 = vld [vmem:[%s2847 + $0x38] sm:$0xf]
        %v2863 = vld [vmem:[%s2847 + $0x3c] sm:$0xf]
        %v2880 = vunpack.c.l.b16 %v2848
        %v2881 = vunpack.c.l.b16 %v2849
        %v2882 = vunpack.c.l.b16 %v2850
        %v2883 = vunpack.c.l.b16 %v2851
        %v2884 = vunpack.c.l.b16 %v2852
        %v2885 = vunpack.c.l.b16 %v2853
        %v2886 = vunpack.c.l.b16 %v2854
        %v2887 = vunpack.c.l.b16 %v2855
        %v2888 = vunpack.c.l.b16 %v2856
        %v2889 = vunpack.c.l.b16 %v2857
        %v2890 = vunpack.c.l.b16 %v2858
        %v2891 = vunpack.c.l.b16 %v2859
        %v2892 = vunpack.c.l.b16 %v2860
        %v2893 = vunpack.c.l.b16 %v2861
        %v2894 = vunpack.c.l.b16 %v2862
        %v2895 = vunpack.c.l.b16 %v2863
        %v2896 = vpack.c.b16 %v2881, %v2880
        %v2897 = vpack.c.b16 %v2883, %v2882
        %v2898 = vpack.c.b16 %v2885, %v2884
        %v2899 = vpack.c.b16 %v2887, %v2886
        %v2900 = vpack.c.b16 %v2889, %v2888
        %v2901 = vpack.c.b16 %v2891, %v2890
        %v2902 = vpack.c.b16 %v2893, %v2892
        %v2903 = vpack.c.b16 %v2895, %v2894
        %2912 = vmatprep.subr.bf16.mxu0 0
        %2913 = vmatpush1.bf16.msra.mxu0 %v2903
        %2914 = vmatprep.subr.bf16.mxu0 0
        %2915 = vmatpush1.bf16.msra.mxu0 %v2902
        %2916 = vmatprep.subr.bf16.mxu0 0
        %2917 = vmatpush1.bf16.msra.mxu0 %v2901
        %2918 = vmatprep.subr.bf16.mxu0 0
        %2919 = vmatpush1.bf16.msra.mxu0 %v2900
        %2920 = vmatprep.subr.bf16.mxu0 0
        %2921 = vmatpush1.bf16.msra.mxu0 %v2899
        %2922 = vmatprep.subr.bf16.mxu0 0
        %2923 = vmatpush1.bf16.msra.mxu0 %v2898
        %2924 = vmatprep.subr.bf16.mxu0 0
        %2925 = vmatpush1.bf16.msra.mxu0 %v2897
        %2926 = vmatprep.subr.bf16.mxu0 0
        %2927 = vmatpush1.bf16.msra.mxu0 %v2896
        %2928 = vmatprep.subr.bf16.mxu0 0
        %2929 = vmatpush2.bf16.msra.mxu0 0
        %2930 = vmatprep.subr.bf16.mxu0 0
        %2931 = vmatpush2.bf16.msra.mxu0 0
        %2932 = vmatprep.subr.bf16.mxu0 0
        %2933 = vmatpush2.bf16.msra.mxu0 0
        %2934 = vmatprep.subr.bf16.mxu0 0
        %2935 = vmatpush2.bf16.msra.mxu0 0
        %2936 = vmatprep.subr.bf16.mxu0 0
        %2937 = vmatpush2.bf16.msra.mxu0 0
        %2938 = vmatprep.subr.bf16.mxu0 0
        %2939 = vmatpush2.bf16.msra.mxu0 0
        %2940 = vmatprep.subr.bf16.mxu0 0
        %2941 = vmatpush2.bf16.msra.mxu0 0
        %2942 = vmatprep.subr.bf16.mxu0 0
        %2943 = vmatpush2.bf16.msra.mxu0 0
        %2944 = vmatprep.mubr.bf16.mxu0 0
        %2945 = vmatmul.mubr.bf16.gmra.mxu0 %v2840
        %v2946 = vpop.f32.mrf.mxu0
        %v2947 = vadd.f32 0.0, %v2946
        %v2948 = vpop.f32.mrf.mxu0
        %v2949 = vpop.f32.mrf.mxu0
        %v2950 = vadd.f32 0.0, %v2949
        %v2951 = vpop.f32.mrf.mxu0
        %2952 = vmatprep.mubr.bf16.mxu0 0
        %2953 = vmatmul.mubr.bf16.gmra.mxu0 %v2841
        %v2954 = vpop.f32.mrf.mxu0
        %v2955 = vadd.f32 0.0, %v2954
        %v2956 = vpop.f32.mrf.mxu0
        %v2957 = vpop.f32.mrf.mxu0
        %v2958 = vadd.f32 0.0, %v2957
        %v2959 = vpop.f32.mrf.mxu0
        %2960 = vmatprep.mubr.bf16.mxu0 0
        %2961 = vmatmul.mubr.bf16.gmra.mxu0 %v2842
        %v2962 = vpop.f32.mrf.mxu0
        %v2963 = vadd.f32 0.0, %v2962
        %v2964 = vpop.f32.mrf.mxu0
        %v2965 = vpop.f32.mrf.mxu0
        %v2966 = vadd.f32 0.0, %v2965
        %v2967 = vpop.f32.mrf.mxu0
        %2968 = vmatprep.mubr.bf16.mxu0 0
        %2969 = vmatmul.mubr.bf16.gmra.mxu0 %v2843
        %v2970 = vpop.f32.mrf.mxu0
        %v2971 = vadd.f32 0.0, %v2970
        %v2972 = vpop.f32.mrf.mxu0
        %v2973 = vpop.f32.mrf.mxu0
        %v2974 = vadd.f32 0.0, %v2973
        %v2975 = vpop.f32.mrf.mxu0
        %2976 = vmatprep.mubr.bf16.mxu0 0
        %2977 = vmatmul.mubr.bf16.gmra.mxu0 %v2844
        %v2978 = vpop.f32.mrf.mxu0
        %v2979 = vadd.f32 0.0, %v2978
        %v2980 = vpop.f32.mrf.mxu0
        %v2981 = vpop.f32.mrf.mxu0
        %v2982 = vadd.f32 0.0, %v2981
        %v2983 = vpop.f32.mrf.mxu0
        %2984 = vmatprep.mubr.bf16.mxu0 0
        %2985 = vmatmul.mubr.bf16.gmra.mxu0 %v2845
        %v2986 = vpop.f32.mrf.mxu0
        %v2987 = vadd.f32 0.0, %v2986
        %v2988 = vpop.f32.mrf.mxu0
        %v2989 = vpop.f32.mrf.mxu0
        %v2990 = vadd.f32 0.0, %v2989
        %v2991 = vpop.f32.mrf.mxu0
        %2992 = vmatprep.mubr.bf16.mxu0 0
        %2993 = vmatmul.mubr.bf16.gmra.mxu0 %v2846
        %v2994 = vpop.f32.mrf.mxu0
        %v2995 = vadd.f32 0.0, %v2994
        %v2996 = vpop.f32.mrf.mxu0
        %v2997 = vpop.f32.mrf.mxu0
        %v2998 = vpop.f32.mrf.mxu0
        %2999 = vdwg.mxu0
        %v3000 = vadd.f32 %v2814, %v2947
        %v3001 = vadd.f32 %v2815, %v2950
        %v3002 = vadd.f32 %v2816, %v2955
        %v3003 = vadd.f32 %v2817, %v2958
        %v3004 = vadd.f32 %v2818, %v2963
        %v3005 = vadd.f32 %v2819, %v2966
        %v3006 = vadd.f32 %v2820, %v2971
        %v3007 = vadd.f32 %v2821, %v2974
        %v3008 = vadd.f32 %v2822, %v2979
        %v3009 = vadd.f32 %v2823, %v2982
        %v3010 = vadd.f32 %v2824, %v2987
        %v3011 = vadd.f32 %v2825, %v2990
        %v3012 = vadd.f32 %v2826, %v2995
        %v3013 = vld [vmem:[#allocation2 + $0x2] sm:$0xff]
        %v3014 = vld [vmem:[#allocation2 + $0xa] sm:$0xff]
        %v3015 = vld [vmem:[#allocation2 + $0x12] sm:$0xff]
        %v3016 = vld [vmem:[#allocation2 + $0x1a] sm:$0xff]
        %v3017 = vld [vmem:[#allocation2 + $0x22] sm:$0xff]
        %v3018 = vld [vmem:[#allocation2 + $0x2a] sm:$0xff]
        %v3019 = vld [vmem:[#allocation2 + $0x32] sm:$0xff]
        %v3020 = vld [vmem:[#allocation2 + $0x3a] sm:$0xff]
        %v3021 = vld [vmem:[#allocation2 + $0x42] sm:$0xff]
        %v3022 = vld [vmem:[#allocation2 + $0x4a] sm:$0xff]
        %v3023 = vld [vmem:[#allocation2 + $0x52] sm:$0xff]
        %v3024 = vld [vmem:[#allocation2 + $0x5a] sm:$0xff]
        %v3025 = vld [vmem:[#allocation2 + $0x62] sm:$0xff]
        %v3026 = vpack.c.bf16 %v3014, %v3013
        %v3027 = vpack.c.bf16 %v3016, %v3015
        %v3028 = vpack.c.bf16 %v3018, %v3017
        %v3029 = vpack.c.bf16 %v3020, %v3019
        %v3030 = vpack.c.bf16 %v3022, %v3021
        %v3031 = vpack.c.bf16 %v3024, %v3023
        %v3032 = vpack.c.bf16 %v3025, %v3025
        %s3033 = scalar_lea.vmem [#allocation6], 128
        %v3034 = vld [vmem:[%s3033] sm:$0xf]
        %v3035 = vld [vmem:[%s3033 + $0x4] sm:$0xf]
        %v3036 = vld [vmem:[%s3033 + $0x8] sm:$0xf]
        %v3037 = vld [vmem:[%s3033 + $0xc] sm:$0xf]
        %v3038 = vld [vmem:[%s3033 + $0x10] sm:$0xf]
        %v3039 = vld [vmem:[%s3033 + $0x14] sm:$0xf]
        %v3040 = vld [vmem:[%s3033 + $0x18] sm:$0xf]
        %v3041 = vld [vmem:[%s3033 + $0x1c] sm:$0xf]
        %v3042 = vld [vmem:[%s3033 + $0x20] sm:$0xf]
        %v3043 = vld [vmem:[%s3033 + $0x24] sm:$0xf]
        %v3044 = vld [vmem:[%s3033 + $0x28] sm:$0xf]
        %v3045 = vld [vmem:[%s3033 + $0x2c] sm:$0xf]
        %v3046 = vld [vmem:[%s3033 + $0x30] sm:$0xf]
        %v3047 = vld [vmem:[%s3033 + $0x34] sm:$0xf]
        %v3048 = vld [vmem:[%s3033 + $0x38] sm:$0xf]
        %v3049 = vld [vmem:[%s3033 + $0x3c] sm:$0xf]
        %v3066 = vunpack.c.l.b16 %v3034
        %v3067 = vunpack.c.l.b16 %v3035
        %v3068 = vunpack.c.l.b16 %v3036
        %v3069 = vunpack.c.l.b16 %v3037
        %v3070 = vunpack.c.l.b16 %v3038
        %v3071 = vunpack.c.l.b16 %v3039
        %v3072 = vunpack.c.l.b16 %v3040
        %v3073 = vunpack.c.l.b16 %v3041
        %v3074 = vunpack.c.l.b16 %v3042
        %v3075 = vunpack.c.l.b16 %v3043
        %v3076 = vunpack.c.l.b16 %v3044
        %v3077 = vunpack.c.l.b16 %v3045
        %v3078 = vunpack.c.l.b16 %v3046
        %v3079 = vunpack.c.l.b16 %v3047
        %v3080 = vunpack.c.l.b16 %v3048
        %v3081 = vunpack.c.l.b16 %v3049
        %v3082 = vpack.c.b16 %v3067, %v3066
        %v3083 = vpack.c.b16 %v3069, %v3068
        %v3084 = vpack.c.b16 %v3071, %v3070
        %v3085 = vpack.c.b16 %v3073, %v3072
        %v3086 = vpack.c.b16 %v3075, %v3074
        %v3087 = vpack.c.b16 %v3077, %v3076
        %v3088 = vpack.c.b16 %v3079, %v3078
        %v3089 = vpack.c.b16 %v3081, %v3080
        %3098 = vmatprep.subr.bf16.mxu0 0
        %3099 = vmatpush1.bf16.msra.mxu0 %v3089
        %3100 = vmatprep.subr.bf16.mxu0 0
        %3101 = vmatpush1.bf16.msra.mxu0 %v3088
        %3102 = vmatprep.subr.bf16.mxu0 0
        %3103 = vmatpush1.bf16.msra.mxu0 %v3087
        %3104 = vmatprep.subr.bf16.mxu0 0
        %3105 = vmatpush1.bf16.msra.mxu0 %v3086
        %3106 = vmatprep.subr.bf16.mxu0 0
        %3107 = vmatpush1.bf16.msra.mxu0 %v3085
        %3108 = vmatprep.subr.bf16.mxu0 0
        %3109 = vmatpush1.bf16.msra.mxu0 %v3084
        %3110 = vmatprep.subr.bf16.mxu0 0
        %3111 = vmatpush1.bf16.msra.mxu0 %v3083
        %3112 = vmatprep.subr.bf16.mxu0 0
        %3113 = vmatpush1.bf16.msra.mxu0 %v3082
        %3114 = vmatprep.subr.bf16.mxu0 0
        %3115 = vmatpush2.bf16.msra.mxu0 0
        %3116 = vmatprep.subr.bf16.mxu0 0
        %3117 = vmatpush2.bf16.msra.mxu0 0
        %3118 = vmatprep.subr.bf16.mxu0 0
        %3119 = vmatpush2.bf16.msra.mxu0 0
        %3120 = vmatprep.subr.bf16.mxu0 0
        %3121 = vmatpush2.bf16.msra.mxu0 0
        %3122 = vmatprep.subr.bf16.mxu0 0
        %3123 = vmatpush2.bf16.msra.mxu0 0
        %3124 = vmatprep.subr.bf16.mxu0 0
        %3125 = vmatpush2.bf16.msra.mxu0 0
        %3126 = vmatprep.subr.bf16.mxu0 0
        %3127 = vmatpush2.bf16.msra.mxu0 0
        %3128 = vmatprep.subr.bf16.mxu0 0
        %3129 = vmatpush2.bf16.msra.mxu0 0
        %3130 = vmatprep.mubr.bf16.mxu0 0
        %3131 = vmatmul.mubr.bf16.gmra.mxu0 %v3026
        %v3132 = vpop.f32.mrf.mxu0
        %v3133 = vadd.f32 0.0, %v3132
        %v3134 = vpop.f32.mrf.mxu0
        %v3135 = vpop.f32.mrf.mxu0
        %v3136 = vadd.f32 0.0, %v3135
        %v3137 = vpop.f32.mrf.mxu0
        %3138 = vmatprep.mubr.bf16.mxu0 0
        %3139 = vmatmul.mubr.bf16.gmra.mxu0 %v3027
        %v3140 = vpop.f32.mrf.mxu0
        %v3141 = vadd.f32 0.0, %v3140
        %v3142 = vpop.f32.mrf.mxu0
        %v3143 = vpop.f32.mrf.mxu0
        %v3144 = vadd.f32 0.0, %v3143
        %v3145 = vpop.f32.mrf.mxu0
        %3146 = vmatprep.mubr.bf16.mxu0 0
        %3147 = vmatmul.mubr.bf16.gmra.mxu0 %v3028
        %v3148 = vpop.f32.mrf.mxu0
        %v3149 = vadd.f32 0.0, %v3148
        %v3150 = vpop.f32.mrf.mxu0
        %v3151 = vpop.f32.mrf.mxu0
        %v3152 = vadd.f32 0.0, %v3151
        %v3153 = vpop.f32.mrf.mxu0
        %3154 = vmatprep.mubr.bf16.mxu0 0
        %3155 = vmatmul.mubr.bf16.gmra.mxu0 %v3029
        %v3156 = vpop.f32.mrf.mxu0
        %v3157 = vadd.f32 0.0, %v3156
        %v3158 = vpop.f32.mrf.mxu0
        %v3159 = vpop.f32.mrf.mxu0
        %v3160 = vadd.f32 0.0, %v3159
        %v3161 = vpop.f32.mrf.mxu0
        %3162 = vmatprep.mubr.bf16.mxu0 0
        %3163 = vmatmul.mubr.bf16.gmra.mxu0 %v3030
        %v3164 = vpop.f32.mrf.mxu0
        %v3165 = vadd.f32 0.0, %v3164
        %v3166 = vpop.f32.mrf.mxu0
        %v3167 = vpop.f32.mrf.mxu0
        %v3168 = vadd.f32 0.0, %v3167
        %v3169 = vpop.f32.mrf.mxu0
        %3170 = vmatprep.mubr.bf16.mxu0 0
        %3171 = vmatmul.mubr.bf16.gmra.mxu0 %v3031
        %v3172 = vpop.f32.mrf.mxu0
        %v3173 = vadd.f32 0.0, %v3172
        %v3174 = vpop.f32.mrf.mxu0
        %v3175 = vpop.f32.mrf.mxu0
        %v3176 = vadd.f32 0.0, %v3175
        %v3177 = vpop.f32.mrf.mxu0
        %3178 = vmatprep.mubr.bf16.mxu0 0
        %3179 = vmatmul.mubr.bf16.gmra.mxu0 %v3032
        %v3180 = vpop.f32.mrf.mxu0
        %v3181 = vadd.f32 0.0, %v3180
        %v3182 = vpop.f32.mrf.mxu0
        %v3183 = vpop.f32.mrf.mxu0
        %v3184 = vpop.f32.mrf.mxu0
        %3185 = vdwg.mxu0
        %v3186 = vadd.f32 %v3000, %v3133
        %v3187 = vadd.f32 %v3001, %v3136
        %v3188 = vadd.f32 %v3002, %v3141
        %v3189 = vadd.f32 %v3003, %v3144
        %v3190 = vadd.f32 %v3004, %v3149
        %v3191 = vadd.f32 %v3005, %v3152
        %v3192 = vadd.f32 %v3006, %v3157
        %v3193 = vadd.f32 %v3007, %v3160
        %v3194 = vadd.f32 %v3008, %v3165
        %v3195 = vadd.f32 %v3009, %v3168
        %v3196 = vadd.f32 %v3010, %v3173
        %v3197 = vadd.f32 %v3011, %v3176
        %v3198 = vadd.f32 %v3012, %v3181
        %v3199 = vld [vmem:[#allocation2 + $0xb] sm:$0xff]
        %v3200 = vld [vmem:[#allocation2 + $0x13] sm:$0xff]
        %v3201 = vld [vmem:[#allocation2 + $0x1b] sm:$0xff]
        %v3202 = vld [vmem:[#allocation2 + $0x23] sm:$0xff]
        %v3203 = vld [vmem:[#allocation2 + $0x2b] sm:$0xff]
        %v3204 = vld [vmem:[#allocation2 + $0x33] sm:$0xff]
        %v3205 = vld [vmem:[#allocation2 + $0x3b] sm:$0xff]
        %v3206 = vld [vmem:[#allocation2 + $0x43] sm:$0xff]
        %v3207 = vld [vmem:[#allocation2 + $0x4b] sm:$0xff]
        %v3208 = vld [vmem:[#allocation2 + $0x53] sm:$0xff]
        %v3209 = vld [vmem:[#allocation2 + $0x5b] sm:$0xff]
        %v3210 = vld [vmem:[#allocation2 + $0x63] sm:$0xff]
        %v3211 = vld [vmem:[#allocation2 + $0x6b] sm:$0xff]
        %v3212 = vpack.c.bf16 %v3200, %v3199
        %v3213 = vpack.c.bf16 %v3202, %v3201
        %v3214 = vpack.c.bf16 %v3204, %v3203
        %v3215 = vpack.c.bf16 %v3206, %v3205
        %v3216 = vpack.c.bf16 %v3208, %v3207
        %v3217 = vpack.c.bf16 %v3210, %v3209
        %v3218 = vpack.c.bf16 %v3211, %v3211
        %s3219 = scalar_lea.vmem [#allocation6], 192
        %v3220 = vld [vmem:[%s3219] sm:$0xf]
        %v3221 = vld [vmem:[%s3219 + $0x4] sm:$0xf]
        %v3222 = vld [vmem:[%s3219 + $0x8] sm:$0xf]
        %v3223 = vld [vmem:[%s3219 + $0xc] sm:$0xf]
        %v3224 = vld [vmem:[%s3219 + $0x10] sm:$0xf]
        %v3225 = vld [vmem:[%s3219 + $0x14] sm:$0xf]
        %v3226 = vld [vmem:[%s3219 + $0x18] sm:$0xf]
        %v3227 = vld [vmem:[%s3219 + $0x1c] sm:$0xf]
        %v3228 = vld [vmem:[%s3219 + $0x20] sm:$0xf]
        %v3229 = vld [vmem:[%s3219 + $0x24] sm:$0xf]
        %v3230 = vld [vmem:[%s3219 + $0x28] sm:$0xf]
        %v3231 = vld [vmem:[%s3219 + $0x2c] sm:$0xf]
        %v3232 = vld [vmem:[%s3219 + $0x30] sm:$0xf]
        %v3233 = vld [vmem:[%s3219 + $0x34] sm:$0xf]
        %v3234 = vld [vmem:[%s3219 + $0x38] sm:$0xf]
        %v3235 = vld [vmem:[%s3219 + $0x3c] sm:$0xf]
        %v3252 = vunpack.c.l.b16 %v3220
        %v3253 = vunpack.c.l.b16 %v3221
        %v3254 = vunpack.c.l.b16 %v3222
        %v3255 = vunpack.c.l.b16 %v3223
        %v3256 = vunpack.c.l.b16 %v3224
        %v3257 = vunpack.c.l.b16 %v3225
        %v3258 = vunpack.c.l.b16 %v3226
        %v3259 = vunpack.c.l.b16 %v3227
        %v3260 = vunpack.c.l.b16 %v3228
        %v3261 = vunpack.c.l.b16 %v3229
        %v3262 = vunpack.c.l.b16 %v3230
        %v3263 = vunpack.c.l.b16 %v3231
        %v3264 = vunpack.c.l.b16 %v3232
        %v3265 = vunpack.c.l.b16 %v3233
        %v3266 = vunpack.c.l.b16 %v3234
        %v3267 = vunpack.c.l.b16 %v3235
        %v3268 = vpack.c.b16 %v3253, %v3252
        %v3269 = vpack.c.b16 %v3255, %v3254
        %v3270 = vpack.c.b16 %v3257, %v3256
        %v3271 = vpack.c.b16 %v3259, %v3258
        %v3272 = vpack.c.b16 %v3261, %v3260
        %v3273 = vpack.c.b16 %v3263, %v3262
        %v3274 = vpack.c.b16 %v3265, %v3264
        %v3275 = vpack.c.b16 %v3267, %v3266
        %3284 = vmatprep.subr.bf16.mxu0 0
        %3285 = vmatpush1.bf16.msra.mxu0 %v3275
        %3286 = vmatprep.subr.bf16.mxu0 0
        %3287 = vmatpush1.bf16.msra.mxu0 %v3274
        %3288 = vmatprep.subr.bf16.mxu0 0
        %3289 = vmatpush1.bf16.msra.mxu0 %v3273
        %3290 = vmatprep.subr.bf16.mxu0 0
        %3291 = vmatpush1.bf16.msra.mxu0 %v3272
        %3292 = vmatprep.subr.bf16.mxu0 0
        %3293 = vmatpush1.bf16.msra.mxu0 %v3271
        %3294 = vmatprep.subr.bf16.mxu0 0
        %3295 = vmatpush1.bf16.msra.mxu0 %v3270
        %3296 = vmatprep.subr.bf16.mxu0 0
        %3297 = vmatpush1.bf16.msra.mxu0 %v3269
        %3298 = vmatprep.subr.bf16.mxu0 0
        %3299 = vmatpush1.bf16.msra.mxu0 %v3268
        %3300 = vmatprep.subr.bf16.mxu0 0
        %3301 = vmatpush2.bf16.msra.mxu0 0
        %3302 = vmatprep.subr.bf16.mxu0 0
        %3303 = vmatpush2.bf16.msra.mxu0 0
        %3304 = vmatprep.subr.bf16.mxu0 0
        %3305 = vmatpush2.bf16.msra.mxu0 0
        %3306 = vmatprep.subr.bf16.mxu0 0
        %3307 = vmatpush2.bf16.msra.mxu0 0
        %3308 = vmatprep.subr.bf16.mxu0 0
        %3309 = vmatpush2.bf16.msra.mxu0 0
        %3310 = vmatprep.subr.bf16.mxu0 0
        %3311 = vmatpush2.bf16.msra.mxu0 0
        %3312 = vmatprep.subr.bf16.mxu0 0
        %3313 = vmatpush2.bf16.msra.mxu0 0
        %3314 = vmatprep.subr.bf16.mxu0 0
        %3315 = vmatpush2.bf16.msra.mxu0 0
        %3316 = vmatprep.mubr.bf16.mxu0 0
        %3317 = vmatmul.mubr.bf16.gmra.mxu0 %v3212
        %v3318 = vpop.f32.mrf.mxu0
        %v3319 = vadd.f32 0.0, %v3318
        %v3320 = vpop.f32.mrf.mxu0
        %v3321 = vpop.f32.mrf.mxu0
        %v3322 = vadd.f32 0.0, %v3321
        %v3323 = vpop.f32.mrf.mxu0
        %3324 = vmatprep.mubr.bf16.mxu0 0
        %3325 = vmatmul.mubr.bf16.gmra.mxu0 %v3213
        %v3326 = vpop.f32.mrf.mxu0
        %v3327 = vadd.f32 0.0, %v3326
        %v3328 = vpop.f32.mrf.mxu0
        %v3329 = vpop.f32.mrf.mxu0
        %v3330 = vadd.f32 0.0, %v3329
        %v3331 = vpop.f32.mrf.mxu0
        %3332 = vmatprep.mubr.bf16.mxu0 0
        %3333 = vmatmul.mubr.bf16.gmra.mxu0 %v3214
        %v3334 = vpop.f32.mrf.mxu0
        %v3335 = vadd.f32 0.0, %v3334
        %v3336 = vpop.f32.mrf.mxu0
        %v3337 = vpop.f32.mrf.mxu0
        %v3338 = vadd.f32 0.0, %v3337
        %v3339 = vpop.f32.mrf.mxu0
        %3340 = vmatprep.mubr.bf16.mxu0 0
        %3341 = vmatmul.mubr.bf16.gmra.mxu0 %v3215
        %v3342 = vpop.f32.mrf.mxu0
        %v3343 = vadd.f32 0.0, %v3342
        %v3344 = vpop.f32.mrf.mxu0
        %v3345 = vpop.f32.mrf.mxu0
        %v3346 = vadd.f32 0.0, %v3345
        %v3347 = vpop.f32.mrf.mxu0
        %3348 = vmatprep.mubr.bf16.mxu0 0
        %3349 = vmatmul.mubr.bf16.gmra.mxu0 %v3216
        %v3350 = vpop.f32.mrf.mxu0
        %v3351 = vadd.f32 0.0, %v3350
        %v3352 = vpop.f32.mrf.mxu0
        %v3353 = vpop.f32.mrf.mxu0
        %v3354 = vadd.f32 0.0, %v3353
        %v3355 = vpop.f32.mrf.mxu0
        %3356 = vmatprep.mubr.bf16.mxu0 0
        %3357 = vmatmul.mubr.bf16.gmra.mxu0 %v3217
        %v3358 = vpop.f32.mrf.mxu0
        %v3359 = vadd.f32 0.0, %v3358
        %v3360 = vpop.f32.mrf.mxu0
        %v3361 = vpop.f32.mrf.mxu0
        %v3362 = vadd.f32 0.0, %v3361
        %v3363 = vpop.f32.mrf.mxu0
        %3364 = vmatprep.mubr.bf16.mxu0 0
        %3365 = vmatmul.mubr.bf16.gmra.mxu0 %v3218
        %v3366 = vpop.f32.mrf.mxu0
        %v3367 = vadd.f32 0.0, %v3366
        %v3368 = vpop.f32.mrf.mxu0
        %v3369 = vpop.f32.mrf.mxu0
        %v3370 = vpop.f32.mrf.mxu0
        %3371 = vdwg.mxu0
        %v3372 = vadd.f32 %v3186, %v3319
        %v3373 = vadd.f32 %v3187, %v3322
        %v3374 = vadd.f32 %v3188, %v3327
        %v3375 = vadd.f32 %v3189, %v3330
        %v3376 = vadd.f32 %v3190, %v3335
        %v3377 = vadd.f32 %v3191, %v3338
        %v3378 = vadd.f32 %v3192, %v3343
        %v3379 = vadd.f32 %v3193, %v3346
        %v3380 = vadd.f32 %v3194, %v3351
        %v3381 = vadd.f32 %v3195, %v3354
        %v3382 = vadd.f32 %v3196, %v3359
        %v3383 = vadd.f32 %v3197, %v3362
        %v3384 = vadd.f32 %v3198, %v3367
        %v3385 = vld [vmem:[#allocation2 + $0xc] sm:$0xff]
        %v3386 = vld [vmem:[#allocation2 + $0x14] sm:$0xff]
        %v3387 = vld [vmem:[#allocation2 + $0x1c] sm:$0xff]
        %v3388 = vld [vmem:[#allocation2 + $0x24] sm:$0xff]
        %v3389 = vld [vmem:[#allocation2 + $0x2c] sm:$0xff]
        %v3390 = vld [vmem:[#allocation2 + $0x34] sm:$0xff]
        %v3391 = vld [vmem:[#allocation2 + $0x3c] sm:$0xff]
        %v3392 = vld [vmem:[#allocation2 + $0x44] sm:$0xff]
        %v3393 = vld [vmem:[#allocation2 + $0x4c] sm:$0xff]
        %v3394 = vld [vmem:[#allocation2 + $0x54] sm:$0xff]
        %v3395 = vld [vmem:[#allocation2 + $0x5c] sm:$0xff]
        %v3396 = vld [vmem:[#allocation2 + $0x64] sm:$0xff]
        %v3397 = vld [vmem:[#allocation2 + $0x6c] sm:$0xff]
        %v3398 = vpack.c.bf16 %v3386, %v3385
        %v3399 = vpack.c.bf16 %v3388, %v3387
        %v3400 = vpack.c.bf16 %v3390, %v3389
        %v3401 = vpack.c.bf16 %v3392, %v3391
        %v3402 = vpack.c.bf16 %v3394, %v3393
        %v3403 = vpack.c.bf16 %v3396, %v3395
        %v3404 = vpack.c.bf16 %v3397, %v3397
        %s3405 = scalar_lea.vmem [#allocation6], 256
        %v3406 = vld [vmem:[%s3405] sm:$0xf]
        %v3407 = vld [vmem:[%s3405 + $0x4] sm:$0xf]
        %v3408 = vld [vmem:[%s3405 + $0x8] sm:$0xf]
        %v3409 = vld [vmem:[%s3405 + $0xc] sm:$0xf]
        %v3410 = vld [vmem:[%s3405 + $0x10] sm:$0xf]
        %v3411 = vld [vmem:[%s3405 + $0x14] sm:$0xf]
        %v3412 = vld [vmem:[%s3405 + $0x18] sm:$0xf]
        %v3413 = vld [vmem:[%s3405 + $0x1c] sm:$0xf]
        %v3414 = vld [vmem:[%s3405 + $0x20] sm:$0xf]
        %v3415 = vld [vmem:[%s3405 + $0x24] sm:$0xf]
        %v3416 = vld [vmem:[%s3405 + $0x28] sm:$0xf]
        %v3417 = vld [vmem:[%s3405 + $0x2c] sm:$0xf]
        %v3418 = vld [vmem:[%s3405 + $0x30] sm:$0xf]
        %v3419 = vld [vmem:[%s3405 + $0x34] sm:$0xf]
        %v3420 = vld [vmem:[%s3405 + $0x38] sm:$0xf]
        %v3421 = vld [vmem:[%s3405 + $0x3c] sm:$0xf]
        %v3438 = vunpack.c.l.b16 %v3406
        %v3439 = vunpack.c.l.b16 %v3407
        %v3440 = vunpack.c.l.b16 %v3408
        %v3441 = vunpack.c.l.b16 %v3409
        %v3442 = vunpack.c.l.b16 %v3410
        %v3443 = vunpack.c.l.b16 %v3411
        %v3444 = vunpack.c.l.b16 %v3412
        %v3445 = vunpack.c.l.b16 %v3413
        %v3446 = vunpack.c.l.b16 %v3414
        %v3447 = vunpack.c.l.b16 %v3415
        %v3448 = vunpack.c.l.b16 %v3416
        %v3449 = vunpack.c.l.b16 %v3417
        %v3450 = vunpack.c.l.b16 %v3418
        %v3451 = vunpack.c.l.b16 %v3419
        %v3452 = vunpack.c.l.b16 %v3420
        %v3453 = vunpack.c.l.b16 %v3421
        %v3454 = vpack.c.b16 %v3439, %v3438
        %v3455 = vpack.c.b16 %v3441, %v3440
        %v3456 = vpack.c.b16 %v3443, %v3442
        %v3457 = vpack.c.b16 %v3445, %v3444
        %v3458 = vpack.c.b16 %v3447, %v3446
        %v3459 = vpack.c.b16 %v3449, %v3448
        %v3460 = vpack.c.b16 %v3451, %v3450
        %v3461 = vpack.c.b16 %v3453, %v3452
        %3470 = vmatprep.subr.bf16.mxu0 0
        %3471 = vmatpush1.bf16.msra.mxu0 %v3461
        %3472 = vmatprep.subr.bf16.mxu0 0
        %3473 = vmatpush1.bf16.msra.mxu0 %v3460
        %3474 = vmatprep.subr.bf16.mxu0 0
        %3475 = vmatpush1.bf16.msra.mxu0 %v3459
        %3476 = vmatprep.subr.bf16.mxu0 0
        %3477 = vmatpush1.bf16.msra.mxu0 %v3458
        %3478 = vmatprep.subr.bf16.mxu0 0
        %3479 = vmatpush1.bf16.msra.mxu0 %v3457
        %3480 = vmatprep.subr.bf16.mxu0 0
        %3481 = vmatpush1.bf16.msra.mxu0 %v3456
        %3482 = vmatprep.subr.bf16.mxu0 0
        %3483 = vmatpush1.bf16.msra.mxu0 %v3455
        %3484 = vmatprep.subr.bf16.mxu0 0
        %3485 = vmatpush1.bf16.msra.mxu0 %v3454
        %3486 = vmatprep.subr.bf16.mxu0 0
        %3487 = vmatpush2.bf16.msra.mxu0 0
        %3488 = vmatprep.subr.bf16.mxu0 0
        %3489 = vmatpush2.bf16.msra.mxu0 0
        %3490 = vmatprep.subr.bf16.mxu0 0
        %3491 = vmatpush2.bf16.msra.mxu0 0
        %3492 = vmatprep.subr.bf16.mxu0 0
        %3493 = vmatpush2.bf16.msra.mxu0 0
        %3494 = vmatprep.subr.bf16.mxu0 0
        %3495 = vmatpush2.bf16.msra.mxu0 0
        %3496 = vmatprep.subr.bf16.mxu0 0
        %3497 = vmatpush2.bf16.msra.mxu0 0
        %3498 = vmatprep.subr.bf16.mxu0 0
        %3499 = vmatpush2.bf16.msra.mxu0 0
        %3500 = vmatprep.subr.bf16.mxu0 0
        %3501 = vmatpush2.bf16.msra.mxu0 0
        %3502 = vmatprep.mubr.bf16.mxu0 0
        %3503 = vmatmul.mubr.bf16.gmra.mxu0 %v3398
        %v3504 = vpop.f32.mrf.mxu0
        %v3505 = vadd.f32 0.0, %v3504
        %v3506 = vpop.f32.mrf.mxu0
        %v3507 = vpop.f32.mrf.mxu0
        %v3508 = vadd.f32 0.0, %v3507
        %v3509 = vpop.f32.mrf.mxu0
        %3510 = vmatprep.mubr.bf16.mxu0 0
        %3511 = vmatmul.mubr.bf16.gmra.mxu0 %v3399
        %v3512 = vpop.f32.mrf.mxu0
        %v3513 = vadd.f32 0.0, %v3512
        %v3514 = vpop.f32.mrf.mxu0
        %v3515 = vpop.f32.mrf.mxu0
        %v3516 = vadd.f32 0.0, %v3515
        %v3517 = vpop.f32.mrf.mxu0
        %3518 = vmatprep.mubr.bf16.mxu0 0
        %3519 = vmatmul.mubr.bf16.gmra.mxu0 %v3400
        %v3520 = vpop.f32.mrf.mxu0
        %v3521 = vadd.f32 0.0, %v3520
        %v3522 = vpop.f32.mrf.mxu0
        %v3523 = vpop.f32.mrf.mxu0
        %v3524 = vadd.f32 0.0, %v3523
        %v3525 = vpop.f32.mrf.mxu0
        %3526 = vmatprep.mubr.bf16.mxu0 0
        %3527 = vmatmul.mubr.bf16.gmra.mxu0 %v3401
        %v3528 = vpop.f32.mrf.mxu0
        %v3529 = vadd.f32 0.0, %v3528
        %v3530 = vpop.f32.mrf.mxu0
        %v3531 = vpop.f32.mrf.mxu0
        %v3532 = vadd.f32 0.0, %v3531
        %v3533 = vpop.f32.mrf.mxu0
        %3534 = vmatprep.mubr.bf16.mxu0 0
        %3535 = vmatmul.mubr.bf16.gmra.mxu0 %v3402
        %v3536 = vpop.f32.mrf.mxu0
        %v3537 = vadd.f32 0.0, %v3536
        %v3538 = vpop.f32.mrf.mxu0
        %v3539 = vpop.f32.mrf.mxu0
        %v3540 = vadd.f32 0.0, %v3539
        %v3541 = vpop.f32.mrf.mxu0
        %3542 = vmatprep.mubr.bf16.mxu0 0
        %3543 = vmatmul.mubr.bf16.gmra.mxu0 %v3403
        %v3544 = vpop.f32.mrf.mxu0
        %v3545 = vadd.f32 0.0, %v3544
        %v3546 = vpop.f32.mrf.mxu0
        %v3547 = vpop.f32.mrf.mxu0
        %v3548 = vadd.f32 0.0, %v3547
        %v3549 = vpop.f32.mrf.mxu0
        %3550 = vmatprep.mubr.bf16.mxu0 0
        %3551 = vmatmul.mubr.bf16.gmra.mxu0 %v3404
        %v3552 = vpop.f32.mrf.mxu0
        %v3553 = vadd.f32 0.0, %v3552
        %v3554 = vpop.f32.mrf.mxu0
        %v3555 = vpop.f32.mrf.mxu0
        %v3556 = vpop.f32.mrf.mxu0
        %3557 = vdwg.mxu0
        %v3558 = vadd.f32 %v3372, %v3505
        %v3559 = vadd.f32 %v3373, %v3508
        %v3560 = vadd.f32 %v3374, %v3513
        %v3561 = vadd.f32 %v3375, %v3516
        %v3562 = vadd.f32 %v3376, %v3521
        %v3563 = vadd.f32 %v3377, %v3524
        %v3564 = vadd.f32 %v3378, %v3529
        %v3565 = vadd.f32 %v3379, %v3532
        %v3566 = vadd.f32 %v3380, %v3537
        %v3567 = vadd.f32 %v3381, %v3540
        %v3568 = vadd.f32 %v3382, %v3545
        %v3569 = vadd.f32 %v3383, %v3548
        %v3570 = vadd.f32 %v3384, %v3553
        %v3571 = vld [vmem:[#allocation2 + $0xd] sm:$0xff]
        %v3572 = vld [vmem:[#allocation2 + $0x15] sm:$0xff]
        %v3573 = vld [vmem:[#allocation2 + $0x1d] sm:$0xff]
        %v3574 = vld [vmem:[#allocation2 + $0x25] sm:$0xff]
        %v3575 = vld [vmem:[#allocation2 + $0x2d] sm:$0xff]
        %v3576 = vld [vmem:[#allocation2 + $0x35] sm:$0xff]
        %v3577 = vld [vmem:[#allocation2 + $0x3d] sm:$0xff]
        %v3578 = vld [vmem:[#allocation2 + $0x45] sm:$0xff]
        %v3579 = vld [vmem:[#allocation2 + $0x4d] sm:$0xff]
        %v3580 = vld [vmem:[#allocation2 + $0x55] sm:$0xff]
        %v3581 = vld [vmem:[#allocation2 + $0x5d] sm:$0xff]
        %v3582 = vld [vmem:[#allocation2 + $0x65] sm:$0xff]
        %v3583 = vld [vmem:[#allocation2 + $0x6d] sm:$0xff]
        %v3584 = vpack.c.bf16 %v3572, %v3571
        %v3585 = vpack.c.bf16 %v3574, %v3573
        %v3586 = vpack.c.bf16 %v3576, %v3575
        %v3587 = vpack.c.bf16 %v3578, %v3577
        %v3588 = vpack.c.bf16 %v3580, %v3579
        %v3589 = vpack.c.bf16 %v3582, %v3581
        %v3590 = vpack.c.bf16 %v3583, %v3583
        %s3591 = scalar_lea.vmem [#allocation6], 320
        %v3592 = vld [vmem:[%s3591] sm:$0xf]
        %v3593 = vld [vmem:[%s3591 + $0x4] sm:$0xf]
        %v3594 = vld [vmem:[%s3591 + $0x8] sm:$0xf]
        %v3595 = vld [vmem:[%s3591 + $0xc] sm:$0xf]
        %v3596 = vld [vmem:[%s3591 + $0x10] sm:$0xf]
        %v3597 = vld [vmem:[%s3591 + $0x14] sm:$0xf]
        %v3598 = vld [vmem:[%s3591 + $0x18] sm:$0xf]
        %v3599 = vld [vmem:[%s3591 + $0x1c] sm:$0xf]
        %v3600 = vld [vmem:[%s3591 + $0x20] sm:$0xf]
        %v3601 = vld [vmem:[%s3591 + $0x24] sm:$0xf]
        %v3602 = vld [vmem:[%s3591 + $0x28] sm:$0xf]
        %v3603 = vld [vmem:[%s3591 + $0x2c] sm:$0xf]
        %v3604 = vld [vmem:[%s3591 + $0x30] sm:$0xf]
        %v3605 = vld [vmem:[%s3591 + $0x34] sm:$0xf]
        %v3606 = vld [vmem:[%s3591 + $0x38] sm:$0xf]
        %v3607 = vld [vmem:[%s3591 + $0x3c] sm:$0xf]
        %v3624 = vunpack.c.l.b16 %v3592
        %v3625 = vunpack.c.l.b16 %v3593
        %v3626 = vunpack.c.l.b16 %v3594
        %v3627 = vunpack.c.l.b16 %v3595
        %v3628 = vunpack.c.l.b16 %v3596
        %v3629 = vunpack.c.l.b16 %v3597
        %v3630 = vunpack.c.l.b16 %v3598
        %v3631 = vunpack.c.l.b16 %v3599
        %v3632 = vunpack.c.l.b16 %v3600
        %v3633 = vunpack.c.l.b16 %v3601
        %v3634 = vunpack.c.l.b16 %v3602
        %v3635 = vunpack.c.l.b16 %v3603
        %v3636 = vunpack.c.l.b16 %v3604
        %v3637 = vunpack.c.l.b16 %v3605
        %v3638 = vunpack.c.l.b16 %v3606
        %v3639 = vunpack.c.l.b16 %v3607
        %v3640 = vpack.c.b16 %v3625, %v3624
        %v3641 = vpack.c.b16 %v3627, %v3626
        %v3642 = vpack.c.b16 %v3629, %v3628
        %v3643 = vpack.c.b16 %v3631, %v3630
        %v3644 = vpack.c.b16 %v3633, %v3632
        %v3645 = vpack.c.b16 %v3635, %v3634
        %v3646 = vpack.c.b16 %v3637, %v3636
        %v3647 = vpack.c.b16 %v3639, %v3638
        %3656 = vmatprep.subr.bf16.mxu0 0
        %3657 = vmatpush1.bf16.msra.mxu0 %v3647
        %3658 = vmatprep.subr.bf16.mxu0 0
        %3659 = vmatpush1.bf16.msra.mxu0 %v3646
        %3660 = vmatprep.subr.bf16.mxu0 0
        %3661 = vmatpush1.bf16.msra.mxu0 %v3645
        %3662 = vmatprep.subr.bf16.mxu0 0
        %3663 = vmatpush1.bf16.msra.mxu0 %v3644
        %3664 = vmatprep.subr.bf16.mxu0 0
        %3665 = vmatpush1.bf16.msra.mxu0 %v3643
        %3666 = vmatprep.subr.bf16.mxu0 0
        %3667 = vmatpush1.bf16.msra.mxu0 %v3642
        %3668 = vmatprep.subr.bf16.mxu0 0
        %3669 = vmatpush1.bf16.msra.mxu0 %v3641
        %3670 = vmatprep.subr.bf16.mxu0 0
        %3671 = vmatpush1.bf16.msra.mxu0 %v3640
        %3672 = vmatprep.subr.bf16.mxu0 0
        %3673 = vmatpush2.bf16.msra.mxu0 0
        %3674 = vmatprep.subr.bf16.mxu0 0
        %3675 = vmatpush2.bf16.msra.mxu0 0
        %3676 = vmatprep.subr.bf16.mxu0 0
        %3677 = vmatpush2.bf16.msra.mxu0 0
        %3678 = vmatprep.subr.bf16.mxu0 0
        %3679 = vmatpush2.bf16.msra.mxu0 0
        %3680 = vmatprep.subr.bf16.mxu0 0
        %3681 = vmatpush2.bf16.msra.mxu0 0
        %3682 = vmatprep.subr.bf16.mxu0 0
        %3683 = vmatpush2.bf16.msra.mxu0 0
        %3684 = vmatprep.subr.bf16.mxu0 0
        %3685 = vmatpush2.bf16.msra.mxu0 0
        %3686 = vmatprep.subr.bf16.mxu0 0
        %3687 = vmatpush2.bf16.msra.mxu0 0
        %3688 = vmatprep.mubr.bf16.mxu0 0
        %3689 = vmatmul.mubr.bf16.gmra.mxu0 %v3584
        %v3690 = vpop.f32.mrf.mxu0
        %v3691 = vadd.f32 0.0, %v3690
        %v3692 = vpop.f32.mrf.mxu0
        %v3693 = vpop.f32.mrf.mxu0
        %v3694 = vadd.f32 0.0, %v3693
        %v3695 = vpop.f32.mrf.mxu0
        %3696 = vmatprep.mubr.bf16.mxu0 0
        %3697 = vmatmul.mubr.bf16.gmra.mxu0 %v3585
        %v3698 = vpop.f32.mrf.mxu0
        %v3699 = vadd.f32 0.0, %v3698
        %v3700 = vpop.f32.mrf.mxu0
        %v3701 = vpop.f32.mrf.mxu0
        %v3702 = vadd.f32 0.0, %v3701
        %v3703 = vpop.f32.mrf.mxu0
        %3704 = vmatprep.mubr.bf16.mxu0 0
        %3705 = vmatmul.mubr.bf16.gmra.mxu0 %v3586
        %v3706 = vpop.f32.mrf.mxu0
        %v3707 = vadd.f32 0.0, %v3706
        %v3708 = vpop.f32.mrf.mxu0
        %v3709 = vpop.f32.mrf.mxu0
        %v3710 = vadd.f32 0.0, %v3709
        %v3711 = vpop.f32.mrf.mxu0
        %3712 = vmatprep.mubr.bf16.mxu0 0
        %3713 = vmatmul.mubr.bf16.gmra.mxu0 %v3587
        %v3714 = vpop.f32.mrf.mxu0
        %v3715 = vadd.f32 0.0, %v3714
        %v3716 = vpop.f32.mrf.mxu0
        %v3717 = vpop.f32.mrf.mxu0
        %v3718 = vadd.f32 0.0, %v3717
        %v3719 = vpop.f32.mrf.mxu0
        %3720 = vmatprep.mubr.bf16.mxu0 0
        %3721 = vmatmul.mubr.bf16.gmra.mxu0 %v3588
        %v3722 = vpop.f32.mrf.mxu0
        %v3723 = vadd.f32 0.0, %v3722
        %v3724 = vpop.f32.mrf.mxu0
        %v3725 = vpop.f32.mrf.mxu0
        %v3726 = vadd.f32 0.0, %v3725
        %v3727 = vpop.f32.mrf.mxu0
        %3728 = vmatprep.mubr.bf16.mxu0 0
        %3729 = vmatmul.mubr.bf16.gmra.mxu0 %v3589
        %v3730 = vpop.f32.mrf.mxu0
        %v3731 = vadd.f32 0.0, %v3730
        %v3732 = vpop.f32.mrf.mxu0
        %v3733 = vpop.f32.mrf.mxu0
        %v3734 = vadd.f32 0.0, %v3733
        %v3735 = vpop.f32.mrf.mxu0
        %3736 = vmatprep.mubr.bf16.mxu0 0
        %3737 = vmatmul.mubr.bf16.gmra.mxu0 %v3590
        %v3738 = vpop.f32.mrf.mxu0
        %v3739 = vadd.f32 0.0, %v3738
        %v3740 = vpop.f32.mrf.mxu0
        %v3741 = vpop.f32.mrf.mxu0
        %v3742 = vpop.f32.mrf.mxu0
        %3743 = vdwg.mxu0
        %v3744 = vadd.f32 %v3558, %v3691
        %v3745 = vadd.f32 %v3559, %v3694
        %v3746 = vadd.f32 %v3560, %v3699
        %v3747 = vadd.f32 %v3561, %v3702
        %v3748 = vadd.f32 %v3562, %v3707
        %v3749 = vadd.f32 %v3563, %v3710
        %v3750 = vadd.f32 %v3564, %v3715
        %v3751 = vadd.f32 %v3565, %v3718
        %v3752 = vadd.f32 %v3566, %v3723
        %v3753 = vadd.f32 %v3567, %v3726
        %v3754 = vadd.f32 %v3568, %v3731
        %v3755 = vadd.f32 %v3569, %v3734
        %v3756 = vadd.f32 %v3570, %v3739
        %v3757 = vld [vmem:[#allocation2 + $0x16] sm:$0xff]
        %v3758 = vld [vmem:[#allocation2 + $0x1e] sm:$0xff]
        %v3759 = vld [vmem:[#allocation2 + $0x26] sm:$0xff]
        %v3760 = vld [vmem:[#allocation2 + $0x2e] sm:$0xff]
        %v3761 = vld [vmem:[#allocation2 + $0x36] sm:$0xff]
        %v3762 = vld [vmem:[#allocation2 + $0x3e] sm:$0xff]
        %v3763 = vld [vmem:[#allocation2 + $0x46] sm:$0xff]
        %v3764 = vld [vmem:[#allocation2 + $0x4e] sm:$0xff]
        %v3765 = vld [vmem:[#allocation2 + $0x56] sm:$0xff]
        %v3766 = vld [vmem:[#allocation2 + $0x5e] sm:$0xff]
        %v3767 = vld [vmem:[#allocation2 + $0x66] sm:$0xff]
        %v3768 = vld [vmem:[#allocation2 + $0x6e] sm:$0xff]
        %v3769 = vld [vmem:[#allocation2 + $0x76] sm:$0xff]
        %v3770 = vpack.c.bf16 %v3758, %v3757
        %v3771 = vpack.c.bf16 %v3760, %v3759
        %v3772 = vpack.c.bf16 %v3762, %v3761
        %v3773 = vpack.c.bf16 %v3764, %v3763
        %v3774 = vpack.c.bf16 %v3766, %v3765
        %v3775 = vpack.c.bf16 %v3768, %v3767
        %v3776 = vpack.c.bf16 %v3769, %v3769
        %s3777 = scalar_lea.vmem [#allocation6], 384
        %v3778 = vld [vmem:[%s3777] sm:$0xf]
        %v3779 = vld [vmem:[%s3777 + $0x4] sm:$0xf]
        %v3780 = vld [vmem:[%s3777 + $0x8] sm:$0xf]
        %v3781 = vld [vmem:[%s3777 + $0xc] sm:$0xf]
        %v3782 = vld [vmem:[%s3777 + $0x10] sm:$0xf]
        %v3783 = vld [vmem:[%s3777 + $0x14] sm:$0xf]
        %v3784 = vld [vmem:[%s3777 + $0x18] sm:$0xf]
        %v3785 = vld [vmem:[%s3777 + $0x1c] sm:$0xf]
        %v3786 = vld [vmem:[%s3777 + $0x20] sm:$0xf]
        %v3787 = vld [vmem:[%s3777 + $0x24] sm:$0xf]
        %v3788 = vld [vmem:[%s3777 + $0x28] sm:$0xf]
        %v3789 = vld [vmem:[%s3777 + $0x2c] sm:$0xf]
        %v3790 = vld [vmem:[%s3777 + $0x30] sm:$0xf]
        %v3791 = vld [vmem:[%s3777 + $0x34] sm:$0xf]
        %v3792 = vld [vmem:[%s3777 + $0x38] sm:$0xf]
        %v3793 = vld [vmem:[%s3777 + $0x3c] sm:$0xf]
        %v3810 = vunpack.c.l.b16 %v3778
        %v3811 = vunpack.c.l.b16 %v3779
        %v3812 = vunpack.c.l.b16 %v3780
        %v3813 = vunpack.c.l.b16 %v3781
        %v3814 = vunpack.c.l.b16 %v3782
        %v3815 = vunpack.c.l.b16 %v3783
        %v3816 = vunpack.c.l.b16 %v3784
        %v3817 = vunpack.c.l.b16 %v3785
        %v3818 = vunpack.c.l.b16 %v3786
        %v3819 = vunpack.c.l.b16 %v3787
        %v3820 = vunpack.c.l.b16 %v3788
        %v3821 = vunpack.c.l.b16 %v3789
        %v3822 = vunpack.c.l.b16 %v3790
        %v3823 = vunpack.c.l.b16 %v3791
        %v3824 = vunpack.c.l.b16 %v3792
        %v3825 = vunpack.c.l.b16 %v3793
        %v3826 = vpack.c.b16 %v3811, %v3810
        %v3827 = vpack.c.b16 %v3813, %v3812
        %v3828 = vpack.c.b16 %v3815, %v3814
        %v3829 = vpack.c.b16 %v3817, %v3816
        %v3830 = vpack.c.b16 %v3819, %v3818
        %v3831 = vpack.c.b16 %v3821, %v3820
        %v3832 = vpack.c.b16 %v3823, %v3822
        %v3833 = vpack.c.b16 %v3825, %v3824
        %3842 = vmatprep.subr.bf16.mxu0 0
        %3843 = vmatpush1.bf16.msra.mxu0 %v3833
        %3844 = vmatprep.subr.bf16.mxu0 0
        %3845 = vmatpush1.bf16.msra.mxu0 %v3832
        %3846 = vmatprep.subr.bf16.mxu0 0
        %3847 = vmatpush1.bf16.msra.mxu0 %v3831
        %3848 = vmatprep.subr.bf16.mxu0 0
        %3849 = vmatpush1.bf16.msra.mxu0 %v3830
        %3850 = vmatprep.subr.bf16.mxu0 0
        %3851 = vmatpush1.bf16.msra.mxu0 %v3829
        %3852 = vmatprep.subr.bf16.mxu0 0
        %3853 = vmatpush1.bf16.msra.mxu0 %v3828
        %3854 = vmatprep.subr.bf16.mxu0 0
        %3855 = vmatpush1.bf16.msra.mxu0 %v3827
        %3856 = vmatprep.subr.bf16.mxu0 0
        %3857 = vmatpush1.bf16.msra.mxu0 %v3826
        %3858 = vmatprep.subr.bf16.mxu0 0
        %3859 = vmatpush2.bf16.msra.mxu0 0
        %3860 = vmatprep.subr.bf16.mxu0 0
        %3861 = vmatpush2.bf16.msra.mxu0 0
        %3862 = vmatprep.subr.bf16.mxu0 0
        %3863 = vmatpush2.bf16.msra.mxu0 0
        %3864 = vmatprep.subr.bf16.mxu0 0
        %3865 = vmatpush2.bf16.msra.mxu0 0
        %3866 = vmatprep.subr.bf16.mxu0 0
        %3867 = vmatpush2.bf16.msra.mxu0 0
        %3868 = vmatprep.subr.bf16.mxu0 0
        %3869 = vmatpush2.bf16.msra.mxu0 0
        %3870 = vmatprep.subr.bf16.mxu0 0
        %3871 = vmatpush2.bf16.msra.mxu0 0
        %3872 = vmatprep.subr.bf16.mxu0 0
        %3873 = vmatpush2.bf16.msra.mxu0 0
        %3874 = vmatprep.mubr.bf16.mxu0 0
        %3875 = vmatmul.mubr.bf16.gmra.mxu0 %v3770
        %v3876 = vpop.f32.mrf.mxu0
        %v3877 = vadd.f32 0.0, %v3876
        %v3878 = vpop.f32.mrf.mxu0
        %v3879 = vpop.f32.mrf.mxu0
        %v3880 = vadd.f32 0.0, %v3879
        %v3881 = vpop.f32.mrf.mxu0
        %3882 = vmatprep.mubr.bf16.mxu0 0
        %3883 = vmatmul.mubr.bf16.gmra.mxu0 %v3771
        %v3884 = vpop.f32.mrf.mxu0
        %v3885 = vadd.f32 0.0, %v3884
        %v3886 = vpop.f32.mrf.mxu0
        %v3887 = vpop.f32.mrf.mxu0
        %v3888 = vadd.f32 0.0, %v3887
        %v3889 = vpop.f32.mrf.mxu0
        %3890 = vmatprep.mubr.bf16.mxu0 0
        %3891 = vmatmul.mubr.bf16.gmra.mxu0 %v3772
        %v3892 = vpop.f32.mrf.mxu0
        %v3893 = vadd.f32 0.0, %v3892
        %v3894 = vpop.f32.mrf.mxu0
        %v3895 = vpop.f32.mrf.mxu0
        %v3896 = vadd.f32 0.0, %v3895
        %v3897 = vpop.f32.mrf.mxu0
        %3898 = vmatprep.mubr.bf16.mxu0 0
        %3899 = vmatmul.mubr.bf16.gmra.mxu0 %v3773
        %v3900 = vpop.f32.mrf.mxu0
        %v3901 = vadd.f32 0.0, %v3900
        %v3902 = vpop.f32.mrf.mxu0
        %v3903 = vpop.f32.mrf.mxu0
        %v3904 = vadd.f32 0.0, %v3903
        %v3905 = vpop.f32.mrf.mxu0
        %3906 = vmatprep.mubr.bf16.mxu0 0
        %3907 = vmatmul.mubr.bf16.gmra.mxu0 %v3774
        %v3908 = vpop.f32.mrf.mxu0
        %v3909 = vadd.f32 0.0, %v3908
        %v3910 = vpop.f32.mrf.mxu0
        %v3911 = vpop.f32.mrf.mxu0
        %v3912 = vadd.f32 0.0, %v3911
        %v3913 = vpop.f32.mrf.mxu0
        %3914 = vmatprep.mubr.bf16.mxu0 0
        %3915 = vmatmul.mubr.bf16.gmra.mxu0 %v3775
        %v3916 = vpop.f32.mrf.mxu0
        %v3917 = vadd.f32 0.0, %v3916
        %v3918 = vpop.f32.mrf.mxu0
        %v3919 = vpop.f32.mrf.mxu0
        %v3920 = vadd.f32 0.0, %v3919
        %v3921 = vpop.f32.mrf.mxu0
        %3922 = vmatprep.mubr.bf16.mxu0 0
        %3923 = vmatmul.mubr.bf16.gmra.mxu0 %v3776
        %v3924 = vpop.f32.mrf.mxu0
        %v3925 = vadd.f32 0.0, %v3924
        %v3926 = vpop.f32.mrf.mxu0
        %v3927 = vpop.f32.mrf.mxu0
        %v3928 = vpop.f32.mrf.mxu0
        %3929 = vdwg.mxu0
        %v3930 = vadd.f32 %v3744, %v3877
        %v3931 = vadd.f32 %v3745, %v3880
        %v3932 = vadd.f32 %v3746, %v3885
        %v3933 = vadd.f32 %v3747, %v3888
        %v3934 = vadd.f32 %v3748, %v3893
        %v3935 = vadd.f32 %v3749, %v3896
        %v3936 = vadd.f32 %v3750, %v3901
        %v3937 = vadd.f32 %v3751, %v3904
        %v3938 = vadd.f32 %v3752, %v3909
        %v3939 = vadd.f32 %v3753, %v3912
        %v3940 = vadd.f32 %v3754, %v3917
        %v3941 = vadd.f32 %v3755, %v3920
        %v3942 = vadd.f32 %v3756, %v3925
        %v3943 = vld [vmem:[#allocation2 + $0x17] sm:$0xff]
        %v3944 = vld [vmem:[#allocation2 + $0x1f] sm:$0xff]
        %v3945 = vld [vmem:[#allocation2 + $0x27] sm:$0xff]
        %v3946 = vld [vmem:[#allocation2 + $0x2f] sm:$0xff]
        %v3947 = vld [vmem:[#allocation2 + $0x37] sm:$0xff]
        %v3948 = vld [vmem:[#allocation2 + $0x3f] sm:$0xff]
        %v3949 = vld [vmem:[#allocation2 + $0x47] sm:$0xff]
        %v3950 = vld [vmem:[#allocation2 + $0x4f] sm:$0xff]
        %v3951 = vld [vmem:[#allocation2 + $0x57] sm:$0xff]
        %v3952 = vld [vmem:[#allocation2 + $0x5f] sm:$0xff]
        %v3953 = vld [vmem:[#allocation2 + $0x67] sm:$0xff]
        %v3954 = vld [vmem:[#allocation2 + $0x6f] sm:$0xff]
        %v3955 = vld [vmem:[#allocation2 + $0x77] sm:$0xff]
        %v3956 = vpack.c.bf16 %v3944, %v3943
        %v3957 = vpack.c.bf16 %v3946, %v3945
        %v3958 = vpack.c.bf16 %v3948, %v3947
        %v3959 = vpack.c.bf16 %v3950, %v3949
        %v3960 = vpack.c.bf16 %v3952, %v3951
        %v3961 = vpack.c.bf16 %v3954, %v3953
        %v3962 = vpack.c.bf16 %v3955, %v3955
        %s3963 = scalar_lea.vmem [#allocation6], 448
        %v3964 = vld [vmem:[%s3963] sm:$0xf]
        %v3965 = vld [vmem:[%s3963 + $0x4] sm:$0xf]
        %v3966 = vld [vmem:[%s3963 + $0x8] sm:$0xf]
        %v3967 = vld [vmem:[%s3963 + $0xc] sm:$0xf]
        %v3968 = vld [vmem:[%s3963 + $0x10] sm:$0xf]
        %v3969 = vld [vmem:[%s3963 + $0x14] sm:$0xf]
        %v3970 = vld [vmem:[%s3963 + $0x18] sm:$0xf]
        %v3971 = vld [vmem:[%s3963 + $0x1c] sm:$0xf]
        %v3972 = vld [vmem:[%s3963 + $0x20] sm:$0xf]
        %v3973 = vld [vmem:[%s3963 + $0x24] sm:$0xf]
        %v3974 = vld [vmem:[%s3963 + $0x28] sm:$0xf]
        %v3975 = vld [vmem:[%s3963 + $0x2c] sm:$0xf]
        %v3976 = vld [vmem:[%s3963 + $0x30] sm:$0xf]
        %v3977 = vld [vmem:[%s3963 + $0x34] sm:$0xf]
        %v3978 = vld [vmem:[%s3963 + $0x38] sm:$0xf]
        %v3979 = vld [vmem:[%s3963 + $0x3c] sm:$0xf]
        %v3996 = vunpack.c.l.b16 %v3964
        %v3997 = vunpack.c.l.b16 %v3965
        %v3998 = vunpack.c.l.b16 %v3966
        %v3999 = vunpack.c.l.b16 %v3967
        %v4000 = vunpack.c.l.b16 %v3968
        %v4001 = vunpack.c.l.b16 %v3969
        %v4002 = vunpack.c.l.b16 %v3970
        %v4003 = vunpack.c.l.b16 %v3971
        %v4004 = vunpack.c.l.b16 %v3972
        %v4005 = vunpack.c.l.b16 %v3973
        %v4006 = vunpack.c.l.b16 %v3974
        %v4007 = vunpack.c.l.b16 %v3975
        %v4008 = vunpack.c.l.b16 %v3976
        %v4009 = vunpack.c.l.b16 %v3977
        %v4010 = vunpack.c.l.b16 %v3978
        %v4011 = vunpack.c.l.b16 %v3979
        %v4012 = vpack.c.b16 %v3997, %v3996
        %v4013 = vpack.c.b16 %v3999, %v3998
        %v4014 = vpack.c.b16 %v4001, %v4000
        %v4015 = vpack.c.b16 %v4003, %v4002
        %v4016 = vpack.c.b16 %v4005, %v4004
        %v4017 = vpack.c.b16 %v4007, %v4006
        %v4018 = vpack.c.b16 %v4009, %v4008
        %v4019 = vpack.c.b16 %v4011, %v4010
        %4028 = vmatprep.subr.bf16.mxu0 0
        %4029 = vmatpush1.bf16.msra.mxu0 %v4019
        %4030 = vmatprep.subr.bf16.mxu0 0
        %4031 = vmatpush1.bf16.msra.mxu0 %v4018
        %4032 = vmatprep.subr.bf16.mxu0 0
        %4033 = vmatpush1.bf16.msra.mxu0 %v4017
        %4034 = vmatprep.subr.bf16.mxu0 0
        %4035 = vmatpush1.bf16.msra.mxu0 %v4016
        %4036 = vmatprep.subr.bf16.mxu0 0
        %4037 = vmatpush1.bf16.msra.mxu0 %v4015
        %4038 = vmatprep.subr.bf16.mxu0 0
        %4039 = vmatpush1.bf16.msra.mxu0 %v4014
        %4040 = vmatprep.subr.bf16.mxu0 0
        %4041 = vmatpush1.bf16.msra.mxu0 %v4013
        %4042 = vmatprep.subr.bf16.mxu0 0
        %4043 = vmatpush1.bf16.msra.mxu0 %v4012
        %4044 = vmatprep.subr.bf16.mxu0 0
        %4045 = vmatpush2.bf16.msra.mxu0 0
        %4046 = vmatprep.subr.bf16.mxu0 0
        %4047 = vmatpush2.bf16.msra.mxu0 0
        %4048 = vmatprep.subr.bf16.mxu0 0
        %4049 = vmatpush2.bf16.msra.mxu0 0
        %4050 = vmatprep.subr.bf16.mxu0 0
        %4051 = vmatpush2.bf16.msra.mxu0 0
        %4052 = vmatprep.subr.bf16.mxu0 0
        %4053 = vmatpush2.bf16.msra.mxu0 0
        %4054 = vmatprep.subr.bf16.mxu0 0
        %4055 = vmatpush2.bf16.msra.mxu0 0
        %4056 = vmatprep.subr.bf16.mxu0 0
        %4057 = vmatpush2.bf16.msra.mxu0 0
        %4058 = vmatprep.subr.bf16.mxu0 0
        %4059 = vmatpush2.bf16.msra.mxu0 0
        %4060 = vmatprep.mubr.bf16.mxu0 0
        %4061 = vmatmul.mubr.bf16.gmra.mxu0 %v3956
        %v4062 = vpop.f32.mrf.mxu0
        %v4063 = vadd.f32 0.0, %v4062
        %v4064 = vpop.f32.mrf.mxu0
        %v4065 = vpop.f32.mrf.mxu0
        %v4066 = vadd.f32 0.0, %v4065
        %v4067 = vpop.f32.mrf.mxu0
        %4068 = vmatprep.mubr.bf16.mxu0 0
        %4069 = vmatmul.mubr.bf16.gmra.mxu0 %v3957
        %v4070 = vpop.f32.mrf.mxu0
        %v4071 = vadd.f32 0.0, %v4070
        %v4072 = vpop.f32.mrf.mxu0
        %v4073 = vpop.f32.mrf.mxu0
        %v4074 = vadd.f32 0.0, %v4073
        %v4075 = vpop.f32.mrf.mxu0
        %4076 = vmatprep.mubr.bf16.mxu0 0
        %4077 = vmatmul.mubr.bf16.gmra.mxu0 %v3958
        %v4078 = vpop.f32.mrf.mxu0
        %v4079 = vadd.f32 0.0, %v4078
        %v4080 = vpop.f32.mrf.mxu0
        %v4081 = vpop.f32.mrf.mxu0
        %v4082 = vadd.f32 0.0, %v4081
        %v4083 = vpop.f32.mrf.mxu0
        %4084 = vmatprep.mubr.bf16.mxu0 0
        %4085 = vmatmul.mubr.bf16.gmra.mxu0 %v3959
        %v4086 = vpop.f32.mrf.mxu0
        %v4087 = vadd.f32 0.0, %v4086
        %v4088 = vpop.f32.mrf.mxu0
        %v4089 = vpop.f32.mrf.mxu0
        %v4090 = vadd.f32 0.0, %v4089
        %v4091 = vpop.f32.mrf.mxu0
        %4092 = vmatprep.mubr.bf16.mxu0 0
        %4093 = vmatmul.mubr.bf16.gmra.mxu0 %v3960
        %v4094 = vpop.f32.mrf.mxu0
        %v4095 = vadd.f32 0.0, %v4094
        %v4096 = vpop.f32.mrf.mxu0
        %v4097 = vpop.f32.mrf.mxu0
        %v4098 = vadd.f32 0.0, %v4097
        %v4099 = vpop.f32.mrf.mxu0
        %4100 = vmatprep.mubr.bf16.mxu0 0
        %4101 = vmatmul.mubr.bf16.gmra.mxu0 %v3961
        %v4102 = vpop.f32.mrf.mxu0
        %v4103 = vadd.f32 0.0, %v4102
        %v4104 = vpop.f32.mrf.mxu0
        %v4105 = vpop.f32.mrf.mxu0
        %v4106 = vadd.f32 0.0, %v4105
        %v4107 = vpop.f32.mrf.mxu0
        %4108 = vmatprep.mubr.bf16.mxu0 0
        %4109 = vmatmul.mubr.bf16.gmra.mxu0 %v3962
        %v4110 = vpop.f32.mrf.mxu0
        %v4111 = vadd.f32 0.0, %v4110
        %v4112 = vpop.f32.mrf.mxu0
        %v4113 = vpop.f32.mrf.mxu0
        %v4114 = vpop.f32.mrf.mxu0
        %4115 = vdwg.mxu0
        %v4116 = vadd.f32 %v3930, %v4063
        %v4117 = vadd.f32 %v3931, %v4066
        %v4118 = vadd.f32 %v3932, %v4071
        %v4119 = vadd.f32 %v3933, %v4074
        %v4120 = vadd.f32 %v3934, %v4079
        %v4121 = vadd.f32 %v3935, %v4082
        %v4122 = vadd.f32 %v3936, %v4087
        %v4123 = vadd.f32 %v3937, %v4090
        %v4124 = vadd.f32 %v3938, %v4095
        %v4125 = vadd.f32 %v3939, %v4098
        %v4126 = vadd.f32 %v3940, %v4103
        %v4127 = vadd.f32 %v3941, %v4106
        %v4128 = vadd.f32 %v3942, %v4111
        %v4129 = vld [vmem:[#allocation2 + $0x18] sm:$0xff]
        %v4130 = vld [vmem:[#allocation2 + $0x20] sm:$0xff]
        %v4131 = vld [vmem:[#allocation2 + $0x28] sm:$0xff]
        %v4132 = vld [vmem:[#allocation2 + $0x30] sm:$0xff]
        %v4133 = vld [vmem:[#allocation2 + $0x38] sm:$0xff]
        %v4134 = vld [vmem:[#allocation2 + $0x40] sm:$0xff]
        %v4135 = vld [vmem:[#allocation2 + $0x48] sm:$0xff]
        %v4136 = vld [vmem:[#allocation2 + $0x50] sm:$0xff]
        %v4137 = vld [vmem:[#allocation2 + $0x58] sm:$0xff]
        %v4138 = vld [vmem:[#allocation2 + $0x60] sm:$0xff]
        %v4139 = vld [vmem:[#allocation2 + $0x68] sm:$0xff]
        %v4140 = vld [vmem:[#allocation2 + $0x70] sm:$0xff]
        %v4141 = vld [vmem:[#allocation2 + $0x78] sm:$0xff]
        %v4142 = vpack.c.bf16 %v4130, %v4129
        %v4143 = vpack.c.bf16 %v4132, %v4131
        %v4144 = vpack.c.bf16 %v4134, %v4133
        %v4145 = vpack.c.bf16 %v4136, %v4135
        %v4146 = vpack.c.bf16 %v4138, %v4137
        %v4147 = vpack.c.bf16 %v4140, %v4139
        %v4148 = vpack.c.bf16 %v4141, %v4141
        %s4149 = scalar_lea.vmem [#allocation6], 512
        %v4150 = vld [vmem:[%s4149] sm:$0xf]
        %v4151 = vld [vmem:[%s4149 + $0x4] sm:$0xf]
        %v4152 = vld [vmem:[%s4149 + $0x8] sm:$0xf]
        %v4153 = vld [vmem:[%s4149 + $0xc] sm:$0xf]
        %v4154 = vld [vmem:[%s4149 + $0x10] sm:$0xf]
        %v4155 = vld [vmem:[%s4149 + $0x14] sm:$0xf]
        %v4156 = vld [vmem:[%s4149 + $0x18] sm:$0xf]
        %v4157 = vld [vmem:[%s4149 + $0x1c] sm:$0xf]
        %v4158 = vld [vmem:[%s4149 + $0x20] sm:$0xf]
        %v4159 = vld [vmem:[%s4149 + $0x24] sm:$0xf]
        %v4160 = vld [vmem:[%s4149 + $0x28] sm:$0xf]
        %v4161 = vld [vmem:[%s4149 + $0x2c] sm:$0xf]
        %v4162 = vld [vmem:[%s4149 + $0x30] sm:$0xf]
        %v4163 = vld [vmem:[%s4149 + $0x34] sm:$0xf]
        %v4164 = vld [vmem:[%s4149 + $0x38] sm:$0xf]
        %v4165 = vld [vmem:[%s4149 + $0x3c] sm:$0xf]
        %v4182 = vunpack.c.l.b16 %v4150
        %v4183 = vunpack.c.l.b16 %v4151
        %v4184 = vunpack.c.l.b16 %v4152
        %v4185 = vunpack.c.l.b16 %v4153
        %v4186 = vunpack.c.l.b16 %v4154
        %v4187 = vunpack.c.l.b16 %v4155
        %v4188 = vunpack.c.l.b16 %v4156
        %v4189 = vunpack.c.l.b16 %v4157
        %v4190 = vunpack.c.l.b16 %v4158
        %v4191 = vunpack.c.l.b16 %v4159
        %v4192 = vunpack.c.l.b16 %v4160
        %v4193 = vunpack.c.l.b16 %v4161
        %v4194 = vunpack.c.l.b16 %v4162
        %v4195 = vunpack.c.l.b16 %v4163
        %v4196 = vunpack.c.l.b16 %v4164
        %v4197 = vunpack.c.l.b16 %v4165
        %v4198 = vpack.c.b16 %v4183, %v4182
        %v4199 = vpack.c.b16 %v4185, %v4184
        %v4200 = vpack.c.b16 %v4187, %v4186
        %v4201 = vpack.c.b16 %v4189, %v4188
        %v4202 = vpack.c.b16 %v4191, %v4190
        %v4203 = vpack.c.b16 %v4193, %v4192
        %v4204 = vpack.c.b16 %v4195, %v4194
        %v4205 = vpack.c.b16 %v4197, %v4196
        %4214 = vmatprep.subr.bf16.mxu0 0
        %4215 = vmatpush1.bf16.msra.mxu0 %v4205
        %4216 = vmatprep.subr.bf16.mxu0 0
        %4217 = vmatpush1.bf16.msra.mxu0 %v4204
        %4218 = vmatprep.subr.bf16.mxu0 0
        %4219 = vmatpush1.bf16.msra.mxu0 %v4203
        %4220 = vmatprep.subr.bf16.mxu0 0
        %4221 = vmatpush1.bf16.msra.mxu0 %v4202
        %4222 = vmatprep.subr.bf16.mxu0 0
        %4223 = vmatpush1.bf16.msra.mxu0 %v4201
        %4224 = vmatprep.subr.bf16.mxu0 0
        %4225 = vmatpush1.bf16.msra.mxu0 %v4200
        %4226 = vmatprep.subr.bf16.mxu0 0
        %4227 = vmatpush1.bf16.msra.mxu0 %v4199
        %4228 = vmatprep.subr.bf16.mxu0 0
        %4229 = vmatpush1.bf16.msra.mxu0 %v4198
        %4230 = vmatprep.subr.bf16.mxu0 0
        %4231 = vmatpush2.bf16.msra.mxu0 0
        %4232 = vmatprep.subr.bf16.mxu0 0
        %4233 = vmatpush2.bf16.msra.mxu0 0
        %4234 = vmatprep.subr.bf16.mxu0 0
        %4235 = vmatpush2.bf16.msra.mxu0 0
        %4236 = vmatprep.subr.bf16.mxu0 0
        %4237 = vmatpush2.bf16.msra.mxu0 0
        %4238 = vmatprep.subr.bf16.mxu0 0
        %4239 = vmatpush2.bf16.msra.mxu0 0
        %4240 = vmatprep.subr.bf16.mxu0 0
        %4241 = vmatpush2.bf16.msra.mxu0 0
        %4242 = vmatprep.subr.bf16.mxu0 0
        %4243 = vmatpush2.bf16.msra.mxu0 0
        %4244 = vmatprep.subr.bf16.mxu0 0
        %4245 = vmatpush2.bf16.msra.mxu0 0
        %4246 = vmatprep.mubr.bf16.mxu0 0
        %4247 = vmatmul.mubr.bf16.gmra.mxu0 %v4142
        %v4248 = vpop.f32.mrf.mxu0
        %v4249 = vadd.f32 0.0, %v4248
        %v4250 = vpop.f32.mrf.mxu0
        %v4251 = vpop.f32.mrf.mxu0
        %v4252 = vadd.f32 0.0, %v4251
        %v4253 = vpop.f32.mrf.mxu0
        %4254 = vmatprep.mubr.bf16.mxu0 0
        %4255 = vmatmul.mubr.bf16.gmra.mxu0 %v4143
        %v4256 = vpop.f32.mrf.mxu0
        %v4257 = vadd.f32 0.0, %v4256
        %v4258 = vpop.f32.mrf.mxu0
        %v4259 = vpop.f32.mrf.mxu0
        %v4260 = vadd.f32 0.0, %v4259
        %v4261 = vpop.f32.mrf.mxu0
        %4262 = vmatprep.mubr.bf16.mxu0 0
        %4263 = vmatmul.mubr.bf16.gmra.mxu0 %v4144
        %v4264 = vpop.f32.mrf.mxu0
        %v4265 = vadd.f32 0.0, %v4264
        %v4266 = vpop.f32.mrf.mxu0
        %v4267 = vpop.f32.mrf.mxu0
        %v4268 = vadd.f32 0.0, %v4267
        %v4269 = vpop.f32.mrf.mxu0
        %4270 = vmatprep.mubr.bf16.mxu0 0
        %4271 = vmatmul.mubr.bf16.gmra.mxu0 %v4145
        %v4272 = vpop.f32.mrf.mxu0
        %v4273 = vadd.f32 0.0, %v4272
        %v4274 = vpop.f32.mrf.mxu0
        %v4275 = vpop.f32.mrf.mxu0
        %v4276 = vadd.f32 0.0, %v4275
        %v4277 = vpop.f32.mrf.mxu0
        %4278 = vmatprep.mubr.bf16.mxu0 0
        %4279 = vmatmul.mubr.bf16.gmra.mxu0 %v4146
        %v4280 = vpop.f32.mrf.mxu0
        %v4281 = vadd.f32 0.0, %v4280
        %v4282 = vpop.f32.mrf.mxu0
        %v4283 = vpop.f32.mrf.mxu0
        %v4284 = vadd.f32 0.0, %v4283
        %v4285 = vpop.f32.mrf.mxu0
        %4286 = vmatprep.mubr.bf16.mxu0 0
        %4287 = vmatmul.mubr.bf16.gmra.mxu0 %v4147
        %v4288 = vpop.f32.mrf.mxu0
        %v4289 = vadd.f32 0.0, %v4288
        %v4290 = vpop.f32.mrf.mxu0
        %v4291 = vpop.f32.mrf.mxu0
        %v4292 = vadd.f32 0.0, %v4291
        %v4293 = vpop.f32.mrf.mxu0
        %4294 = vmatprep.mubr.bf16.mxu0 0
        %4295 = vmatmul.mubr.bf16.gmra.mxu0 %v4148
        %v4296 = vpop.f32.mrf.mxu0
        %v4297 = vadd.f32 0.0, %v4296
        %v4298 = vpop.f32.mrf.mxu0
        %v4299 = vpop.f32.mrf.mxu0
        %v4300 = vpop.f32.mrf.mxu0
        %4301 = vdwg.mxu0
        %v4302 = vadd.f32 %v4116, %v4249
        %v4303 = vadd.f32 %v4117, %v4252
        %v4304 = vadd.f32 %v4118, %v4257
        %v4305 = vadd.f32 %v4119, %v4260
        %v4306 = vadd.f32 %v4120, %v4265
        %v4307 = vadd.f32 %v4121, %v4268
        %v4308 = vadd.f32 %v4122, %v4273
        %v4309 = vadd.f32 %v4123, %v4276
        %v4310 = vadd.f32 %v4124, %v4281
        %v4311 = vadd.f32 %v4125, %v4284
        %v4312 = vadd.f32 %v4126, %v4289
        %v4313 = vadd.f32 %v4127, %v4292
        %v4314 = vadd.f32 %v4128, %v4297
        %v4315 = vmin.f32 %v4302, 0.0
        %v4316 = vmin.f32 %v4303, 0.0
        %v4317 = vmin.f32 %v4304, 0.0
        %v4318 = vmin.f32 %v4305, 0.0
        %v4319 = vmin.f32 %v4306, 0.0
        %v4320 = vmin.f32 %v4307, 0.0
        %v4321 = vmin.f32 %v4308, 0.0
        %v4322 = vmin.f32 %v4309, 0.0
        %v4323 = vmin.f32 %v4310, 0.0
        %v4324 = vmin.f32 %v4311, 0.0
        %v4325 = vmin.f32 %v4312, 0.0
        %v4326 = vmin.f32 %v4313, 0.0
        %v4327 = vmin.f32 %v4314, 0.0
        %v4328 = vmul.f32 %v4315, 1.442695
        %v4329 = vpow.pop %v4328
        %v4330 = vmul.f32 %v4316, 1.442695
        %v4331 = vpow.pop %v4330
        %v4332 = vmul.f32 %v4317, 1.442695
        %v4333 = vpow.pop %v4332
        %v4334 = vmul.f32 %v4318, 1.442695
        %v4335 = vpow.pop %v4334
        %v4336 = vmul.f32 %v4319, 1.442695
        %v4337 = vpow.pop %v4336
        %v4338 = vmul.f32 %v4320, 1.442695
        %v4339 = vpow.pop %v4338
        %v4340 = vmul.f32 %v4321, 1.442695
        %v4341 = vpow.pop %v4340
        %v4342 = vmul.f32 %v4322, 1.442695
        %v4343 = vpow.pop %v4342
        %v4344 = vmul.f32 %v4323, 1.442695
        %v4345 = vpow.pop %v4344
        %v4346 = vmul.f32 %v4324, 1.442695
        %v4347 = vpow.pop %v4346
        %v4348 = vmul.f32 %v4325, 1.442695
        %v4349 = vpow.pop %v4348
        %v4350 = vmul.f32 %v4326, 1.442695
        %v4351 = vpow.pop %v4350
        %v4352 = vmul.f32 %v4327, 1.442695
        %v4353 = vpow.pop %v4352
        %v4354 = vsub.f32 %v4329, 1.0
        %v4355 = vsub.f32 %v4331, 1.0
        %v4356 = vsub.f32 %v4333, 1.0
        %v4357 = vsub.f32 %v4335, 1.0
        %v4358 = vsub.f32 %v4337, 1.0
        %v4359 = vsub.f32 %v4339, 1.0
        %v4360 = vsub.f32 %v4341, 1.0
        %v4361 = vsub.f32 %v4343, 1.0
        %v4362 = vsub.f32 %v4345, 1.0
        %v4363 = vsub.f32 %v4347, 1.0
        %v4364 = vsub.f32 %v4349, 1.0
        %v4365 = vsub.f32 %v4351, 1.0
        %v4366 = vsub.f32 %v4353, 1.0
        %v4367 = vmul.f32 %v4354, 1.6732632
        %v4368 = vmul.f32 %v4355, 1.6732632
        %v4369 = vmul.f32 %v4356, 1.6732632
        %v4370 = vmul.f32 %v4357, 1.6732632
        %v4371 = vmul.f32 %v4358, 1.6732632
        %v4372 = vmul.f32 %v4359, 1.6732632
        %v4373 = vmul.f32 %v4360, 1.6732632
        %v4374 = vmul.f32 %v4361, 1.6732632
        %v4375 = vmul.f32 %v4362, 1.6732632
        %v4376 = vmul.f32 %v4363, 1.6732632
        %v4377 = vmul.f32 %v4364, 1.6732632
        %v4378 = vmul.f32 %v4365, 1.6732632
        %v4379 = vmul.f32 %v4366, 1.6732632
        %vm4380 = vcmp.gt.f32.partialorder %v4302, 0.0
        %vm4381 = vcmp.gt.f32.partialorder %v4303, 0.0
        %vm4382 = vcmp.gt.f32.partialorder %v4304, 0.0
        %vm4383 = vcmp.gt.f32.partialorder %v4305, 0.0
        %vm4384 = vcmp.gt.f32.partialorder %v4306, 0.0
        %vm4385 = vcmp.gt.f32.partialorder %v4307, 0.0
        %vm4386 = vcmp.gt.f32.partialorder %v4308, 0.0
        %vm4387 = vcmp.gt.f32.partialorder %v4309, 0.0
        %vm4388 = vcmp.gt.f32.partialorder %v4310, 0.0
        %vm4389 = vcmp.gt.f32.partialorder %v4311, 0.0
        %vm4390 = vcmp.gt.f32.partialorder %v4312, 0.0
        %vm4391 = vcmp.gt.f32.partialorder %v4313, 0.0
        %vm4392 = vcmp.gt.f32.partialorder %v4314, 0.0
        %v4393 = vsel %vm4380, %v4302, %v4367
        %v4394 = vsel %vm4381, %v4303, %v4368
        %v4395 = vsel %vm4382, %v4304, %v4369
        %v4396 = vsel %vm4383, %v4305, %v4370
        %v4397 = vsel %vm4384, %v4306, %v4371
        %v4398 = vsel %vm4385, %v4307, %v4372
        %v4399 = vsel %vm4386, %v4308, %v4373
        %v4400 = vsel %vm4387, %v4309, %v4374
        %v4401 = vsel %vm4388, %v4310, %v4375
        %v4402 = vsel %vm4389, %v4311, %v4376
        %v4403 = vsel %vm4390, %v4312, %v4377
        %v4404 = vsel %vm4391, %v4313, %v4378
        %v4405 = vsel %vm4392, %v4314, %v4379
        %v4406 = vmul.f32 %v4393, 1.050701
        %v4407 = vmul.f32 %v4394, 1.050701
        %v4408 = vmul.f32 %v4395, 1.050701
        %v4409 = vmul.f32 %v4396, 1.050701
        %v4410 = vmul.f32 %v4397, 1.050701
        %v4411 = vmul.f32 %v4398, 1.050701
        %v4412 = vmul.f32 %v4399, 1.050701
        %v4413 = vmul.f32 %v4400, 1.050701
        %v4414 = vmul.f32 %v4401, 1.050701
        %v4415 = vmul.f32 %v4402, 1.050701
        %v4416 = vmul.f32 %v4403, 1.050701
        %v4417 = vmul.f32 %v4404, 1.050701
        %v4418 = vmul.f32 %v4405, 1.050701
        %v4419 = vpack.c.bf16 %v4407, %v4406
        %v4420 = vpack.c.bf16 %v4409, %v4408
        %v4421 = vpack.c.bf16 %v4411, %v4410
        %v4422 = vpack.c.bf16 %v4413, %v4412
        %v4423 = vpack.c.bf16 %v4415, %v4414
        %v4424 = vpack.c.bf16 %v4417, %v4416
        %v4425 = vpack.c.bf16 %v4418, %v4418
        %v4426 = vld [vmem:[%s2] sm:$0xf]
        %v4427 = vld [vmem:[%s2 + $0x4] sm:$0xf]
        %v4428 = vld [vmem:[%s2 + $0x8] sm:$0xf]
        %v4429 = vld [vmem:[%s2 + $0xc] sm:$0xf]
        %v4430 = vld [vmem:[%s2 + $0x10] sm:$0xf]
        %v4431 = vld [vmem:[%s2 + $0x14] sm:$0xf]
        %v4432 = vld [vmem:[%s2 + $0x18] sm:$0xf]
        %v4440 = vunpack.c.l.b16 %v4426
        %v4441 = vunpack.c.l.b16 %v4427
        %v4442 = vunpack.c.l.b16 %v4428
        %v4443 = vunpack.c.l.b16 %v4429
        %v4444 = vunpack.c.l.b16 %v4430
        %v4445 = vunpack.c.l.b16 %v4431
        %v4446 = vunpack.c.l.b16 %v4432
        %v4447 = vpack.c.b16 %v4441, %v4440
        %v4448 = vpack.c.b16 %v4443, %v4442
        %v4449 = vpack.c.b16 %v4445, %v4444
        %v4450 = vpack.c.b16 %v4446, %v4446
        %v4452 = vsel %vm2493, %v4447, 0
        %v4455 = vsel %vm2493, %v4448, 0
        %v4458 = vsel %vm2493, %v4449, 0
        %v4461 = vsel %vm2493, %v4450, 0
        %v4464 = vsel %vm2518, %v4425, 0
        %4466 = vmatprep.subr.bf16.mxu0 0
        %4467 = vmatpush1.bf16.msra.mxu0 0
        %4468 = vmatprep.subr.bf16.mxu0 0
        %4469 = vmatpush1.bf16.msra.mxu0 %v4464
        %4470 = vmatprep.subr.bf16.mxu0 0
        %4471 = vmatpush1.bf16.msra.mxu0 %v4424
        %4472 = vmatprep.subr.bf16.mxu0 0
        %4473 = vmatpush1.bf16.msra.mxu0 %v4423
        %4474 = vmatprep.subr.bf16.mxu0 0
        %4475 = vmatpush1.bf16.msra.mxu0 %v4422
        %4476 = vmatprep.subr.bf16.mxu0 0
        %4477 = vmatpush1.bf16.msra.mxu0 %v4421
        %4478 = vmatprep.subr.bf16.mxu0 0
        %4479 = vmatpush1.bf16.msra.mxu0 %v4420
        %4480 = vmatprep.subr.bf16.mxu0 0
        %4481 = vmatpush1.bf16.msra.mxu0 %v4419
        %4482 = vmatprep.subr.bf16.mxu0 0
        %4483 = vmatpush2.bf16.msra.mxu0 0
        %4484 = vmatprep.subr.bf16.mxu0 0
        %4485 = vmatpush2.bf16.msra.mxu0 0
        %4486 = vmatprep.subr.bf16.mxu0 0
        %4487 = vmatpush2.bf16.msra.mxu0 0
        %4488 = vmatprep.subr.bf16.mxu0 0
        %4489 = vmatpush2.bf16.msra.mxu0 0
        %4490 = vmatprep.subr.bf16.mxu0 0
        %4491 = vmatpush2.bf16.msra.mxu0 0
        %4492 = vmatprep.subr.bf16.mxu0 0
        %4493 = vmatpush2.bf16.msra.mxu0 0
        %4494 = vmatprep.subr.bf16.mxu0 0
        %4495 = vmatpush2.bf16.msra.mxu0 0
        %4496 = vmatprep.subr.bf16.mxu0 0
        %4497 = vmatpush2.bf16.msra.mxu0 0
        %4498 = vmatprep.mubr.bf16.mxu0 0
        %4499 = vmatmul.mubr.bf16.gmra.mxu0 %v4452
        %v4500 = vpop.f32.mrf.mxu0
        %v4501 = vadd.f32 0.0, %v4500
        %v4502 = vpop.f32.mrf.mxu0
        %v4503 = vpop.f32.mrf.mxu0
        %v4504 = vadd.f32 0.0, %v4503
        %v4505 = vpop.f32.mrf.mxu0
        %4506 = vmatprep.mubr.bf16.mxu0 0
        %4507 = vmatmul.mubr.bf16.gmra.mxu0 %v4455
        %v4508 = vpop.f32.mrf.mxu0
        %v4509 = vadd.f32 0.0, %v4508
        %v4510 = vpop.f32.mrf.mxu0
        %v4511 = vpop.f32.mrf.mxu0
        %v4512 = vadd.f32 0.0, %v4511
        %v4513 = vpop.f32.mrf.mxu0
        %4514 = vmatprep.mubr.bf16.mxu0 0
        %4515 = vmatmul.mubr.bf16.gmra.mxu0 %v4458
        %v4516 = vpop.f32.mrf.mxu0
        %v4517 = vadd.f32 0.0, %v4516
        %v4518 = vpop.f32.mrf.mxu0
        %v4519 = vpop.f32.mrf.mxu0
        %v4520 = vadd.f32 0.0, %v4519
        %v4521 = vpop.f32.mrf.mxu0
        %4522 = vmatprep.mubr.bf16.mxu0 0
        %4523 = vmatmul.mubr.bf16.gmra.mxu0 %v4461
        %v4524 = vpop.f32.mrf.mxu0
        %v4525 = vadd.f32 0.0, %v4524
        %v4526 = vpop.f32.mrf.mxu0
        %v4527 = vpop.f32.mrf.mxu0
        %v4528 = vpop.f32.mrf.mxu0
        %4529 = vdwg.mxu0
        %4530 = vst [vmem:[#allocation3] sm:$0xff] %v4501
        %4531 = vst [vmem:[#allocation3 + $0x8] sm:$0xff] %v4504
        %4532 = vst [vmem:[#allocation3 + $0x10] sm:$0xff] %v4509
        %4533 = vst [vmem:[#allocation3 + $0x18] sm:$0xff] %v4512
        %4534 = vst [vmem:[#allocation3 + $0x20] sm:$0xff] %v4517
        %4535 = vst [vmem:[#allocation3 + $0x28] sm:$0xff] %v4520
        %4536 = vst [vmem:[#allocation3 + $0x30] sm:$0xff] %v4525
        %v4537 = vld [vmem:[%s10] sm:$0x1]
        %v4539 = vlaneseq
        %v4540 = vshrl.u32 %v4539, 7
        %v4541 = vsub.s32 0, %v4540
        %v4542 = vrot.slane %v4537, %v4541
        %v4544 = vld [vmem:[#allocation3] sm:$0xff]
        %v4545 = vld [vmem:[#allocation3 + $0x8] sm:$0xff]
        %v4546 = vld [vmem:[#allocation3 + $0x10] sm:$0xff]
        %v4547 = vld [vmem:[#allocation3 + $0x18] sm:$0xff]
        %v4548 = vld [vmem:[#allocation3 + $0x20] sm:$0xff]
        %v4549 = vpack.c.bf16 %v4545, %v4544
        %v4550 = vpack.c.bf16 %v4547, %v4546
        %v4551 = vpack.c.bf16 %v4548, %v4548
        %v4552 = vld [vmem:[#allocation8] sm:$0xf]
        %v4553 = vld [vmem:[#allocation8 + $0x4] sm:$0xf]
        %v4554 = vld [vmem:[#allocation8 + $0x8] sm:$0xf]
        %v4555 = vld [vmem:[#allocation8 + $0xc] sm:$0xf]
        %v4556 = vld [vmem:[#allocation8 + $0x10] sm:$0xf]
        %v4557 = vld [vmem:[#allocation8 + $0x14] sm:$0xf]
        %v4558 = vld [vmem:[#allocation8 + $0x18] sm:$0xf]
        %v4559 = vld [vmem:[#allocation8 + $0x1c] sm:$0xf]
        %v4560 = vld [vmem:[#allocation8 + $0x20] sm:$0xf]
        %v4561 = vld [vmem:[#allocation8 + $0x24] sm:$0xf]
        %v4562 = vld [vmem:[#allocation8 + $0x28] sm:$0xf]
        %v4563 = vld [vmem:[#allocation8 + $0x2c] sm:$0xf]
        %v4564 = vld [vmem:[#allocation8 + $0x30] sm:$0xf]
        %v4565 = vld [vmem:[#allocation8 + $0x34] sm:$0xf]
        %v4566 = vld [vmem:[#allocation8 + $0x38] sm:$0xf]
        %v4567 = vld [vmem:[#allocation8 + $0x3c] sm:$0xf]
        %v4584 = vunpack.c.l.b16 %v4552
        %v4585 = vunpack.c.l.b16 %v4553
        %v4586 = vunpack.c.l.b16 %v4554
        %v4587 = vunpack.c.l.b16 %v4555
        %v4588 = vunpack.c.l.b16 %v4556
        %v4589 = vunpack.c.l.b16 %v4557
        %v4590 = vunpack.c.l.b16 %v4558
        %v4591 = vunpack.c.l.b16 %v4559
        %v4592 = vunpack.c.l.b16 %v4560
        %v4593 = vunpack.c.l.b16 %v4561
        %v4594 = vunpack.c.l.b16 %v4562
        %v4595 = vunpack.c.l.b16 %v4563
        %v4596 = vunpack.c.l.b16 %v4564
        %v4597 = vunpack.c.l.b16 %v4565
        %v4598 = vunpack.c.l.b16 %v4566
        %v4599 = vunpack.c.l.b16 %v4567
        %v4600 = vpack.c.b16 %v4585, %v4584
        %v4601 = vpack.c.b16 %v4587, %v4586
        %v4602 = vpack.c.b16 %v4589, %v4588
        %v4603 = vpack.c.b16 %v4591, %v4590
        %v4604 = vpack.c.b16 %v4593, %v4592
        %v4605 = vpack.c.b16 %v4595, %v4594
        %v4606 = vpack.c.b16 %v4597, %v4596
        %v4607 = vpack.c.b16 %v4599, %v4598
        %4616 = vmatprep.subr.bf16.mxu0 0
        %4617 = vmatpush1.bf16.msra.mxu0 %v4607
        %4618 = vmatprep.subr.bf16.mxu0 0
        %4619 = vmatpush1.bf16.msra.mxu0 %v4606
        %4620 = vmatprep.subr.bf16.mxu0 0
        %4621 = vmatpush1.bf16.msra.mxu0 %v4605
        %4622 = vmatprep.subr.bf16.mxu0 0
        %4623 = vmatpush1.bf16.msra.mxu0 %v4604
        %4624 = vmatprep.subr.bf16.mxu0 0
        %4625 = vmatpush1.bf16.msra.mxu0 %v4603
        %4626 = vmatprep.subr.bf16.mxu0 0
        %4627 = vmatpush1.bf16.msra.mxu0 %v4602
        %4628 = vmatprep.subr.bf16.mxu0 0
        %4629 = vmatpush1.bf16.msra.mxu0 %v4601
        %4630 = vmatprep.subr.bf16.mxu0 0
        %4631 = vmatpush1.bf16.msra.mxu0 %v4600
        %4632 = vmatprep.subr.bf16.mxu0 0
        %4633 = vmatpush2.bf16.msra.mxu0 0
        %4634 = vmatprep.subr.bf16.mxu0 0
        %4635 = vmatpush2.bf16.msra.mxu0 0
        %4636 = vmatprep.subr.bf16.mxu0 0
        %4637 = vmatpush2.bf16.msra.mxu0 0
        %4638 = vmatprep.subr.bf16.mxu0 0
        %4639 = vmatpush2.bf16.msra.mxu0 0
        %4640 = vmatprep.subr.bf16.mxu0 0
        %4641 = vmatpush2.bf16.msra.mxu0 0
        %4642 = vmatprep.subr.bf16.mxu0 0
        %4643 = vmatpush2.bf16.msra.mxu0 0
        %4644 = vmatprep.subr.bf16.mxu0 0
        %4645 = vmatpush2.bf16.msra.mxu0 0
        %4646 = vmatprep.subr.bf16.mxu0 0
        %4647 = vmatpush2.bf16.msra.mxu0 0
        %4648 = vmatprep.mubr.bf16.mxu0 0
        %4649 = vmatmul.mubr.bf16.gmra.mxu0 %v4549
        %v4650 = vpop.f32.mrf.mxu0
        %v4651 = vadd.f32 0.0, %v4650
        %v4652 = vpop.f32.mrf.mxu0
        %v4653 = vpop.f32.mrf.mxu0
        %v4654 = vadd.f32 0.0, %v4653
        %v4655 = vpop.f32.mrf.mxu0
        %4656 = vmatprep.mubr.bf16.mxu0 0
        %4657 = vmatmul.mubr.bf16.gmra.mxu0 %v4550
        %v4658 = vpop.f32.mrf.mxu0
        %v4659 = vadd.f32 0.0, %v4658
        %v4660 = vpop.f32.mrf.mxu0
        %v4661 = vpop.f32.mrf.mxu0
        %v4662 = vadd.f32 0.0, %v4661
        %v4663 = vpop.f32.mrf.mxu0
        %4664 = vmatprep.mubr.bf16.mxu0 0
        %4665 = vmatmul.mubr.bf16.gmra.mxu0 %v4551
        %v4666 = vpop.f32.mrf.mxu0
        %v4667 = vadd.f32 0.0, %v4666
        %v4668 = vpop.f32.mrf.mxu0
        %v4669 = vpop.f32.mrf.mxu0
        %v4670 = vpop.f32.mrf.mxu0
        %4671 = vdwg.mxu0
        %v4672 = vadd.f32 %v4542, %v4651
        %v4673 = vadd.f32 %v4542, %v4654
        %v4674 = vadd.f32 %v4542, %v4659
        %v4675 = vadd.f32 %v4542, %v4662
        %v4676 = vadd.f32 %v4542, %v4667
        %v4677 = vld [vmem:[#allocation3 + $0x1] sm:$0xff]
        %v4678 = vld [vmem:[#allocation3 + $0x9] sm:$0xff]
        %v4679 = vld [vmem:[#allocation3 + $0x11] sm:$0xff]
        %v4680 = vld [vmem:[#allocation3 + $0x19] sm:$0xff]
        %v4681 = vld [vmem:[#allocation3 + $0x21] sm:$0xff]
        %v4682 = vpack.c.bf16 %v4678, %v4677
        %v4683 = vpack.c.bf16 %v4680, %v4679
        %v4684 = vpack.c.bf16 %v4681, %v4681
        %s4685 = scalar_lea.vmem [#allocation8], 64
        %v4686 = vld [vmem:[%s4685] sm:$0xf]
        %v4687 = vld [vmem:[%s4685 + $0x4] sm:$0xf]
        %v4688 = vld [vmem:[%s4685 + $0x8] sm:$0xf]
        %v4689 = vld [vmem:[%s4685 + $0xc] sm:$0xf]
        %v4690 = vld [vmem:[%s4685 + $0x10] sm:$0xf]
        %v4691 = vld [vmem:[%s4685 + $0x14] sm:$0xf]
        %v4692 = vld [vmem:[%s4685 + $0x18] sm:$0xf]
        %v4693 = vld [vmem:[%s4685 + $0x1c] sm:$0xf]
        %v4694 = vld [vmem:[%s4685 + $0x20] sm:$0xf]
        %v4695 = vld [vmem:[%s4685 + $0x24] sm:$0xf]
        %v4696 = vld [vmem:[%s4685 + $0x28] sm:$0xf]
        %v4697 = vld [vmem:[%s4685 + $0x2c] sm:$0xf]
        %v4698 = vld [vmem:[%s4685 + $0x30] sm:$0xf]
        %v4699 = vld [vmem:[%s4685 + $0x34] sm:$0xf]
        %v4700 = vld [vmem:[%s4685 + $0x38] sm:$0xf]
        %v4701 = vld [vmem:[%s4685 + $0x3c] sm:$0xf]
        %v4718 = vunpack.c.l.b16 %v4686
        %v4719 = vunpack.c.l.b16 %v4687
        %v4720 = vunpack.c.l.b16 %v4688
        %v4721 = vunpack.c.l.b16 %v4689
        %v4722 = vunpack.c.l.b16 %v4690
        %v4723 = vunpack.c.l.b16 %v4691
        %v4724 = vunpack.c.l.b16 %v4692
        %v4725 = vunpack.c.l.b16 %v4693
        %v4726 = vunpack.c.l.b16 %v4694
        %v4727 = vunpack.c.l.b16 %v4695
        %v4728 = vunpack.c.l.b16 %v4696
        %v4729 = vunpack.c.l.b16 %v4697
        %v4730 = vunpack.c.l.b16 %v4698
        %v4731 = vunpack.c.l.b16 %v4699
        %v4732 = vunpack.c.l.b16 %v4700
        %v4733 = vunpack.c.l.b16 %v4701
        %v4734 = vpack.c.b16 %v4719, %v4718
        %v4735 = vpack.c.b16 %v4721, %v4720
        %v4736 = vpack.c.b16 %v4723, %v4722
        %v4737 = vpack.c.b16 %v4725, %v4724
        %v4738 = vpack.c.b16 %v4727, %v4726
        %v4739 = vpack.c.b16 %v4729, %v4728
        %v4740 = vpack.c.b16 %v4731, %v4730
        %v4741 = vpack.c.b16 %v4733, %v4732
        %4750 = vmatprep.subr.bf16.mxu0 0
        %4751 = vmatpush1.bf16.msra.mxu0 %v4741
        %4752 = vmatprep.subr.bf16.mxu0 0
        %4753 = vmatpush1.bf16.msra.mxu0 %v4740
        %4754 = vmatprep.subr.bf16.mxu0 0
        %4755 = vmatpush1.bf16.msra.mxu0 %v4739
        %4756 = vmatprep.subr.bf16.mxu0 0
        %4757 = vmatpush1.bf16.msra.mxu0 %v4738
        %4758 = vmatprep.subr.bf16.mxu0 0
        %4759 = vmatpush1.bf16.msra.mxu0 %v4737
        %4760 = vmatprep.subr.bf16.mxu0 0
        %4761 = vmatpush1.bf16.msra.mxu0 %v4736
        %4762 = vmatprep.subr.bf16.mxu0 0
        %4763 = vmatpush1.bf16.msra.mxu0 %v4735
        %4764 = vmatprep.subr.bf16.mxu0 0
        %4765 = vmatpush1.bf16.msra.mxu0 %v4734
        %4766 = vmatprep.subr.bf16.mxu0 0
        %4767 = vmatpush2.bf16.msra.mxu0 0
        %4768 = vmatprep.subr.bf16.mxu0 0
        %4769 = vmatpush2.bf16.msra.mxu0 0
        %4770 = vmatprep.subr.bf16.mxu0 0
        %4771 = vmatpush2.bf16.msra.mxu0 0
        %4772 = vmatprep.subr.bf16.mxu0 0
        %4773 = vmatpush2.bf16.msra.mxu0 0
        %4774 = vmatprep.subr.bf16.mxu0 0
        %4775 = vmatpush2.bf16.msra.mxu0 0
        %4776 = vmatprep.subr.bf16.mxu0 0
        %4777 = vmatpush2.bf16.msra.mxu0 0
        %4778 = vmatprep.subr.bf16.mxu0 0
        %4779 = vmatpush2.bf16.msra.mxu0 0
        %4780 = vmatprep.subr.bf16.mxu0 0
        %4781 = vmatpush2.bf16.msra.mxu0 0
        %4782 = vmatprep.mubr.bf16.mxu0 0
        %4783 = vmatmul.mubr.bf16.gmra.mxu0 %v4682
        %v4784 = vpop.f32.mrf.mxu0
        %v4785 = vadd.f32 0.0, %v4784
        %v4786 = vpop.f32.mrf.mxu0
        %v4787 = vpop.f32.mrf.mxu0
        %v4788 = vadd.f32 0.0, %v4787
        %v4789 = vpop.f32.mrf.mxu0
        %4790 = vmatprep.mubr.bf16.mxu0 0
        %4791 = vmatmul.mubr.bf16.gmra.mxu0 %v4683
        %v4792 = vpop.f32.mrf.mxu0
        %v4793 = vadd.f32 0.0, %v4792
        %v4794 = vpop.f32.mrf.mxu0
        %v4795 = vpop.f32.mrf.mxu0
        %v4796 = vadd.f32 0.0, %v4795
        %v4797 = vpop.f32.mrf.mxu0
        %4798 = vmatprep.mubr.bf16.mxu0 0
        %4799 = vmatmul.mubr.bf16.gmra.mxu0 %v4684
        %v4800 = vpop.f32.mrf.mxu0
        %v4801 = vadd.f32 0.0, %v4800
        %v4802 = vpop.f32.mrf.mxu0
        %v4803 = vpop.f32.mrf.mxu0
        %v4804 = vpop.f32.mrf.mxu0
        %4805 = vdwg.mxu0
        %v4806 = vadd.f32 %v4672, %v4785
        %v4807 = vadd.f32 %v4673, %v4788
        %v4808 = vadd.f32 %v4674, %v4793
        %v4809 = vadd.f32 %v4675, %v4796
        %v4810 = vadd.f32 %v4676, %v4801
        %v4811 = vld [vmem:[#allocation3 + $0x2] sm:$0xff]
        %v4812 = vld [vmem:[#allocation3 + $0xa] sm:$0xff]
        %v4813 = vld [vmem:[#allocation3 + $0x12] sm:$0xff]
        %v4814 = vld [vmem:[#allocation3 + $0x1a] sm:$0xff]
        %v4815 = vld [vmem:[#allocation3 + $0x22] sm:$0xff]
        %v4816 = vpack.c.bf16 %v4812, %v4811
        %v4817 = vpack.c.bf16 %v4814, %v4813
        %v4818 = vpack.c.bf16 %v4815, %v4815
        %s4819 = scalar_lea.vmem [#allocation8], 128
        %v4820 = vld [vmem:[%s4819] sm:$0xf]
        %v4821 = vld [vmem:[%s4819 + $0x4] sm:$0xf]
        %v4822 = vld [vmem:[%s4819 + $0x8] sm:$0xf]
        %v4823 = vld [vmem:[%s4819 + $0xc] sm:$0xf]
        %v4824 = vld [vmem:[%s4819 + $0x10] sm:$0xf]
        %v4825 = vld [vmem:[%s4819 + $0x14] sm:$0xf]
        %v4826 = vld [vmem:[%s4819 + $0x18] sm:$0xf]
        %v4827 = vld [vmem:[%s4819 + $0x1c] sm:$0xf]
        %v4828 = vld [vmem:[%s4819 + $0x20] sm:$0xf]
        %v4829 = vld [vmem:[%s4819 + $0x24] sm:$0xf]
        %v4830 = vld [vmem:[%s4819 + $0x28] sm:$0xf]
        %v4831 = vld [vmem:[%s4819 + $0x2c] sm:$0xf]
        %v4832 = vld [vmem:[%s4819 + $0x30] sm:$0xf]
        %v4833 = vld [vmem:[%s4819 + $0x34] sm:$0xf]
        %v4834 = vld [vmem:[%s4819 + $0x38] sm:$0xf]
        %v4835 = vld [vmem:[%s4819 + $0x3c] sm:$0xf]
        %v4852 = vunpack.c.l.b16 %v4820
        %v4853 = vunpack.c.l.b16 %v4821
        %v4854 = vunpack.c.l.b16 %v4822
        %v4855 = vunpack.c.l.b16 %v4823
        %v4856 = vunpack.c.l.b16 %v4824
        %v4857 = vunpack.c.l.b16 %v4825
        %v4858 = vunpack.c.l.b16 %v4826
        %v4859 = vunpack.c.l.b16 %v4827
        %v4860 = vunpack.c.l.b16 %v4828
        %v4861 = vunpack.c.l.b16 %v4829
        %v4862 = vunpack.c.l.b16 %v4830
        %v4863 = vunpack.c.l.b16 %v4831
        %v4864 = vunpack.c.l.b16 %v4832
        %v4865 = vunpack.c.l.b16 %v4833
        %v4866 = vunpack.c.l.b16 %v4834
        %v4867 = vunpack.c.l.b16 %v4835
        %v4868 = vpack.c.b16 %v4853, %v4852
        %v4869 = vpack.c.b16 %v4855, %v4854
        %v4870 = vpack.c.b16 %v4857, %v4856
        %v4871 = vpack.c.b16 %v4859, %v4858
        %v4872 = vpack.c.b16 %v4861, %v4860
        %v4873 = vpack.c.b16 %v4863, %v4862
        %v4874 = vpack.c.b16 %v4865, %v4864
        %v4875 = vpack.c.b16 %v4867, %v4866
        %4884 = vmatprep.subr.bf16.mxu0 0
        %4885 = vmatpush1.bf16.msra.mxu0 %v4875
        %4886 = vmatprep.subr.bf16.mxu0 0
        %4887 = vmatpush1.bf16.msra.mxu0 %v4874
        %4888 = vmatprep.subr.bf16.mxu0 0
        %4889 = vmatpush1.bf16.msra.mxu0 %v4873
        %4890 = vmatprep.subr.bf16.mxu0 0
        %4891 = vmatpush1.bf16.msra.mxu0 %v4872
        %4892 = vmatprep.subr.bf16.mxu0 0
        %4893 = vmatpush1.bf16.msra.mxu0 %v4871
        %4894 = vmatprep.subr.bf16.mxu0 0
        %4895 = vmatpush1.bf16.msra.mxu0 %v4870
        %4896 = vmatprep.subr.bf16.mxu0 0
        %4897 = vmatpush1.bf16.msra.mxu0 %v4869
        %4898 = vmatprep.subr.bf16.mxu0 0
        %4899 = vmatpush1.bf16.msra.mxu0 %v4868
        %4900 = vmatprep.subr.bf16.mxu0 0
        %4901 = vmatpush2.bf16.msra.mxu0 0
        %4902 = vmatprep.subr.bf16.mxu0 0
        %4903 = vmatpush2.bf16.msra.mxu0 0
        %4904 = vmatprep.subr.bf16.mxu0 0
        %4905 = vmatpush2.bf16.msra.mxu0 0
        %4906 = vmatprep.subr.bf16.mxu0 0
        %4907 = vmatpush2.bf16.msra.mxu0 0
        %4908 = vmatprep.subr.bf16.mxu0 0
        %4909 = vmatpush2.bf16.msra.mxu0 0
        %4910 = vmatprep.subr.bf16.mxu0 0
        %4911 = vmatpush2.bf16.msra.mxu0 0
        %4912 = vmatprep.subr.bf16.mxu0 0
        %4913 = vmatpush2.bf16.msra.mxu0 0
        %4914 = vmatprep.subr.bf16.mxu0 0
        %4915 = vmatpush2.bf16.msra.mxu0 0
        %4916 = vmatprep.mubr.bf16.mxu0 0
        %4917 = vmatmul.mubr.bf16.gmra.mxu0 %v4816
        %v4918 = vpop.f32.mrf.mxu0
        %v4919 = vadd.f32 0.0, %v4918
        %v4920 = vpop.f32.mrf.mxu0
        %v4921 = vpop.f32.mrf.mxu0
        %v4922 = vadd.f32 0.0, %v4921
        %v4923 = vpop.f32.mrf.mxu0
        %4924 = vmatprep.mubr.bf16.mxu0 0
        %4925 = vmatmul.mubr.bf16.gmra.mxu0 %v4817
        %v4926 = vpop.f32.mrf.mxu0
        %v4927 = vadd.f32 0.0, %v4926
        %v4928 = vpop.f32.mrf.mxu0
        %v4929 = vpop.f32.mrf.mxu0
        %v4930 = vadd.f32 0.0, %v4929
        %v4931 = vpop.f32.mrf.mxu0
        %4932 = vmatprep.mubr.bf16.mxu0 0
        %4933 = vmatmul.mubr.bf16.gmra.mxu0 %v4818
        %v4934 = vpop.f32.mrf.mxu0
        %v4935 = vadd.f32 0.0, %v4934
        %v4936 = vpop.f32.mrf.mxu0
        %v4937 = vpop.f32.mrf.mxu0
        %v4938 = vpop.f32.mrf.mxu0
        %4939 = vdwg.mxu0
        %v4940 = vadd.f32 %v4806, %v4919
        %v4941 = vadd.f32 %v4807, %v4922
        %v4942 = vadd.f32 %v4808, %v4927
        %v4943 = vadd.f32 %v4809, %v4930
        %v4944 = vadd.f32 %v4810, %v4935
        %v4945 = vld [vmem:[#allocation3 + $0x7] sm:$0xff]
        %v4946 = vld [vmem:[#allocation3 + $0xf] sm:$0xff]
        %v4947 = vld [vmem:[#allocation3 + $0x17] sm:$0xff]
        %v4948 = vld [vmem:[#allocation3 + $0x1f] sm:$0xff]
        %v4949 = vld [vmem:[#allocation3 + $0x27] sm:$0xff]
        %v4950 = vpack.c.bf16 %v4946, %v4945
        %v4951 = vpack.c.bf16 %v4948, %v4947
        %v4952 = vpack.c.bf16 %v4949, %v4949
        %s4953 = scalar_lea.vmem [#allocation8], 192
        %v4954 = vld [vmem:[%s4953] sm:$0xf]
        %v4955 = vld [vmem:[%s4953 + $0x4] sm:$0xf]
        %v4956 = vld [vmem:[%s4953 + $0x8] sm:$0xf]
        %v4957 = vld [vmem:[%s4953 + $0xc] sm:$0xf]
        %v4958 = vld [vmem:[%s4953 + $0x10] sm:$0xf]
        %v4959 = vld [vmem:[%s4953 + $0x14] sm:$0xf]
        %v4960 = vld [vmem:[%s4953 + $0x18] sm:$0xf]
        %v4961 = vld [vmem:[%s4953 + $0x1c] sm:$0xf]
        %v4962 = vld [vmem:[%s4953 + $0x20] sm:$0xf]
        %v4963 = vld [vmem:[%s4953 + $0x24] sm:$0xf]
        %v4964 = vld [vmem:[%s4953 + $0x28] sm:$0xf]
        %v4965 = vld [vmem:[%s4953 + $0x2c] sm:$0xf]
        %v4966 = vld [vmem:[%s4953 + $0x30] sm:$0xf]
        %v4967 = vld [vmem:[%s4953 + $0x34] sm:$0xf]
        %v4968 = vld [vmem:[%s4953 + $0x38] sm:$0xf]
        %v4969 = vld [vmem:[%s4953 + $0x3c] sm:$0xf]
        %v4986 = vunpack.c.l.b16 %v4954
        %v4987 = vunpack.c.l.b16 %v4955
        %v4988 = vunpack.c.l.b16 %v4956
        %v4989 = vunpack.c.l.b16 %v4957
        %v4990 = vunpack.c.l.b16 %v4958
        %v4991 = vunpack.c.l.b16 %v4959
        %v4992 = vunpack.c.l.b16 %v4960
        %v4993 = vunpack.c.l.b16 %v4961
        %v4994 = vunpack.c.l.b16 %v4962
        %v4995 = vunpack.c.l.b16 %v4963
        %v4996 = vunpack.c.l.b16 %v4964
        %v4997 = vunpack.c.l.b16 %v4965
        %v4998 = vunpack.c.l.b16 %v4966
        %v4999 = vunpack.c.l.b16 %v4967
        %v5000 = vunpack.c.l.b16 %v4968
        %v5001 = vunpack.c.l.b16 %v4969
        %v5002 = vpack.c.b16 %v4987, %v4986
        %v5003 = vpack.c.b16 %v4989, %v4988
        %v5004 = vpack.c.b16 %v4991, %v4990
        %v5005 = vpack.c.b16 %v4993, %v4992
        %v5006 = vpack.c.b16 %v4995, %v4994
        %v5007 = vpack.c.b16 %v4997, %v4996
        %v5008 = vpack.c.b16 %v4999, %v4998
        %v5009 = vpack.c.b16 %v5001, %v5000
        %5018 = vmatprep.subr.bf16.mxu0 0
        %5019 = vmatpush1.bf16.msra.mxu0 %v5009
        %5020 = vmatprep.subr.bf16.mxu0 0
        %5021 = vmatpush1.bf16.msra.mxu0 %v5008
        %5022 = vmatprep.subr.bf16.mxu0 0
        %5023 = vmatpush1.bf16.msra.mxu0 %v5007
        %5024 = vmatprep.subr.bf16.mxu0 0
        %5025 = vmatpush1.bf16.msra.mxu0 %v5006
        %5026 = vmatprep.subr.bf16.mxu0 0
        %5027 = vmatpush1.bf16.msra.mxu0 %v5005
        %5028 = vmatprep.subr.bf16.mxu0 0
        %5029 = vmatpush1.bf16.msra.mxu0 %v5004
        %5030 = vmatprep.subr.bf16.mxu0 0
        %5031 = vmatpush1.bf16.msra.mxu0 %v5003
        %5032 = vmatprep.subr.bf16.mxu0 0
        %5033 = vmatpush1.bf16.msra.mxu0 %v5002
        %5034 = vmatprep.subr.bf16.mxu0 0
        %5035 = vmatpush2.bf16.msra.mxu0 0
        %5036 = vmatprep.subr.bf16.mxu0 0
        %5037 = vmatpush2.bf16.msra.mxu0 0
        %5038 = vmatprep.subr.bf16.mxu0 0
        %5039 = vmatpush2.bf16.msra.mxu0 0
        %5040 = vmatprep.subr.bf16.mxu0 0
        %5041 = vmatpush2.bf16.msra.mxu0 0
        %5042 = vmatprep.subr.bf16.mxu0 0
        %5043 = vmatpush2.bf16.msra.mxu0 0
        %5044 = vmatprep.subr.bf16.mxu0 0
        %5045 = vmatpush2.bf16.msra.mxu0 0
        %5046 = vmatprep.subr.bf16.mxu0 0
        %5047 = vmatpush2.bf16.msra.mxu0 0
        %5048 = vmatprep.subr.bf16.mxu0 0
        %5049 = vmatpush2.bf16.msra.mxu0 0
        %5050 = vmatprep.mubr.bf16.mxu0 0
        %5051 = vmatmul.mubr.bf16.gmra.mxu0 %v4950
        %v5052 = vpop.f32.mrf.mxu0
        %v5053 = vadd.f32 0.0, %v5052
        %v5054 = vpop.f32.mrf.mxu0
        %v5055 = vpop.f32.mrf.mxu0
        %v5056 = vadd.f32 0.0, %v5055
        %v5057 = vpop.f32.mrf.mxu0
        %5058 = vmatprep.mubr.bf16.mxu0 0
        %5059 = vmatmul.mubr.bf16.gmra.mxu0 %v4951
        %v5060 = vpop.f32.mrf.mxu0
        %v5061 = vadd.f32 0.0, %v5060
        %v5062 = vpop.f32.mrf.mxu0
        %v5063 = vpop.f32.mrf.mxu0
        %v5064 = vadd.f32 0.0, %v5063
        %v5065 = vpop.f32.mrf.mxu0
        %5066 = vmatprep.mubr.bf16.mxu0 0
        %5067 = vmatmul.mubr.bf16.gmra.mxu0 %v4952
        %v5068 = vpop.f32.mrf.mxu0
        %v5069 = vadd.f32 0.0, %v5068
        %v5070 = vpop.f32.mrf.mxu0
        %v5071 = vpop.f32.mrf.mxu0
        %v5072 = vpop.f32.mrf.mxu0
        %5073 = vdwg.mxu0
        %v5074 = vadd.f32 %v4940, %v5053
        %v5075 = vadd.f32 %v4941, %v5056
        %v5076 = vadd.f32 %v4942, %v5061
        %v5077 = vadd.f32 %v4943, %v5064
        %v5078 = vadd.f32 %v4944, %v5069
        %v5079 = vld [vmem:[#allocation3 + $0x8] sm:$0xff]
        %v5080 = vld [vmem:[#allocation3 + $0x10] sm:$0xff]
        %v5081 = vld [vmem:[#allocation3 + $0x18] sm:$0xff]
        %v5082 = vld [vmem:[#allocation3 + $0x20] sm:$0xff]
        %v5083 = vld [vmem:[#allocation3 + $0x28] sm:$0xff]
        %v5084 = vpack.c.bf16 %v5080, %v5079
        %v5085 = vpack.c.bf16 %v5082, %v5081
        %v5086 = vpack.c.bf16 %v5083, %v5083
        %s5087 = scalar_lea.vmem [#allocation8], 256
        %v5088 = vld [vmem:[%s5087] sm:$0xf]
        %v5089 = vld [vmem:[%s5087 + $0x4] sm:$0xf]
        %v5090 = vld [vmem:[%s5087 + $0x8] sm:$0xf]
        %v5091 = vld [vmem:[%s5087 + $0xc] sm:$0xf]
        %v5092 = vld [vmem:[%s5087 + $0x10] sm:$0xf]
        %v5093 = vld [vmem:[%s5087 + $0x14] sm:$0xf]
        %v5094 = vld [vmem:[%s5087 + $0x18] sm:$0xf]
        %v5095 = vld [vmem:[%s5087 + $0x1c] sm:$0xf]
        %v5096 = vld [vmem:[%s5087 + $0x20] sm:$0xf]
        %v5097 = vld [vmem:[%s5087 + $0x24] sm:$0xf]
        %v5098 = vld [vmem:[%s5087 + $0x28] sm:$0xf]
        %v5099 = vld [vmem:[%s5087 + $0x2c] sm:$0xf]
        %v5100 = vld [vmem:[%s5087 + $0x30] sm:$0xf]
        %v5101 = vld [vmem:[%s5087 + $0x34] sm:$0xf]
        %v5102 = vld [vmem:[%s5087 + $0x38] sm:$0xf]
        %v5103 = vld [vmem:[%s5087 + $0x3c] sm:$0xf]
        %v5120 = vunpack.c.l.b16 %v5088
        %v5121 = vunpack.c.l.b16 %v5089
        %v5122 = vunpack.c.l.b16 %v5090
        %v5123 = vunpack.c.l.b16 %v5091
        %v5124 = vunpack.c.l.b16 %v5092
        %v5125 = vunpack.c.l.b16 %v5093
        %v5126 = vunpack.c.l.b16 %v5094
        %v5127 = vunpack.c.l.b16 %v5095
        %v5128 = vunpack.c.l.b16 %v5096
        %v5129 = vunpack.c.l.b16 %v5097
        %v5130 = vunpack.c.l.b16 %v5098
        %v5131 = vunpack.c.l.b16 %v5099
        %v5132 = vunpack.c.l.b16 %v5100
        %v5133 = vunpack.c.l.b16 %v5101
        %v5134 = vunpack.c.l.b16 %v5102
        %v5135 = vunpack.c.l.b16 %v5103
        %v5136 = vpack.c.b16 %v5121, %v5120
        %v5137 = vpack.c.b16 %v5123, %v5122
        %v5138 = vpack.c.b16 %v5125, %v5124
        %v5139 = vpack.c.b16 %v5127, %v5126
        %v5140 = vpack.c.b16 %v5129, %v5128
        %v5141 = vpack.c.b16 %v5131, %v5130
        %v5142 = vpack.c.b16 %v5133, %v5132
        %v5143 = vpack.c.b16 %v5135, %v5134
        %5152 = vmatprep.subr.bf16.mxu0 0
        %5153 = vmatpush1.bf16.msra.mxu0 %v5143
        %5154 = vmatprep.subr.bf16.mxu0 0
        %5155 = vmatpush1.bf16.msra.mxu0 %v5142
        %5156 = vmatprep.subr.bf16.mxu0 0
        %5157 = vmatpush1.bf16.msra.mxu0 %v5141
        %5158 = vmatprep.subr.bf16.mxu0 0
        %5159 = vmatpush1.bf16.msra.mxu0 %v5140
        %5160 = vmatprep.subr.bf16.mxu0 0
        %5161 = vmatpush1.bf16.msra.mxu0 %v5139
        %5162 = vmatprep.subr.bf16.mxu0 0
        %5163 = vmatpush1.bf16.msra.mxu0 %v5138
        %5164 = vmatprep.subr.bf16.mxu0 0
        %5165 = vmatpush1.bf16.msra.mxu0 %v5137
        %5166 = vmatprep.subr.bf16.mxu0 0
        %5167 = vmatpush1.bf16.msra.mxu0 %v5136
        %5168 = vmatprep.subr.bf16.mxu0 0
        %5169 = vmatpush2.bf16.msra.mxu0 0
        %5170 = vmatprep.subr.bf16.mxu0 0
        %5171 = vmatpush2.bf16.msra.mxu0 0
        %5172 = vmatprep.subr.bf16.mxu0 0
        %5173 = vmatpush2.bf16.msra.mxu0 0
        %5174 = vmatprep.subr.bf16.mxu0 0
        %5175 = vmatpush2.bf16.msra.mxu0 0
        %5176 = vmatprep.subr.bf16.mxu0 0
        %5177 = vmatpush2.bf16.msra.mxu0 0
        %5178 = vmatprep.subr.bf16.mxu0 0
        %5179 = vmatpush2.bf16.msra.mxu0 0
        %5180 = vmatprep.subr.bf16.mxu0 0
        %5181 = vmatpush2.bf16.msra.mxu0 0
        %5182 = vmatprep.subr.bf16.mxu0 0
        %5183 = vmatpush2.bf16.msra.mxu0 0
        %5184 = vmatprep.mubr.bf16.mxu0 0
        %5185 = vmatmul.mubr.bf16.gmra.mxu0 %v5084
        %v5186 = vpop.f32.mrf.mxu0
        %v5187 = vadd.f32 0.0, %v5186
        %v5188 = vpop.f32.mrf.mxu0
        %v5189 = vpop.f32.mrf.mxu0
        %v5190 = vadd.f32 0.0, %v5189
        %v5191 = vpop.f32.mrf.mxu0
        %5192 = vmatprep.mubr.bf16.mxu0 0
        %5193 = vmatmul.mubr.bf16.gmra.mxu0 %v5085
        %v5194 = vpop.f32.mrf.mxu0
        %v5195 = vadd.f32 0.0, %v5194
        %v5196 = vpop.f32.mrf.mxu0
        %v5197 = vpop.f32.mrf.mxu0
        %v5198 = vadd.f32 0.0, %v5197
        %v5199 = vpop.f32.mrf.mxu0
        %5200 = vmatprep.mubr.bf16.mxu0 0
        %5201 = vmatmul.mubr.bf16.gmra.mxu0 %v5086
        %v5202 = vpop.f32.mrf.mxu0
        %v5203 = vadd.f32 0.0, %v5202
        %v5204 = vpop.f32.mrf.mxu0
        %v5205 = vpop.f32.mrf.mxu0
        %v5206 = vpop.f32.mrf.mxu0
        %5207 = vdwg.mxu0
        %v5208 = vadd.f32 %v5074, %v5187
        %v5209 = vadd.f32 %v5075, %v5190
        %v5210 = vadd.f32 %v5076, %v5195
        %v5211 = vadd.f32 %v5077, %v5198
        %v5212 = vadd.f32 %v5078, %v5203
        %v5213 = vld [vmem:[#allocation3 + $0x9] sm:$0xff]
        %v5214 = vld [vmem:[#allocation3 + $0x11] sm:$0xff]
        %v5215 = vld [vmem:[#allocation3 + $0x19] sm:$0xff]
        %v5216 = vld [vmem:[#allocation3 + $0x21] sm:$0xff]
        %v5217 = vld [vmem:[#allocation3 + $0x29] sm:$0xff]
        %v5218 = vpack.c.bf16 %v5214, %v5213
        %v5219 = vpack.c.bf16 %v5216, %v5215
        %v5220 = vpack.c.bf16 %v5217, %v5217
        %s5221 = scalar_lea.vmem [#allocation8], 320
        %v5222 = vld [vmem:[%s5221] sm:$0xf]
        %v5223 = vld [vmem:[%s5221 + $0x4] sm:$0xf]
        %v5224 = vld [vmem:[%s5221 + $0x8] sm:$0xf]
        %v5225 = vld [vmem:[%s5221 + $0xc] sm:$0xf]
        %v5226 = vld [vmem:[%s5221 + $0x10] sm:$0xf]
        %v5227 = vld [vmem:[%s5221 + $0x14] sm:$0xf]
        %v5228 = vld [vmem:[%s5221 + $0x18] sm:$0xf]
        %v5229 = vld [vmem:[%s5221 + $0x1c] sm:$0xf]
        %v5230 = vld [vmem:[%s5221 + $0x20] sm:$0xf]
        %v5231 = vld [vmem:[%s5221 + $0x24] sm:$0xf]
        %v5232 = vld [vmem:[%s5221 + $0x28] sm:$0xf]
        %v5233 = vld [vmem:[%s5221 + $0x2c] sm:$0xf]
        %v5234 = vld [vmem:[%s5221 + $0x30] sm:$0xf]
        %v5235 = vld [vmem:[%s5221 + $0x34] sm:$0xf]
        %v5236 = vld [vmem:[%s5221 + $0x38] sm:$0xf]
        %v5237 = vld [vmem:[%s5221 + $0x3c] sm:$0xf]
        %v5254 = vunpack.c.l.b16 %v5222
        %v5255 = vunpack.c.l.b16 %v5223
        %v5256 = vunpack.c.l.b16 %v5224
        %v5257 = vunpack.c.l.b16 %v5225
        %v5258 = vunpack.c.l.b16 %v5226
        %v5259 = vunpack.c.l.b16 %v5227
        %v5260 = vunpack.c.l.b16 %v5228
        %v5261 = vunpack.c.l.b16 %v5229
        %v5262 = vunpack.c.l.b16 %v5230
        %v5263 = vunpack.c.l.b16 %v5231
        %v5264 = vunpack.c.l.b16 %v5232
        %v5265 = vunpack.c.l.b16 %v5233
        %v5266 = vunpack.c.l.b16 %v5234
        %v5267 = vunpack.c.l.b16 %v5235
        %v5268 = vunpack.c.l.b16 %v5236
        %v5269 = vunpack.c.l.b16 %v5237
        %v5270 = vpack.c.b16 %v5255, %v5254
        %v5271 = vpack.c.b16 %v5257, %v5256
        %v5272 = vpack.c.b16 %v5259, %v5258
        %v5273 = vpack.c.b16 %v5261, %v5260
        %v5274 = vpack.c.b16 %v5263, %v5262
        %v5275 = vpack.c.b16 %v5265, %v5264
        %v5276 = vpack.c.b16 %v5267, %v5266
        %v5277 = vpack.c.b16 %v5269, %v5268
        %5286 = vmatprep.subr.bf16.mxu0 0
        %5287 = vmatpush1.bf16.msra.mxu0 %v5277
        %5288 = vmatprep.subr.bf16.mxu0 0
        %5289 = vmatpush1.bf16.msra.mxu0 %v5276
        %5290 = vmatprep.subr.bf16.mxu0 0
        %5291 = vmatpush1.bf16.msra.mxu0 %v5275
        %5292 = vmatprep.subr.bf16.mxu0 0
        %5293 = vmatpush1.bf16.msra.mxu0 %v5274
        %5294 = vmatprep.subr.bf16.mxu0 0
        %5295 = vmatpush1.bf16.msra.mxu0 %v5273
        %5296 = vmatprep.subr.bf16.mxu0 0
        %5297 = vmatpush1.bf16.msra.mxu0 %v5272
        %5298 = vmatprep.subr.bf16.mxu0 0
        %5299 = vmatpush1.bf16.msra.mxu0 %v5271
        %5300 = vmatprep.subr.bf16.mxu0 0
        %5301 = vmatpush1.bf16.msra.mxu0 %v5270
        %5302 = vmatprep.subr.bf16.mxu0 0
        %5303 = vmatpush2.bf16.msra.mxu0 0
        %5304 = vmatprep.subr.bf16.mxu0 0
        %5305 = vmatpush2.bf16.msra.mxu0 0
        %5306 = vmatprep.subr.bf16.mxu0 0
        %5307 = vmatpush2.bf16.msra.mxu0 0
        %5308 = vmatprep.subr.bf16.mxu0 0
        %5309 = vmatpush2.bf16.msra.mxu0 0
        %5310 = vmatprep.subr.bf16.mxu0 0
        %5311 = vmatpush2.bf16.msra.mxu0 0
        %5312 = vmatprep.subr.bf16.mxu0 0
        %5313 = vmatpush2.bf16.msra.mxu0 0
        %5314 = vmatprep.subr.bf16.mxu0 0
        %5315 = vmatpush2.bf16.msra.mxu0 0
        %5316 = vmatprep.subr.bf16.mxu0 0
        %5317 = vmatpush2.bf16.msra.mxu0 0
        %5318 = vmatprep.mubr.bf16.mxu0 0
        %5319 = vmatmul.mubr.bf16.gmra.mxu0 %v5218
        %v5320 = vpop.f32.mrf.mxu0
        %v5321 = vadd.f32 0.0, %v5320
        %v5322 = vpop.f32.mrf.mxu0
        %v5323 = vpop.f32.mrf.mxu0
        %v5324 = vadd.f32 0.0, %v5323
        %v5325 = vpop.f32.mrf.mxu0
        %5326 = vmatprep.mubr.bf16.mxu0 0
        %5327 = vmatmul.mubr.bf16.gmra.mxu0 %v5219
        %v5328 = vpop.f32.mrf.mxu0
        %v5329 = vadd.f32 0.0, %v5328
        %v5330 = vpop.f32.mrf.mxu0
        %v5331 = vpop.f32.mrf.mxu0
        %v5332 = vadd.f32 0.0, %v5331
        %v5333 = vpop.f32.mrf.mxu0
        %5334 = vmatprep.mubr.bf16.mxu0 0
        %5335 = vmatmul.mubr.bf16.gmra.mxu0 %v5220
        %v5336 = vpop.f32.mrf.mxu0
        %v5337 = vadd.f32 0.0, %v5336
        %v5338 = vpop.f32.mrf.mxu0
        %v5339 = vpop.f32.mrf.mxu0
        %v5340 = vpop.f32.mrf.mxu0
        %5341 = vdwg.mxu0
        %v5342 = vadd.f32 %v5208, %v5321
        %v5343 = vadd.f32 %v5209, %v5324
        %v5344 = vadd.f32 %v5210, %v5329
        %v5345 = vadd.f32 %v5211, %v5332
        %v5346 = vadd.f32 %v5212, %v5337
        %v5347 = vld [vmem:[#allocation3 + $0xe] sm:$0xff]
        %v5348 = vld [vmem:[#allocation3 + $0x16] sm:$0xff]
        %v5349 = vld [vmem:[#allocation3 + $0x1e] sm:$0xff]
        %v5350 = vld [vmem:[#allocation3 + $0x26] sm:$0xff]
        %v5351 = vld [vmem:[#allocation3 + $0x2e] sm:$0xff]
        %v5352 = vpack.c.bf16 %v5348, %v5347
        %v5353 = vpack.c.bf16 %v5350, %v5349
        %v5354 = vpack.c.bf16 %v5351, %v5351
        %s5355 = scalar_lea.vmem [#allocation8], 384
        %v5356 = vld [vmem:[%s5355] sm:$0xf]
        %v5357 = vld [vmem:[%s5355 + $0x4] sm:$0xf]
        %v5358 = vld [vmem:[%s5355 + $0x8] sm:$0xf]
        %v5359 = vld [vmem:[%s5355 + $0xc] sm:$0xf]
        %v5360 = vld [vmem:[%s5355 + $0x10] sm:$0xf]
        %v5361 = vld [vmem:[%s5355 + $0x14] sm:$0xf]
        %v5362 = vld [vmem:[%s5355 + $0x18] sm:$0xf]
        %v5363 = vld [vmem:[%s5355 + $0x1c] sm:$0xf]
        %v5364 = vld [vmem:[%s5355 + $0x20] sm:$0xf]
        %v5365 = vld [vmem:[%s5355 + $0x24] sm:$0xf]
        %v5366 = vld [vmem:[%s5355 + $0x28] sm:$0xf]
        %v5367 = vld [vmem:[%s5355 + $0x2c] sm:$0xf]
        %v5368 = vld [vmem:[%s5355 + $0x30] sm:$0xf]
        %v5369 = vld [vmem:[%s5355 + $0x34] sm:$0xf]
        %v5370 = vld [vmem:[%s5355 + $0x38] sm:$0xf]
        %v5371 = vld [vmem:[%s5355 + $0x3c] sm:$0xf]
        %v5388 = vunpack.c.l.b16 %v5356
        %v5389 = vunpack.c.l.b16 %v5357
        %v5390 = vunpack.c.l.b16 %v5358
        %v5391 = vunpack.c.l.b16 %v5359
        %v5392 = vunpack.c.l.b16 %v5360
        %v5393 = vunpack.c.l.b16 %v5361
        %v5394 = vunpack.c.l.b16 %v5362
        %v5395 = vunpack.c.l.b16 %v5363
        %v5396 = vunpack.c.l.b16 %v5364
        %v5397 = vunpack.c.l.b16 %v5365
        %v5398 = vunpack.c.l.b16 %v5366
        %v5399 = vunpack.c.l.b16 %v5367
        %v5400 = vunpack.c.l.b16 %v5368
        %v5401 = vunpack.c.l.b16 %v5369
        %v5402 = vunpack.c.l.b16 %v5370
        %v5403 = vunpack.c.l.b16 %v5371
        %v5404 = vpack.c.b16 %v5389, %v5388
        %v5405 = vpack.c.b16 %v5391, %v5390
        %v5406 = vpack.c.b16 %v5393, %v5392
        %v5407 = vpack.c.b16 %v5395, %v5394
        %v5408 = vpack.c.b16 %v5397, %v5396
        %v5409 = vpack.c.b16 %v5399, %v5398
        %v5410 = vpack.c.b16 %v5401, %v5400
        %v5411 = vpack.c.b16 %v5403, %v5402
        %5420 = vmatprep.subr.bf16.mxu0 0
        %5421 = vmatpush1.bf16.msra.mxu0 %v5411
        %5422 = vmatprep.subr.bf16.mxu0 0
        %5423 = vmatpush1.bf16.msra.mxu0 %v5410
        %5424 = vmatprep.subr.bf16.mxu0 0
        %5425 = vmatpush1.bf16.msra.mxu0 %v5409
        %5426 = vmatprep.subr.bf16.mxu0 0
        %5427 = vmatpush1.bf16.msra.mxu0 %v5408
        %5428 = vmatprep.subr.bf16.mxu0 0
        %5429 = vmatpush1.bf16.msra.mxu0 %v5407
        %5430 = vmatprep.subr.bf16.mxu0 0
        %5431 = vmatpush1.bf16.msra.mxu0 %v5406
        %5432 = vmatprep.subr.bf16.mxu0 0
        %5433 = vmatpush1.bf16.msra.mxu0 %v5405
        %5434 = vmatprep.subr.bf16.mxu0 0
        %5435 = vmatpush1.bf16.msra.mxu0 %v5404
        %5436 = vmatprep.subr.bf16.mxu0 0
        %5437 = vmatpush2.bf16.msra.mxu0 0
        %5438 = vmatprep.subr.bf16.mxu0 0
        %5439 = vmatpush2.bf16.msra.mxu0 0
        %5440 = vmatprep.subr.bf16.mxu0 0
        %5441 = vmatpush2.bf16.msra.mxu0 0
        %5442 = vmatprep.subr.bf16.mxu0 0
        %5443 = vmatpush2.bf16.msra.mxu0 0
        %5444 = vmatprep.subr.bf16.mxu0 0
        %5445 = vmatpush2.bf16.msra.mxu0 0
        %5446 = vmatprep.subr.bf16.mxu0 0
        %5447 = vmatpush2.bf16.msra.mxu0 0
        %5448 = vmatprep.subr.bf16.mxu0 0
        %5449 = vmatpush2.bf16.msra.mxu0 0
        %5450 = vmatprep.subr.bf16.mxu0 0
        %5451 = vmatpush2.bf16.msra.mxu0 0
        %5452 = vmatprep.mubr.bf16.mxu0 0
        %5453 = vmatmul.mubr.bf16.gmra.mxu0 %v5352
        %v5454 = vpop.f32.mrf.mxu0
        %v5455 = vadd.f32 0.0, %v5454
        %v5456 = vpop.f32.mrf.mxu0
        %v5457 = vpop.f32.mrf.mxu0
        %v5458 = vadd.f32 0.0, %v5457
        %v5459 = vpop.f32.mrf.mxu0
        %5460 = vmatprep.mubr.bf16.mxu0 0
        %5461 = vmatmul.mubr.bf16.gmra.mxu0 %v5353
        %v5462 = vpop.f32.mrf.mxu0
        %v5463 = vadd.f32 0.0, %v5462
        %v5464 = vpop.f32.mrf.mxu0
        %v5465 = vpop.f32.mrf.mxu0
        %v5466 = vadd.f32 0.0, %v5465
        %v5467 = vpop.f32.mrf.mxu0
        %5468 = vmatprep.mubr.bf16.mxu0 0
        %5469 = vmatmul.mubr.bf16.gmra.mxu0 %v5354
        %v5470 = vpop.f32.mrf.mxu0
        %v5471 = vadd.f32 0.0, %v5470
        %v5472 = vpop.f32.mrf.mxu0
        %v5473 = vpop.f32.mrf.mxu0
        %v5474 = vpop.f32.mrf.mxu0
        %5475 = vdwg.mxu0
        %v5476 = vadd.f32 %v5342, %v5455
        %v5477 = vadd.f32 %v5343, %v5458
        %v5478 = vadd.f32 %v5344, %v5463
        %v5479 = vadd.f32 %v5345, %v5466
        %v5480 = vadd.f32 %v5346, %v5471
        %v5481 = vld [vmem:[#allocation3 + $0xf] sm:$0xff]
        %v5482 = vld [vmem:[#allocation3 + $0x17] sm:$0xff]
        %v5483 = vld [vmem:[#allocation3 + $0x1f] sm:$0xff]
        %v5484 = vld [vmem:[#allocation3 + $0x27] sm:$0xff]
        %v5485 = vld [vmem:[#allocation3 + $0x2f] sm:$0xff]
        %v5486 = vpack.c.bf16 %v5482, %v5481
        %v5487 = vpack.c.bf16 %v5484, %v5483
        %v5488 = vpack.c.bf16 %v5485, %v5485
        %s5489 = scalar_lea.vmem [#allocation8], 448
        %v5490 = vld [vmem:[%s5489] sm:$0xf]
        %v5491 = vld [vmem:[%s5489 + $0x4] sm:$0xf]
        %v5492 = vld [vmem:[%s5489 + $0x8] sm:$0xf]
        %v5493 = vld [vmem:[%s5489 + $0xc] sm:$0xf]
        %v5494 = vld [vmem:[%s5489 + $0x10] sm:$0xf]
        %v5495 = vld [vmem:[%s5489 + $0x14] sm:$0xf]
        %v5496 = vld [vmem:[%s5489 + $0x18] sm:$0xf]
        %v5497 = vld [vmem:[%s5489 + $0x1c] sm:$0xf]
        %v5498 = vld [vmem:[%s5489 + $0x20] sm:$0xf]
        %v5499 = vld [vmem:[%s5489 + $0x24] sm:$0xf]
        %v5500 = vld [vmem:[%s5489 + $0x28] sm:$0xf]
        %v5501 = vld [vmem:[%s5489 + $0x2c] sm:$0xf]
        %v5502 = vld [vmem:[%s5489 + $0x30] sm:$0xf]
        %v5503 = vld [vmem:[%s5489 + $0x34] sm:$0xf]
        %v5504 = vld [vmem:[%s5489 + $0x38] sm:$0xf]
        %v5505 = vld [vmem:[%s5489 + $0x3c] sm:$0xf]
        %v5522 = vunpack.c.l.b16 %v5490
        %v5523 = vunpack.c.l.b16 %v5491
        %v5524 = vunpack.c.l.b16 %v5492
        %v5525 = vunpack.c.l.b16 %v5493
        %v5526 = vunpack.c.l.b16 %v5494
        %v5527 = vunpack.c.l.b16 %v5495
        %v5528 = vunpack.c.l.b16 %v5496
        %v5529 = vunpack.c.l.b16 %v5497
        %v5530 = vunpack.c.l.b16 %v5498
        %v5531 = vunpack.c.l.b16 %v5499
        %v5532 = vunpack.c.l.b16 %v5500
        %v5533 = vunpack.c.l.b16 %v5501
        %v5534 = vunpack.c.l.b16 %v5502
        %v5535 = vunpack.c.l.b16 %v5503
        %v5536 = vunpack.c.l.b16 %v5504
        %v5537 = vunpack.c.l.b16 %v5505
        %v5538 = vpack.c.b16 %v5523, %v5522
        %v5539 = vpack.c.b16 %v5525, %v5524
        %v5540 = vpack.c.b16 %v5527, %v5526
        %v5541 = vpack.c.b16 %v5529, %v5528
        %v5542 = vpack.c.b16 %v5531, %v5530
        %v5543 = vpack.c.b16 %v5533, %v5532
        %v5544 = vpack.c.b16 %v5535, %v5534
        %v5545 = vpack.c.b16 %v5537, %v5536
        %5554 = vmatprep.subr.bf16.mxu0 0
        %5555 = vmatpush1.bf16.msra.mxu0 %v5545
        %5556 = vmatprep.subr.bf16.mxu0 0
        %5557 = vmatpush1.bf16.msra.mxu0 %v5544
        %5558 = vmatprep.subr.bf16.mxu0 0
        %5559 = vmatpush1.bf16.msra.mxu0 %v5543
        %5560 = vmatprep.subr.bf16.mxu0 0
        %5561 = vmatpush1.bf16.msra.mxu0 %v5542
        %5562 = vmatprep.subr.bf16.mxu0 0
        %5563 = vmatpush1.bf16.msra.mxu0 %v5541
        %5564 = vmatprep.subr.bf16.mxu0 0
        %5565 = vmatpush1.bf16.msra.mxu0 %v5540
        %5566 = vmatprep.subr.bf16.mxu0 0
        %5567 = vmatpush1.bf16.msra.mxu0 %v5539
        %5568 = vmatprep.subr.bf16.mxu0 0
        %5569 = vmatpush1.bf16.msra.mxu0 %v5538
        %5570 = vmatprep.subr.bf16.mxu0 0
        %5571 = vmatpush2.bf16.msra.mxu0 0
        %5572 = vmatprep.subr.bf16.mxu0 0
        %5573 = vmatpush2.bf16.msra.mxu0 0
        %5574 = vmatprep.subr.bf16.mxu0 0
        %5575 = vmatpush2.bf16.msra.mxu0 0
        %5576 = vmatprep.subr.bf16.mxu0 0
        %5577 = vmatpush2.bf16.msra.mxu0 0
        %5578 = vmatprep.subr.bf16.mxu0 0
        %5579 = vmatpush2.bf16.msra.mxu0 0
        %5580 = vmatprep.subr.bf16.mxu0 0
        %5581 = vmatpush2.bf16.msra.mxu0 0
        %5582 = vmatprep.subr.bf16.mxu0 0
        %5583 = vmatpush2.bf16.msra.mxu0 0
        %5584 = vmatprep.subr.bf16.mxu0 0
        %5585 = vmatpush2.bf16.msra.mxu0 0
        %5586 = vmatprep.mubr.bf16.mxu0 0
        %5587 = vmatmul.mubr.bf16.gmra.mxu0 %v5486
        %v5588 = vpop.f32.mrf.mxu0
        %v5589 = vadd.f32 0.0, %v5588
        %v5590 = vpop.f32.mrf.mxu0
        %v5591 = vpop.f32.mrf.mxu0
        %v5592 = vadd.f32 0.0, %v5591
        %v5593 = vpop.f32.mrf.mxu0
        %5594 = vmatprep.mubr.bf16.mxu0 0
        %5595 = vmatmul.mubr.bf16.gmra.mxu0 %v5487
        %v5596 = vpop.f32.mrf.mxu0
        %v5597 = vadd.f32 0.0, %v5596
        %v5598 = vpop.f32.mrf.mxu0
        %v5599 = vpop.f32.mrf.mxu0
        %v5600 = vadd.f32 0.0, %v5599
        %v5601 = vpop.f32.mrf.mxu0
        %5602 = vmatprep.mubr.bf16.mxu0 0
        %5603 = vmatmul.mubr.bf16.gmra.mxu0 %v5488
        %v5604 = vpop.f32.mrf.mxu0
        %v5605 = vadd.f32 0.0, %v5604
        %v5606 = vpop.f32.mrf.mxu0
        %v5607 = vpop.f32.mrf.mxu0
        %v5608 = vpop.f32.mrf.mxu0
        %5609 = vdwg.mxu0
        %v5610 = vadd.f32 %v5476, %v5589
        %v5611 = vadd.f32 %v5477, %v5592
        %v5612 = vadd.f32 %v5478, %v5597
        %v5613 = vadd.f32 %v5479, %v5600
        %v5614 = vadd.f32 %v5480, %v5605
        %v5615 = vld [vmem:[#allocation3 + $0x10] sm:$0xff]
        %v5616 = vld [vmem:[#allocation3 + $0x18] sm:$0xff]
        %v5617 = vld [vmem:[#allocation3 + $0x20] sm:$0xff]
        %v5618 = vld [vmem:[#allocation3 + $0x28] sm:$0xff]
        %v5619 = vld [vmem:[#allocation3 + $0x30] sm:$0xff]
        %v5620 = vpack.c.bf16 %v5616, %v5615
        %v5621 = vpack.c.bf16 %v5618, %v5617
        %v5622 = vpack.c.bf16 %v5619, %v5619
        %s5623 = scalar_lea.vmem [#allocation8], 512
        %v5624 = vld [vmem:[%s5623] sm:$0xf]
        %v5625 = vld [vmem:[%s5623 + $0x4] sm:$0xf]
        %v5626 = vld [vmem:[%s5623 + $0x8] sm:$0xf]
        %v5627 = vld [vmem:[%s5623 + $0xc] sm:$0xf]
        %v5628 = vld [vmem:[%s5623 + $0x10] sm:$0xf]
        %v5629 = vld [vmem:[%s5623 + $0x14] sm:$0xf]
        %v5630 = vld [vmem:[%s5623 + $0x18] sm:$0xf]
        %v5631 = vld [vmem:[%s5623 + $0x1c] sm:$0xf]
        %v5632 = vld [vmem:[%s5623 + $0x20] sm:$0xf]
        %v5633 = vld [vmem:[%s5623 + $0x24] sm:$0xf]
        %v5634 = vld [vmem:[%s5623 + $0x28] sm:$0xf]
        %v5635 = vld [vmem:[%s5623 + $0x2c] sm:$0xf]
        %v5636 = vld [vmem:[%s5623 + $0x30] sm:$0xf]
        %v5637 = vld [vmem:[%s5623 + $0x34] sm:$0xf]
        %v5638 = vld [vmem:[%s5623 + $0x38] sm:$0xf]
        %v5639 = vld [vmem:[%s5623 + $0x3c] sm:$0xf]
        %v5656 = vunpack.c.l.b16 %v5624
        %v5657 = vunpack.c.l.b16 %v5625
        %v5658 = vunpack.c.l.b16 %v5626
        %v5659 = vunpack.c.l.b16 %v5627
        %v5660 = vunpack.c.l.b16 %v5628
        %v5661 = vunpack.c.l.b16 %v5629
        %v5662 = vunpack.c.l.b16 %v5630
        %v5663 = vunpack.c.l.b16 %v5631
        %v5664 = vunpack.c.l.b16 %v5632
        %v5665 = vunpack.c.l.b16 %v5633
        %v5666 = vunpack.c.l.b16 %v5634
        %v5667 = vunpack.c.l.b16 %v5635
        %v5668 = vunpack.c.l.b16 %v5636
        %v5669 = vunpack.c.l.b16 %v5637
        %v5670 = vunpack.c.l.b16 %v5638
        %v5671 = vunpack.c.l.b16 %v5639
        %v5672 = vpack.c.b16 %v5657, %v5656
        %v5673 = vpack.c.b16 %v5659, %v5658
        %v5674 = vpack.c.b16 %v5661, %v5660
        %v5675 = vpack.c.b16 %v5663, %v5662
        %v5676 = vpack.c.b16 %v5665, %v5664
        %v5677 = vpack.c.b16 %v5667, %v5666
        %v5678 = vpack.c.b16 %v5669, %v5668
        %v5679 = vpack.c.b16 %v5671, %v5670
        %5688 = vmatprep.subr.bf16.mxu0 0
        %5689 = vmatpush1.bf16.msra.mxu0 %v5679
        %5690 = vmatprep.subr.bf16.mxu0 0
        %5691 = vmatpush1.bf16.msra.mxu0 %v5678
        %5692 = vmatprep.subr.bf16.mxu0 0
        %5693 = vmatpush1.bf16.msra.mxu0 %v5677
        %5694 = vmatprep.subr.bf16.mxu0 0
        %5695 = vmatpush1.bf16.msra.mxu0 %v5676
        %5696 = vmatprep.subr.bf16.mxu0 0
        %5697 = vmatpush1.bf16.msra.mxu0 %v5675
        %5698 = vmatprep.subr.bf16.mxu0 0
        %5699 = vmatpush1.bf16.msra.mxu0 %v5674
        %5700 = vmatprep.subr.bf16.mxu0 0
        %5701 = vmatpush1.bf16.msra.mxu0 %v5673
        %5702 = vmatprep.subr.bf16.mxu0 0
        %5703 = vmatpush1.bf16.msra.mxu0 %v5672
        %5704 = vmatprep.subr.bf16.mxu0 0
        %5705 = vmatpush2.bf16.msra.mxu0 0
        %5706 = vmatprep.subr.bf16.mxu0 0
        %5707 = vmatpush2.bf16.msra.mxu0 0
        %5708 = vmatprep.subr.bf16.mxu0 0
        %5709 = vmatpush2.bf16.msra.mxu0 0
        %5710 = vmatprep.subr.bf16.mxu0 0
        %5711 = vmatpush2.bf16.msra.mxu0 0
        %5712 = vmatprep.subr.bf16.mxu0 0
        %5713 = vmatpush2.bf16.msra.mxu0 0
        %5714 = vmatprep.subr.bf16.mxu0 0
        %5715 = vmatpush2.bf16.msra.mxu0 0
        %5716 = vmatprep.subr.bf16.mxu0 0
        %5717 = vmatpush2.bf16.msra.mxu0 0
        %5718 = vmatprep.subr.bf16.mxu0 0
        %5719 = vmatpush2.bf16.msra.mxu0 0
        %5720 = vmatprep.mubr.bf16.mxu0 0
        %5721 = vmatmul.mubr.bf16.gmra.mxu0 %v5620
        %v5722 = vpop.f32.mrf.mxu0
        %v5723 = vadd.f32 0.0, %v5722
        %v5724 = vpop.f32.mrf.mxu0
        %v5725 = vpop.f32.mrf.mxu0
        %v5726 = vadd.f32 0.0, %v5725
        %v5727 = vpop.f32.mrf.mxu0
        %5728 = vmatprep.mubr.bf16.mxu0 0
        %5729 = vmatmul.mubr.bf16.gmra.mxu0 %v5621
        %v5730 = vpop.f32.mrf.mxu0
        %v5731 = vadd.f32 0.0, %v5730
        %v5732 = vpop.f32.mrf.mxu0
        %v5733 = vpop.f32.mrf.mxu0
        %v5734 = vadd.f32 0.0, %v5733
        %v5735 = vpop.f32.mrf.mxu0
        %5736 = vmatprep.mubr.bf16.mxu0 0
        %5737 = vmatmul.mubr.bf16.gmra.mxu0 %v5622
        %v5738 = vpop.f32.mrf.mxu0
        %v5739 = vadd.f32 0.0, %v5738
        %v5740 = vpop.f32.mrf.mxu0
        %v5741 = vpop.f32.mrf.mxu0
        %v5742 = vpop.f32.mrf.mxu0
        %5743 = vdwg.mxu0
        %v5744 = vadd.f32 %v5610, %v5723
        %v5745 = vadd.f32 %v5611, %v5726
        %v5746 = vadd.f32 %v5612, %v5731
        %v5747 = vadd.f32 %v5613, %v5734
        %v5748 = vadd.f32 %v5614, %v5739
        %v5749 = vmin.f32 %v5744, 0.0
        %v5750 = vmin.f32 %v5745, 0.0
        %v5751 = vmin.f32 %v5746, 0.0
        %v5752 = vmin.f32 %v5747, 0.0
        %v5753 = vmin.f32 %v5748, 0.0
        %v5754 = vmul.f32 %v5749, 1.442695
        %v5755 = vpow.pop %v5754
        %v5756 = vmul.f32 %v5750, 1.442695
        %v5757 = vpow.pop %v5756
        %v5758 = vmul.f32 %v5751, 1.442695
        %v5759 = vpow.pop %v5758
        %v5760 = vmul.f32 %v5752, 1.442695
        %v5761 = vpow.pop %v5760
        %v5762 = vmul.f32 %v5753, 1.442695
        %v5763 = vpow.pop %v5762
        %v5764 = vsub.f32 %v5755, 1.0
        %v5765 = vsub.f32 %v5757, 1.0
        %v5766 = vsub.f32 %v5759, 1.0
        %v5767 = vsub.f32 %v5761, 1.0
        %v5768 = vsub.f32 %v5763, 1.0
        %v5769 = vmul.f32 %v5764, 1.6732632
        %v5770 = vmul.f32 %v5765, 1.6732632
        %v5771 = vmul.f32 %v5766, 1.6732632
        %v5772 = vmul.f32 %v5767, 1.6732632
        %v5773 = vmul.f32 %v5768, 1.6732632
        %vm5774 = vcmp.gt.f32.partialorder %v5744, 0.0
        %vm5775 = vcmp.gt.f32.partialorder %v5745, 0.0
        %vm5776 = vcmp.gt.f32.partialorder %v5746, 0.0
        %vm5777 = vcmp.gt.f32.partialorder %v5747, 0.0
        %vm5778 = vcmp.gt.f32.partialorder %v5748, 0.0
        %v5779 = vsel %vm5774, %v5744, %v5769
        %v5780 = vsel %vm5775, %v5745, %v5770
        %v5781 = vsel %vm5776, %v5746, %v5771
        %v5782 = vsel %vm5777, %v5747, %v5772
        %v5783 = vsel %vm5778, %v5748, %v5773
        %v5784 = vmul.f32 %v5779, 1.050701
        %v5785 = vmul.f32 %v5780, 1.050701
        %v5786 = vmul.f32 %v5781, 1.050701
        %v5787 = vmul.f32 %v5782, 1.050701
        %v5788 = vmul.f32 %v5783, 1.050701
        %v5789 = vpack.c.bf16 %v5785, %v5784
        %v5790 = vpack.c.bf16 %v5787, %v5786
        %v5791 = vpack.c.bf16 %v5788, %v5788
        %v5792 = vld [vmem:[%s3] sm:$0xf]
        %v5793 = vld [vmem:[%s3 + $0x4] sm:$0xf]
        %v5794 = vld [vmem:[%s3 + $0x8] sm:$0xf]
        %v5795 = vld [vmem:[%s3 + $0xc] sm:$0xf]
        %v5796 = vld [vmem:[%s3 + $0x10] sm:$0xf]
        %v5797 = vld [vmem:[%s3 + $0x14] sm:$0xf]
        %v5798 = vld [vmem:[%s3 + $0x18] sm:$0xf]
        %v5806 = vunpack.c.l.b16 %v5792
        %v5807 = vunpack.c.l.b16 %v5793
        %v5808 = vunpack.c.l.b16 %v5794
        %v5809 = vunpack.c.l.b16 %v5795
        %v5810 = vunpack.c.l.b16 %v5796
        %v5811 = vunpack.c.l.b16 %v5797
        %v5812 = vunpack.c.l.b16 %v5798
        %v5813 = vpack.c.b16 %v5807, %v5806
        %v5814 = vpack.c.b16 %v5809, %v5808
        %v5815 = vpack.c.b16 %v5811, %v5810
        %v5816 = vpack.c.b16 %v5812, %v5812
        %vm5817 = vcmask 326656
        %v5819 = vsel %vm5817, %v5813, 0
        %v5822 = vsel %vm5817, %v5814, 0
        %v5825 = vsel %vm5817, %v5815, 0
        %v5828 = vsel %vm5817, %v5816, 0
        %v5831 = vsel %vm2518, %v5791, 0
        %5833 = vmatprep.subr.bf16.mxu0 0
        %5834 = vmatpush1.bf16.msra.mxu0 0
        %5835 = vmatprep.subr.bf16.mxu0 0
        %5836 = vmatpush1.bf16.msra.mxu0 0
        %5837 = vmatprep.subr.bf16.mxu0 0
        %5838 = vmatpush1.bf16.msra.mxu0 0
        %5839 = vmatprep.subr.bf16.mxu0 0
        %5840 = vmatpush1.bf16.msra.mxu0 0
        %5841 = vmatprep.subr.bf16.mxu0 0
        %5842 = vmatpush1.bf16.msra.mxu0 0
        %5843 = vmatprep.subr.bf16.mxu0 0
        %5844 = vmatpush1.bf16.msra.mxu0 %v5831
        %5845 = vmatprep.subr.bf16.mxu0 0
        %5846 = vmatpush1.bf16.msra.mxu0 %v5790
        %5847 = vmatprep.subr.bf16.mxu0 0
        %5848 = vmatpush1.bf16.msra.mxu0 %v5789
        %5849 = vmatprep.subr.bf16.mxu0 0
        %5850 = vmatpush2.bf16.msra.mxu0 0
        %5851 = vmatprep.subr.bf16.mxu0 0
        %5852 = vmatpush2.bf16.msra.mxu0 0
        %5853 = vmatprep.subr.bf16.mxu0 0
        %5854 = vmatpush2.bf16.msra.mxu0 0
        %5855 = vmatprep.subr.bf16.mxu0 0
        %5856 = vmatpush2.bf16.msra.mxu0 0
        %5857 = vmatprep.subr.bf16.mxu0 0
        %5858 = vmatpush2.bf16.msra.mxu0 0
        %5859 = vmatprep.subr.bf16.mxu0 0
        %5860 = vmatpush2.bf16.msra.mxu0 0
        %5861 = vmatprep.subr.bf16.mxu0 0
        %5862 = vmatpush2.bf16.msra.mxu0 0
        %5863 = vmatprep.subr.bf16.mxu0 0
        %5864 = vmatpush2.bf16.msra.mxu0 0
        %5865 = vmatprep.mubr.bf16.mxu0 0
        %5866 = vmatmul.mubr.bf16.gmra.mxu0 %v5819
        %v5867 = vpop.f32.mrf.mxu0
        %v5868 = vadd.f32 0.0, %v5867
        %v5869 = vpop.f32.mrf.mxu0
        %v5870 = vpop.f32.mrf.mxu0
        %v5871 = vadd.f32 0.0, %v5870
        %v5872 = vpop.f32.mrf.mxu0
        %5873 = vmatprep.mubr.bf16.mxu0 0
        %5874 = vmatmul.mubr.bf16.gmra.mxu0 %v5822
        %v5875 = vpop.f32.mrf.mxu0
        %v5876 = vadd.f32 0.0, %v5875
        %v5877 = vpop.f32.mrf.mxu0
        %v5878 = vpop.f32.mrf.mxu0
        %v5879 = vadd.f32 0.0, %v5878
        %v5880 = vpop.f32.mrf.mxu0
        %5881 = vmatprep.mubr.bf16.mxu0 0
        %5882 = vmatmul.mubr.bf16.gmra.mxu0 %v5825
        %v5883 = vpop.f32.mrf.mxu0
        %v5884 = vadd.f32 0.0, %v5883
        %v5885 = vpop.f32.mrf.mxu0
        %v5886 = vpop.f32.mrf.mxu0
        %v5887 = vadd.f32 0.0, %v5886
        %v5888 = vpop.f32.mrf.mxu0
        %5889 = vmatprep.mubr.bf16.mxu0 0
        %5890 = vmatmul.mubr.bf16.gmra.mxu0 %v5828
        %v5891 = vpop.f32.mrf.mxu0
        %v5892 = vadd.f32 0.0, %v5891
        %v5893 = vpop.f32.mrf.mxu0
        %v5894 = vpop.f32.mrf.mxu0
        %v5895 = vpop.f32.mrf.mxu0
        %5896 = vdwg.mxu0
        %5897 = vst [vmem:[#allocation4] sm:$0xff] %v5868
        %5898 = vst [vmem:[#allocation4 + $0x8] sm:$0xff] %v5871
        %5899 = vst [vmem:[#allocation4 + $0x10] sm:$0xff] %v5876
        %5900 = vst [vmem:[#allocation4 + $0x18] sm:$0xff] %v5879
        %5901 = vst [vmem:[#allocation4 + $0x20] sm:$0xff] %v5884
        %5902 = vst [vmem:[#allocation4 + $0x28] sm:$0xff] %v5887
        %5903 = vst [vmem:[#allocation4 + $0x30] sm:$0xff] %v5892
        %v5904 = vld [vmem:[%s12] sm:$0x1]
        %v5906 = vlaneseq
        %v5907 = vshrl.u32 %v5906, 7
        %v5908 = vsub.s32 0, %v5907
        %v5909 = vrot.slane %v5904, %v5908
        %v5911 = vld [vmem:[#allocation4] sm:$0xff]
        %v5912 = vld [vmem:[#allocation4 + $0x8] sm:$0xff]
        %v5913 = vld [vmem:[#allocation4 + $0x10] sm:$0xff]
        %v5914 = vld [vmem:[#allocation4 + $0x18] sm:$0xff]
        %v5915 = vld [vmem:[#allocation4 + $0x20] sm:$0xff]
        %v5916 = vpack.c.bf16 %v5912, %v5911
        %v5917 = vpack.c.bf16 %v5914, %v5913
        %v5918 = vpack.c.bf16 %v5915, %v5915
        %v5919 = vld [vmem:[#allocation10] sm:$0xf]
        %v5920 = vld [vmem:[#allocation10 + $0x4] sm:$0xf]
        %v5921 = vld [vmem:[#allocation10 + $0x8] sm:$0xf]
        %v5922 = vld [vmem:[#allocation10 + $0xc] sm:$0xf]
        %v5923 = vld [vmem:[#allocation10 + $0x10] sm:$0xf]
        %v5924 = vld [vmem:[#allocation10 + $0x14] sm:$0xf]
        %v5925 = vld [vmem:[#allocation10 + $0x18] sm:$0xf]
        %v5926 = vld [vmem:[#allocation10 + $0x1c] sm:$0xf]
        %v5927 = vld [vmem:[#allocation10 + $0x20] sm:$0xf]
        %v5928 = vld [vmem:[#allocation10 + $0x24] sm:$0xf]
        %v5929 = vld [vmem:[#allocation10 + $0x28] sm:$0xf]
        %v5930 = vld [vmem:[#allocation10 + $0x2c] sm:$0xf]
        %v5931 = vld [vmem:[#allocation10 + $0x30] sm:$0xf]
        %v5932 = vld [vmem:[#allocation10 + $0x34] sm:$0xf]
        %v5933 = vld [vmem:[#allocation10 + $0x38] sm:$0xf]
        %v5934 = vld [vmem:[#allocation10 + $0x3c] sm:$0xf]
        %v5951 = vunpack.c.l.b16 %v5919
        %v5952 = vunpack.c.l.b16 %v5920
        %v5953 = vunpack.c.l.b16 %v5921
        %v5954 = vunpack.c.l.b16 %v5922
        %v5955 = vunpack.c.l.b16 %v5923
        %v5956 = vunpack.c.l.b16 %v5924
        %v5957 = vunpack.c.l.b16 %v5925
        %v5958 = vunpack.c.l.b16 %v5926
        %v5959 = vunpack.c.l.b16 %v5927
        %v5960 = vunpack.c.l.b16 %v5928
        %v5961 = vunpack.c.l.b16 %v5929
        %v5962 = vunpack.c.l.b16 %v5930
        %v5963 = vunpack.c.l.b16 %v5931
        %v5964 = vunpack.c.l.b16 %v5932
        %v5965 = vunpack.c.l.b16 %v5933
        %v5966 = vunpack.c.l.b16 %v5934
        %v5967 = vpack.c.b16 %v5952, %v5951
        %v5968 = vpack.c.b16 %v5954, %v5953
        %v5969 = vpack.c.b16 %v5956, %v5955
        %v5970 = vpack.c.b16 %v5958, %v5957
        %v5971 = vpack.c.b16 %v5960, %v5959
        %v5972 = vpack.c.b16 %v5962, %v5961
        %v5973 = vpack.c.b16 %v5964, %v5963
        %v5974 = vpack.c.b16 %v5966, %v5965
        %5983 = vmatprep.subr.bf16.mxu0 0
        %5984 = vmatpush1.bf16.msra.mxu0 %v5974
        %5985 = vmatprep.subr.bf16.mxu0 0
        %5986 = vmatpush1.bf16.msra.mxu0 %v5973
        %5987 = vmatprep.subr.bf16.mxu0 0
        %5988 = vmatpush1.bf16.msra.mxu0 %v5972
        %5989 = vmatprep.subr.bf16.mxu0 0
        %5990 = vmatpush1.bf16.msra.mxu0 %v5971
        %5991 = vmatprep.subr.bf16.mxu0 0
        %5992 = vmatpush1.bf16.msra.mxu0 %v5970
        %5993 = vmatprep.subr.bf16.mxu0 0
        %5994 = vmatpush1.bf16.msra.mxu0 %v5969
        %5995 = vmatprep.subr.bf16.mxu0 0
        %5996 = vmatpush1.bf16.msra.mxu0 %v5968
        %5997 = vmatprep.subr.bf16.mxu0 0
        %5998 = vmatpush1.bf16.msra.mxu0 %v5967
        %5999 = vmatprep.subr.bf16.mxu0 0
        %6000 = vmatpush2.bf16.msra.mxu0 0
        %6001 = vmatprep.subr.bf16.mxu0 0
        %6002 = vmatpush2.bf16.msra.mxu0 0
        %6003 = vmatprep.subr.bf16.mxu0 0
        %6004 = vmatpush2.bf16.msra.mxu0 0
        %6005 = vmatprep.subr.bf16.mxu0 0
        %6006 = vmatpush2.bf16.msra.mxu0 0
        %6007 = vmatprep.subr.bf16.mxu0 0
        %6008 = vmatpush2.bf16.msra.mxu0 0
        %6009 = vmatprep.subr.bf16.mxu0 0
        %6010 = vmatpush2.bf16.msra.mxu0 0
        %6011 = vmatprep.subr.bf16.mxu0 0
        %6012 = vmatpush2.bf16.msra.mxu0 0
        %6013 = vmatprep.subr.bf16.mxu0 0
        %6014 = vmatpush2.bf16.msra.mxu0 0
        %6015 = vmatprep.mubr.bf16.mxu0 0
        %6016 = vmatmul.mubr.bf16.gmra.mxu0 %v5916
        %v6017 = vpop.f32.mrf.mxu0
        %v6018 = vadd.f32 0.0, %v6017
        %v6019 = vpop.f32.mrf.mxu0
        %v6020 = vpop.f32.mrf.mxu0
        %v6021 = vadd.f32 0.0, %v6020
        %v6022 = vpop.f32.mrf.mxu0
        %6023 = vmatprep.mubr.bf16.mxu0 0
        %6024 = vmatmul.mubr.bf16.gmra.mxu0 %v5917
        %v6025 = vpop.f32.mrf.mxu0
        %v6026 = vadd.f32 0.0, %v6025
        %v6027 = vpop.f32.mrf.mxu0
        %v6028 = vpop.f32.mrf.mxu0
        %v6029 = vadd.f32 0.0, %v6028
        %v6030 = vpop.f32.mrf.mxu0
        %6031 = vmatprep.mubr.bf16.mxu0 0
        %6032 = vmatmul.mubr.bf16.gmra.mxu0 %v5918
        %v6033 = vpop.f32.mrf.mxu0
        %v6034 = vadd.f32 0.0, %v6033
        %v6035 = vpop.f32.mrf.mxu0
        %v6036 = vpop.f32.mrf.mxu0
        %v6037 = vpop.f32.mrf.mxu0
        %6038 = vdwg.mxu0
        %v6039 = vadd.f32 %v5909, %v6018
        %v6040 = vadd.f32 %v5909, %v6021
        %v6041 = vadd.f32 %v5909, %v6026
        %v6042 = vadd.f32 %v5909, %v6029
        %v6043 = vadd.f32 %v5909, %v6034
        %v6044 = vld [vmem:[#allocation4 + $0x1] sm:$0xff]
        %v6045 = vld [vmem:[#allocation4 + $0x9] sm:$0xff]
        %v6046 = vld [vmem:[#allocation4 + $0x11] sm:$0xff]
        %v6047 = vld [vmem:[#allocation4 + $0x19] sm:$0xff]
        %v6048 = vld [vmem:[#allocation4 + $0x21] sm:$0xff]
        %v6049 = vpack.c.bf16 %v6045, %v6044
        %v6050 = vpack.c.bf16 %v6047, %v6046
        %v6051 = vpack.c.bf16 %v6048, %v6048
        %s6052 = scalar_lea.vmem [#allocation10], 64
        %v6053 = vld [vmem:[%s6052] sm:$0xf]
        %v6054 = vld [vmem:[%s6052 + $0x4] sm:$0xf]
        %v6055 = vld [vmem:[%s6052 + $0x8] sm:$0xf]
        %v6056 = vld [vmem:[%s6052 + $0xc] sm:$0xf]
        %v6057 = vld [vmem:[%s6052 + $0x10] sm:$0xf]
        %v6058 = vld [vmem:[%s6052 + $0x14] sm:$0xf]
        %v6059 = vld [vmem:[%s6052 + $0x18] sm:$0xf]
        %v6060 = vld [vmem:[%s6052 + $0x1c] sm:$0xf]
        %v6061 = vld [vmem:[%s6052 + $0x20] sm:$0xf]
        %v6062 = vld [vmem:[%s6052 + $0x24] sm:$0xf]
        %v6063 = vld [vmem:[%s6052 + $0x28] sm:$0xf]
        %v6064 = vld [vmem:[%s6052 + $0x2c] sm:$0xf]
        %v6065 = vld [vmem:[%s6052 + $0x30] sm:$0xf]
        %v6066 = vld [vmem:[%s6052 + $0x34] sm:$0xf]
        %v6067 = vld [vmem:[%s6052 + $0x38] sm:$0xf]
        %v6068 = vld [vmem:[%s6052 + $0x3c] sm:$0xf]
        %v6085 = vunpack.c.l.b16 %v6053
        %v6086 = vunpack.c.l.b16 %v6054
        %v6087 = vunpack.c.l.b16 %v6055
        %v6088 = vunpack.c.l.b16 %v6056
        %v6089 = vunpack.c.l.b16 %v6057
        %v6090 = vunpack.c.l.b16 %v6058
        %v6091 = vunpack.c.l.b16 %v6059
        %v6092 = vunpack.c.l.b16 %v6060
        %v6093 = vunpack.c.l.b16 %v6061
        %v6094 = vunpack.c.l.b16 %v6062
        %v6095 = vunpack.c.l.b16 %v6063
        %v6096 = vunpack.c.l.b16 %v6064
        %v6097 = vunpack.c.l.b16 %v6065
        %v6098 = vunpack.c.l.b16 %v6066
        %v6099 = vunpack.c.l.b16 %v6067
        %v6100 = vunpack.c.l.b16 %v6068
        %v6101 = vpack.c.b16 %v6086, %v6085
        %v6102 = vpack.c.b16 %v6088, %v6087
        %v6103 = vpack.c.b16 %v6090, %v6089
        %v6104 = vpack.c.b16 %v6092, %v6091
        %v6105 = vpack.c.b16 %v6094, %v6093
        %v6106 = vpack.c.b16 %v6096, %v6095
        %v6107 = vpack.c.b16 %v6098, %v6097
        %v6108 = vpack.c.b16 %v6100, %v6099
        %6117 = vmatprep.subr.bf16.mxu0 0
        %6118 = vmatpush1.bf16.msra.mxu0 %v6108
        %6119 = vmatprep.subr.bf16.mxu0 0
        %6120 = vmatpush1.bf16.msra.mxu0 %v6107
        %6121 = vmatprep.subr.bf16.mxu0 0
        %6122 = vmatpush1.bf16.msra.mxu0 %v6106
        %6123 = vmatprep.subr.bf16.mxu0 0
        %6124 = vmatpush1.bf16.msra.mxu0 %v6105
        %6125 = vmatprep.subr.bf16.mxu0 0
        %6126 = vmatpush1.bf16.msra.mxu0 %v6104
        %6127 = vmatprep.subr.bf16.mxu0 0
        %6128 = vmatpush1.bf16.msra.mxu0 %v6103
        %6129 = vmatprep.subr.bf16.mxu0 0
        %6130 = vmatpush1.bf16.msra.mxu0 %v6102
        %6131 = vmatprep.subr.bf16.mxu0 0
        %6132 = vmatpush1.bf16.msra.mxu0 %v6101
        %6133 = vmatprep.subr.bf16.mxu0 0
        %6134 = vmatpush2.bf16.msra.mxu0 0
        %6135 = vmatprep.subr.bf16.mxu0 0
        %6136 = vmatpush2.bf16.msra.mxu0 0
        %6137 = vmatprep.subr.bf16.mxu0 0
        %6138 = vmatpush2.bf16.msra.mxu0 0
        %6139 = vmatprep.subr.bf16.mxu0 0
        %6140 = vmatpush2.bf16.msra.mxu0 0
        %6141 = vmatprep.subr.bf16.mxu0 0
        %6142 = vmatpush2.bf16.msra.mxu0 0
        %6143 = vmatprep.subr.bf16.mxu0 0
        %6144 = vmatpush2.bf16.msra.mxu0 0
        %6145 = vmatprep.subr.bf16.mxu0 0
        %6146 = vmatpush2.bf16.msra.mxu0 0
        %6147 = vmatprep.subr.bf16.mxu0 0
        %6148 = vmatpush2.bf16.msra.mxu0 0
        %6149 = vmatprep.mubr.bf16.mxu0 0
        %6150 = vmatmul.mubr.bf16.gmra.mxu0 %v6049
        %v6151 = vpop.f32.mrf.mxu0
        %v6152 = vadd.f32 0.0, %v6151
        %v6153 = vpop.f32.mrf.mxu0
        %v6154 = vpop.f32.mrf.mxu0
        %v6155 = vadd.f32 0.0, %v6154
        %v6156 = vpop.f32.mrf.mxu0
        %6157 = vmatprep.mubr.bf16.mxu0 0
        %6158 = vmatmul.mubr.bf16.gmra.mxu0 %v6050
        %v6159 = vpop.f32.mrf.mxu0
        %v6160 = vadd.f32 0.0, %v6159
        %v6161 = vpop.f32.mrf.mxu0
        %v6162 = vpop.f32.mrf.mxu0
        %v6163 = vadd.f32 0.0, %v6162
        %v6164 = vpop.f32.mrf.mxu0
        %6165 = vmatprep.mubr.bf16.mxu0 0
        %6166 = vmatmul.mubr.bf16.gmra.mxu0 %v6051
        %v6167 = vpop.f32.mrf.mxu0
        %v6168 = vadd.f32 0.0, %v6167
        %v6169 = vpop.f32.mrf.mxu0
        %v6170 = vpop.f32.mrf.mxu0
        %v6171 = vpop.f32.mrf.mxu0
        %6172 = vdwg.mxu0
        %v6173 = vadd.f32 %v6039, %v6152
        %v6174 = vadd.f32 %v6040, %v6155
        %v6175 = vadd.f32 %v6041, %v6160
        %v6176 = vadd.f32 %v6042, %v6163
        %v6177 = vadd.f32 %v6043, %v6168
        %v6178 = vld [vmem:[#allocation4 + $0x2] sm:$0xff]
        %v6179 = vld [vmem:[#allocation4 + $0xa] sm:$0xff]
        %v6180 = vld [vmem:[#allocation4 + $0x12] sm:$0xff]
        %v6181 = vld [vmem:[#allocation4 + $0x1a] sm:$0xff]
        %v6182 = vld [vmem:[#allocation4 + $0x22] sm:$0xff]
        %v6183 = vpack.c.bf16 %v6179, %v6178
        %v6184 = vpack.c.bf16 %v6181, %v6180
        %v6185 = vpack.c.bf16 %v6182, %v6182
        %s6186 = scalar_lea.vmem [#allocation10], 128
        %v6187 = vld [vmem:[%s6186] sm:$0xf]
        %v6188 = vld [vmem:[%s6186 + $0x4] sm:$0xf]
        %v6189 = vld [vmem:[%s6186 + $0x8] sm:$0xf]
        %v6190 = vld [vmem:[%s6186 + $0xc] sm:$0xf]
        %v6191 = vld [vmem:[%s6186 + $0x10] sm:$0xf]
        %v6192 = vld [vmem:[%s6186 + $0x14] sm:$0xf]
        %v6193 = vld [vmem:[%s6186 + $0x18] sm:$0xf]
        %v6194 = vld [vmem:[%s6186 + $0x1c] sm:$0xf]
        %v6195 = vld [vmem:[%s6186 + $0x20] sm:$0xf]
        %v6196 = vld [vmem:[%s6186 + $0x24] sm:$0xf]
        %v6197 = vld [vmem:[%s6186 + $0x28] sm:$0xf]
        %v6198 = vld [vmem:[%s6186 + $0x2c] sm:$0xf]
        %v6199 = vld [vmem:[%s6186 + $0x30] sm:$0xf]
        %v6200 = vld [vmem:[%s6186 + $0x34] sm:$0xf]
        %v6201 = vld [vmem:[%s6186 + $0x38] sm:$0xf]
        %v6202 = vld [vmem:[%s6186 + $0x3c] sm:$0xf]
        %v6219 = vunpack.c.l.b16 %v6187
        %v6220 = vunpack.c.l.b16 %v6188
        %v6221 = vunpack.c.l.b16 %v6189
        %v6222 = vunpack.c.l.b16 %v6190
        %v6223 = vunpack.c.l.b16 %v6191
        %v6224 = vunpack.c.l.b16 %v6192
        %v6225 = vunpack.c.l.b16 %v6193
        %v6226 = vunpack.c.l.b16 %v6194
        %v6227 = vunpack.c.l.b16 %v6195
        %v6228 = vunpack.c.l.b16 %v6196
        %v6229 = vunpack.c.l.b16 %v6197
        %v6230 = vunpack.c.l.b16 %v6198
        %v6231 = vunpack.c.l.b16 %v6199
        %v6232 = vunpack.c.l.b16 %v6200
        %v6233 = vunpack.c.l.b16 %v6201
        %v6234 = vunpack.c.l.b16 %v6202
        %v6235 = vpack.c.b16 %v6220, %v6219
        %v6236 = vpack.c.b16 %v6222, %v6221
        %v6237 = vpack.c.b16 %v6224, %v6223
        %v6238 = vpack.c.b16 %v6226, %v6225
        %v6239 = vpack.c.b16 %v6228, %v6227
        %v6240 = vpack.c.b16 %v6230, %v6229
        %v6241 = vpack.c.b16 %v6232, %v6231
        %v6242 = vpack.c.b16 %v6234, %v6233
        %6251 = vmatprep.subr.bf16.mxu0 0
        %6252 = vmatpush1.bf16.msra.mxu0 %v6242
        %6253 = vmatprep.subr.bf16.mxu0 0
        %6254 = vmatpush1.bf16.msra.mxu0 %v6241
        %6255 = vmatprep.subr.bf16.mxu0 0
        %6256 = vmatpush1.bf16.msra.mxu0 %v6240
        %6257 = vmatprep.subr.bf16.mxu0 0
        %6258 = vmatpush1.bf16.msra.mxu0 %v6239
        %6259 = vmatprep.subr.bf16.mxu0 0
        %6260 = vmatpush1.bf16.msra.mxu0 %v6238
        %6261 = vmatprep.subr.bf16.mxu0 0
        %6262 = vmatpush1.bf16.msra.mxu0 %v6237
        %6263 = vmatprep.subr.bf16.mxu0 0
        %6264 = vmatpush1.bf16.msra.mxu0 %v6236
        %6265 = vmatprep.subr.bf16.mxu0 0
        %6266 = vmatpush1.bf16.msra.mxu0 %v6235
        %6267 = vmatprep.subr.bf16.mxu0 0
        %6268 = vmatpush2.bf16.msra.mxu0 0
        %6269 = vmatprep.subr.bf16.mxu0 0
        %6270 = vmatpush2.bf16.msra.mxu0 0
        %6271 = vmatprep.subr.bf16.mxu0 0
        %6272 = vmatpush2.bf16.msra.mxu0 0
        %6273 = vmatprep.subr.bf16.mxu0 0
        %6274 = vmatpush2.bf16.msra.mxu0 0
        %6275 = vmatprep.subr.bf16.mxu0 0
        %6276 = vmatpush2.bf16.msra.mxu0 0
        %6277 = vmatprep.subr.bf16.mxu0 0
        %6278 = vmatpush2.bf16.msra.mxu0 0
        %6279 = vmatprep.subr.bf16.mxu0 0
        %6280 = vmatpush2.bf16.msra.mxu0 0
        %6281 = vmatprep.subr.bf16.mxu0 0
        %6282 = vmatpush2.bf16.msra.mxu0 0
        %6283 = vmatprep.mubr.bf16.mxu0 0
        %6284 = vmatmul.mubr.bf16.gmra.mxu0 %v6183
        %v6285 = vpop.f32.mrf.mxu0
        %v6286 = vadd.f32 0.0, %v6285
        %v6287 = vpop.f32.mrf.mxu0
        %v6288 = vpop.f32.mrf.mxu0
        %v6289 = vadd.f32 0.0, %v6288
        %v6290 = vpop.f32.mrf.mxu0
        %6291 = vmatprep.mubr.bf16.mxu0 0
        %6292 = vmatmul.mubr.bf16.gmra.mxu0 %v6184
        %v6293 = vpop.f32.mrf.mxu0
        %v6294 = vadd.f32 0.0, %v6293
        %v6295 = vpop.f32.mrf.mxu0
        %v6296 = vpop.f32.mrf.mxu0
        %v6297 = vadd.f32 0.0, %v6296
        %v6298 = vpop.f32.mrf.mxu0
        %6299 = vmatprep.mubr.bf16.mxu0 0
        %6300 = vmatmul.mubr.bf16.gmra.mxu0 %v6185
        %v6301 = vpop.f32.mrf.mxu0
        %v6302 = vadd.f32 0.0, %v6301
        %v6303 = vpop.f32.mrf.mxu0
        %v6304 = vpop.f32.mrf.mxu0
        %v6305 = vpop.f32.mrf.mxu0
        %6306 = vdwg.mxu0
        %v6307 = vadd.f32 %v6173, %v6286
        %v6308 = vadd.f32 %v6174, %v6289
        %v6309 = vadd.f32 %v6175, %v6294
        %v6310 = vadd.f32 %v6176, %v6297
        %v6311 = vadd.f32 %v6177, %v6302
        %v6312 = vld [vmem:[#allocation4 + $0x7] sm:$0xff]
        %v6313 = vld [vmem:[#allocation4 + $0xf] sm:$0xff]
        %v6314 = vld [vmem:[#allocation4 + $0x17] sm:$0xff]
        %v6315 = vld [vmem:[#allocation4 + $0x1f] sm:$0xff]
        %v6316 = vld [vmem:[#allocation4 + $0x27] sm:$0xff]
        %v6317 = vpack.c.bf16 %v6313, %v6312
        %v6318 = vpack.c.bf16 %v6315, %v6314
        %v6319 = vpack.c.bf16 %v6316, %v6316
        %s6320 = scalar_lea.vmem [#allocation10], 192
        %v6321 = vld [vmem:[%s6320] sm:$0xf]
        %v6322 = vld [vmem:[%s6320 + $0x4] sm:$0xf]
        %v6323 = vld [vmem:[%s6320 + $0x8] sm:$0xf]
        %v6324 = vld [vmem:[%s6320 + $0xc] sm:$0xf]
        %v6325 = vld [vmem:[%s6320 + $0x10] sm:$0xf]
        %v6326 = vld [vmem:[%s6320 + $0x14] sm:$0xf]
        %v6327 = vld [vmem:[%s6320 + $0x18] sm:$0xf]
        %v6328 = vld [vmem:[%s6320 + $0x1c] sm:$0xf]
        %v6329 = vld [vmem:[%s6320 + $0x20] sm:$0xf]
        %v6330 = vld [vmem:[%s6320 + $0x24] sm:$0xf]
        %v6331 = vld [vmem:[%s6320 + $0x28] sm:$0xf]
        %v6332 = vld [vmem:[%s6320 + $0x2c] sm:$0xf]
        %v6333 = vld [vmem:[%s6320 + $0x30] sm:$0xf]
        %v6334 = vld [vmem:[%s6320 + $0x34] sm:$0xf]
        %v6335 = vld [vmem:[%s6320 + $0x38] sm:$0xf]
        %v6336 = vld [vmem:[%s6320 + $0x3c] sm:$0xf]
        %v6353 = vunpack.c.l.b16 %v6321
        %v6354 = vunpack.c.l.b16 %v6322
        %v6355 = vunpack.c.l.b16 %v6323
        %v6356 = vunpack.c.l.b16 %v6324
        %v6357 = vunpack.c.l.b16 %v6325
        %v6358 = vunpack.c.l.b16 %v6326
        %v6359 = vunpack.c.l.b16 %v6327
        %v6360 = vunpack.c.l.b16 %v6328
        %v6361 = vunpack.c.l.b16 %v6329
        %v6362 = vunpack.c.l.b16 %v6330
        %v6363 = vunpack.c.l.b16 %v6331
        %v6364 = vunpack.c.l.b16 %v6332
        %v6365 = vunpack.c.l.b16 %v6333
        %v6366 = vunpack.c.l.b16 %v6334
        %v6367 = vunpack.c.l.b16 %v6335
        %v6368 = vunpack.c.l.b16 %v6336
        %v6369 = vpack.c.b16 %v6354, %v6353
        %v6370 = vpack.c.b16 %v6356, %v6355
        %v6371 = vpack.c.b16 %v6358, %v6357
        %v6372 = vpack.c.b16 %v6360, %v6359
        %v6373 = vpack.c.b16 %v6362, %v6361
        %v6374 = vpack.c.b16 %v6364, %v6363
        %v6375 = vpack.c.b16 %v6366, %v6365
        %v6376 = vpack.c.b16 %v6368, %v6367
        %6385 = vmatprep.subr.bf16.mxu0 0
        %6386 = vmatpush1.bf16.msra.mxu0 %v6376
        %6387 = vmatprep.subr.bf16.mxu0 0
        %6388 = vmatpush1.bf16.msra.mxu0 %v6375
        %6389 = vmatprep.subr.bf16.mxu0 0
        %6390 = vmatpush1.bf16.msra.mxu0 %v6374
        %6391 = vmatprep.subr.bf16.mxu0 0
        %6392 = vmatpush1.bf16.msra.mxu0 %v6373
        %6393 = vmatprep.subr.bf16.mxu0 0
        %6394 = vmatpush1.bf16.msra.mxu0 %v6372
        %6395 = vmatprep.subr.bf16.mxu0 0
        %6396 = vmatpush1.bf16.msra.mxu0 %v6371
        %6397 = vmatprep.subr.bf16.mxu0 0
        %6398 = vmatpush1.bf16.msra.mxu0 %v6370
        %6399 = vmatprep.subr.bf16.mxu0 0
        %6400 = vmatpush1.bf16.msra.mxu0 %v6369
        %6401 = vmatprep.subr.bf16.mxu0 0
        %6402 = vmatpush2.bf16.msra.mxu0 0
        %6403 = vmatprep.subr.bf16.mxu0 0
        %6404 = vmatpush2.bf16.msra.mxu0 0
        %6405 = vmatprep.subr.bf16.mxu0 0
        %6406 = vmatpush2.bf16.msra.mxu0 0
        %6407 = vmatprep.subr.bf16.mxu0 0
        %6408 = vmatpush2.bf16.msra.mxu0 0
        %6409 = vmatprep.subr.bf16.mxu0 0
        %6410 = vmatpush2.bf16.msra.mxu0 0
        %6411 = vmatprep.subr.bf16.mxu0 0
        %6412 = vmatpush2.bf16.msra.mxu0 0
        %6413 = vmatprep.subr.bf16.mxu0 0
        %6414 = vmatpush2.bf16.msra.mxu0 0
        %6415 = vmatprep.subr.bf16.mxu0 0
        %6416 = vmatpush2.bf16.msra.mxu0 0
        %6417 = vmatprep.mubr.bf16.mxu0 0
        %6418 = vmatmul.mubr.bf16.gmra.mxu0 %v6317
        %v6419 = vpop.f32.mrf.mxu0
        %v6420 = vadd.f32 0.0, %v6419
        %v6421 = vpop.f32.mrf.mxu0
        %v6422 = vpop.f32.mrf.mxu0
        %v6423 = vadd.f32 0.0, %v6422
        %v6424 = vpop.f32.mrf.mxu0
        %6425 = vmatprep.mubr.bf16.mxu0 0
        %6426 = vmatmul.mubr.bf16.gmra.mxu0 %v6318
        %v6427 = vpop.f32.mrf.mxu0
        %v6428 = vadd.f32 0.0, %v6427
        %v6429 = vpop.f32.mrf.mxu0
        %v6430 = vpop.f32.mrf.mxu0
        %v6431 = vadd.f32 0.0, %v6430
        %v6432 = vpop.f32.mrf.mxu0
        %6433 = vmatprep.mubr.bf16.mxu0 0
        %6434 = vmatmul.mubr.bf16.gmra.mxu0 %v6319
        %v6435 = vpop.f32.mrf.mxu0
        %v6436 = vadd.f32 0.0, %v6435
        %v6437 = vpop.f32.mrf.mxu0
        %v6438 = vpop.f32.mrf.mxu0
        %v6439 = vpop.f32.mrf.mxu0
        %6440 = vdwg.mxu0
        %v6441 = vadd.f32 %v6307, %v6420
        %v6442 = vadd.f32 %v6308, %v6423
        %v6443 = vadd.f32 %v6309, %v6428
        %v6444 = vadd.f32 %v6310, %v6431
        %v6445 = vadd.f32 %v6311, %v6436
        %v6446 = vld [vmem:[#allocation4 + $0x8] sm:$0xff]
        %v6447 = vld [vmem:[#allocation4 + $0x10] sm:$0xff]
        %v6448 = vld [vmem:[#allocation4 + $0x18] sm:$0xff]
        %v6449 = vld [vmem:[#allocation4 + $0x20] sm:$0xff]
        %v6450 = vld [vmem:[#allocation4 + $0x28] sm:$0xff]
        %v6451 = vpack.c.bf16 %v6447, %v6446
        %v6452 = vpack.c.bf16 %v6449, %v6448
        %v6453 = vpack.c.bf16 %v6450, %v6450
        %s6454 = scalar_lea.vmem [#allocation10], 256
        %v6455 = vld [vmem:[%s6454] sm:$0xf]
        %v6456 = vld [vmem:[%s6454 + $0x4] sm:$0xf]
        %v6457 = vld [vmem:[%s6454 + $0x8] sm:$0xf]
        %v6458 = vld [vmem:[%s6454 + $0xc] sm:$0xf]
        %v6459 = vld [vmem:[%s6454 + $0x10] sm:$0xf]
        %v6460 = vld [vmem:[%s6454 + $0x14] sm:$0xf]
        %v6461 = vld [vmem:[%s6454 + $0x18] sm:$0xf]
        %v6462 = vld [vmem:[%s6454 + $0x1c] sm:$0xf]
        %v6463 = vld [vmem:[%s6454 + $0x20] sm:$0xf]
        %v6464 = vld [vmem:[%s6454 + $0x24] sm:$0xf]
        %v6465 = vld [vmem:[%s6454 + $0x28] sm:$0xf]
        %v6466 = vld [vmem:[%s6454 + $0x2c] sm:$0xf]
        %v6467 = vld [vmem:[%s6454 + $0x30] sm:$0xf]
        %v6468 = vld [vmem:[%s6454 + $0x34] sm:$0xf]
        %v6469 = vld [vmem:[%s6454 + $0x38] sm:$0xf]
        %v6470 = vld [vmem:[%s6454 + $0x3c] sm:$0xf]
        %v6487 = vunpack.c.l.b16 %v6455
        %v6488 = vunpack.c.l.b16 %v6456
        %v6489 = vunpack.c.l.b16 %v6457
        %v6490 = vunpack.c.l.b16 %v6458
        %v6491 = vunpack.c.l.b16 %v6459
        %v6492 = vunpack.c.l.b16 %v6460
        %v6493 = vunpack.c.l.b16 %v6461
        %v6494 = vunpack.c.l.b16 %v6462
        %v6495 = vunpack.c.l.b16 %v6463
        %v6496 = vunpack.c.l.b16 %v6464
        %v6497 = vunpack.c.l.b16 %v6465
        %v6498 = vunpack.c.l.b16 %v6466
        %v6499 = vunpack.c.l.b16 %v6467
        %v6500 = vunpack.c.l.b16 %v6468
        %v6501 = vunpack.c.l.b16 %v6469
        %v6502 = vunpack.c.l.b16 %v6470
        %v6503 = vpack.c.b16 %v6488, %v6487
        %v6504 = vpack.c.b16 %v6490, %v6489
        %v6505 = vpack.c.b16 %v6492, %v6491
        %v6506 = vpack.c.b16 %v6494, %v6493
        %v6507 = vpack.c.b16 %v6496, %v6495
        %v6508 = vpack.c.b16 %v6498, %v6497
        %v6509 = vpack.c.b16 %v6500, %v6499
        %v6510 = vpack.c.b16 %v6502, %v6501
        %6519 = vmatprep.subr.bf16.mxu0 0
        %6520 = vmatpush1.bf16.msra.mxu0 %v6510
        %6521 = vmatprep.subr.bf16.mxu0 0
        %6522 = vmatpush1.bf16.msra.mxu0 %v6509
        %6523 = vmatprep.subr.bf16.mxu0 0
        %6524 = vmatpush1.bf16.msra.mxu0 %v6508
        %6525 = vmatprep.subr.bf16.mxu0 0
        %6526 = vmatpush1.bf16.msra.mxu0 %v6507
        %6527 = vmatprep.subr.bf16.mxu0 0
        %6528 = vmatpush1.bf16.msra.mxu0 %v6506
        %6529 = vmatprep.subr.bf16.mxu0 0
        %6530 = vmatpush1.bf16.msra.mxu0 %v6505
        %6531 = vmatprep.subr.bf16.mxu0 0
        %6532 = vmatpush1.bf16.msra.mxu0 %v6504
        %6533 = vmatprep.subr.bf16.mxu0 0
        %6534 = vmatpush1.bf16.msra.mxu0 %v6503
        %6535 = vmatprep.subr.bf16.mxu0 0
        %6536 = vmatpush2.bf16.msra.mxu0 0
        %6537 = vmatprep.subr.bf16.mxu0 0
        %6538 = vmatpush2.bf16.msra.mxu0 0
        %6539 = vmatprep.subr.bf16.mxu0 0
        %6540 = vmatpush2.bf16.msra.mxu0 0
        %6541 = vmatprep.subr.bf16.mxu0 0
        %6542 = vmatpush2.bf16.msra.mxu0 0
        %6543 = vmatprep.subr.bf16.mxu0 0
        %6544 = vmatpush2.bf16.msra.mxu0 0
        %6545 = vmatprep.subr.bf16.mxu0 0
        %6546 = vmatpush2.bf16.msra.mxu0 0
        %6547 = vmatprep.subr.bf16.mxu0 0
        %6548 = vmatpush2.bf16.msra.mxu0 0
        %6549 = vmatprep.subr.bf16.mxu0 0
        %6550 = vmatpush2.bf16.msra.mxu0 0
        %6551 = vmatprep.mubr.bf16.mxu0 0
        %6552 = vmatmul.mubr.bf16.gmra.mxu0 %v6451
        %v6553 = vpop.f32.mrf.mxu0
        %v6554 = vadd.f32 0.0, %v6553
        %v6555 = vpop.f32.mrf.mxu0
        %v6556 = vpop.f32.mrf.mxu0
        %v6557 = vadd.f32 0.0, %v6556
        %v6558 = vpop.f32.mrf.mxu0
        %6559 = vmatprep.mubr.bf16.mxu0 0
        %6560 = vmatmul.mubr.bf16.gmra.mxu0 %v6452
        %v6561 = vpop.f32.mrf.mxu0
        %v6562 = vadd.f32 0.0, %v6561
        %v6563 = vpop.f32.mrf.mxu0
        %v6564 = vpop.f32.mrf.mxu0
        %v6565 = vadd.f32 0.0, %v6564
        %v6566 = vpop.f32.mrf.mxu0
        %6567 = vmatprep.mubr.bf16.mxu0 0
        %6568 = vmatmul.mubr.bf16.gmra.mxu0 %v6453
        %v6569 = vpop.f32.mrf.mxu0
        %v6570 = vadd.f32 0.0, %v6569
        %v6571 = vpop.f32.mrf.mxu0
        %v6572 = vpop.f32.mrf.mxu0
        %v6573 = vpop.f32.mrf.mxu0
        %6574 = vdwg.mxu0
        %v6575 = vadd.f32 %v6441, %v6554
        %v6576 = vadd.f32 %v6442, %v6557
        %v6577 = vadd.f32 %v6443, %v6562
        %v6578 = vadd.f32 %v6444, %v6565
        %v6579 = vadd.f32 %v6445, %v6570
        %v6580 = vld [vmem:[#allocation4 + $0x9] sm:$0xff]
        %v6581 = vld [vmem:[#allocation4 + $0x11] sm:$0xff]
        %v6582 = vld [vmem:[#allocation4 + $0x19] sm:$0xff]
        %v6583 = vld [vmem:[#allocation4 + $0x21] sm:$0xff]
        %v6584 = vld [vmem:[#allocation4 + $0x29] sm:$0xff]
        %v6585 = vpack.c.bf16 %v6581, %v6580
        %v6586 = vpack.c.bf16 %v6583, %v6582
        %v6587 = vpack.c.bf16 %v6584, %v6584
        %s6588 = scalar_lea.vmem [#allocation10], 320
        %v6589 = vld [vmem:[%s6588] sm:$0xf]
        %v6590 = vld [vmem:[%s6588 + $0x4] sm:$0xf]
        %v6591 = vld [vmem:[%s6588 + $0x8] sm:$0xf]
        %v6592 = vld [vmem:[%s6588 + $0xc] sm:$0xf]
        %v6593 = vld [vmem:[%s6588 + $0x10] sm:$0xf]
        %v6594 = vld [vmem:[%s6588 + $0x14] sm:$0xf]
        %v6595 = vld [vmem:[%s6588 + $0x18] sm:$0xf]
        %v6596 = vld [vmem:[%s6588 + $0x1c] sm:$0xf]
        %v6597 = vld [vmem:[%s6588 + $0x20] sm:$0xf]
        %v6598 = vld [vmem:[%s6588 + $0x24] sm:$0xf]
        %v6599 = vld [vmem:[%s6588 + $0x28] sm:$0xf]
        %v6600 = vld [vmem:[%s6588 + $0x2c] sm:$0xf]
        %v6601 = vld [vmem:[%s6588 + $0x30] sm:$0xf]
        %v6602 = vld [vmem:[%s6588 + $0x34] sm:$0xf]
        %v6603 = vld [vmem:[%s6588 + $0x38] sm:$0xf]
        %v6604 = vld [vmem:[%s6588 + $0x3c] sm:$0xf]
        %v6621 = vunpack.c.l.b16 %v6589
        %v6622 = vunpack.c.l.b16 %v6590
        %v6623 = vunpack.c.l.b16 %v6591
        %v6624 = vunpack.c.l.b16 %v6592
        %v6625 = vunpack.c.l.b16 %v6593
        %v6626 = vunpack.c.l.b16 %v6594
        %v6627 = vunpack.c.l.b16 %v6595
        %v6628 = vunpack.c.l.b16 %v6596
        %v6629 = vunpack.c.l.b16 %v6597
        %v6630 = vunpack.c.l.b16 %v6598
        %v6631 = vunpack.c.l.b16 %v6599
        %v6632 = vunpack.c.l.b16 %v6600
        %v6633 = vunpack.c.l.b16 %v6601
        %v6634 = vunpack.c.l.b16 %v6602
        %v6635 = vunpack.c.l.b16 %v6603
        %v6636 = vunpack.c.l.b16 %v6604
        %v6637 = vpack.c.b16 %v6622, %v6621
        %v6638 = vpack.c.b16 %v6624, %v6623
        %v6639 = vpack.c.b16 %v6626, %v6625
        %v6640 = vpack.c.b16 %v6628, %v6627
        %v6641 = vpack.c.b16 %v6630, %v6629
        %v6642 = vpack.c.b16 %v6632, %v6631
        %v6643 = vpack.c.b16 %v6634, %v6633
        %v6644 = vpack.c.b16 %v6636, %v6635
        %6653 = vmatprep.subr.bf16.mxu0 0
        %6654 = vmatpush1.bf16.msra.mxu0 %v6644
        %6655 = vmatprep.subr.bf16.mxu0 0
        %6656 = vmatpush1.bf16.msra.mxu0 %v6643
        %6657 = vmatprep.subr.bf16.mxu0 0
        %6658 = vmatpush1.bf16.msra.mxu0 %v6642
        %6659 = vmatprep.subr.bf16.mxu0 0
        %6660 = vmatpush1.bf16.msra.mxu0 %v6641
        %6661 = vmatprep.subr.bf16.mxu0 0
        %6662 = vmatpush1.bf16.msra.mxu0 %v6640
        %6663 = vmatprep.subr.bf16.mxu0 0
        %6664 = vmatpush1.bf16.msra.mxu0 %v6639
        %6665 = vmatprep.subr.bf16.mxu0 0
        %6666 = vmatpush1.bf16.msra.mxu0 %v6638
        %6667 = vmatprep.subr.bf16.mxu0 0
        %6668 = vmatpush1.bf16.msra.mxu0 %v6637
        %6669 = vmatprep.subr.bf16.mxu0 0
        %6670 = vmatpush2.bf16.msra.mxu0 0
        %6671 = vmatprep.subr.bf16.mxu0 0
        %6672 = vmatpush2.bf16.msra.mxu0 0
        %6673 = vmatprep.subr.bf16.mxu0 0
        %6674 = vmatpush2.bf16.msra.mxu0 0
        %6675 = vmatprep.subr.bf16.mxu0 0
        %6676 = vmatpush2.bf16.msra.mxu0 0
        %6677 = vmatprep.subr.bf16.mxu0 0
        %6678 = vmatpush2.bf16.msra.mxu0 0
        %6679 = vmatprep.subr.bf16.mxu0 0
        %6680 = vmatpush2.bf16.msra.mxu0 0
        %6681 = vmatprep.subr.bf16.mxu0 0
        %6682 = vmatpush2.bf16.msra.mxu0 0
        %6683 = vmatprep.subr.bf16.mxu0 0
        %6684 = vmatpush2.bf16.msra.mxu0 0
        %6685 = vmatprep.mubr.bf16.mxu0 0
        %6686 = vmatmul.mubr.bf16.gmra.mxu0 %v6585
        %v6687 = vpop.f32.mrf.mxu0
        %v6688 = vadd.f32 0.0, %v6687
        %v6689 = vpop.f32.mrf.mxu0
        %v6690 = vpop.f32.mrf.mxu0
        %v6691 = vadd.f32 0.0, %v6690
        %v6692 = vpop.f32.mrf.mxu0
        %6693 = vmatprep.mubr.bf16.mxu0 0
        %6694 = vmatmul.mubr.bf16.gmra.mxu0 %v6586
        %v6695 = vpop.f32.mrf.mxu0
        %v6696 = vadd.f32 0.0, %v6695
        %v6697 = vpop.f32.mrf.mxu0
        %v6698 = vpop.f32.mrf.mxu0
        %v6699 = vadd.f32 0.0, %v6698
        %v6700 = vpop.f32.mrf.mxu0
        %6701 = vmatprep.mubr.bf16.mxu0 0
        %6702 = vmatmul.mubr.bf16.gmra.mxu0 %v6587
        %v6703 = vpop.f32.mrf.mxu0
        %v6704 = vadd.f32 0.0, %v6703
        %v6705 = vpop.f32.mrf.mxu0
        %v6706 = vpop.f32.mrf.mxu0
        %v6707 = vpop.f32.mrf.mxu0
        %6708 = vdwg.mxu0
        %v6709 = vadd.f32 %v6575, %v6688
        %v6710 = vadd.f32 %v6576, %v6691
        %v6711 = vadd.f32 %v6577, %v6696
        %v6712 = vadd.f32 %v6578, %v6699
        %v6713 = vadd.f32 %v6579, %v6704
        %v6714 = vld [vmem:[#allocation4 + $0xe] sm:$0xff]
        %v6715 = vld [vmem:[#allocation4 + $0x16] sm:$0xff]
        %v6716 = vld [vmem:[#allocation4 + $0x1e] sm:$0xff]
        %v6717 = vld [vmem:[#allocation4 + $0x26] sm:$0xff]
        %v6718 = vld [vmem:[#allocation4 + $0x2e] sm:$0xff]
        %v6719 = vpack.c.bf16 %v6715, %v6714
        %v6720 = vpack.c.bf16 %v6717, %v6716
        %v6721 = vpack.c.bf16 %v6718, %v6718
        %s6722 = scalar_lea.vmem [#allocation10], 384
        %v6723 = vld [vmem:[%s6722] sm:$0xf]
        %v6724 = vld [vmem:[%s6722 + $0x4] sm:$0xf]
        %v6725 = vld [vmem:[%s6722 + $0x8] sm:$0xf]
        %v6726 = vld [vmem:[%s6722 + $0xc] sm:$0xf]
        %v6727 = vld [vmem:[%s6722 + $0x10] sm:$0xf]
        %v6728 = vld [vmem:[%s6722 + $0x14] sm:$0xf]
        %v6729 = vld [vmem:[%s6722 + $0x18] sm:$0xf]
        %v6730 = vld [vmem:[%s6722 + $0x1c] sm:$0xf]
        %v6731 = vld [vmem:[%s6722 + $0x20] sm:$0xf]
        %v6732 = vld [vmem:[%s6722 + $0x24] sm:$0xf]
        %v6733 = vld [vmem:[%s6722 + $0x28] sm:$0xf]
        %v6734 = vld [vmem:[%s6722 + $0x2c] sm:$0xf]
        %v6735 = vld [vmem:[%s6722 + $0x30] sm:$0xf]
        %v6736 = vld [vmem:[%s6722 + $0x34] sm:$0xf]
        %v6737 = vld [vmem:[%s6722 + $0x38] sm:$0xf]
        %v6738 = vld [vmem:[%s6722 + $0x3c] sm:$0xf]
        %v6755 = vunpack.c.l.b16 %v6723
        %v6756 = vunpack.c.l.b16 %v6724
        %v6757 = vunpack.c.l.b16 %v6725
        %v6758 = vunpack.c.l.b16 %v6726
        %v6759 = vunpack.c.l.b16 %v6727
        %v6760 = vunpack.c.l.b16 %v6728
        %v6761 = vunpack.c.l.b16 %v6729
        %v6762 = vunpack.c.l.b16 %v6730
        %v6763 = vunpack.c.l.b16 %v6731
        %v6764 = vunpack.c.l.b16 %v6732
        %v6765 = vunpack.c.l.b16 %v6733
        %v6766 = vunpack.c.l.b16 %v6734
        %v6767 = vunpack.c.l.b16 %v6735
        %v6768 = vunpack.c.l.b16 %v6736
        %v6769 = vunpack.c.l.b16 %v6737
        %v6770 = vunpack.c.l.b16 %v6738
        %v6771 = vpack.c.b16 %v6756, %v6755
        %v6772 = vpack.c.b16 %v6758, %v6757
        %v6773 = vpack.c.b16 %v6760, %v6759
        %v6774 = vpack.c.b16 %v6762, %v6761
        %v6775 = vpack.c.b16 %v6764, %v6763
        %v6776 = vpack.c.b16 %v6766, %v6765
        %v6777 = vpack.c.b16 %v6768, %v6767
        %v6778 = vpack.c.b16 %v6770, %v6769
        %6787 = vmatprep.subr.bf16.mxu0 0
        %6788 = vmatpush1.bf16.msra.mxu0 %v6778
        %6789 = vmatprep.subr.bf16.mxu0 0
        %6790 = vmatpush1.bf16.msra.mxu0 %v6777
        %6791 = vmatprep.subr.bf16.mxu0 0
        %6792 = vmatpush1.bf16.msra.mxu0 %v6776
        %6793 = vmatprep.subr.bf16.mxu0 0
        %6794 = vmatpush1.bf16.msra.mxu0 %v6775
        %6795 = vmatprep.subr.bf16.mxu0 0
        %6796 = vmatpush1.bf16.msra.mxu0 %v6774
        %6797 = vmatprep.subr.bf16.mxu0 0
        %6798 = vmatpush1.bf16.msra.mxu0 %v6773
        %6799 = vmatprep.subr.bf16.mxu0 0
        %6800 = vmatpush1.bf16.msra.mxu0 %v6772
        %6801 = vmatprep.subr.bf16.mxu0 0
        %6802 = vmatpush1.bf16.msra.mxu0 %v6771
        %6803 = vmatprep.subr.bf16.mxu0 0
        %6804 = vmatpush2.bf16.msra.mxu0 0
        %6805 = vmatprep.subr.bf16.mxu0 0
        %6806 = vmatpush2.bf16.msra.mxu0 0
        %6807 = vmatprep.subr.bf16.mxu0 0
        %6808 = vmatpush2.bf16.msra.mxu0 0
        %6809 = vmatprep.subr.bf16.mxu0 0
        %6810 = vmatpush2.bf16.msra.mxu0 0
        %6811 = vmatprep.subr.bf16.mxu0 0
        %6812 = vmatpush2.bf16.msra.mxu0 0
        %6813 = vmatprep.subr.bf16.mxu0 0
        %6814 = vmatpush2.bf16.msra.mxu0 0
        %6815 = vmatprep.subr.bf16.mxu0 0
        %6816 = vmatpush2.bf16.msra.mxu0 0
        %6817 = vmatprep.subr.bf16.mxu0 0
        %6818 = vmatpush2.bf16.msra.mxu0 0
        %6819 = vmatprep.mubr.bf16.mxu0 0
        %6820 = vmatmul.mubr.bf16.gmra.mxu0 %v6719
        %v6821 = vpop.f32.mrf.mxu0
        %v6822 = vadd.f32 0.0, %v6821
        %v6823 = vpop.f32.mrf.mxu0
        %v6824 = vpop.f32.mrf.mxu0
        %v6825 = vadd.f32 0.0, %v6824
        %v6826 = vpop.f32.mrf.mxu0
        %6827 = vmatprep.mubr.bf16.mxu0 0
        %6828 = vmatmul.mubr.bf16.gmra.mxu0 %v6720
        %v6829 = vpop.f32.mrf.mxu0
        %v6830 = vadd.f32 0.0, %v6829
        %v6831 = vpop.f32.mrf.mxu0
        %v6832 = vpop.f32.mrf.mxu0
        %v6833 = vadd.f32 0.0, %v6832
        %v6834 = vpop.f32.mrf.mxu0
        %6835 = vmatprep.mubr.bf16.mxu0 0
        %6836 = vmatmul.mubr.bf16.gmra.mxu0 %v6721
        %v6837 = vpop.f32.mrf.mxu0
        %v6838 = vadd.f32 0.0, %v6837
        %v6839 = vpop.f32.mrf.mxu0
        %v6840 = vpop.f32.mrf.mxu0
        %v6841 = vpop.f32.mrf.mxu0
        %6842 = vdwg.mxu0
        %v6843 = vadd.f32 %v6709, %v6822
        %v6844 = vadd.f32 %v6710, %v6825
        %v6845 = vadd.f32 %v6711, %v6830
        %v6846 = vadd.f32 %v6712, %v6833
        %v6847 = vadd.f32 %v6713, %v6838
        %v6848 = vld [vmem:[#allocation4 + $0xf] sm:$0xff]
        %v6849 = vld [vmem:[#allocation4 + $0x17] sm:$0xff]
        %v6850 = vld [vmem:[#allocation4 + $0x1f] sm:$0xff]
        %v6851 = vld [vmem:[#allocation4 + $0x27] sm:$0xff]
        %v6852 = vld [vmem:[#allocation4 + $0x2f] sm:$0xff]
        %v6853 = vpack.c.bf16 %v6849, %v6848
        %v6854 = vpack.c.bf16 %v6851, %v6850
        %v6855 = vpack.c.bf16 %v6852, %v6852
        %s6856 = scalar_lea.vmem [#allocation10], 448
        %v6857 = vld [vmem:[%s6856] sm:$0xf]
        %v6858 = vld [vmem:[%s6856 + $0x4] sm:$0xf]
        %v6859 = vld [vmem:[%s6856 + $0x8] sm:$0xf]
        %v6860 = vld [vmem:[%s6856 + $0xc] sm:$0xf]
        %v6861 = vld [vmem:[%s6856 + $0x10] sm:$0xf]
        %v6862 = vld [vmem:[%s6856 + $0x14] sm:$0xf]
        %v6863 = vld [vmem:[%s6856 + $0x18] sm:$0xf]
        %v6864 = vld [vmem:[%s6856 + $0x1c] sm:$0xf]
        %v6865 = vld [vmem:[%s6856 + $0x20] sm:$0xf]
        %v6866 = vld [vmem:[%s6856 + $0x24] sm:$0xf]
        %v6867 = vld [vmem:[%s6856 + $0x28] sm:$0xf]
        %v6868 = vld [vmem:[%s6856 + $0x2c] sm:$0xf]
        %v6869 = vld [vmem:[%s6856 + $0x30] sm:$0xf]
        %v6870 = vld [vmem:[%s6856 + $0x34] sm:$0xf]
        %v6871 = vld [vmem:[%s6856 + $0x38] sm:$0xf]
        %v6872 = vld [vmem:[%s6856 + $0x3c] sm:$0xf]
        %v6889 = vunpack.c.l.b16 %v6857
        %v6890 = vunpack.c.l.b16 %v6858
        %v6891 = vunpack.c.l.b16 %v6859
        %v6892 = vunpack.c.l.b16 %v6860
        %v6893 = vunpack.c.l.b16 %v6861
        %v6894 = vunpack.c.l.b16 %v6862
        %v6895 = vunpack.c.l.b16 %v6863
        %v6896 = vunpack.c.l.b16 %v6864
        %v6897 = vunpack.c.l.b16 %v6865
        %v6898 = vunpack.c.l.b16 %v6866
        %v6899 = vunpack.c.l.b16 %v6867
        %v6900 = vunpack.c.l.b16 %v6868
        %v6901 = vunpack.c.l.b16 %v6869
        %v6902 = vunpack.c.l.b16 %v6870
        %v6903 = vunpack.c.l.b16 %v6871
        %v6904 = vunpack.c.l.b16 %v6872
        %v6905 = vpack.c.b16 %v6890, %v6889
        %v6906 = vpack.c.b16 %v6892, %v6891
        %v6907 = vpack.c.b16 %v6894, %v6893
        %v6908 = vpack.c.b16 %v6896, %v6895
        %v6909 = vpack.c.b16 %v6898, %v6897
        %v6910 = vpack.c.b16 %v6900, %v6899
        %v6911 = vpack.c.b16 %v6902, %v6901
        %v6912 = vpack.c.b16 %v6904, %v6903
        %6921 = vmatprep.subr.bf16.mxu0 0
        %6922 = vmatpush1.bf16.msra.mxu0 %v6912
        %6923 = vmatprep.subr.bf16.mxu0 0
        %6924 = vmatpush1.bf16.msra.mxu0 %v6911
        %6925 = vmatprep.subr.bf16.mxu0 0
        %6926 = vmatpush1.bf16.msra.mxu0 %v6910
        %6927 = vmatprep.subr.bf16.mxu0 0
        %6928 = vmatpush1.bf16.msra.mxu0 %v6909
        %6929 = vmatprep.subr.bf16.mxu0 0
        %6930 = vmatpush1.bf16.msra.mxu0 %v6908
        %6931 = vmatprep.subr.bf16.mxu0 0
        %6932 = vmatpush1.bf16.msra.mxu0 %v6907
        %6933 = vmatprep.subr.bf16.mxu0 0
        %6934 = vmatpush1.bf16.msra.mxu0 %v6906
        %6935 = vmatprep.subr.bf16.mxu0 0
        %6936 = vmatpush1.bf16.msra.mxu0 %v6905
        %6937 = vmatprep.subr.bf16.mxu0 0
        %6938 = vmatpush2.bf16.msra.mxu0 0
        %6939 = vmatprep.subr.bf16.mxu0 0
        %6940 = vmatpush2.bf16.msra.mxu0 0
        %6941 = vmatprep.subr.bf16.mxu0 0
        %6942 = vmatpush2.bf16.msra.mxu0 0
        %6943 = vmatprep.subr.bf16.mxu0 0
        %6944 = vmatpush2.bf16.msra.mxu0 0
        %6945 = vmatprep.subr.bf16.mxu0 0
        %6946 = vmatpush2.bf16.msra.mxu0 0
        %6947 = vmatprep.subr.bf16.mxu0 0
        %6948 = vmatpush2.bf16.msra.mxu0 0
        %6949 = vmatprep.subr.bf16.mxu0 0
        %6950 = vmatpush2.bf16.msra.mxu0 0
        %6951 = vmatprep.subr.bf16.mxu0 0
        %6952 = vmatpush2.bf16.msra.mxu0 0
        %6953 = vmatprep.mubr.bf16.mxu0 0
        %6954 = vmatmul.mubr.bf16.gmra.mxu0 %v6853
        %v6955 = vpop.f32.mrf.mxu0
        %v6956 = vadd.f32 0.0, %v6955
        %v6957 = vpop.f32.mrf.mxu0
        %v6958 = vpop.f32.mrf.mxu0
        %v6959 = vadd.f32 0.0, %v6958
        %v6960 = vpop.f32.mrf.mxu0
        %6961 = vmatprep.mubr.bf16.mxu0 0
        %6962 = vmatmul.mubr.bf16.gmra.mxu0 %v6854
        %v6963 = vpop.f32.mrf.mxu0
        %v6964 = vadd.f32 0.0, %v6963
        %v6965 = vpop.f32.mrf.mxu0
        %v6966 = vpop.f32.mrf.mxu0
        %v6967 = vadd.f32 0.0, %v6966
        %v6968 = vpop.f32.mrf.mxu0
        %6969 = vmatprep.mubr.bf16.mxu0 0
        %6970 = vmatmul.mubr.bf16.gmra.mxu0 %v6855
        %v6971 = vpop.f32.mrf.mxu0
        %v6972 = vadd.f32 0.0, %v6971
        %v6973 = vpop.f32.mrf.mxu0
        %v6974 = vpop.f32.mrf.mxu0
        %v6975 = vpop.f32.mrf.mxu0
        %6976 = vdwg.mxu0
        %v6977 = vadd.f32 %v6843, %v6956
        %v6978 = vadd.f32 %v6844, %v6959
        %v6979 = vadd.f32 %v6845, %v6964
        %v6980 = vadd.f32 %v6846, %v6967
        %v6981 = vadd.f32 %v6847, %v6972
        %v6982 = vld [vmem:[#allocation4 + $0x10] sm:$0xff]
        %v6983 = vld [vmem:[#allocation4 + $0x18] sm:$0xff]
        %v6984 = vld [vmem:[#allocation4 + $0x20] sm:$0xff]
        %v6985 = vld [vmem:[#allocation4 + $0x28] sm:$0xff]
        %v6986 = vld [vmem:[#allocation4 + $0x30] sm:$0xff]
        %v6987 = vpack.c.bf16 %v6983, %v6982
        %v6988 = vpack.c.bf16 %v6985, %v6984
        %v6989 = vpack.c.bf16 %v6986, %v6986
        %s6990 = scalar_lea.vmem [#allocation10], 512
        %v6991 = vld [vmem:[%s6990] sm:$0xf]
        %v6992 = vld [vmem:[%s6990 + $0x4] sm:$0xf]
        %v6993 = vld [vmem:[%s6990 + $0x8] sm:$0xf]
        %v6994 = vld [vmem:[%s6990 + $0xc] sm:$0xf]
        %v6995 = vld [vmem:[%s6990 + $0x10] sm:$0xf]
        %v6996 = vld [vmem:[%s6990 + $0x14] sm:$0xf]
        %v6997 = vld [vmem:[%s6990 + $0x18] sm:$0xf]
        %v6998 = vld [vmem:[%s6990 + $0x1c] sm:$0xf]
        %v6999 = vld [vmem:[%s6990 + $0x20] sm:$0xf]
        %v7000 = vld [vmem:[%s6990 + $0x24] sm:$0xf]
        %v7001 = vld [vmem:[%s6990 + $0x28] sm:$0xf]
        %v7002 = vld [vmem:[%s6990 + $0x2c] sm:$0xf]
        %v7003 = vld [vmem:[%s6990 + $0x30] sm:$0xf]
        %v7004 = vld [vmem:[%s6990 + $0x34] sm:$0xf]
        %v7005 = vld [vmem:[%s6990 + $0x38] sm:$0xf]
        %v7006 = vld [vmem:[%s6990 + $0x3c] sm:$0xf]
        %v7023 = vunpack.c.l.b16 %v6991
        %v7024 = vunpack.c.l.b16 %v6992
        %v7025 = vunpack.c.l.b16 %v6993
        %v7026 = vunpack.c.l.b16 %v6994
        %v7027 = vunpack.c.l.b16 %v6995
        %v7028 = vunpack.c.l.b16 %v6996
        %v7029 = vunpack.c.l.b16 %v6997
        %v7030 = vunpack.c.l.b16 %v6998
        %v7031 = vunpack.c.l.b16 %v6999
        %v7032 = vunpack.c.l.b16 %v7000
        %v7033 = vunpack.c.l.b16 %v7001
        %v7034 = vunpack.c.l.b16 %v7002
        %v7035 = vunpack.c.l.b16 %v7003
        %v7036 = vunpack.c.l.b16 %v7004
        %v7037 = vunpack.c.l.b16 %v7005
        %v7038 = vunpack.c.l.b16 %v7006
        %v7039 = vpack.c.b16 %v7024, %v7023
        %v7040 = vpack.c.b16 %v7026, %v7025
        %v7041 = vpack.c.b16 %v7028, %v7027
        %v7042 = vpack.c.b16 %v7030, %v7029
        %v7043 = vpack.c.b16 %v7032, %v7031
        %v7044 = vpack.c.b16 %v7034, %v7033
        %v7045 = vpack.c.b16 %v7036, %v7035
        %v7046 = vpack.c.b16 %v7038, %v7037
        %7055 = vmatprep.subr.bf16.mxu0 0
        %7056 = vmatpush1.bf16.msra.mxu0 %v7046
        %7057 = vmatprep.subr.bf16.mxu0 0
        %7058 = vmatpush1.bf16.msra.mxu0 %v7045
        %7059 = vmatprep.subr.bf16.mxu0 0
        %7060 = vmatpush1.bf16.msra.mxu0 %v7044
        %7061 = vmatprep.subr.bf16.mxu0 0
        %7062 = vmatpush1.bf16.msra.mxu0 %v7043
        %7063 = vmatprep.subr.bf16.mxu0 0
        %7064 = vmatpush1.bf16.msra.mxu0 %v7042
        %7065 = vmatprep.subr.bf16.mxu0 0
        %7066 = vmatpush1.bf16.msra.mxu0 %v7041
        %7067 = vmatprep.subr.bf16.mxu0 0
        %7068 = vmatpush1.bf16.msra.mxu0 %v7040
        %7069 = vmatprep.subr.bf16.mxu0 0
        %7070 = vmatpush1.bf16.msra.mxu0 %v7039
        %7071 = vmatprep.subr.bf16.mxu0 0
        %7072 = vmatpush2.bf16.msra.mxu0 0
        %7073 = vmatprep.subr.bf16.mxu0 0
        %7074 = vmatpush2.bf16.msra.mxu0 0
        %7075 = vmatprep.subr.bf16.mxu0 0
        %7076 = vmatpush2.bf16.msra.mxu0 0
        %7077 = vmatprep.subr.bf16.mxu0 0
        %7078 = vmatpush2.bf16.msra.mxu0 0
        %7079 = vmatprep.subr.bf16.mxu0 0
        %7080 = vmatpush2.bf16.msra.mxu0 0
        %7081 = vmatprep.subr.bf16.mxu0 0
        %7082 = vmatpush2.bf16.msra.mxu0 0
        %7083 = vmatprep.subr.bf16.mxu0 0
        %7084 = vmatpush2.bf16.msra.mxu0 0
        %7085 = vmatprep.subr.bf16.mxu0 0
        %7086 = vmatpush2.bf16.msra.mxu0 0
        %7087 = vmatprep.mubr.bf16.mxu0 0
        %7088 = vmatmul.mubr.bf16.gmra.mxu0 %v6987
        %v7089 = vpop.f32.mrf.mxu0
        %v7090 = vadd.f32 0.0, %v7089
        %v7091 = vpop.f32.mrf.mxu0
        %v7092 = vpop.f32.mrf.mxu0
        %v7093 = vadd.f32 0.0, %v7092
        %v7094 = vpop.f32.mrf.mxu0
        %7095 = vmatprep.mubr.bf16.mxu0 0
        %7096 = vmatmul.mubr.bf16.gmra.mxu0 %v6988
        %v7097 = vpop.f32.mrf.mxu0
        %v7098 = vadd.f32 0.0, %v7097
        %v7099 = vpop.f32.mrf.mxu0
        %v7100 = vpop.f32.mrf.mxu0
        %v7101 = vadd.f32 0.0, %v7100
        %v7102 = vpop.f32.mrf.mxu0
        %7103 = vmatprep.mubr.bf16.mxu0 0
        %7104 = vmatmul.mubr.bf16.gmra.mxu0 %v6989
        %v7105 = vpop.f32.mrf.mxu0
        %v7106 = vadd.f32 0.0, %v7105
        %v7107 = vpop.f32.mrf.mxu0
        %v7108 = vpop.f32.mrf.mxu0
        %v7109 = vpop.f32.mrf.mxu0
        %7110 = vdwg.mxu0
        %v7111 = vadd.f32 %v6977, %v7090
        %v7112 = vadd.f32 %v6978, %v7093
        %v7113 = vadd.f32 %v6979, %v7098
        %v7114 = vadd.f32 %v6980, %v7101
        %v7115 = vadd.f32 %v6981, %v7106
        %v7116 = vmin.f32 %v7111, 0.0
        %v7117 = vmin.f32 %v7112, 0.0
        %v7118 = vmin.f32 %v7113, 0.0
        %v7119 = vmin.f32 %v7114, 0.0
        %v7120 = vmin.f32 %v7115, 0.0
        %v7121 = vmul.f32 %v7116, 1.442695
        %v7122 = vpow.pop %v7121
        %v7123 = vmul.f32 %v7117, 1.442695
        %v7124 = vpow.pop %v7123
        %v7125 = vmul.f32 %v7118, 1.442695
        %v7126 = vpow.pop %v7125
        %v7127 = vmul.f32 %v7119, 1.442695
        %v7128 = vpow.pop %v7127
        %v7129 = vmul.f32 %v7120, 1.442695
        %v7130 = vpow.pop %v7129
        %v7131 = vsub.f32 %v7122, 1.0
        %v7132 = vsub.f32 %v7124, 1.0
        %v7133 = vsub.f32 %v7126, 1.0
        %v7134 = vsub.f32 %v7128, 1.0
        %v7135 = vsub.f32 %v7130, 1.0
        %v7136 = vmul.f32 %v7131, 1.6732632
        %v7137 = vmul.f32 %v7132, 1.6732632
        %v7138 = vmul.f32 %v7133, 1.6732632
        %v7139 = vmul.f32 %v7134, 1.6732632
        %v7140 = vmul.f32 %v7135, 1.6732632
        %vm7141 = vcmp.gt.f32.partialorder %v7111, 0.0
        %vm7142 = vcmp.gt.f32.partialorder %v7112, 0.0
        %vm7143 = vcmp.gt.f32.partialorder %v7113, 0.0
        %vm7144 = vcmp.gt.f32.partialorder %v7114, 0.0
        %vm7145 = vcmp.gt.f32.partialorder %v7115, 0.0
        %v7146 = vsel %vm7141, %v7111, %v7136
        %v7147 = vsel %vm7142, %v7112, %v7137
        %v7148 = vsel %vm7143, %v7113, %v7138
        %v7149 = vsel %vm7144, %v7114, %v7139
        %v7150 = vsel %vm7145, %v7115, %v7140
        %v7151 = vmul.f32 %v7146, 1.050701
        %v7152 = vmul.f32 %v7147, 1.050701
        %v7153 = vmul.f32 %v7148, 1.050701
        %v7154 = vmul.f32 %v7149, 1.050701
        %v7155 = vmul.f32 %v7150, 1.050701
        %v7156 = vpack.c.bf16 %v7152, %v7151
        %v7157 = vpack.c.bf16 %v7154, %v7153
        %v7158 = vpack.c.bf16 %v7155, %v7155
        %v7159 = vld [vmem:[%s4] sm:$0xf]
        %v7160 = vld [vmem:[%s4 + $0x4] sm:$0xf]
        %v7163 = vunpack.c.l.b16 %v7159
        %v7164 = vunpack.c.l.b16 %v7160
        %v7165 = vpack.c.b16 %v7164, %v7163
        %v7167 = vsel %vm5817, %v7165, 0
        %v7170 = vsel %vm2518, %v7158, 0
        %7172 = vmatprep.subr.bf16.mxu0 0
        %7173 = vmatpush1.bf16.msra.mxu0 0
        %7174 = vmatprep.subr.bf16.mxu0 0
        %7175 = vmatpush1.bf16.msra.mxu0 0
        %7176 = vmatprep.subr.bf16.mxu0 0
        %7177 = vmatpush1.bf16.msra.mxu0 0
        %7178 = vmatprep.subr.bf16.mxu0 0
        %7179 = vmatpush1.bf16.msra.mxu0 0
        %7180 = vmatprep.subr.bf16.mxu0 0
        %7181 = vmatpush1.bf16.msra.mxu0 0
        %7182 = vmatprep.subr.bf16.mxu0 0
        %7183 = vmatpush1.bf16.msra.mxu0 %v7170
        %7184 = vmatprep.subr.bf16.mxu0 0
        %7185 = vmatpush1.bf16.msra.mxu0 %v7157
        %7186 = vmatprep.subr.bf16.mxu0 0
        %7187 = vmatpush1.bf16.msra.mxu0 %v7156
        %7188 = vmatprep.subr.bf16.mxu0 0
        %7189 = vmatpush2.bf16.msra.mxu0 0
        %7190 = vmatprep.subr.bf16.mxu0 0
        %7191 = vmatpush2.bf16.msra.mxu0 0
        %7192 = vmatprep.subr.bf16.mxu0 0
        %7193 = vmatpush2.bf16.msra.mxu0 0
        %7194 = vmatprep.subr.bf16.mxu0 0
        %7195 = vmatpush2.bf16.msra.mxu0 0
        %7196 = vmatprep.subr.bf16.mxu0 0
        %7197 = vmatpush2.bf16.msra.mxu0 0
        %7198 = vmatprep.subr.bf16.mxu0 0
        %7199 = vmatpush2.bf16.msra.mxu0 0
        %7200 = vmatprep.subr.bf16.mxu0 0
        %7201 = vmatpush2.bf16.msra.mxu0 0
        %7202 = vmatprep.subr.bf16.mxu0 0
        %7203 = vmatpush2.bf16.msra.mxu0 0
        %7204 = vmatprep.mubr.bf16.mxu0 0
        %7205 = vmatmul.mubr.bf16.gmra.mxu0 %v7167
        %v7206 = vpop.f32.mrf.mxu0
        %v7207 = vadd.f32 0.0, %v7206
        %v7208 = vpop.f32.mrf.mxu0
        %v7209 = vpop.f32.mrf.mxu0
        %v7210 = vadd.f32 0.0, %v7209
        %v7211 = vpop.f32.mrf.mxu0
        %7212 = vdwg.mxu0
        %7213 = vst [vmem:[#allocation5] sm:$0xff] %v7207
        %7214 = vst [vmem:[#allocation5 + $0x8] sm:$0xff] %v7210
        %v7215 = vld [vmem:[%s14] sm:$0x1]
        %v7216 = vld [vmem:[#allocation5] sm:$0x1]
        %v7217 = vpack.c.bf16 %v7216, %v7216
        %v7218 = vld [vmem:[%s13] sm:$0xf]
        %v7219 = vld [vmem:[%s13 + $0x4] sm:$0xf]
        %v7220 = vld [vmem:[%s13 + $0x8] sm:$0xf]
        %v7221 = vld [vmem:[%s13 + $0xc] sm:$0xf]
        %v7222 = vld [vmem:[%s13 + $0x10] sm:$0xf]
        %v7223 = vld [vmem:[%s13 + $0x14] sm:$0xf]
        %v7224 = vld [vmem:[%s13 + $0x18] sm:$0xf]
        %v7225 = vld [vmem:[%s13 + $0x1c] sm:$0xf]
        %v7226 = vld [vmem:[%s13 + $0x20] sm:$0xf]
        %v7227 = vld [vmem:[%s13 + $0x24] sm:$0xf]
        %v7228 = vld [vmem:[%s13 + $0x28] sm:$0xf]
        %v7229 = vld [vmem:[%s13 + $0x2c] sm:$0xf]
        %v7230 = vld [vmem:[%s13 + $0x30] sm:$0xf]
        %v7231 = vld [vmem:[%s13 + $0x34] sm:$0xf]
        %v7232 = vld [vmem:[%s13 + $0x38] sm:$0xf]
        %v7233 = vld [vmem:[%s13 + $0x3c] sm:$0xf]
        %v7250 = vunpack.c.l.b16 %v7218
        %v7251 = vunpack.c.l.b16 %v7219
        %v7252 = vunpack.c.l.b16 %v7220
        %v7253 = vunpack.c.l.b16 %v7221
        %v7254 = vunpack.c.l.b16 %v7222
        %v7255 = vunpack.c.l.b16 %v7223
        %v7256 = vunpack.c.l.b16 %v7224
        %v7257 = vunpack.c.l.b16 %v7225
        %v7258 = vunpack.c.l.b16 %v7226
        %v7259 = vunpack.c.l.b16 %v7227
        %v7260 = vunpack.c.l.b16 %v7228
        %v7261 = vunpack.c.l.b16 %v7229
        %v7262 = vunpack.c.l.b16 %v7230
        %v7263 = vunpack.c.l.b16 %v7231
        %v7264 = vunpack.c.l.b16 %v7232
        %v7265 = vunpack.c.l.b16 %v7233
        %v7266 = vpack.c.b16 %v7251, %v7250
        %v7267 = vpack.c.b16 %v7253, %v7252
        %v7268 = vpack.c.b16 %v7255, %v7254
        %v7269 = vpack.c.b16 %v7257, %v7256
        %v7270 = vpack.c.b16 %v7259, %v7258
        %v7271 = vpack.c.b16 %v7261, %v7260
        %v7272 = vpack.c.b16 %v7263, %v7262
        %v7273 = vpack.c.b16 %v7265, %v7264
        %7282 = vmatprep.subr.bf16.mxu0 0
        %7283 = vmatpush1.bf16.msra.mxu0 %v7273
        %7284 = vmatprep.subr.bf16.mxu0 0
        %7285 = vmatpush1.bf16.msra.mxu0 %v7272
        %7286 = vmatprep.subr.bf16.mxu0 0
        %7287 = vmatpush1.bf16.msra.mxu0 %v7271
        %7288 = vmatprep.subr.bf16.mxu0 0
        %7289 = vmatpush1.bf16.msra.mxu0 %v7270
        %7290 = vmatprep.subr.bf16.mxu0 0
        %7291 = vmatpush1.bf16.msra.mxu0 %v7269
        %7292 = vmatprep.subr.bf16.mxu0 0
        %7293 = vmatpush1.bf16.msra.mxu0 %v7268
        %7294 = vmatprep.subr.bf16.mxu0 0
        %7295 = vmatpush1.bf16.msra.mxu0 %v7267
        %7296 = vmatprep.subr.bf16.mxu0 0
        %7297 = vmatpush1.bf16.msra.mxu0 %v7266
        %7298 = vmatprep.subr.bf16.mxu0 0
        %7299 = vmatpush2.bf16.msra.mxu0 0
        %7300 = vmatprep.subr.bf16.mxu0 0
        %7301 = vmatpush2.bf16.msra.mxu0 0
        %7302 = vmatprep.subr.bf16.mxu0 0
        %7303 = vmatpush2.bf16.msra.mxu0 0
        %7304 = vmatprep.subr.bf16.mxu0 0
        %7305 = vmatpush2.bf16.msra.mxu0 0
        %7306 = vmatprep.subr.bf16.mxu0 0
        %7307 = vmatpush2.bf16.msra.mxu0 0
        %7308 = vmatprep.subr.bf16.mxu0 0
        %7309 = vmatpush2.bf16.msra.mxu0 0
        %7310 = vmatprep.subr.bf16.mxu0 0
        %7311 = vmatpush2.bf16.msra.mxu0 0
        %7312 = vmatprep.subr.bf16.mxu0 0
        %7313 = vmatpush2.bf16.msra.mxu0 0
        %7314 = vmatprep.mubr.bf16.mxu0 0
        %7315 = vmatmul.mubr.bf16.gmra.mxu0 %v7217
        %v7316 = vpop.f32.mrf.mxu0
        %v7317 = vadd.f32 0.0, %v7316
        %v7318 = vpop.f32.mrf.mxu0
        %v7319 = vpop.f32.mrf.mxu0
        %v7320 = vpop.f32.mrf.mxu0
        %7321 = vdwg.mxu0
        %v7322 = vadd.f32 %v7215, %v7317
        %v7323 = vld [vmem:[#allocation5 + $0x1] sm:$0x1]
        %v7324 = vpack.c.bf16 %v7323, %v7323
        %s7325 = scalar_lea.vmem %s13, 64
        %v7326 = vld [vmem:[%s7325] sm:$0xf]
        %v7327 = vld [vmem:[%s7325 + $0x4] sm:$0xf]
        %v7328 = vld [vmem:[%s7325 + $0x8] sm:$0xf]
        %v7329 = vld [vmem:[%s7325 + $0xc] sm:$0xf]
        %v7330 = vld [vmem:[%s7325 + $0x10] sm:$0xf]
        %v7331 = vld [vmem:[%s7325 + $0x14] sm:$0xf]
        %v7332 = vld [vmem:[%s7325 + $0x18] sm:$0xf]
        %v7333 = vld [vmem:[%s7325 + $0x1c] sm:$0xf]
        %v7334 = vld [vmem:[%s7325 + $0x20] sm:$0xf]
        %v7335 = vld [vmem:[%s7325 + $0x24] sm:$0xf]
        %v7336 = vld [vmem:[%s7325 + $0x28] sm:$0xf]
        %v7337 = vld [vmem:[%s7325 + $0x2c] sm:$0xf]
        %v7338 = vld [vmem:[%s7325 + $0x30] sm:$0xf]
        %v7339 = vld [vmem:[%s7325 + $0x34] sm:$0xf]
        %v7340 = vld [vmem:[%s7325 + $0x38] sm:$0xf]
        %v7341 = vld [vmem:[%s7325 + $0x3c] sm:$0xf]
        %v7358 = vunpack.c.l.b16 %v7326
        %v7359 = vunpack.c.l.b16 %v7327
        %v7360 = vunpack.c.l.b16 %v7328
        %v7361 = vunpack.c.l.b16 %v7329
        %v7362 = vunpack.c.l.b16 %v7330
        %v7363 = vunpack.c.l.b16 %v7331
        %v7364 = vunpack.c.l.b16 %v7332
        %v7365 = vunpack.c.l.b16 %v7333
        %v7366 = vunpack.c.l.b16 %v7334
        %v7367 = vunpack.c.l.b16 %v7335
        %v7368 = vunpack.c.l.b16 %v7336
        %v7369 = vunpack.c.l.b16 %v7337
        %v7370 = vunpack.c.l.b16 %v7338
        %v7371 = vunpack.c.l.b16 %v7339
        %v7372 = vunpack.c.l.b16 %v7340
        %v7373 = vunpack.c.l.b16 %v7341
        %v7374 = vpack.c.b16 %v7359, %v7358
        %v7375 = vpack.c.b16 %v7361, %v7360
        %v7376 = vpack.c.b16 %v7363, %v7362
        %v7377 = vpack.c.b16 %v7365, %v7364
        %v7378 = vpack.c.b16 %v7367, %v7366
        %v7379 = vpack.c.b16 %v7369, %v7368
        %v7380 = vpack.c.b16 %v7371, %v7370
        %v7381 = vpack.c.b16 %v7373, %v7372
        %7390 = vmatprep.subr.bf16.mxu0 0
        %7391 = vmatpush1.bf16.msra.mxu0 %v7381
        %7392 = vmatprep.subr.bf16.mxu0 0
        %7393 = vmatpush1.bf16.msra.mxu0 %v7380
        %7394 = vmatprep.subr.bf16.mxu0 0
        %7395 = vmatpush1.bf16.msra.mxu0 %v7379
        %7396 = vmatprep.subr.bf16.mxu0 0
        %7397 = vmatpush1.bf16.msra.mxu0 %v7378
        %7398 = vmatprep.subr.bf16.mxu0 0
        %7399 = vmatpush1.bf16.msra.mxu0 %v7377
        %7400 = vmatprep.subr.bf16.mxu0 0
        %7401 = vmatpush1.bf16.msra.mxu0 %v7376
        %7402 = vmatprep.subr.bf16.mxu0 0
        %7403 = vmatpush1.bf16.msra.mxu0 %v7375
        %7404 = vmatprep.subr.bf16.mxu0 0
        %7405 = vmatpush1.bf16.msra.mxu0 %v7374
        %7406 = vmatprep.subr.bf16.mxu0 0
        %7407 = vmatpush2.bf16.msra.mxu0 0
        %7408 = vmatprep.subr.bf16.mxu0 0
        %7409 = vmatpush2.bf16.msra.mxu0 0
        %7410 = vmatprep.subr.bf16.mxu0 0
        %7411 = vmatpush2.bf16.msra.mxu0 0
        %7412 = vmatprep.subr.bf16.mxu0 0
        %7413 = vmatpush2.bf16.msra.mxu0 0
        %7414 = vmatprep.subr.bf16.mxu0 0
        %7415 = vmatpush2.bf16.msra.mxu0 0
        %7416 = vmatprep.subr.bf16.mxu0 0
        %7417 = vmatpush2.bf16.msra.mxu0 0
        %7418 = vmatprep.subr.bf16.mxu0 0
        %7419 = vmatpush2.bf16.msra.mxu0 0
        %7420 = vmatprep.subr.bf16.mxu0 0
        %7421 = vmatpush2.bf16.msra.mxu0 0
        %7422 = vmatprep.mubr.bf16.mxu0 0
        %7423 = vmatmul.mubr.bf16.gmra.mxu0 %v7324
        %v7424 = vpop.f32.mrf.mxu0
        %v7425 = vadd.f32 0.0, %v7424
        %v7426 = vpop.f32.mrf.mxu0
        %v7427 = vpop.f32.mrf.mxu0
        %v7428 = vpop.f32.mrf.mxu0
        %7429 = vdwg.mxu0
        %v7430 = vadd.f32 %v7322, %v7425
        %v7431 = vld [vmem:[#allocation5 + $0x2] sm:$0x1]
        %v7432 = vpack.c.bf16 %v7431, %v7431
        %s7433 = scalar_lea.vmem %s13, 128
        %v7434 = vld [vmem:[%s7433] sm:$0xf]
        %v7435 = vld [vmem:[%s7433 + $0x4] sm:$0xf]
        %v7436 = vld [vmem:[%s7433 + $0x8] sm:$0xf]
        %v7437 = vld [vmem:[%s7433 + $0xc] sm:$0xf]
        %v7438 = vld [vmem:[%s7433 + $0x10] sm:$0xf]
        %v7439 = vld [vmem:[%s7433 + $0x14] sm:$0xf]
        %v7440 = vld [vmem:[%s7433 + $0x18] sm:$0xf]
        %v7441 = vld [vmem:[%s7433 + $0x1c] sm:$0xf]
        %v7442 = vld [vmem:[%s7433 + $0x20] sm:$0xf]
        %v7443 = vld [vmem:[%s7433 + $0x24] sm:$0xf]
        %v7444 = vld [vmem:[%s7433 + $0x28] sm:$0xf]
        %v7445 = vld [vmem:[%s7433 + $0x2c] sm:$0xf]
        %v7446 = vld [vmem:[%s7433 + $0x30] sm:$0xf]
        %v7447 = vld [vmem:[%s7433 + $0x34] sm:$0xf]
        %v7448 = vld [vmem:[%s7433 + $0x38] sm:$0xf]
        %v7449 = vld [vmem:[%s7433 + $0x3c] sm:$0xf]
        %v7466 = vunpack.c.l.b16 %v7434
        %v7467 = vunpack.c.l.b16 %v7435
        %v7468 = vunpack.c.l.b16 %v7436
        %v7469 = vunpack.c.l.b16 %v7437
        %v7470 = vunpack.c.l.b16 %v7438
        %v7471 = vunpack.c.l.b16 %v7439
        %v7472 = vunpack.c.l.b16 %v7440
        %v7473 = vunpack.c.l.b16 %v7441
        %v7474 = vunpack.c.l.b16 %v7442
        %v7475 = vunpack.c.l.b16 %v7443
        %v7476 = vunpack.c.l.b16 %v7444
        %v7477 = vunpack.c.l.b16 %v7445
        %v7478 = vunpack.c.l.b16 %v7446
        %v7479 = vunpack.c.l.b16 %v7447
        %v7480 = vunpack.c.l.b16 %v7448
        %v7481 = vunpack.c.l.b16 %v7449
        %v7482 = vpack.c.b16 %v7467, %v7466
        %v7483 = vpack.c.b16 %v7469, %v7468
        %v7484 = vpack.c.b16 %v7471, %v7470
        %v7485 = vpack.c.b16 %v7473, %v7472
        %v7486 = vpack.c.b16 %v7475, %v7474
        %v7487 = vpack.c.b16 %v7477, %v7476
        %v7488 = vpack.c.b16 %v7479, %v7478
        %v7489 = vpack.c.b16 %v7481, %v7480
        %7498 = vmatprep.subr.bf16.mxu0 0
        %7499 = vmatpush1.bf16.msra.mxu0 %v7489
        %7500 = vmatprep.subr.bf16.mxu0 0
        %7501 = vmatpush1.bf16.msra.mxu0 %v7488
        %7502 = vmatprep.subr.bf16.mxu0 0
        %7503 = vmatpush1.bf16.msra.mxu0 %v7487
        %7504 = vmatprep.subr.bf16.mxu0 0
        %7505 = vmatpush1.bf16.msra.mxu0 %v7486
        %7506 = vmatprep.subr.bf16.mxu0 0
        %7507 = vmatpush1.bf16.msra.mxu0 %v7485
        %7508 = vmatprep.subr.bf16.mxu0 0
        %7509 = vmatpush1.bf16.msra.mxu0 %v7484
        %7510 = vmatprep.subr.bf16.mxu0 0
        %7511 = vmatpush1.bf16.msra.mxu0 %v7483
        %7512 = vmatprep.subr.bf16.mxu0 0
        %7513 = vmatpush1.bf16.msra.mxu0 %v7482
        %7514 = vmatprep.subr.bf16.mxu0 0
        %7515 = vmatpush2.bf16.msra.mxu0 0
        %7516 = vmatprep.subr.bf16.mxu0 0
        %7517 = vmatpush2.bf16.msra.mxu0 0
        %7518 = vmatprep.subr.bf16.mxu0 0
        %7519 = vmatpush2.bf16.msra.mxu0 0
        %7520 = vmatprep.subr.bf16.mxu0 0
        %7521 = vmatpush2.bf16.msra.mxu0 0
        %7522 = vmatprep.subr.bf16.mxu0 0
        %7523 = vmatpush2.bf16.msra.mxu0 0
        %7524 = vmatprep.subr.bf16.mxu0 0
        %7525 = vmatpush2.bf16.msra.mxu0 0
        %7526 = vmatprep.subr.bf16.mxu0 0
        %7527 = vmatpush2.bf16.msra.mxu0 0
        %7528 = vmatprep.subr.bf16.mxu0 0
        %7529 = vmatpush2.bf16.msra.mxu0 0
        %7530 = vmatprep.mubr.bf16.mxu0 0
        %7531 = vmatmul.mubr.bf16.gmra.mxu0 %v7432
        %v7532 = vpop.f32.mrf.mxu0
        %v7533 = vadd.f32 0.0, %v7532
        %v7534 = vpop.f32.mrf.mxu0
        %v7535 = vpop.f32.mrf.mxu0
        %v7536 = vpop.f32.mrf.mxu0
        %7537 = vdwg.mxu0
        %v7538 = vadd.f32 %v7430, %v7533
        %v7539 = vld [vmem:[#allocation5 + $0x3] sm:$0x1]
        %v7540 = vpack.c.bf16 %v7539, %v7539
        %s7541 = scalar_lea.vmem %s13, 192
        %v7542 = vld [vmem:[%s7541] sm:$0xf]
        %v7543 = vld [vmem:[%s7541 + $0x4] sm:$0xf]
        %v7544 = vld [vmem:[%s7541 + $0x8] sm:$0xf]
        %v7545 = vld [vmem:[%s7541 + $0xc] sm:$0xf]
        %v7546 = vld [vmem:[%s7541 + $0x10] sm:$0xf]
        %v7547 = vld [vmem:[%s7541 + $0x14] sm:$0xf]
        %v7548 = vld [vmem:[%s7541 + $0x18] sm:$0xf]
        %v7549 = vld [vmem:[%s7541 + $0x1c] sm:$0xf]
        %v7550 = vld [vmem:[%s7541 + $0x20] sm:$0xf]
        %v7551 = vld [vmem:[%s7541 + $0x24] sm:$0xf]
        %v7552 = vld [vmem:[%s7541 + $0x28] sm:$0xf]
        %v7553 = vld [vmem:[%s7541 + $0x2c] sm:$0xf]
        %v7554 = vld [vmem:[%s7541 + $0x30] sm:$0xf]
        %v7555 = vld [vmem:[%s7541 + $0x34] sm:$0xf]
        %v7556 = vld [vmem:[%s7541 + $0x38] sm:$0xf]
        %v7557 = vld [vmem:[%s7541 + $0x3c] sm:$0xf]
        %v7574 = vunpack.c.l.b16 %v7542
        %v7575 = vunpack.c.l.b16 %v7543
        %v7576 = vunpack.c.l.b16 %v7544
        %v7577 = vunpack.c.l.b16 %v7545
        %v7578 = vunpack.c.l.b16 %v7546
        %v7579 = vunpack.c.l.b16 %v7547
        %v7580 = vunpack.c.l.b16 %v7548
        %v7581 = vunpack.c.l.b16 %v7549
        %v7582 = vunpack.c.l.b16 %v7550
        %v7583 = vunpack.c.l.b16 %v7551
        %v7584 = vunpack.c.l.b16 %v7552
        %v7585 = vunpack.c.l.b16 %v7553
        %v7586 = vunpack.c.l.b16 %v7554
        %v7587 = vunpack.c.l.b16 %v7555
        %v7588 = vunpack.c.l.b16 %v7556
        %v7589 = vunpack.c.l.b16 %v7557
        %v7590 = vpack.c.b16 %v7575, %v7574
        %v7591 = vpack.c.b16 %v7577, %v7576
        %v7592 = vpack.c.b16 %v7579, %v7578
        %v7593 = vpack.c.b16 %v7581, %v7580
        %v7594 = vpack.c.b16 %v7583, %v7582
        %v7595 = vpack.c.b16 %v7585, %v7584
        %v7596 = vpack.c.b16 %v7587, %v7586
        %v7597 = vpack.c.b16 %v7589, %v7588
        %7606 = vmatprep.subr.bf16.mxu0 0
        %7607 = vmatpush1.bf16.msra.mxu0 %v7597
        %7608 = vmatprep.subr.bf16.mxu0 0
        %7609 = vmatpush1.bf16.msra.mxu0 %v7596
        %7610 = vmatprep.subr.bf16.mxu0 0
        %7611 = vmatpush1.bf16.msra.mxu0 %v7595
        %7612 = vmatprep.subr.bf16.mxu0 0
        %7613 = vmatpush1.bf16.msra.mxu0 %v7594
        %7614 = vmatprep.subr.bf16.mxu0 0
        %7615 = vmatpush1.bf16.msra.mxu0 %v7593
        %7616 = vmatprep.subr.bf16.mxu0 0
        %7617 = vmatpush1.bf16.msra.mxu0 %v7592
        %7618 = vmatprep.subr.bf16.mxu0 0
        %7619 = vmatpush1.bf16.msra.mxu0 %v7591
        %7620 = vmatprep.subr.bf16.mxu0 0
        %7621 = vmatpush1.bf16.msra.mxu0 %v7590
        %7622 = vmatprep.subr.bf16.mxu0 0
        %7623 = vmatpush2.bf16.msra.mxu0 0
        %7624 = vmatprep.subr.bf16.mxu0 0
        %7625 = vmatpush2.bf16.msra.mxu0 0
        %7626 = vmatprep.subr.bf16.mxu0 0
        %7627 = vmatpush2.bf16.msra.mxu0 0
        %7628 = vmatprep.subr.bf16.mxu0 0
        %7629 = vmatpush2.bf16.msra.mxu0 0
        %7630 = vmatprep.subr.bf16.mxu0 0
        %7631 = vmatpush2.bf16.msra.mxu0 0
        %7632 = vmatprep.subr.bf16.mxu0 0
        %7633 = vmatpush2.bf16.msra.mxu0 0
        %7634 = vmatprep.subr.bf16.mxu0 0
        %7635 = vmatpush2.bf16.msra.mxu0 0
        %7636 = vmatprep.subr.bf16.mxu0 0
        %7637 = vmatpush2.bf16.msra.mxu0 0
        %7638 = vmatprep.mubr.bf16.mxu0 0
        %7639 = vmatmul.mubr.bf16.gmra.mxu0 %v7540
        %v7640 = vpop.f32.mrf.mxu0
        %v7641 = vadd.f32 0.0, %v7640
        %v7642 = vpop.f32.mrf.mxu0
        %v7643 = vpop.f32.mrf.mxu0
        %v7644 = vpop.f32.mrf.mxu0
        %7645 = vdwg.mxu0
        %v7646 = vadd.f32 %v7538, %v7641
        %v7647 = vld [vmem:[#allocation5 + $0x4] sm:$0x1]
        %v7648 = vpack.c.bf16 %v7647, %v7647
        %s7649 = scalar_lea.vmem %s13, 256
        %v7650 = vld [vmem:[%s7649] sm:$0xf]
        %v7651 = vld [vmem:[%s7649 + $0x4] sm:$0xf]
        %v7652 = vld [vmem:[%s7649 + $0x8] sm:$0xf]
        %v7653 = vld [vmem:[%s7649 + $0xc] sm:$0xf]
        %v7654 = vld [vmem:[%s7649 + $0x10] sm:$0xf]
        %v7655 = vld [vmem:[%s7649 + $0x14] sm:$0xf]
        %v7656 = vld [vmem:[%s7649 + $0x18] sm:$0xf]
        %v7657 = vld [vmem:[%s7649 + $0x1c] sm:$0xf]
        %v7658 = vld [vmem:[%s7649 + $0x20] sm:$0xf]
        %v7659 = vld [vmem:[%s7649 + $0x24] sm:$0xf]
        %v7660 = vld [vmem:[%s7649 + $0x28] sm:$0xf]
        %v7661 = vld [vmem:[%s7649 + $0x2c] sm:$0xf]
        %v7662 = vld [vmem:[%s7649 + $0x30] sm:$0xf]
        %v7663 = vld [vmem:[%s7649 + $0x34] sm:$0xf]
        %v7664 = vld [vmem:[%s7649 + $0x38] sm:$0xf]
        %v7665 = vld [vmem:[%s7649 + $0x3c] sm:$0xf]
        %v7682 = vunpack.c.l.b16 %v7650
        %v7683 = vunpack.c.l.b16 %v7651
        %v7684 = vunpack.c.l.b16 %v7652
        %v7685 = vunpack.c.l.b16 %v7653
        %v7686 = vunpack.c.l.b16 %v7654
        %v7687 = vunpack.c.l.b16 %v7655
        %v7688 = vunpack.c.l.b16 %v7656
        %v7689 = vunpack.c.l.b16 %v7657
        %v7690 = vunpack.c.l.b16 %v7658
        %v7691 = vunpack.c.l.b16 %v7659
        %v7692 = vunpack.c.l.b16 %v7660
        %v7693 = vunpack.c.l.b16 %v7661
        %v7694 = vunpack.c.l.b16 %v7662
        %v7695 = vunpack.c.l.b16 %v7663
        %v7696 = vunpack.c.l.b16 %v7664
        %v7697 = vunpack.c.l.b16 %v7665
        %v7698 = vpack.c.b16 %v7683, %v7682
        %v7699 = vpack.c.b16 %v7685, %v7684
        %v7700 = vpack.c.b16 %v7687, %v7686
        %v7701 = vpack.c.b16 %v7689, %v7688
        %v7702 = vpack.c.b16 %v7691, %v7690
        %v7703 = vpack.c.b16 %v7693, %v7692
        %v7704 = vpack.c.b16 %v7695, %v7694
        %v7705 = vpack.c.b16 %v7697, %v7696
        %7714 = vmatprep.subr.bf16.mxu0 0
        %7715 = vmatpush1.bf16.msra.mxu0 %v7705
        %7716 = vmatprep.subr.bf16.mxu0 0
        %7717 = vmatpush1.bf16.msra.mxu0 %v7704
        %7718 = vmatprep.subr.bf16.mxu0 0
        %7719 = vmatpush1.bf16.msra.mxu0 %v7703
        %7720 = vmatprep.subr.bf16.mxu0 0
        %7721 = vmatpush1.bf16.msra.mxu0 %v7702
        %7722 = vmatprep.subr.bf16.mxu0 0
        %7723 = vmatpush1.bf16.msra.mxu0 %v7701
        %7724 = vmatprep.subr.bf16.mxu0 0
        %7725 = vmatpush1.bf16.msra.mxu0 %v7700
        %7726 = vmatprep.subr.bf16.mxu0 0
        %7727 = vmatpush1.bf16.msra.mxu0 %v7699
        %7728 = vmatprep.subr.bf16.mxu0 0
        %7729 = vmatpush1.bf16.msra.mxu0 %v7698
        %7730 = vmatprep.subr.bf16.mxu0 0
        %7731 = vmatpush2.bf16.msra.mxu0 0
        %7732 = vmatprep.subr.bf16.mxu0 0
        %7733 = vmatpush2.bf16.msra.mxu0 0
        %7734 = vmatprep.subr.bf16.mxu0 0
        %7735 = vmatpush2.bf16.msra.mxu0 0
        %7736 = vmatprep.subr.bf16.mxu0 0
        %7737 = vmatpush2.bf16.msra.mxu0 0
        %7738 = vmatprep.subr.bf16.mxu0 0
        %7739 = vmatpush2.bf16.msra.mxu0 0
        %7740 = vmatprep.subr.bf16.mxu0 0
        %7741 = vmatpush2.bf16.msra.mxu0 0
        %7742 = vmatprep.subr.bf16.mxu0 0
        %7743 = vmatpush2.bf16.msra.mxu0 0
        %7744 = vmatprep.subr.bf16.mxu0 0
        %7745 = vmatpush2.bf16.msra.mxu0 0
        %7746 = vmatprep.mubr.bf16.mxu0 0
        %7747 = vmatmul.mubr.bf16.gmra.mxu0 %v7648
        %v7748 = vpop.f32.mrf.mxu0
        %v7749 = vadd.f32 0.0, %v7748
        %v7750 = vpop.f32.mrf.mxu0
        %v7751 = vpop.f32.mrf.mxu0
        %v7752 = vpop.f32.mrf.mxu0
        %7753 = vdwg.mxu0
        %v7754 = vadd.f32 %v7646, %v7749
        %v7755 = vld [vmem:[#allocation5 + $0x5] sm:$0x1]
        %v7756 = vpack.c.bf16 %v7755, %v7755
        %s7757 = scalar_lea.vmem %s13, 320
        %v7758 = vld [vmem:[%s7757] sm:$0xf]
        %v7759 = vld [vmem:[%s7757 + $0x4] sm:$0xf]
        %v7760 = vld [vmem:[%s7757 + $0x8] sm:$0xf]
        %v7761 = vld [vmem:[%s7757 + $0xc] sm:$0xf]
        %v7762 = vld [vmem:[%s7757 + $0x10] sm:$0xf]
        %v7763 = vld [vmem:[%s7757 + $0x14] sm:$0xf]
        %v7764 = vld [vmem:[%s7757 + $0x18] sm:$0xf]
        %v7765 = vld [vmem:[%s7757 + $0x1c] sm:$0xf]
        %v7766 = vld [vmem:[%s7757 + $0x20] sm:$0xf]
        %v7767 = vld [vmem:[%s7757 + $0x24] sm:$0xf]
        %v7768 = vld [vmem:[%s7757 + $0x28] sm:$0xf]
        %v7769 = vld [vmem:[%s7757 + $0x2c] sm:$0xf]
        %v7770 = vld [vmem:[%s7757 + $0x30] sm:$0xf]
        %v7771 = vld [vmem:[%s7757 + $0x34] sm:$0xf]
        %v7772 = vld [vmem:[%s7757 + $0x38] sm:$0xf]
        %v7773 = vld [vmem:[%s7757 + $0x3c] sm:$0xf]
        %v7790 = vunpack.c.l.b16 %v7758
        %v7791 = vunpack.c.l.b16 %v7759
        %v7792 = vunpack.c.l.b16 %v7760
        %v7793 = vunpack.c.l.b16 %v7761
        %v7794 = vunpack.c.l.b16 %v7762
        %v7795 = vunpack.c.l.b16 %v7763
        %v7796 = vunpack.c.l.b16 %v7764
        %v7797 = vunpack.c.l.b16 %v7765
        %v7798 = vunpack.c.l.b16 %v7766
        %v7799 = vunpack.c.l.b16 %v7767
        %v7800 = vunpack.c.l.b16 %v7768
        %v7801 = vunpack.c.l.b16 %v7769
        %v7802 = vunpack.c.l.b16 %v7770
        %v7803 = vunpack.c.l.b16 %v7771
        %v7804 = vunpack.c.l.b16 %v7772
        %v7805 = vunpack.c.l.b16 %v7773
        %v7806 = vpack.c.b16 %v7791, %v7790
        %v7807 = vpack.c.b16 %v7793, %v7792
        %v7808 = vpack.c.b16 %v7795, %v7794
        %v7809 = vpack.c.b16 %v7797, %v7796
        %v7810 = vpack.c.b16 %v7799, %v7798
        %v7811 = vpack.c.b16 %v7801, %v7800
        %v7812 = vpack.c.b16 %v7803, %v7802
        %v7813 = vpack.c.b16 %v7805, %v7804
        %7822 = vmatprep.subr.bf16.mxu0 0
        %7823 = vmatpush1.bf16.msra.mxu0 %v7813
        %7824 = vmatprep.subr.bf16.mxu0 0
        %7825 = vmatpush1.bf16.msra.mxu0 %v7812
        %7826 = vmatprep.subr.bf16.mxu0 0
        %7827 = vmatpush1.bf16.msra.mxu0 %v7811
        %7828 = vmatprep.subr.bf16.mxu0 0
        %7829 = vmatpush1.bf16.msra.mxu0 %v7810
        %7830 = vmatprep.subr.bf16.mxu0 0
        %7831 = vmatpush1.bf16.msra.mxu0 %v7809
        %7832 = vmatprep.subr.bf16.mxu0 0
        %7833 = vmatpush1.bf16.msra.mxu0 %v7808
        %7834 = vmatprep.subr.bf16.mxu0 0
        %7835 = vmatpush1.bf16.msra.mxu0 %v7807
        %7836 = vmatprep.subr.bf16.mxu0 0
        %7837 = vmatpush1.bf16.msra.mxu0 %v7806
        %7838 = vmatprep.subr.bf16.mxu0 0
        %7839 = vmatpush2.bf16.msra.mxu0 0
        %7840 = vmatprep.subr.bf16.mxu0 0
        %7841 = vmatpush2.bf16.msra.mxu0 0
        %7842 = vmatprep.subr.bf16.mxu0 0
        %7843 = vmatpush2.bf16.msra.mxu0 0
        %7844 = vmatprep.subr.bf16.mxu0 0
        %7845 = vmatpush2.bf16.msra.mxu0 0
        %7846 = vmatprep.subr.bf16.mxu0 0
        %7847 = vmatpush2.bf16.msra.mxu0 0
        %7848 = vmatprep.subr.bf16.mxu0 0
        %7849 = vmatpush2.bf16.msra.mxu0 0
        %7850 = vmatprep.subr.bf16.mxu0 0
        %7851 = vmatpush2.bf16.msra.mxu0 0
        %7852 = vmatprep.subr.bf16.mxu0 0
        %7853 = vmatpush2.bf16.msra.mxu0 0
        %7854 = vmatprep.mubr.bf16.mxu0 0
        %7855 = vmatmul.mubr.bf16.gmra.mxu0 %v7756
        %v7856 = vpop.f32.mrf.mxu0
        %v7857 = vadd.f32 0.0, %v7856
        %v7858 = vpop.f32.mrf.mxu0
        %v7859 = vpop.f32.mrf.mxu0
        %v7860 = vpop.f32.mrf.mxu0
        %7861 = vdwg.mxu0
        %v7862 = vadd.f32 %v7754, %v7857
        %v7863 = vld [vmem:[#allocation5 + $0x6] sm:$0x1]
        %v7864 = vpack.c.bf16 %v7863, %v7863
        %s7865 = scalar_lea.vmem %s13, 384
        %v7866 = vld [vmem:[%s7865] sm:$0xf]
        %v7867 = vld [vmem:[%s7865 + $0x4] sm:$0xf]
        %v7868 = vld [vmem:[%s7865 + $0x8] sm:$0xf]
        %v7869 = vld [vmem:[%s7865 + $0xc] sm:$0xf]
        %v7870 = vld [vmem:[%s7865 + $0x10] sm:$0xf]
        %v7871 = vld [vmem:[%s7865 + $0x14] sm:$0xf]
        %v7872 = vld [vmem:[%s7865 + $0x18] sm:$0xf]
        %v7873 = vld [vmem:[%s7865 + $0x1c] sm:$0xf]
        %v7874 = vld [vmem:[%s7865 + $0x20] sm:$0xf]
        %v7875 = vld [vmem:[%s7865 + $0x24] sm:$0xf]
        %v7876 = vld [vmem:[%s7865 + $0x28] sm:$0xf]
        %v7877 = vld [vmem:[%s7865 + $0x2c] sm:$0xf]
        %v7878 = vld [vmem:[%s7865 + $0x30] sm:$0xf]
        %v7879 = vld [vmem:[%s7865 + $0x34] sm:$0xf]
        %v7880 = vld [vmem:[%s7865 + $0x38] sm:$0xf]
        %v7881 = vld [vmem:[%s7865 + $0x3c] sm:$0xf]
        %v7898 = vunpack.c.l.b16 %v7866
        %v7899 = vunpack.c.l.b16 %v7867
        %v7900 = vunpack.c.l.b16 %v7868
        %v7901 = vunpack.c.l.b16 %v7869
        %v7902 = vunpack.c.l.b16 %v7870
        %v7903 = vunpack.c.l.b16 %v7871
        %v7904 = vunpack.c.l.b16 %v7872
        %v7905 = vunpack.c.l.b16 %v7873
        %v7906 = vunpack.c.l.b16 %v7874
        %v7907 = vunpack.c.l.b16 %v7875
        %v7908 = vunpack.c.l.b16 %v7876
        %v7909 = vunpack.c.l.b16 %v7877
        %v7910 = vunpack.c.l.b16 %v7878
        %v7911 = vunpack.c.l.b16 %v7879
        %v7912 = vunpack.c.l.b16 %v7880
        %v7913 = vunpack.c.l.b16 %v7881
        %v7914 = vpack.c.b16 %v7899, %v7898
        %v7915 = vpack.c.b16 %v7901, %v7900
        %v7916 = vpack.c.b16 %v7903, %v7902
        %v7917 = vpack.c.b16 %v7905, %v7904
        %v7918 = vpack.c.b16 %v7907, %v7906
        %v7919 = vpack.c.b16 %v7909, %v7908
        %v7920 = vpack.c.b16 %v7911, %v7910
        %v7921 = vpack.c.b16 %v7913, %v7912
        %7930 = vmatprep.subr.bf16.mxu0 0
        %7931 = vmatpush1.bf16.msra.mxu0 %v7921
        %7932 = vmatprep.subr.bf16.mxu0 0
        %7933 = vmatpush1.bf16.msra.mxu0 %v7920
        %7934 = vmatprep.subr.bf16.mxu0 0
        %7935 = vmatpush1.bf16.msra.mxu0 %v7919
        %7936 = vmatprep.subr.bf16.mxu0 0
        %7937 = vmatpush1.bf16.msra.mxu0 %v7918
        %7938 = vmatprep.subr.bf16.mxu0 0
        %7939 = vmatpush1.bf16.msra.mxu0 %v7917
        %7940 = vmatprep.subr.bf16.mxu0 0
        %7941 = vmatpush1.bf16.msra.mxu0 %v7916
        %7942 = vmatprep.subr.bf16.mxu0 0
        %7943 = vmatpush1.bf16.msra.mxu0 %v7915
        %7944 = vmatprep.subr.bf16.mxu0 0
        %7945 = vmatpush1.bf16.msra.mxu0 %v7914
        %7946 = vmatprep.subr.bf16.mxu0 0
        %7947 = vmatpush2.bf16.msra.mxu0 0
        %7948 = vmatprep.subr.bf16.mxu0 0
        %7949 = vmatpush2.bf16.msra.mxu0 0
        %7950 = vmatprep.subr.bf16.mxu0 0
        %7951 = vmatpush2.bf16.msra.mxu0 0
        %7952 = vmatprep.subr.bf16.mxu0 0
        %7953 = vmatpush2.bf16.msra.mxu0 0
        %7954 = vmatprep.subr.bf16.mxu0 0
        %7955 = vmatpush2.bf16.msra.mxu0 0
        %7956 = vmatprep.subr.bf16.mxu0 0
        %7957 = vmatpush2.bf16.msra.mxu0 0
        %7958 = vmatprep.subr.bf16.mxu0 0
        %7959 = vmatpush2.bf16.msra.mxu0 0
        %7960 = vmatprep.subr.bf16.mxu0 0
        %7961 = vmatpush2.bf16.msra.mxu0 0
        %7962 = vmatprep.mubr.bf16.mxu0 0
        %7963 = vmatmul.mubr.bf16.gmra.mxu0 %v7864
        %v7964 = vpop.f32.mrf.mxu0
        %v7965 = vadd.f32 0.0, %v7964
        %v7966 = vpop.f32.mrf.mxu0
        %v7967 = vpop.f32.mrf.mxu0
        %v7968 = vpop.f32.mrf.mxu0
        %7969 = vdwg.mxu0
        %v7970 = vadd.f32 %v7862, %v7965
        %v7971 = vld [vmem:[#allocation5 + $0x7] sm:$0x1]
        %v7972 = vpack.c.bf16 %v7971, %v7971
        %s7973 = scalar_lea.vmem %s13, 448
        %v7974 = vld [vmem:[%s7973] sm:$0xf]
        %v7975 = vld [vmem:[%s7973 + $0x4] sm:$0xf]
        %v7976 = vld [vmem:[%s7973 + $0x8] sm:$0xf]
        %v7977 = vld [vmem:[%s7973 + $0xc] sm:$0xf]
        %v7978 = vld [vmem:[%s7973 + $0x10] sm:$0xf]
        %v7979 = vld [vmem:[%s7973 + $0x14] sm:$0xf]
        %v7980 = vld [vmem:[%s7973 + $0x18] sm:$0xf]
        %v7981 = vld [vmem:[%s7973 + $0x1c] sm:$0xf]
        %v7982 = vld [vmem:[%s7973 + $0x20] sm:$0xf]
        %v7983 = vld [vmem:[%s7973 + $0x24] sm:$0xf]
        %v7984 = vld [vmem:[%s7973 + $0x28] sm:$0xf]
        %v7985 = vld [vmem:[%s7973 + $0x2c] sm:$0xf]
        %v7986 = vld [vmem:[%s7973 + $0x30] sm:$0xf]
        %v7987 = vld [vmem:[%s7973 + $0x34] sm:$0xf]
        %v7988 = vld [vmem:[%s7973 + $0x38] sm:$0xf]
        %v7989 = vld [vmem:[%s7973 + $0x3c] sm:$0xf]
        %v8006 = vunpack.c.l.b16 %v7974
        %v8007 = vunpack.c.l.b16 %v7975
        %v8008 = vunpack.c.l.b16 %v7976
        %v8009 = vunpack.c.l.b16 %v7977
        %v8010 = vunpack.c.l.b16 %v7978
        %v8011 = vunpack.c.l.b16 %v7979
        %v8012 = vunpack.c.l.b16 %v7980
        %v8013 = vunpack.c.l.b16 %v7981
        %v8014 = vunpack.c.l.b16 %v7982
        %v8015 = vunpack.c.l.b16 %v7983
        %v8016 = vunpack.c.l.b16 %v7984
        %v8017 = vunpack.c.l.b16 %v7985
        %v8018 = vunpack.c.l.b16 %v7986
        %v8019 = vunpack.c.l.b16 %v7987
        %v8020 = vunpack.c.l.b16 %v7988
        %v8021 = vunpack.c.l.b16 %v7989
        %v8022 = vpack.c.b16 %v8007, %v8006
        %v8023 = vpack.c.b16 %v8009, %v8008
        %v8024 = vpack.c.b16 %v8011, %v8010
        %v8025 = vpack.c.b16 %v8013, %v8012
        %v8026 = vpack.c.b16 %v8015, %v8014
        %v8027 = vpack.c.b16 %v8017, %v8016
        %v8028 = vpack.c.b16 %v8019, %v8018
        %v8029 = vpack.c.b16 %v8021, %v8020
        %8038 = vmatprep.subr.bf16.mxu0 0
        %8039 = vmatpush1.bf16.msra.mxu0 %v8029
        %8040 = vmatprep.subr.bf16.mxu0 0
        %8041 = vmatpush1.bf16.msra.mxu0 %v8028
        %8042 = vmatprep.subr.bf16.mxu0 0
        %8043 = vmatpush1.bf16.msra.mxu0 %v8027
        %8044 = vmatprep.subr.bf16.mxu0 0
        %8045 = vmatpush1.bf16.msra.mxu0 %v8026
        %8046 = vmatprep.subr.bf16.mxu0 0
        %8047 = vmatpush1.bf16.msra.mxu0 %v8025
        %8048 = vmatprep.subr.bf16.mxu0 0
        %8049 = vmatpush1.bf16.msra.mxu0 %v8024
        %8050 = vmatprep.subr.bf16.mxu0 0
        %8051 = vmatpush1.bf16.msra.mxu0 %v8023
        %8052 = vmatprep.subr.bf16.mxu0 0
        %8053 = vmatpush1.bf16.msra.mxu0 %v8022
        %8054 = vmatprep.subr.bf16.mxu0 0
        %8055 = vmatpush2.bf16.msra.mxu0 0
        %8056 = vmatprep.subr.bf16.mxu0 0
        %8057 = vmatpush2.bf16.msra.mxu0 0
        %8058 = vmatprep.subr.bf16.mxu0 0
        %8059 = vmatpush2.bf16.msra.mxu0 0
        %8060 = vmatprep.subr.bf16.mxu0 0
        %8061 = vmatpush2.bf16.msra.mxu0 0
        %8062 = vmatprep.subr.bf16.mxu0 0
        %8063 = vmatpush2.bf16.msra.mxu0 0
        %8064 = vmatprep.subr.bf16.mxu0 0
        %8065 = vmatpush2.bf16.msra.mxu0 0
        %8066 = vmatprep.subr.bf16.mxu0 0
        %8067 = vmatpush2.bf16.msra.mxu0 0
        %8068 = vmatprep.subr.bf16.mxu0 0
        %8069 = vmatpush2.bf16.msra.mxu0 0
        %8070 = vmatprep.mubr.bf16.mxu0 0
        %8071 = vmatmul.mubr.bf16.gmra.mxu0 %v7972
        %v8072 = vpop.f32.mrf.mxu0
        %v8073 = vadd.f32 0.0, %v8072
        %v8074 = vpop.f32.mrf.mxu0
        %v8075 = vpop.f32.mrf.mxu0
        %v8076 = vpop.f32.mrf.mxu0
        %8077 = vdwg.mxu0
        %v8078 = vadd.f32 %v7970, %v8073
        %v8079 = vld [vmem:[#allocation5 + $0x8] sm:$0x1]
        %v8080 = vpack.c.bf16 %v8079, %v8079
        %s8081 = scalar_lea.vmem %s13, 512
        %v8082 = vld [vmem:[%s8081] sm:$0xf]
        %v8083 = vld [vmem:[%s8081 + $0x4] sm:$0xf]
        %v8084 = vld [vmem:[%s8081 + $0x8] sm:$0xf]
        %v8085 = vld [vmem:[%s8081 + $0xc] sm:$0xf]
        %v8086 = vld [vmem:[%s8081 + $0x10] sm:$0xf]
        %v8087 = vld [vmem:[%s8081 + $0x14] sm:$0xf]
        %v8088 = vld [vmem:[%s8081 + $0x18] sm:$0xf]
        %v8089 = vld [vmem:[%s8081 + $0x1c] sm:$0xf]
        %v8090 = vld [vmem:[%s8081 + $0x20] sm:$0xf]
        %v8091 = vld [vmem:[%s8081 + $0x24] sm:$0xf]
        %v8092 = vld [vmem:[%s8081 + $0x28] sm:$0xf]
        %v8093 = vld [vmem:[%s8081 + $0x2c] sm:$0xf]
        %v8094 = vld [vmem:[%s8081 + $0x30] sm:$0xf]
        %v8095 = vld [vmem:[%s8081 + $0x34] sm:$0xf]
        %v8096 = vld [vmem:[%s8081 + $0x38] sm:$0xf]
        %v8097 = vld [vmem:[%s8081 + $0x3c] sm:$0xf]
        %v8114 = vunpack.c.l.b16 %v8082
        %v8115 = vunpack.c.l.b16 %v8083
        %v8116 = vunpack.c.l.b16 %v8084
        %v8117 = vunpack.c.l.b16 %v8085
        %v8118 = vunpack.c.l.b16 %v8086
        %v8119 = vunpack.c.l.b16 %v8087
        %v8120 = vunpack.c.l.b16 %v8088
        %v8121 = vunpack.c.l.b16 %v8089
        %v8122 = vunpack.c.l.b16 %v8090
        %v8123 = vunpack.c.l.b16 %v8091
        %v8124 = vunpack.c.l.b16 %v8092
        %v8125 = vunpack.c.l.b16 %v8093
        %v8126 = vunpack.c.l.b16 %v8094
        %v8127 = vunpack.c.l.b16 %v8095
        %v8128 = vunpack.c.l.b16 %v8096
        %v8129 = vunpack.c.l.b16 %v8097
        %v8130 = vpack.c.b16 %v8115, %v8114
        %v8131 = vpack.c.b16 %v8117, %v8116
        %v8132 = vpack.c.b16 %v8119, %v8118
        %v8133 = vpack.c.b16 %v8121, %v8120
        %v8134 = vpack.c.b16 %v8123, %v8122
        %v8135 = vpack.c.b16 %v8125, %v8124
        %v8136 = vpack.c.b16 %v8127, %v8126
        %v8137 = vpack.c.b16 %v8129, %v8128
        %8146 = vmatprep.subr.bf16.mxu0 0
        %8147 = vmatpush1.bf16.msra.mxu0 %v8137
        %8148 = vmatprep.subr.bf16.mxu0 0
        %8149 = vmatpush1.bf16.msra.mxu0 %v8136
        %8150 = vmatprep.subr.bf16.mxu0 0
        %8151 = vmatpush1.bf16.msra.mxu0 %v8135
        %8152 = vmatprep.subr.bf16.mxu0 0
        %8153 = vmatpush1.bf16.msra.mxu0 %v8134
        %8154 = vmatprep.subr.bf16.mxu0 0
        %8155 = vmatpush1.bf16.msra.mxu0 %v8133
        %8156 = vmatprep.subr.bf16.mxu0 0
        %8157 = vmatpush1.bf16.msra.mxu0 %v8132
        %8158 = vmatprep.subr.bf16.mxu0 0
        %8159 = vmatpush1.bf16.msra.mxu0 %v8131
        %8160 = vmatprep.subr.bf16.mxu0 0
        %8161 = vmatpush1.bf16.msra.mxu0 %v8130
        %8162 = vmatprep.subr.bf16.mxu0 0
        %8163 = vmatpush2.bf16.msra.mxu0 0
        %8164 = vmatprep.subr.bf16.mxu0 0
        %8165 = vmatpush2.bf16.msra.mxu0 0
        %8166 = vmatprep.subr.bf16.mxu0 0
        %8167 = vmatpush2.bf16.msra.mxu0 0
        %8168 = vmatprep.subr.bf16.mxu0 0
        %8169 = vmatpush2.bf16.msra.mxu0 0
        %8170 = vmatprep.subr.bf16.mxu0 0
        %8171 = vmatpush2.bf16.msra.mxu0 0
        %8172 = vmatprep.subr.bf16.mxu0 0
        %8173 = vmatpush2.bf16.msra.mxu0 0
        %8174 = vmatprep.subr.bf16.mxu0 0
        %8175 = vmatpush2.bf16.msra.mxu0 0
        %8176 = vmatprep.subr.bf16.mxu0 0
        %8177 = vmatpush2.bf16.msra.mxu0 0
        %8178 = vmatprep.mubr.bf16.mxu0 0
        %8179 = vmatmul.mubr.bf16.gmra.mxu0 %v8080
        %v8180 = vpop.f32.mrf.mxu0
        %v8181 = vadd.f32 0.0, %v8180
        %v8182 = vpop.f32.mrf.mxu0
        %v8183 = vpop.f32.mrf.mxu0
        %v8184 = vpop.f32.mrf.mxu0
        %8185 = vdwg.mxu0
        %v8186 = vadd.f32 %v8078, %v8181
        %v8187 = vmin.f32 %v8186, 0.0
        %v8188 = vmul.f32 %v8187, 1.442695
        %v8189 = vpow.pop %v8188
        %v8190 = vsub.f32 %v8189, 1.0
        %v8191 = vmul.f32 %v8190, 1.6732632
        %vm8192 = vcmp.gt.f32.partialorder %v8186, 0.0
        %v8193 = vsel %vm8192, %v8186, %v8191
        %v8194 = vmul.f32 %v8193, 1.050701
        %v8195 = vpack.c.bf16 %v8194, %v8194
        %v8196 = vld [vmem:[%s15] sm:$0xf]
        %v8197 = vld [vmem:[%s15 + $0x4] sm:$0xf]
        %v8198 = vld [vmem:[%s15 + $0x8] sm:$0xf]
        %v8199 = vld [vmem:[%s15 + $0xc] sm:$0xf]
        %v8200 = vld [vmem:[%s15 + $0x10] sm:$0xf]
        %v8201 = vld [vmem:[%s15 + $0x14] sm:$0xf]
        %v8202 = vld [vmem:[%s15 + $0x18] sm:$0xf]
        %v8203 = vld [vmem:[%s15 + $0x1c] sm:$0xf]
        %v8204 = vld [vmem:[%s15 + $0x20] sm:$0xf]
        %v8205 = vld [vmem:[%s15 + $0x24] sm:$0xf]
        %v8206 = vld [vmem:[%s15 + $0x28] sm:$0xf]
        %v8207 = vld [vmem:[%s15 + $0x2c] sm:$0xf]
        %v8208 = vld [vmem:[%s15 + $0x30] sm:$0xf]
        %v8209 = vld [vmem:[%s15 + $0x34] sm:$0xf]
        %v8210 = vld [vmem:[%s15 + $0x38] sm:$0xf]
        %v8211 = vld [vmem:[%s15 + $0x3c] sm:$0xf]
        %v8212 = vld [vmem:[%s16] sm:$0x1]
        %v8229 = vunpack.c.l.b16 %v8196
        %v8230 = vunpack.c.l.b16 %v8197
        %v8231 = vunpack.c.l.b16 %v8198
        %v8232 = vunpack.c.l.b16 %v8199
        %v8233 = vunpack.c.l.b16 %v8200
        %v8234 = vunpack.c.l.b16 %v8201
        %v8235 = vunpack.c.l.b16 %v8202
        %v8236 = vunpack.c.l.b16 %v8203
        %v8237 = vunpack.c.l.b16 %v8204
        %v8238 = vunpack.c.l.b16 %v8205
        %v8239 = vunpack.c.l.b16 %v8206
        %v8240 = vunpack.c.l.b16 %v8207
        %v8241 = vunpack.c.l.b16 %v8208
        %v8242 = vunpack.c.l.b16 %v8209
        %v8243 = vunpack.c.l.b16 %v8210
        %v8244 = vunpack.c.l.b16 %v8211
        %v8245 = vpack.c.b16 %v8230, %v8229
        %v8246 = vpack.c.b16 %v8232, %v8231
        %v8247 = vpack.c.b16 %v8234, %v8233
        %v8248 = vpack.c.b16 %v8236, %v8235
        %v8249 = vpack.c.b16 %v8238, %v8237
        %v8250 = vpack.c.b16 %v8240, %v8239
        %v8251 = vpack.c.b16 %v8242, %v8241
        %v8252 = vpack.c.b16 %v8244, %v8243
        %8261 = vmatprep.subr.bf16.mxu0 0
        %8262 = vmatpush1.bf16.msra.mxu0 %v8252
        %8263 = vmatprep.subr.bf16.mxu0 0
        %8264 = vmatpush1.bf16.msra.mxu0 %v8251
        %8265 = vmatprep.subr.bf16.mxu0 0
        %8266 = vmatpush1.bf16.msra.mxu0 %v8250
        %8267 = vmatprep.subr.bf16.mxu0 0
        %8268 = vmatpush1.bf16.msra.mxu0 %v8249
        %8269 = vmatprep.subr.bf16.mxu0 0
        %8270 = vmatpush1.bf16.msra.mxu0 %v8248
        %8271 = vmatprep.subr.bf16.mxu0 0
        %8272 = vmatpush1.bf16.msra.mxu0 %v8247
        %8273 = vmatprep.subr.bf16.mxu0 0
        %8274 = vmatpush1.bf16.msra.mxu0 %v8246
        %8275 = vmatprep.subr.bf16.mxu0 0
        %8276 = vmatpush1.bf16.msra.mxu0 %v8245
        %8277 = vmatprep.subr.bf16.mxu0 0
        %8278 = vmatpush2.bf16.msra.mxu0 0
        %8279 = vmatprep.subr.bf16.mxu0 0
        %8280 = vmatpush2.bf16.msra.mxu0 0
        %8281 = vmatprep.subr.bf16.mxu0 0
        %8282 = vmatpush2.bf16.msra.mxu0 0
        %8283 = vmatprep.subr.bf16.mxu0 0
        %8284 = vmatpush2.bf16.msra.mxu0 0
        %8285 = vmatprep.subr.bf16.mxu0 0
        %8286 = vmatpush2.bf16.msra.mxu0 0
        %8287 = vmatprep.subr.bf16.mxu0 0
        %8288 = vmatpush2.bf16.msra.mxu0 0
        %8289 = vmatprep.subr.bf16.mxu0 0
        %8290 = vmatpush2.bf16.msra.mxu0 0
        %8291 = vmatprep.subr.bf16.mxu0 0
        %8292 = vmatpush2.bf16.msra.mxu0 0
        %8293 = vmatprep.mubr.bf16.mxu0 0
        %8294 = vmatmul.mubr.bf16.gmra.mxu0 %v8195
        %v8295 = vpop.f32.mrf.mxu0
        %v8296 = vadd.f32 %v8212, %v8295
        %v8297 = vpop.f32.mrf.mxu0
        %v8298 = vpop.f32.mrf.mxu0
        %v8299 = vpop.f32.mrf.mxu0
        %8300 = vdwg.mxu0
        %v8301 = vmin.f32 %v8296, 0.0
        %v8302 = vmul.f32 %v8301, 1.442695
        %v8303 = vpow.pop %v8302
        %v8304 = vsub.f32 %v8303, 1.0
        %v8305 = vmul.f32 %v8304, 1.6732632
        %vm8306 = vcmp.gt.f32.partialorder %v8296, 0.0
        %v8307 = vsel %vm8306, %v8296, %v8305
        %v8308 = vmul.f32 %v8307, 1.050701
        %v8309 = vpack.c.bf16 %v8308, %v8308
        %v8310 = vld [vmem:[%s17] sm:$0xf]
        %v8311 = vld [vmem:[%s17 + $0x4] sm:$0xf]
        %v8312 = vld [vmem:[%s17 + $0x8] sm:$0xf]
        %v8313 = vld [vmem:[%s17 + $0xc] sm:$0xf]
        %v8314 = vld [vmem:[%s17 + $0x10] sm:$0xf]
        %v8315 = vld [vmem:[%s17 + $0x14] sm:$0xf]
        %v8316 = vld [vmem:[%s17 + $0x18] sm:$0xf]
        %v8317 = vld [vmem:[%s17 + $0x1c] sm:$0xf]
        %v8318 = vld [vmem:[%s17 + $0x20] sm:$0xf]
        %v8319 = vld [vmem:[%s17 + $0x24] sm:$0xf]
        %v8320 = vld [vmem:[%s17 + $0x28] sm:$0xf]
        %v8321 = vld [vmem:[%s17 + $0x2c] sm:$0xf]
        %v8322 = vld [vmem:[%s17 + $0x30] sm:$0xf]
        %v8323 = vld [vmem:[%s17 + $0x34] sm:$0xf]
        %v8324 = vld [vmem:[%s17 + $0x38] sm:$0xf]
        %v8325 = vld [vmem:[%s17 + $0x3c] sm:$0xf]
        %v8326 = vld [vmem:[%s18] sm:$0x1]
        %v8343 = vunpack.c.l.b16 %v8310
        %v8344 = vunpack.c.l.b16 %v8311
        %v8345 = vunpack.c.l.b16 %v8312
        %v8346 = vunpack.c.l.b16 %v8313
        %v8347 = vunpack.c.l.b16 %v8314
        %v8348 = vunpack.c.l.b16 %v8315
        %v8349 = vunpack.c.l.b16 %v8316
        %v8350 = vunpack.c.l.b16 %v8317
        %v8351 = vunpack.c.l.b16 %v8318
        %v8352 = vunpack.c.l.b16 %v8319
        %v8353 = vunpack.c.l.b16 %v8320
        %v8354 = vunpack.c.l.b16 %v8321
        %v8355 = vunpack.c.l.b16 %v8322
        %v8356 = vunpack.c.l.b16 %v8323
        %v8357 = vunpack.c.l.b16 %v8324
        %v8358 = vunpack.c.l.b16 %v8325
        %v8359 = vpack.c.b16 %v8344, %v8343
        %v8360 = vpack.c.b16 %v8346, %v8345
        %v8361 = vpack.c.b16 %v8348, %v8347
        %v8362 = vpack.c.b16 %v8350, %v8349
        %v8363 = vpack.c.b16 %v8352, %v8351
        %v8364 = vpack.c.b16 %v8354, %v8353
        %v8365 = vpack.c.b16 %v8356, %v8355
        %v8366 = vpack.c.b16 %v8358, %v8357
        %8375 = vmatprep.subr.bf16.mxu0 0
        %8376 = vmatpush1.bf16.msra.mxu0 %v8366
        %8377 = vmatprep.subr.bf16.mxu0 0
        %8378 = vmatpush1.bf16.msra.mxu0 %v8365
        %8379 = vmatprep.subr.bf16.mxu0 0
        %8380 = vmatpush1.bf16.msra.mxu0 %v8364
        %8381 = vmatprep.subr.bf16.mxu0 0
        %8382 = vmatpush1.bf16.msra.mxu0 %v8363
        %8383 = vmatprep.subr.bf16.mxu0 0
        %8384 = vmatpush1.bf16.msra.mxu0 %v8362
        %8385 = vmatprep.subr.bf16.mxu0 0
        %8386 = vmatpush1.bf16.msra.mxu0 %v8361
        %8387 = vmatprep.subr.bf16.mxu0 0
        %8388 = vmatpush1.bf16.msra.mxu0 %v8360
        %8389 = vmatprep.subr.bf16.mxu0 0
        %8390 = vmatpush1.bf16.msra.mxu0 %v8359
        %8391 = vmatprep.subr.bf16.mxu0 0
        %8392 = vmatpush2.bf16.msra.mxu0 0
        %8393 = vmatprep.subr.bf16.mxu0 0
        %8394 = vmatpush2.bf16.msra.mxu0 0
        %8395 = vmatprep.subr.bf16.mxu0 0
        %8396 = vmatpush2.bf16.msra.mxu0 0
        %8397 = vmatprep.subr.bf16.mxu0 0
        %8398 = vmatpush2.bf16.msra.mxu0 0
        %8399 = vmatprep.subr.bf16.mxu0 0
        %8400 = vmatpush2.bf16.msra.mxu0 0
        %8401 = vmatprep.subr.bf16.mxu0 0
        %8402 = vmatpush2.bf16.msra.mxu0 0
        %8403 = vmatprep.subr.bf16.mxu0 0
        %8404 = vmatpush2.bf16.msra.mxu0 0
        %8405 = vmatprep.subr.bf16.mxu0 0
        %8406 = vmatpush2.bf16.msra.mxu0 0
        %8407 = vmatprep.mubr.bf16.mxu0 0
        %8408 = vmatmul.mubr.bf16.gmra.mxu0 %v8309
        %v8409 = vpop.f32.mrf.mxu0
        %v8410 = vadd.f32 %v8326, %v8409
        %v8411 = vpop.f32.mrf.mxu0
        %v8412 = vpop.f32.mrf.mxu0
        %v8413 = vpop.f32.mrf.mxu0
        %8414 = vdwg.mxu0
        %v8415 = vlaneseq
        %v8416 = vshrl.u32 %v8415, 7
        %v8417 = vsub.s32 0, %v8416
        %v8418 = vrot.slane %v8410, %v8417
        %8419 = vst [vmem:[%s644] sm:$0xff] %v8418
        %p8420 = scmp.lt.s32.totalorder %s32, 1
        %s8421 = scalar_select %p8420, %s32, 1
        %s8422 = smul.addr %s8421, 8
        %s8423 = scalar_lea.vmem %s19, %s8422
        // Predicated region
        $region109: #{_forward_impl.1} parent=95 // pred_check
          %p8424 = pneg %p454
        $region110: #{_forward_impl.1} parent=95 // pred_check_branch
          %8426 = sbr.rel (%p8424) target = $region112
        $region111: #{_forward_impl.1} parent=95 // pred_region
          _
        $region112: #{_forward_impl.1} parent=95 // pred_fallthru
          _
      $region96: #{_forward_impl.1} parent=5 // pred_fallthru
        _
      %p8427 = scmp.le.s32.totalorder 2, %s27
      // Predicated region
      $region113: #{_forward_impl.1} parent=5 // pred_check
        %p8428 = pneg %p8427
      $region114: #{_forward_impl.1} parent=5 // pred_check_branch
        %8430 = sbr.rel (%p8428) target = $region116
      $region115: #{_forward_impl.1} parent=5 // pred_region
        %s8431 = ssub.s32 %s27, 2
        // Predicated region
        $region117: #{_forward_impl.1} parent=115 // pred_check
          %p8432 = pneg %p460
        $region118: #{_forward_impl.1} parent=115 // pred_check_branch
          %8434 = sbr.rel (%p8432) target = $region120
        $region119: #{_forward_impl.1} parent=115 // pred_region
          %p8435 = scmp.lt.s32.totalorder %s33, 1
          %s8436 = scalar_select %p8435, %s33, 1
          %s8437 = smul.addr %s8436, 8
          %s8438 = scalar_lea.vmem %s19, %s8437
        $region120: #{_forward_impl.1} parent=115 // pred_fallthru
          _
      $region116: #{_forward_impl.1} parent=5 // pred_fallthru
        _
    $region6: #{_forward_impl.1} parent=1 // loop_footer
      %s31 = sadd.s32 1, %s27
    $region7: #{_forward_impl.1} parent=1 // loop_footer_branch
      %26 = sbr.rel target = $region3
    $region8: #{_forward_impl.1} parent=1 // loop_exit
      _
    %8439 = vsyncpa [#allocation7], 1
    %s8440 = scalar_lea.sflag [#allocation7], 1
    %8441 = vsyncpa %s8440, 1
    %8442 = vsyncpa [#allocation9], 1

</llo_original>
